<compile_context>
chip_gen: v6e
topology: v6e:2x2x1
jax: 0.10.0
libtpu: 0.0.40
codegen_flags: <defaults>
</compile_context>

<pallas_src>
import jax
import jax.numpy as jnp
import numpy as np
from jax.experimental import pallas as pl
from jax.experimental.pallas import tpu as pltpu

HIDDEN = 1000          # logical hidden width (PyTorch)
HIDDEN_PAD = 1024      # lane-dense padded width (multiple of 128)
IN_F = 2
OUT_F = 2
BN_EPS = 1e-5
LEAKY_SLOPE = 0.01     # PyTorch LeakyReLU default negative_slope


def _bn_leaky(h, g_ref, be_ref):
    """BatchNorm1d (training-mode batch stats, biased var) -> LeakyReLU, in f32."""
    mean = jnp.mean(h, axis=0, keepdims=True)                    # (1, Hp)
    var = jnp.mean(jnp.square(h - mean), axis=0, keepdims=True)  # biased variance
    hn = (h - mean) * jax.lax.rsqrt(var + BN_EPS)
    hn = hn * g_ref[...] + be_ref[...]
    return jnp.where(hn >= 0, hn, LEAKY_SLOPE * hn)


def generator_kernel(
    x_ref,
    w1_ref, b1_ref, g1_ref, be1_ref,
    w2_ref, b2_ref, g2_ref, be2_ref,
    w3_ref, b3_ref, g3_ref, be3_ref,
    w4_ref, b4_ref, g4_ref, be4_ref,
    w5_ref, b5_ref,
    o_ref,
):
    x = x_ref[...].astype(jnp.float32)                     # (B, 2)

    # Layer 1: K=2 contraction -> two VPU broadcast FMAs (skip a mostly-padded
    # MXU pass). Math is identical to x @ w1 + b1.
    w1 = w1_ref[...].astype(jnp.float32)                   # (2, Hp)
    h = x[:, 0:1] * w1[0:1, :] + x[:, 1:2] * w1[1:2, :] + b1_ref[...]
    h = _bn_leaky(h, g1_ref, be1_ref)

    # Hidden layers 2-4: bf16 x bf16 MXU matmuls with f32 accumulation.
    for w_ref, b_ref, g_ref, be_ref in (
        (w2_ref, b2_ref, g2_ref, be2_ref),
        (w3_ref, b3_ref, g3_ref, be3_ref),
        (w4_ref, b4_ref, g4_ref, be4_ref),
    ):
        h = jnp.dot(h.astype(jnp.bfloat16), w_ref[...],
                    preferred_element_type=jnp.float32) + b_ref[...]
        h = _bn_leaky(h, g_ref, be_ref)

    # Output projection (Hp -> 2).
    out = jnp.dot(h.astype(jnp.bfloat16), w5_ref[...],
                  preferred_element_type=jnp.float32) + b5_ref[...]
    o_ref[...] = out.astype(o_ref.dtype)


def init_params(key):
    """PyTorch-like uniform init at logical dims, zero-padded to lane-dense dims.

    Returns [w1,b1,g1,be1, w2,b2,g2,be2, w3,..., w4,..., w5,b5] with
    weights in bf16 (transposed vs. PyTorch: (in_features, out_features)),
    bias/gamma/beta in f32.  Padded gamma/beta are 0 so padded columns stay 0.
    """
    params = []
    dims = [(IN_F, HIDDEN), (HIDDEN, HIDDEN), (HIDDEN, HIDDEN),
            (HIDDEN, HIDDEN), (HIDDEN, OUT_F)]
    keys = jax.random.split(key, 2 * len(dims))
    for li, (fan_in, fan_out) in enumerate(dims):
        bound = 1.0 / (fan_in ** 0.5)
        w = jax.random.uniform(keys[2 * li], (fan_in, fan_out),
                               minval=-bound, maxval=bound, dtype=jnp.float32)
        b = jax.random.uniform(keys[2 * li + 1], (1, fan_out),
                               minval=-bound, maxval=bound, dtype=jnp.float32)
        fi_pad = HIDDEN_PAD if fan_in == HIDDEN else fan_in
        fo_pad = HIDDEN_PAD if fan_out == HIDDEN else fan_out
        w = jnp.pad(w, ((0, fi_pad - fan_in), (0, fo_pad - fan_out)))
        b = jnp.pad(b, ((0, 0), (0, fo_pad - fan_out)))
        params.append(w.astype(jnp.bfloat16))   # weights stream in bf16
        params.append(b)                        # bias stays f32
        if li < 4:  # BatchNorm params for the first 4 Linear layers
            g = jnp.pad(jnp.ones((1, fan_out), jnp.float32),
                        ((0, 0), (0, fo_pad - fan_out)))        # gamma pad = 0!
            be = jnp.zeros((1, fo_pad), jnp.float32)            # beta pad = 0
            params.append(g)
            params.append(be)
    return params


@jax.jit
def generator_forward(x, *params):
    B = x.shape[0]
    args = (x,) + tuple(params)

    # Whole-array, unpipelined VMEM residents: no grid => no pointless
    # double-buffering of the weights.
    vmem_spec = pl.BlockSpec(memory_space=pltpu.MemorySpace.VMEM)

    flops = (2 * B * IN_F * HIDDEN_PAD
             + 3 * 2 * B * HIDDEN_PAD * HIDDEN_PAD
             + 2 * B * HIDDEN_PAD * OUT_F)
    bytes_accessed = sum(int(a.size) * a.dtype.itemsize for a in args) + B * OUT_F * 4

    return pl.pallas_call(
        generator_kernel,
        out_shape=jax.ShapeDtypeStruct((B, OUT_F), jnp.float32),
        in_specs=[vmem_spec] * len(args),
        out_specs=vmem_spec,
        compiler_params=pltpu.CompilerParams(
            # Actual footprint < 10 MiB; 32 MiB fits every generation incl. v7x.
            vmem_limit_bytes=32 << 20,
        ),
        cost_estimate=pl.CostEstimate(
            flops=flops,
            transcendentals=4 * HIDDEN_PAD,
            bytes_accessed=bytes_accessed,
        ),
    )(*args)


def _reference_forward(x, params):
    """Pure-JAX reference mirroring the kernel's numerics (bf16 weights)."""
    (w1, b1, g1, be1, w2, b2, g2, be2, w3, b3, g3, be3,
     w4, b4, g4, be4, w5, b5) = params

    def bn_leaky(h, g, be):
        mean = jnp.mean(h, axis=0, keepdims=True)
        var = jnp.mean(jnp.square(h - mean), axis=0, keepdims=True)
        hn = (h - mean) * jax.lax.rsqrt(var + BN_EPS)
        hn = hn * g + be
        return jnp.where(hn >= 0, hn, LEAKY_SLOPE * hn)

    h = x.astype(jnp.float32) @ w1.astype(jnp.float32) + b1
    h = bn_leaky(h, g1, be1)
    for w, b, g, be in ((w2, b2, g2, be2), (w3, b3, g3, be3), (w4, b4, g4, be4)):
        h = jnp.dot(h.astype(jnp.bfloat16), w,
                    preferred_element_type=jnp.float32) + b
        h = bn_leaky(h, g, be)
    return jnp.dot(h.astype(jnp.bfloat16), w5,
                   preferred_element_type=jnp.float32) + b5


if __name__ == "__main__":
    key = jax.random.PRNGKey(0)
    pkey, xkey = jax.random.split(key)
    params = init_params(pkey)

    B = 8  # batch size (training-mode BatchNorm1d needs a batch)
    x = jax.random.normal(xkey, (B, IN_F), dtype=jnp.float32)

    out = generator_forward(x, *params)
    jax.block_until_ready(out)
    assert out.shape == (B, OUT_F)
    assert bool(jnp.all(jnp.isfinite(out)))

    ref = _reference_forward(x, params)
    np.testing.assert_allclose(np.asarray(out), np.asarray(ref),
                               rtol=2e-2, atol=2e-2)
    print("KERNEL_OK")
</pallas_src>

<mosaic_0001>
module attributes {stable_mosaic.version = 11 : i64} {
  func.func @generator_kernel(%arg0: memref<8x2xf32, #tpu.memory_space<vmem>>, %arg1: memref<2x1024xbf16, #tpu.memory_space<vmem>>, %arg2: memref<1x1024xf32, #tpu.memory_space<vmem>>, %arg3: memref<1x1024xf32, #tpu.memory_space<vmem>>, %arg4: memref<1x1024xf32, #tpu.memory_space<vmem>>, %arg5: memref<1024x1024xbf16, #tpu.memory_space<vmem>>, %arg6: memref<1x1024xf32, #tpu.memory_space<vmem>>, %arg7: memref<1x1024xf32, #tpu.memory_space<vmem>>, %arg8: memref<1x1024xf32, #tpu.memory_space<vmem>>, %arg9: memref<1024x1024xbf16, #tpu.memory_space<vmem>>, %arg10: memref<1x1024xf32, #tpu.memory_space<vmem>>, %arg11: memref<1x1024xf32, #tpu.memory_space<vmem>>, %arg12: memref<1x1024xf32, #tpu.memory_space<vmem>>, %arg13: memref<1024x1024xbf16, #tpu.memory_space<vmem>>, %arg14: memref<1x1024xf32, #tpu.memory_space<vmem>>, %arg15: memref<1x1024xf32, #tpu.memory_space<vmem>>, %arg16: memref<1x1024xf32, #tpu.memory_space<vmem>>, %arg17: memref<1024x2xbf16, #tpu.memory_space<vmem>>, %arg18: memref<1x2xf32, #tpu.memory_space<vmem>>, %arg19: memref<8x2xf32, #tpu.memory_space<vmem>>) attributes {dimension_semantics = [], scalar_prefetch = 0 : i64, scratch_operands = 0 : i64, tpu.core_type = #tpu.core_type<tc>} {
    %c0 = arith.constant 0 : index
    %c0_0 = arith.constant 0 : index
    %0 = vector.load %arg0[%c0, %c0_0] : memref<8x2xf32, #tpu.memory_space<vmem>>, vector<8x2xf32>
    %c0_1 = arith.constant 0 : index
    %c0_2 = arith.constant 0 : index
    %1 = vector.load %arg1[%c0_1, %c0_2] : memref<2x1024xbf16, #tpu.memory_space<vmem>>, vector<2x1024xbf16>
    %2 = arith.extf %1 : vector<2x1024xbf16> to vector<2x1024xf32>
    %3 = vector.extract_strided_slice %0 {offsets = [0, 0], sizes = [8, 1], strides = [1, 1]} : vector<8x2xf32> to vector<8x1xf32>
    %4 = vector.extract_strided_slice %2 {offsets = [0, 0], sizes = [1, 1024], strides = [1, 1]} : vector<2x1024xf32> to vector<1x1024xf32>
    %5 = vector.broadcast %3 : vector<8x1xf32> to vector<8x1024xf32>
    %6 = vector.broadcast %4 : vector<1x1024xf32> to vector<8x1024xf32>
    %7 = arith.mulf %5, %6 : vector<8x1024xf32>
    %8 = vector.extract_strided_slice %0 {offsets = [0, 1], sizes = [8, 1], strides = [1, 1]} : vector<8x2xf32> to vector<8x1xf32>
    %9 = vector.extract_strided_slice %2 {offsets = [1, 0], sizes = [1, 1024], strides = [1, 1]} : vector<2x1024xf32> to vector<1x1024xf32>
    %10 = vector.broadcast %8 : vector<8x1xf32> to vector<8x1024xf32>
    %11 = vector.broadcast %9 : vector<1x1024xf32> to vector<8x1024xf32>
    %12 = arith.mulf %10, %11 : vector<8x1024xf32>
    %13 = arith.addf %7, %12 : vector<8x1024xf32>
    %c0_3 = arith.constant 0 : index
    %c0_4 = arith.constant 0 : index
    %14 = vector.load %arg2[%c0_3, %c0_4] : memref<1x1024xf32, #tpu.memory_space<vmem>>, vector<1x1024xf32>
    %15 = vector.broadcast %14 : vector<1x1024xf32> to vector<8x1024xf32>
    %16 = arith.addf %13, %15 : vector<8x1024xf32>
    %cst = arith.constant dense<0.000000e+00> : vector<1024xf32>
    %17 = vector.multi_reduction <add>, %16, %cst [0] : vector<8x1024xf32> to vector<1024xf32>
    %18 = vector.shape_cast %17 : vector<1024xf32> to vector<1x1024xf32>
    %cst_5 = arith.constant 8.000000e+00 : f32
    %19 = vector.broadcast %cst_5 : f32 to vector<1x1024xf32>
    %20 = arith.divf %18, %19 : vector<1x1024xf32>
    %21 = vector.broadcast %20 : vector<1x1024xf32> to vector<8x1024xf32>
    %22 = arith.subf %16, %21 : vector<8x1024xf32>
    %23 = arith.mulf %22, %22 : vector<8x1024xf32>
    %cst_6 = arith.constant dense<0.000000e+00> : vector<1024xf32>
    %24 = vector.multi_reduction <add>, %23, %cst_6 [0] : vector<8x1024xf32> to vector<1024xf32>
    %25 = vector.shape_cast %24 : vector<1024xf32> to vector<1x1024xf32>
    %cst_7 = arith.constant 8.000000e+00 : f32
    %26 = vector.broadcast %cst_7 : f32 to vector<1x1024xf32>
    %27 = arith.divf %25, %26 : vector<1x1024xf32>
    %28 = vector.broadcast %20 : vector<1x1024xf32> to vector<8x1024xf32>
    %29 = arith.subf %16, %28 : vector<8x1024xf32>
    %cst_8 = arith.constant 9.99999974E-6 : f32
    %30 = vector.broadcast %cst_8 : f32 to vector<1x1024xf32>
    %31 = arith.addf %27, %30 : vector<1x1024xf32>
    %32 = math.rsqrt %31 : vector<1x1024xf32>
    %33 = vector.broadcast %32 : vector<1x1024xf32> to vector<8x1024xf32>
    %34 = arith.mulf %29, %33 : vector<8x1024xf32>
    %c0_9 = arith.constant 0 : index
    %c0_10 = arith.constant 0 : index
    %35 = vector.load %arg3[%c0_9, %c0_10] : memref<1x1024xf32, #tpu.memory_space<vmem>>, vector<1x1024xf32>
    %36 = vector.broadcast %35 : vector<1x1024xf32> to vector<8x1024xf32>
    %37 = arith.mulf %34, %36 : vector<8x1024xf32>
    %c0_11 = arith.constant 0 : index
    %c0_12 = arith.constant 0 : index
    %38 = vector.load %arg4[%c0_11, %c0_12] : memref<1x1024xf32, #tpu.memory_space<vmem>>, vector<1x1024xf32>
    %39 = vector.broadcast %38 : vector<1x1024xf32> to vector<8x1024xf32>
    %40 = arith.addf %37, %39 : vector<8x1024xf32>
    %cst_13 = arith.constant 0.000000e+00 : f32
    %41 = vector.broadcast %cst_13 : f32 to vector<8x1024xf32>
    %42 = arith.cmpf oge, %40, %41 : vector<8x1024xf32>
    %cst_14 = arith.constant 0.00999999977 : f32
    %43 = vector.broadcast %cst_14 : f32 to vector<8x1024xf32>
    %44 = arith.mulf %43, %40 : vector<8x1024xf32>
    %45 = arith.select %42, %40, %44 : vector<8x1024xi1>, vector<8x1024xf32>
    %46 = arith.truncf %45 : vector<8x1024xf32> to vector<8x1024xbf16>
    %c0_15 = arith.constant 0 : index
    %c0_16 = arith.constant 0 : index
    %47 = vector.load %arg5[%c0_15, %c0_16] : memref<1024x1024xbf16, #tpu.memory_space<vmem>>, vector<1024x1024xbf16>
    %cst_17 = arith.constant dense<0.000000e+00> : vector<8x1024xf32>
    %48 = tpu.matmul %46, %47, %cst_17 {dimension_numbers = #tpu.dot_dimension_numbers<[1], [0], [0], [1], [0, 0, 1, 1], [], []>} : vector<8x1024xbf16>, vector<1024x1024xbf16>, vector<8x1024xf32> -> vector<8x1024xf32>
    %c0_18 = arith.constant 0 : index
    %c0_19 = arith.constant 0 : index
    %49 = vector.load %arg6[%c0_18, %c0_19] : memref<1x1024xf32, #tpu.memory_space<vmem>>, vector<1x1024xf32>
    %50 = vector.broadcast %49 : vector<1x1024xf32> to vector<8x1024xf32>
    %51 = arith.addf %48, %50 : vector<8x1024xf32>
    %cst_20 = arith.constant dense<0.000000e+00> : vector<1024xf32>
    %52 = vector.multi_reduction <add>, %51, %cst_20 [0] : vector<8x1024xf32> to vector<1024xf32>
    %53 = vector.shape_cast %52 : vector<1024xf32> to vector<1x1024xf32>
    %cst_21 = arith.constant 8.000000e+00 : f32
    %54 = vector.broadcast %cst_21 : f32 to vector<1x1024xf32>
    %55 = arith.divf %53, %54 : vector<1x1024xf32>
    %56 = vector.broadcast %55 : vector<1x1024xf32> to vector<8x1024xf32>
    %57 = arith.subf %51, %56 : vector<8x1024xf32>
    %58 = arith.mulf %57, %57 : vector<8x1024xf32>
    %cst_22 = arith.constant dense<0.000000e+00> : vector<1024xf32>
    %59 = vector.multi_reduction <add>, %58, %cst_22 [0] : vector<8x1024xf32> to vector<1024xf32>
    %60 = vector.shape_cast %59 : vector<1024xf32> to vector<1x1024xf32>
    %cst_23 = arith.constant 8.000000e+00 : f32
    %61 = vector.broadcast %cst_23 : f32 to vector<1x1024xf32>
    %62 = arith.divf %60, %61 : vector<1x1024xf32>
    %63 = vector.broadcast %55 : vector<1x1024xf32> to vector<8x1024xf32>
    %64 = arith.subf %51, %63 : vector<8x1024xf32>
    %cst_24 = arith.constant 9.99999974E-6 : f32
    %65 = vector.broadcast %cst_24 : f32 to vector<1x1024xf32>
    %66 = arith.addf %62, %65 : vector<1x1024xf32>
    %67 = math.rsqrt %66 : vector<1x1024xf32>
    %68 = vector.broadcast %67 : vector<1x1024xf32> to vector<8x1024xf32>
    %69 = arith.mulf %64, %68 : vector<8x1024xf32>
    %c0_25 = arith.constant 0 : index
    %c0_26 = arith.constant 0 : index
    %70 = vector.load %arg7[%c0_25, %c0_26] : memref<1x1024xf32, #tpu.memory_space<vmem>>, vector<1x1024xf32>
    %71 = vector.broadcast %70 : vector<1x1024xf32> to vector<8x1024xf32>
    %72 = arith.mulf %69, %71 : vector<8x1024xf32>
    %c0_27 = arith.constant 0 : index
    %c0_28 = arith.constant 0 : index
    %73 = vector.load %arg8[%c0_27, %c0_28] : memref<1x1024xf32, #tpu.memory_space<vmem>>, vector<1x1024xf32>
    %74 = vector.broadcast %73 : vector<1x1024xf32> to vector<8x1024xf32>
    %75 = arith.addf %72, %74 : vector<8x1024xf32>
    %cst_29 = arith.constant 0.000000e+00 : f32
    %76 = vector.broadcast %cst_29 : f32 to vector<8x1024xf32>
    %77 = arith.cmpf oge, %75, %76 : vector<8x1024xf32>
    %cst_30 = arith.constant 0.00999999977 : f32
    %78 = vector.broadcast %cst_30 : f32 to vector<8x1024xf32>
    %79 = arith.mulf %78, %75 : vector<8x1024xf32>
    %80 = arith.select %77, %75, %79 : vector<8x1024xi1>, vector<8x1024xf32>
    %81 = arith.truncf %80 : vector<8x1024xf32> to vector<8x1024xbf16>
    %c0_31 = arith.constant 0 : index
    %c0_32 = arith.constant 0 : index
    %82 = vector.load %arg9[%c0_31, %c0_32] : memref<1024x1024xbf16, #tpu.memory_space<vmem>>, vector<1024x1024xbf16>
    %cst_33 = arith.constant dense<0.000000e+00> : vector<8x1024xf32>
    %83 = tpu.matmul %81, %82, %cst_33 {dimension_numbers = #tpu.dot_dimension_numbers<[1], [0], [0], [1], [0, 0, 1, 1], [], []>} : vector<8x1024xbf16>, vector<1024x1024xbf16>, vector<8x1024xf32> -> vector<8x1024xf32>
    %c0_34 = arith.constant 0 : index
    %c0_35 = arith.constant 0 : index
    %84 = vector.load %arg10[%c0_34, %c0_35] : memref<1x1024xf32, #tpu.memory_space<vmem>>, vector<1x1024xf32>
    %85 = vector.broadcast %84 : vector<1x1024xf32> to vector<8x1024xf32>
    %86 = arith.addf %83, %85 : vector<8x1024xf32>
    %cst_36 = arith.constant dense<0.000000e+00> : vector<1024xf32>
    %87 = vector.multi_reduction <add>, %86, %cst_36 [0] : vector<8x1024xf32> to vector<1024xf32>
    %88 = vector.shape_cast %87 : vector<1024xf32> to vector<1x1024xf32>
    %cst_37 = arith.constant 8.000000e+00 : f32
    %89 = vector.broadcast %cst_37 : f32 to vector<1x1024xf32>
    %90 = arith.divf %88, %89 : vector<1x1024xf32>
    %91 = vector.broadcast %90 : vector<1x1024xf32> to vector<8x1024xf32>
    %92 = arith.subf %86, %91 : vector<8x1024xf32>
    %93 = arith.mulf %92, %92 : vector<8x1024xf32>
    %cst_38 = arith.constant dense<0.000000e+00> : vector<1024xf32>
    %94 = vector.multi_reduction <add>, %93, %cst_38 [0] : vector<8x1024xf32> to vector<1024xf32>
    %95 = vector.shape_cast %94 : vector<1024xf32> to vector<1x1024xf32>
    %cst_39 = arith.constant 8.000000e+00 : f32
    %96 = vector.broadcast %cst_39 : f32 to vector<1x1024xf32>
    %97 = arith.divf %95, %96 : vector<1x1024xf32>
    %98 = vector.broadcast %90 : vector<1x1024xf32> to vector<8x1024xf32>
    %99 = arith.subf %86, %98 : vector<8x1024xf32>
    %cst_40 = arith.constant 9.99999974E-6 : f32
    %100 = vector.broadcast %cst_40 : f32 to vector<1x1024xf32>
    %101 = arith.addf %97, %100 : vector<1x1024xf32>
    %102 = math.rsqrt %101 : vector<1x1024xf32>
    %103 = vector.broadcast %102 : vector<1x1024xf32> to vector<8x1024xf32>
    %104 = arith.mulf %99, %103 : vector<8x1024xf32>
    %c0_41 = arith.constant 0 : index
    %c0_42 = arith.constant 0 : index
    %105 = vector.load %arg11[%c0_41, %c0_42] : memref<1x1024xf32, #tpu.memory_space<vmem>>, vector<1x1024xf32>
    %106 = vector.broadcast %105 : vector<1x1024xf32> to vector<8x1024xf32>
    %107 = arith.mulf %104, %106 : vector<8x1024xf32>
    %c0_43 = arith.constant 0 : index
    %c0_44 = arith.constant 0 : index
    %108 = vector.load %arg12[%c0_43, %c0_44] : memref<1x1024xf32, #tpu.memory_space<vmem>>, vector<1x1024xf32>
    %109 = vector.broadcast %108 : vector<1x1024xf32> to vector<8x1024xf32>
    %110 = arith.addf %107, %109 : vector<8x1024xf32>
    %cst_45 = arith.constant 0.000000e+00 : f32
    %111 = vector.broadcast %cst_45 : f32 to vector<8x1024xf32>
    %112 = arith.cmpf oge, %110, %111 : vector<8x1024xf32>
    %cst_46 = arith.constant 0.00999999977 : f32
    %113 = vector.broadcast %cst_46 : f32 to vector<8x1024xf32>
    %114 = arith.mulf %113, %110 : vector<8x1024xf32>
    %115 = arith.select %112, %110, %114 : vector<8x1024xi1>, vector<8x1024xf32>
    %116 = arith.truncf %115 : vector<8x1024xf32> to vector<8x1024xbf16>
    %c0_47 = arith.constant 0 : index
    %c0_48 = arith.constant 0 : index
    %117 = vector.load %arg13[%c0_47, %c0_48] : memref<1024x1024xbf16, #tpu.memory_space<vmem>>, vector<1024x1024xbf16>
    %cst_49 = arith.constant dense<0.000000e+00> : vector<8x1024xf32>
    %118 = tpu.matmul %116, %117, %cst_49 {dimension_numbers = #tpu.dot_dimension_numbers<[1], [0], [0], [1], [0, 0, 1, 1], [], []>} : vector<8x1024xbf16>, vector<1024x1024xbf16>, vector<8x1024xf32> -> vector<8x1024xf32>
    %c0_50 = arith.constant 0 : index
    %c0_51 = arith.constant 0 : index
    %119 = vector.load %arg14[%c0_50, %c0_51] : memref<1x1024xf32, #tpu.memory_space<vmem>>, vector<1x1024xf32>
    %120 = vector.broadcast %119 : vector<1x1024xf32> to vector<8x1024xf32>
    %121 = arith.addf %118, %120 : vector<8x1024xf32>
    %cst_52 = arith.constant dense<0.000000e+00> : vector<1024xf32>
    %122 = vector.multi_reduction <add>, %121, %cst_52 [0] : vector<8x1024xf32> to vector<1024xf32>
    %123 = vector.shape_cast %122 : vector<1024xf32> to vector<1x1024xf32>
    %cst_53 = arith.constant 8.000000e+00 : f32
    %124 = vector.broadcast %cst_53 : f32 to vector<1x1024xf32>
    %125 = arith.divf %123, %124 : vector<1x1024xf32>
    %126 = vector.broadcast %125 : vector<1x1024xf32> to vector<8x1024xf32>
    %127 = arith.subf %121, %126 : vector<8x1024xf32>
    %128 = arith.mulf %127, %127 : vector<8x1024xf32>
    %cst_54 = arith.constant dense<0.000000e+00> : vector<1024xf32>
    %129 = vector.multi_reduction <add>, %128, %cst_54 [0] : vector<8x1024xf32> to vector<1024xf32>
    %130 = vector.shape_cast %129 : vector<1024xf32> to vector<1x1024xf32>
    %cst_55 = arith.constant 8.000000e+00 : f32
    %131 = vector.broadcast %cst_55 : f32 to vector<1x1024xf32>
    %132 = arith.divf %130, %131 : vector<1x1024xf32>
    %133 = vector.broadcast %125 : vector<1x1024xf32> to vector<8x1024xf32>
    %134 = arith.subf %121, %133 : vector<8x1024xf32>
    %cst_56 = arith.constant 9.99999974E-6 : f32
    %135 = vector.broadcast %cst_56 : f32 to vector<1x1024xf32>
    %136 = arith.addf %132, %135 : vector<1x1024xf32>
    %137 = math.rsqrt %136 : vector<1x1024xf32>
    %138 = vector.broadcast %137 : vector<1x1024xf32> to vector<8x1024xf32>
    %139 = arith.mulf %134, %138 : vector<8x1024xf32>
    %c0_57 = arith.constant 0 : index
    %c0_58 = arith.constant 0 : index
    %140 = vector.load %arg15[%c0_57, %c0_58] : memref<1x1024xf32, #tpu.memory_space<vmem>>, vector<1x1024xf32>
    %141 = vector.broadcast %140 : vector<1x1024xf32> to vector<8x1024xf32>
    %142 = arith.mulf %139, %141 : vector<8x1024xf32>
    %c0_59 = arith.constant 0 : index
    %c0_60 = arith.constant 0 : index
    %143 = vector.load %arg16[%c0_59, %c0_60] : memref<1x1024xf32, #tpu.memory_space<vmem>>, vector<1x1024xf32>
    %144 = vector.broadcast %143 : vector<1x1024xf32> to vector<8x1024xf32>
    %145 = arith.addf %142, %144 : vector<8x1024xf32>
    %cst_61 = arith.constant 0.000000e+00 : f32
    %146 = vector.broadcast %cst_61 : f32 to vector<8x1024xf32>
    %147 = arith.cmpf oge, %145, %146 : vector<8x1024xf32>
    %cst_62 = arith.constant 0.00999999977 : f32
    %148 = vector.broadcast %cst_62 : f32 to vector<8x1024xf32>
    %149 = arith.mulf %148, %145 : vector<8x1024xf32>
    %150 = arith.select %147, %145, %149 : vector<8x1024xi1>, vector<8x1024xf32>
    %151 = arith.truncf %150 : vector<8x1024xf32> to vector<8x1024xbf16>
    %c0_63 = arith.constant 0 : index
    %c0_64 = arith.constant 0 : index
    %152 = vector.load %arg17[%c0_63, %c0_64] : memref<1024x2xbf16, #tpu.memory_space<vmem>>, vector<1024x2xbf16>
    %cst_65 = arith.constant dense<0.000000e+00> : vector<8x2xf32>
    %153 = tpu.matmul %151, %152, %cst_65 {dimension_numbers = #tpu.dot_dimension_numbers<[1], [0], [0], [1], [0, 0, 1, 1], [], []>} : vector<8x1024xbf16>, vector<1024x2xbf16>, vector<8x2xf32> -> vector<8x2xf32>
    %c0_66 = arith.constant 0 : index
    %c0_67 = arith.constant 0 : index
    %154 = vector.load %arg18[%c0_66, %c0_67] : memref<1x2xf32, #tpu.memory_space<vmem>>, vector<1x2xf32>
    %155 = vector.broadcast %154 : vector<1x2xf32> to vector<8x2xf32>
    %156 = arith.addf %153, %155 : vector<8x2xf32>
    %c0_68 = arith.constant 0 : index
    %c0_69 = arith.constant 0 : index
    %157 = vector.load %arg19[%c0_68, %c0_69] : memref<8x2xf32, #tpu.memory_space<vmem>>, vector<8x2xf32>
    tpu.vector_store %arg19[%c0_68, %c0_69], %156 {strides = array<i32>} : memref<8x2xf32, #tpu.memory_space<vmem>>, vector<8x2xf32>,
    return
  }
}

</mosaic_0001>

<llo_original>
// kernel: generator_forward.1
$region0: #{generator_forward.1}
  #allocation0 [shape = 'u32[]', space=smem, size = 0x4, offset = 0x4, fixed_abs, tag = 'smem constant byte address 0x4 - core index']
  #allocation1 [shape = 'u32[144,128]{1,0:T(1,128)}', space=vmem, size = 0x12000, scoped, tag = 'internal scratch']
  %s0 = inlined_call_operand.vmem [shape: f32[8,2], index: 0, kind: input, shape index: {}]
  %s1 = inlined_call_operand.hbm [shape: bf16[2,1024], index: 1, kind: input, shape index: {}]
  %s2 = inlined_call_operand.hbm [shape: f32[1,1024], index: 2, kind: input, shape index: {}]
  %s3 = inlined_call_operand.hbm [shape: f32[1,1024], index: 3, kind: input, shape index: {}]
  %s4 = inlined_call_operand.hbm [shape: f32[1,1024], index: 4, kind: input, shape index: {}]
  %s5 = inlined_call_operand.hbm [shape: bf16[1024,1024], index: 5, kind: input, shape index: {}]
  %s6 = inlined_call_operand.hbm [shape: f32[1,1024], index: 6, kind: input, shape index: {}]
  %s7 = inlined_call_operand.hbm [shape: f32[1,1024], index: 7, kind: input, shape index: {}]
  %s8 = inlined_call_operand.hbm [shape: f32[1,1024], index: 8, kind: input, shape index: {}]
  %s9 = inlined_call_operand.hbm [shape: bf16[1024,1024], index: 9, kind: input, shape index: {}]
  %s10 = inlined_call_operand.hbm [shape: f32[1,1024], index: 10, kind: input, shape index: {}]
  %s11 = inlined_call_operand.hbm [shape: f32[1,1024], index: 11, kind: input, shape index: {}]
  %s12 = inlined_call_operand.hbm [shape: f32[1,1024], index: 12, kind: input, shape index: {}]
  %s13 = inlined_call_operand.hbm [shape: bf16[1024,1024], index: 13, kind: input, shape index: {}]
  %s14 = inlined_call_operand.hbm [shape: f32[1,1024], index: 14, kind: input, shape index: {}]
  %s15 = inlined_call_operand.hbm [shape: f32[1,1024], index: 15, kind: input, shape index: {}]
  %s16 = inlined_call_operand.hbm [shape: f32[1,1024], index: 16, kind: input, shape index: {}]
  %s17 = inlined_call_operand.vmem [shape: bf16[1024,2], index: 17, kind: input, shape index: {}]
  %s18 = inlined_call_operand.hbm [shape: f32[1,2], index: 18, kind: input, shape index: {}]
  %s19 = inlined_call_operand.vmem [shape: f32[8,2], index: 19, kind: output, shape index: {}]
  %s20 = sld [smem:[#allocation0]]
  $region154: #{generator_forward.1} parent=0
    _
  %s22 = ssub.s32 1, %s20
  %s23 = scalar_select 0, %s22, %s20
  $region1: #{generator_forward.1} parent=0
    #allocation2 [shape = 'u8[4096]{0}', space=vmem, size = 0x1000, scoped, tag = 'input window, operand 1, single buffered']
    #allocation3 [shape = 's32[1]{0}', space=sflag, size = 0x4, scoped, tag = 'scoped memory for generator_forward.1']
    #allocation4 [shape = 'u8[4096]{0}', space=vmem, size = 0x1000, scoped, tag = 'input window, operand 2, single buffered']
    #allocation5 [shape = 's32[1]{0}', space=sflag, size = 0x4, scoped, tag = 'scoped memory for generator_forward.1']
    #allocation6 [shape = 'u8[4096]{0}', space=vmem, size = 0x1000, scoped, tag = 'input window, operand 3, single buffered']
    #allocation7 [shape = 'u8[4096]{0}', space=vmem, size = 0x1000, scoped, tag = 'input window, operand 4, single buffered']
    #allocation8 [shape = 's32[1]{0}', space=sflag, size = 0x4, scoped, tag = 'scoped memory for generator_forward.1']
    #allocation9 [shape = 'u8[2097152]{0}', space=vmem, size = 0x200000, scoped, tag = 'input window, operand 5, single buffered']
    #allocation10 [shape = 'u8[4096]{0}', space=vmem, size = 0x1000, scoped, tag = 'input window, operand 6, single buffered']
    #allocation11 [shape = 's32[1]{0}', space=sflag, size = 0x4, scoped, tag = 'scoped memory for generator_forward.1']
    #allocation12 [shape = 'u8[4096]{0}', space=vmem, size = 0x1000, scoped, tag = 'input window, operand 7, single buffered']
    #allocation13 [shape = 'u8[4096]{0}', space=vmem, size = 0x1000, scoped, tag = 'input window, operand 8, single buffered']
    #allocation14 [shape = 's32[1]{0}', space=sflag, size = 0x4, scoped, tag = 'scoped memory for generator_forward.1']
    #allocation15 [shape = 'u8[2097152]{0}', space=vmem, size = 0x200000, scoped, tag = 'input window, operand 9, single buffered']
    #allocation16 [shape = 'u8[4096]{0}', space=vmem, size = 0x1000, scoped, tag = 'input window, operand 10, single buffered']
    #allocation17 [shape = 's32[1]{0}', space=sflag, size = 0x4, scoped, tag = 'scoped memory for generator_forward.1']
    #allocation18 [shape = 'u8[4096]{0}', space=vmem, size = 0x1000, scoped, tag = 'input window, operand 11, single buffered']
    #allocation19 [shape = 'u8[4096]{0}', space=vmem, size = 0x1000, scoped, tag = 'input window, operand 12, single buffered']
    #allocation20 [shape = 's32[1]{0}', space=sflag, size = 0x4, scoped, tag = 'scoped memory for generator_forward.1']
    #allocation21 [shape = 'u8[2097152]{0}', space=vmem, size = 0x200000, scoped, tag = 'input window, operand 13, single buffered']
    #allocation22 [shape = 'u8[4096]{0}', space=vmem, size = 0x1000, scoped, tag = 'input window, operand 14, single buffered']
    #allocation23 [shape = 's32[1]{0}', space=sflag, size = 0x4, scoped, tag = 'scoped memory for generator_forward.1']
    #allocation24 [shape = 'u8[4096]{0}', space=vmem, size = 0x1000, scoped, tag = 'input window, operand 15, single buffered']
    #allocation25 [shape = 'u8[4096]{0}', space=vmem, size = 0x1000, scoped, tag = 'input window, operand 16, single buffered']
    #allocation26 [shape = 's32[1]{0}', space=sflag, size = 0x4, scoped, tag = 'scoped memory for generator_forward.1']
    #allocation27 [shape = 'u8[512]{0}', space=vmem, size = 0x400, scoped, tag = 'input window, operand 18, single buffered']
    %24 = vsyncpa [#allocation3], 0
    %25 = vsyncpa [#allocation5], 0
    %26 = vsyncpa [#allocation8], 0
    %27 = vsyncpa [#allocation11], 0
    %28 = vsyncpa [#allocation14], 0
    %29 = vsyncpa [#allocation17], 0
    %30 = vsyncpa [#allocation20], 0
    %31 = vsyncpa [#allocation23], 0
    %32 = vsyncpa [#allocation26], 0
    // Predicated region
    $region2: #{generator_forward.1} parent=1 // pred_check
      _
    $region3: #{generator_forward.1} parent=1 // pred_check_branch
      %34 = sbr.rel (0) target = $region5
    $region4: #{generator_forward.1} parent=1 // pred_region
      _
    $region5: #{generator_forward.1} parent=1 // pred_fallthru
      _
    // Predicated region
    $region6: #{generator_forward.1} parent=1 // pred_check
      _
    $region7: #{generator_forward.1} parent=1 // pred_check_branch
      %36 = sbr.rel (0) target = $region9
    $region8: #{generator_forward.1} parent=1 // pred_region
      %s38 = ssub.s32 128, 128
      %39 = vsyncadd [#allocation3], %s38
      %s41 = sshll.u32 [#allocation2], 4
      %s42 = int_to_ptr.vmem [resolvable:$true] %s41
      %44 = dma.hbm_to_vmem [thread:$0]  %s1, 128, %s42, [#allocation3]
    $region9: #{generator_forward.1} parent=1 // pred_fallthru
      _
    // Predicated region
    $region10: #{generator_forward.1} parent=1 // pred_check
      _
    $region11: #{generator_forward.1} parent=1 // pred_check_branch
      %46 = sbr.rel (0) target = $region13
    $region12: #{generator_forward.1} parent=1 // pred_region
      %s48 = ssub.s32 128, 128
      %49 = vsyncadd [#allocation5], %s48
      %s51 = sshll.u32 [#allocation4], 4
      %s52 = int_to_ptr.vmem [resolvable:$true] %s51
      %54 = dma.hbm_to_vmem [thread:$0]  %s2, 128, %s52, [#allocation5]
    $region13: #{generator_forward.1} parent=1 // pred_fallthru
      _
    // Predicated region
    $region14: #{generator_forward.1} parent=1 // pred_check
      _
    $region15: #{generator_forward.1} parent=1 // pred_check_branch
      %56 = sbr.rel (0) target = $region17
    $region16: #{generator_forward.1} parent=1 // pred_region
      %s58 = ssub.s32 128, 128
      %59 = vsyncadd [#allocation5], %s58
      %s61 = sshll.u32 [#allocation6], 4
      %s62 = int_to_ptr.vmem [resolvable:$true] %s61
      %64 = dma.hbm_to_vmem [thread:$0]  %s3, 128, %s62, [#allocation5]
    $region17: #{generator_forward.1} parent=1 // pred_fallthru
      _
    // Predicated region
    $region18: #{generator_forward.1} parent=1 // pred_check
      _
    $region19: #{generator_forward.1} parent=1 // pred_check_branch
      %66 = sbr.rel (0) target = $region21
    $region20: #{generator_forward.1} parent=1 // pred_region
      %s68 = ssub.s32 128, 128
      %69 = vsyncadd [#allocation8], %s68
      %s71 = sshll.u32 [#allocation7], 4
      %s72 = int_to_ptr.vmem [resolvable:$true] %s71
      %74 = dma.hbm_to_vmem [thread:$0]  %s4, 128, %s72, [#allocation8]
    $region21: #{generator_forward.1} parent=1 // pred_fallthru
      _
    // Predicated region
    $region22: #{generator_forward.1} parent=1 // pred_check
      _
    $region23: #{generator_forward.1} parent=1 // pred_check_branch
      %76 = sbr.rel (0) target = $region25
    $region24: #{generator_forward.1} parent=1 // pred_region
      %s78 = ssub.s32 65536, 65536
      %79 = vsyncadd [#allocation8], %s78
      %s80 = sshll.u32 [#allocation9], 4
      %s81 = int_to_ptr.vmem [resolvable:$true] %s80
      %86 = dma.hbm_to_vmem [thread:$0]  %s5, 65536, %s81, [#allocation8], 512, 512, 32
    $region25: #{generator_forward.1} parent=1 // pred_fallthru
      _
    // Predicated region
    $region26: #{generator_forward.1} parent=1 // pred_check
      _
    $region27: #{generator_forward.1} parent=1 // pred_check_branch
      %88 = sbr.rel (0) target = $region29
    $region28: #{generator_forward.1} parent=1 // pred_region
      %s90 = ssub.s32 128, 128
      %91 = vsyncadd [#allocation11], %s90
      %s93 = sshll.u32 [#allocation10], 4
      %s94 = int_to_ptr.vmem [resolvable:$true] %s93
      %96 = dma.hbm_to_vmem [thread:$0]  %s6, 128, %s94, [#allocation11]
    $region29: #{generator_forward.1} parent=1 // pred_fallthru
      _
    // Predicated region
    $region30: #{generator_forward.1} parent=1 // pred_check
      _
    $region31: #{generator_forward.1} parent=1 // pred_check_branch
      %98 = sbr.rel (0) target = $region33
    $region32: #{generator_forward.1} parent=1 // pred_region
      %s100 = ssub.s32 128, 128
      %101 = vsyncadd [#allocation11], %s100
      %s103 = sshll.u32 [#allocation12], 4
      %s104 = int_to_ptr.vmem [resolvable:$true] %s103
      %106 = dma.hbm_to_vmem [thread:$0]  %s7, 128, %s104, [#allocation11]
    $region33: #{generator_forward.1} parent=1 // pred_fallthru
      _
    // Predicated region
    $region34: #{generator_forward.1} parent=1 // pred_check
      _
    $region35: #{generator_forward.1} parent=1 // pred_check_branch
      %108 = sbr.rel (0) target = $region37
    $region36: #{generator_forward.1} parent=1 // pred_region
      %s110 = ssub.s32 128, 128
      %111 = vsyncadd [#allocation14], %s110
      %s113 = sshll.u32 [#allocation13], 4
      %s114 = int_to_ptr.vmem [resolvable:$true] %s113
      %116 = dma.hbm_to_vmem [thread:$0]  %s8, 128, %s114, [#allocation14]
    $region37: #{generator_forward.1} parent=1 // pred_fallthru
      _
    // Predicated region
    $region38: #{generator_forward.1} parent=1 // pred_check
      _
    $region39: #{generator_forward.1} parent=1 // pred_check_branch
      %118 = sbr.rel (0) target = $region41
    $region40: #{generator_forward.1} parent=1 // pred_region
      %s120 = ssub.s32 65536, 65536
      %121 = vsyncadd [#allocation14], %s120
      %s122 = sshll.u32 [#allocation15], 4
      %s123 = int_to_ptr.vmem [resolvable:$true] %s122
      %128 = dma.hbm_to_vmem [thread:$0]  %s9, 65536, %s123, [#allocation14], 512, 512, 32
    $region41: #{generator_forward.1} parent=1 // pred_fallthru
      _
    // Predicated region
    $region42: #{generator_forward.1} parent=1 // pred_check
      _
    $region43: #{generator_forward.1} parent=1 // pred_check_branch
      %130 = sbr.rel (0) target = $region45
    $region44: #{generator_forward.1} parent=1 // pred_region
      %s132 = ssub.s32 128, 128
      %133 = vsyncadd [#allocation17], %s132
      %s135 = sshll.u32 [#allocation16], 4
      %s136 = int_to_ptr.vmem [resolvable:$true] %s135
      %138 = dma.hbm_to_vmem [thread:$0]  %s10, 128, %s136, [#allocation17]
    $region45: #{generator_forward.1} parent=1 // pred_fallthru
      _
    // Predicated region
    $region46: #{generator_forward.1} parent=1 // pred_check
      _
    $region47: #{generator_forward.1} parent=1 // pred_check_branch
      %140 = sbr.rel (0) target = $region49
    $region48: #{generator_forward.1} parent=1 // pred_region
      %s142 = ssub.s32 128, 128
      %143 = vsyncadd [#allocation17], %s142
      %s145 = sshll.u32 [#allocation18], 4
      %s146 = int_to_ptr.vmem [resolvable:$true] %s145
      %148 = dma.hbm_to_vmem [thread:$0]  %s11, 128, %s146, [#allocation17]
    $region49: #{generator_forward.1} parent=1 // pred_fallthru
      _
    // Predicated region
    $region50: #{generator_forward.1} parent=1 // pred_check
      _
    $region51: #{generator_forward.1} parent=1 // pred_check_branch
      %150 = sbr.rel (0) target = $region53
    $region52: #{generator_forward.1} parent=1 // pred_region
      %s152 = ssub.s32 128, 128
      %153 = vsyncadd [#allocation20], %s152
      %s155 = sshll.u32 [#allocation19], 4
      %s156 = int_to_ptr.vmem [resolvable:$true] %s155
      %158 = dma.hbm_to_vmem [thread:$0]  %s12, 128, %s156, [#allocation20]
    $region53: #{generator_forward.1} parent=1 // pred_fallthru
      _
    // Predicated region
    $region54: #{generator_forward.1} parent=1 // pred_check
      _
    $region55: #{generator_forward.1} parent=1 // pred_check_branch
      %160 = sbr.rel (0) target = $region57
    $region56: #{generator_forward.1} parent=1 // pred_region
      %s162 = ssub.s32 65536, 65536
      %163 = vsyncadd [#allocation20], %s162
      %s164 = sshll.u32 [#allocation21], 4
      %s165 = int_to_ptr.vmem [resolvable:$true] %s164
      %170 = dma.hbm_to_vmem [thread:$0]  %s13, 65536, %s165, [#allocation20], 512, 512, 32
    $region57: #{generator_forward.1} parent=1 // pred_fallthru
      _
    // Predicated region
    $region58: #{generator_forward.1} parent=1 // pred_check
      _
    $region59: #{generator_forward.1} parent=1 // pred_check_branch
      %172 = sbr.rel (0) target = $region61
    $region60: #{generator_forward.1} parent=1 // pred_region
      %s174 = ssub.s32 128, 128
      %175 = vsyncadd [#allocation23], %s174
      %s177 = sshll.u32 [#allocation22], 4
      %s178 = int_to_ptr.vmem [resolvable:$true] %s177
      %180 = dma.hbm_to_vmem [thread:$0]  %s14, 128, %s178, [#allocation23]
    $region61: #{generator_forward.1} parent=1 // pred_fallthru
      _
    // Predicated region
    $region62: #{generator_forward.1} parent=1 // pred_check
      _
    $region63: #{generator_forward.1} parent=1 // pred_check_branch
      %182 = sbr.rel (0) target = $region65
    $region64: #{generator_forward.1} parent=1 // pred_region
      %s184 = ssub.s32 128, 128
      %185 = vsyncadd [#allocation23], %s184
      %s187 = sshll.u32 [#allocation24], 4
      %s188 = int_to_ptr.vmem [resolvable:$true] %s187
      %190 = dma.hbm_to_vmem [thread:$0]  %s15, 128, %s188, [#allocation23]
    $region65: #{generator_forward.1} parent=1 // pred_fallthru
      _
    // Predicated region
    $region66: #{generator_forward.1} parent=1 // pred_check
      _
    $region67: #{generator_forward.1} parent=1 // pred_check_branch
      %192 = sbr.rel (0) target = $region69
    $region68: #{generator_forward.1} parent=1 // pred_region
      %s194 = ssub.s32 128, 128
      %195 = vsyncadd [#allocation26], %s194
      %s197 = sshll.u32 [#allocation25], 4
      %s198 = int_to_ptr.vmem [resolvable:$true] %s197
      %200 = dma.hbm_to_vmem [thread:$0]  %s16, 128, %s198, [#allocation26]
    $region69: #{generator_forward.1} parent=1 // pred_fallthru
      _
    // Predicated region
    $region70: #{generator_forward.1} parent=1 // pred_check
      _
    $region71: #{generator_forward.1} parent=1 // pred_check_branch
      %202 = sbr.rel (0) target = $region73
    $region72: #{generator_forward.1} parent=1 // pred_region
      _
    $region73: #{generator_forward.1} parent=1 // pred_fallthru
      _
    // Predicated region
    $region74: #{generator_forward.1} parent=1 // pred_check
      _
    $region75: #{generator_forward.1} parent=1 // pred_check_branch
      %204 = sbr.rel (0) target = $region77
    $region76: #{generator_forward.1} parent=1 // pred_region
      %s206 = ssub.s32 16, 16
      %207 = vsyncadd [#allocation26], %s206
      %s209 = sshll.u32 [#allocation27], 4
      %s210 = int_to_ptr.vmem [resolvable:$true] %s209
      %212 = dma.hbm_to_vmem [thread:$0]  %s18, 16, %s210, [#allocation26]
    $region77: #{generator_forward.1} parent=1 // pred_fallthru
      _
    // Predicated region
    $region78: #{generator_forward.1} parent=1 // pred_check
      _
    $region79: #{generator_forward.1} parent=1 // pred_check_branch
      %214 = sbr.rel (0) target = $region81
    $region80: #{generator_forward.1} parent=1 // pred_region
      %215 = dma.done [#allocation3], 128
    $region81: #{generator_forward.1} parent=1 // pred_fallthru
      _
    // Predicated region
    $region82: #{generator_forward.1} parent=1 // pred_check
      _
    $region83: #{generator_forward.1} parent=1 // pred_check_branch
      %217 = sbr.rel (0) target = $region85
    $region84: #{generator_forward.1} parent=1 // pred_region
      %218 = dma.done [#allocation5], 128
    $region85: #{generator_forward.1} parent=1 // pred_fallthru
      _
    // Predicated region
    $region86: #{generator_forward.1} parent=1 // pred_check
      _
    $region87: #{generator_forward.1} parent=1 // pred_check_branch
      %220 = sbr.rel (0) target = $region89
    $region88: #{generator_forward.1} parent=1 // pred_region
      %221 = dma.done [#allocation5], 128
    $region89: #{generator_forward.1} parent=1 // pred_fallthru
      _
    // Predicated region
    $region90: #{generator_forward.1} parent=1 // pred_check
      _
    $region91: #{generator_forward.1} parent=1 // pred_check_branch
      %223 = sbr.rel (0) target = $region93
    $region92: #{generator_forward.1} parent=1 // pred_region
      %224 = dma.done [#allocation8], 128
    $region93: #{generator_forward.1} parent=1 // pred_fallthru
      _
    // Predicated region
    $region94: #{generator_forward.1} parent=1 // pred_check
      _
    $region95: #{generator_forward.1} parent=1 // pred_check_branch
      %226 = sbr.rel (0) target = $region97
    $region96: #{generator_forward.1} parent=1 // pred_region
      %227 = dma.done [#allocation8], 65536
    $region97: #{generator_forward.1} parent=1 // pred_fallthru
      _
    // Predicated region
    $region98: #{generator_forward.1} parent=1 // pred_check
      _
    $region99: #{generator_forward.1} parent=1 // pred_check_branch
      %229 = sbr.rel (0) target = $region101
    $region100: #{generator_forward.1} parent=1 // pred_region
      %230 = dma.done [#allocation11], 128
    $region101: #{generator_forward.1} parent=1 // pred_fallthru
      _
    // Predicated region
    $region102: #{generator_forward.1} parent=1 // pred_check
      _
    $region103: #{generator_forward.1} parent=1 // pred_check_branch
      %232 = sbr.rel (0) target = $region105
    $region104: #{generator_forward.1} parent=1 // pred_region
      %233 = dma.done [#allocation11], 128
    $region105: #{generator_forward.1} parent=1 // pred_fallthru
      _
    // Predicated region
    $region106: #{generator_forward.1} parent=1 // pred_check
      _
    $region107: #{generator_forward.1} parent=1 // pred_check_branch
      %235 = sbr.rel (0) target = $region109
    $region108: #{generator_forward.1} parent=1 // pred_region
      %236 = dma.done [#allocation14], 128
    $region109: #{generator_forward.1} parent=1 // pred_fallthru
      _
    // Predicated region
    $region110: #{generator_forward.1} parent=1 // pred_check
      _
    $region111: #{generator_forward.1} parent=1 // pred_check_branch
      %238 = sbr.rel (0) target = $region113
    $region112: #{generator_forward.1} parent=1 // pred_region
      %239 = dma.done [#allocation14], 65536
    $region113: #{generator_forward.1} parent=1 // pred_fallthru
      _
    // Predicated region
    $region114: #{generator_forward.1} parent=1 // pred_check
      _
    $region115: #{generator_forward.1} parent=1 // pred_check_branch
      %241 = sbr.rel (0) target = $region117
    $region116: #{generator_forward.1} parent=1 // pred_region
      %242 = dma.done [#allocation17], 128
    $region117: #{generator_forward.1} parent=1 // pred_fallthru
      _
    // Predicated region
    $region118: #{generator_forward.1} parent=1 // pred_check
      _
    $region119: #{generator_forward.1} parent=1 // pred_check_branch
      %244 = sbr.rel (0) target = $region121
    $region120: #{generator_forward.1} parent=1 // pred_region
      %245 = dma.done [#allocation17], 128
    $region121: #{generator_forward.1} parent=1 // pred_fallthru
      _
    // Predicated region
    $region122: #{generator_forward.1} parent=1 // pred_check
      _
    $region123: #{generator_forward.1} parent=1 // pred_check_branch
      %247 = sbr.rel (0) target = $region125
    $region124: #{generator_forward.1} parent=1 // pred_region
      %248 = dma.done [#allocation20], 128
    $region125: #{generator_forward.1} parent=1 // pred_fallthru
      _
    // Predicated region
    $region126: #{generator_forward.1} parent=1 // pred_check
      _
    $region127: #{generator_forward.1} parent=1 // pred_check_branch
      %250 = sbr.rel (0) target = $region129
    $region128: #{generator_forward.1} parent=1 // pred_region
      %251 = dma.done [#allocation20], 65536
    $region129: #{generator_forward.1} parent=1 // pred_fallthru
      _
    // Predicated region
    $region130: #{generator_forward.1} parent=1 // pred_check
      _
    $region131: #{generator_forward.1} parent=1 // pred_check_branch
      %253 = sbr.rel (0) target = $region133
    $region132: #{generator_forward.1} parent=1 // pred_region
      %254 = dma.done [#allocation23], 128
    $region133: #{generator_forward.1} parent=1 // pred_fallthru
      _
    // Predicated region
    $region134: #{generator_forward.1} parent=1 // pred_check
      _
    $region135: #{generator_forward.1} parent=1 // pred_check_branch
      %256 = sbr.rel (0) target = $region137
    $region136: #{generator_forward.1} parent=1 // pred_region
      %257 = dma.done [#allocation23], 128
    $region137: #{generator_forward.1} parent=1 // pred_fallthru
      _
    // Predicated region
    $region138: #{generator_forward.1} parent=1 // pred_check
      _
    $region139: #{generator_forward.1} parent=1 // pred_check_branch
      %259 = sbr.rel (0) target = $region141
    $region140: #{generator_forward.1} parent=1 // pred_region
      %260 = dma.done [#allocation26], 128
    $region141: #{generator_forward.1} parent=1 // pred_fallthru
      _
    // Predicated region
    $region142: #{generator_forward.1} parent=1 // pred_check
      _
    $region143: #{generator_forward.1} parent=1 // pred_check_branch
      %262 = sbr.rel (0) target = $region145
    $region144: #{generator_forward.1} parent=1 // pred_region
      %263 = dma.done [#allocation26], 16
    $region145: #{generator_forward.1} parent=1 // pred_fallthru
      _
    %v265 = vld [vmem:[%s0] sm:$0xff]
    %v266 = vld [vmem:[#allocation2] sm:$0xff]
    %v267 = vunpack.c.l.bf16 %v266
    %v268 = vunpack.c.h.bf16 %v266
    %270 = vset.pattern.permute.xlu0 0
    %271 = vperm.xlu0 %270, %v265
    %v272 = vpop.permute.xlu0 %271
    %v276 = vlaneseq
    %v277 = vshrl.u32 %v276, 7
    %v278 = vsub.s32 0, %v277
    %v279 = vrot.slane %v267, %v278
    %v280 = vlaneseq
    %v281 = vshrl.u32 %v280, 7
    %v282 = vsub.s32 2, %v281
    %v283 = vrot.slane %v267, %v282
    %v284 = vlaneseq
    %v285 = vshrl.u32 %v284, 7
    %v286 = vsub.s32 4, %v285
    %v287 = vrot.slane %v267, %v286
    %v288 = vlaneseq
    %v289 = vshrl.u32 %v288, 7
    %v290 = vsub.s32 6, %v289
    %v291 = vrot.slane %v267, %v290
    %v292 = vlaneseq
    %v293 = vshrl.u32 %v292, 7
    %v294 = vsub.s32 0, %v293
    %v295 = vrot.slane %v268, %v294
    %v296 = vlaneseq
    %v297 = vshrl.u32 %v296, 7
    %v298 = vsub.s32 2, %v297
    %v299 = vrot.slane %v268, %v298
    %v300 = vlaneseq
    %v301 = vshrl.u32 %v300, 7
    %v302 = vsub.s32 4, %v301
    %v303 = vrot.slane %v268, %v302
    %v304 = vlaneseq
    %v305 = vshrl.u32 %v304, 7
    %v306 = vsub.s32 6, %v305
    %v307 = vrot.slane %v268, %v306
    %v316 = vlaneseq
    %v317 = vshrl.u32 %v316, 7
    %v318 = vsub.s32 0, %v317
    %v319 = vrot.slane %v279, %v318
    %v320 = vlaneseq
    %v321 = vshrl.u32 %v320, 7
    %v322 = vsub.s32 0, %v321
    %v323 = vrot.slane %v283, %v322
    %v324 = vlaneseq
    %v325 = vshrl.u32 %v324, 7
    %v326 = vsub.s32 0, %v325
    %v327 = vrot.slane %v287, %v326
    %v328 = vlaneseq
    %v329 = vshrl.u32 %v328, 7
    %v330 = vsub.s32 0, %v329
    %v331 = vrot.slane %v291, %v330
    %v332 = vlaneseq
    %v333 = vshrl.u32 %v332, 7
    %v334 = vsub.s32 0, %v333
    %v335 = vrot.slane %v295, %v334
    %v336 = vlaneseq
    %v337 = vshrl.u32 %v336, 7
    %v338 = vsub.s32 0, %v337
    %v339 = vrot.slane %v299, %v338
    %v340 = vlaneseq
    %v341 = vshrl.u32 %v340, 7
    %v342 = vsub.s32 0, %v341
    %v343 = vrot.slane %v303, %v342
    %v344 = vlaneseq
    %v345 = vshrl.u32 %v344, 7
    %v346 = vsub.s32 0, %v345
    %v347 = vrot.slane %v307, %v346
    %v348 = vmul.f32 %v272, %v319
    %v349 = vmul.f32 %v272, %v323
    %v350 = vmul.f32 %v272, %v327
    %v351 = vmul.f32 %v272, %v331
    %v352 = vmul.f32 %v272, %v335
    %v353 = vmul.f32 %v272, %v339
    %v354 = vmul.f32 %v272, %v343
    %v355 = vmul.f32 %v272, %v347
    %356 = vset.pattern.permute.xlu0 1
    %357 = vperm.xlu0 %356, %v265
    %v358 = vpop.permute.xlu0 %357
    %v360 = vlaneseq
    %v361 = vshrl.u32 %v360, 7
    %v362 = vsub.s32 1, %v361
    %v363 = vrot.slane %v267, %v362
    %v364 = vlaneseq
    %v365 = vshrl.u32 %v364, 7
    %v366 = vsub.s32 3, %v365
    %v367 = vrot.slane %v267, %v366
    %v368 = vlaneseq
    %v369 = vshrl.u32 %v368, 7
    %v370 = vsub.s32 5, %v369
    %v371 = vrot.slane %v267, %v370
    %v372 = vlaneseq
    %v373 = vshrl.u32 %v372, 7
    %v374 = vsub.s32 7, %v373
    %v375 = vrot.slane %v267, %v374
    %v376 = vlaneseq
    %v377 = vshrl.u32 %v376, 7
    %v378 = vsub.s32 1, %v377
    %v379 = vrot.slane %v268, %v378
    %v380 = vlaneseq
    %v381 = vshrl.u32 %v380, 7
    %v382 = vsub.s32 3, %v381
    %v383 = vrot.slane %v268, %v382
    %v384 = vlaneseq
    %v385 = vshrl.u32 %v384, 7
    %v386 = vsub.s32 5, %v385
    %v387 = vrot.slane %v268, %v386
    %v388 = vlaneseq
    %v389 = vshrl.u32 %v388, 7
    %v390 = vsub.s32 7, %v389
    %v391 = vrot.slane %v268, %v390
    %v400 = vlaneseq
    %v401 = vshrl.u32 %v400, 7
    %v402 = vsub.s32 1, %v401
    %v403 = vrot.slane %v363, %v402
    %v404 = vlaneseq
    %v405 = vshrl.u32 %v404, 7
    %v406 = vsub.s32 1, %v405
    %v407 = vrot.slane %v367, %v406
    %v408 = vlaneseq
    %v409 = vshrl.u32 %v408, 7
    %v410 = vsub.s32 1, %v409
    %v411 = vrot.slane %v371, %v410
    %v412 = vlaneseq
    %v413 = vshrl.u32 %v412, 7
    %v414 = vsub.s32 1, %v413
    %v415 = vrot.slane %v375, %v414
    %v416 = vlaneseq
    %v417 = vshrl.u32 %v416, 7
    %v418 = vsub.s32 1, %v417
    %v419 = vrot.slane %v379, %v418
    %v420 = vlaneseq
    %v421 = vshrl.u32 %v420, 7
    %v422 = vsub.s32 1, %v421
    %v423 = vrot.slane %v383, %v422
    %v424 = vlaneseq
    %v425 = vshrl.u32 %v424, 7
    %v426 = vsub.s32 1, %v425
    %v427 = vrot.slane %v387, %v426
    %v428 = vlaneseq
    %v429 = vshrl.u32 %v428, 7
    %v430 = vsub.s32 1, %v429
    %v431 = vrot.slane %v391, %v430
    %v432 = vmul.f32 %v358, %v403
    %v433 = vmul.f32 %v358, %v407
    %v434 = vmul.f32 %v358, %v411
    %v435 = vmul.f32 %v358, %v415
    %v436 = vmul.f32 %v358, %v419
    %v437 = vmul.f32 %v358, %v423
    %v438 = vmul.f32 %v358, %v427
    %v439 = vmul.f32 %v358, %v431
    %v440 = vadd.f32 %v348, %v432
    %v441 = vadd.f32 %v349, %v433
    %v442 = vadd.f32 %v350, %v434
    %v443 = vadd.f32 %v351, %v435
    %v444 = vadd.f32 %v352, %v436
    %v445 = vadd.f32 %v353, %v437
    %v446 = vadd.f32 %v354, %v438
    %v447 = vadd.f32 %v355, %v439
    %v448 = vld [vmem:[#allocation4] sm:$0xff]
    %v450 = vlaneseq
    %v451 = vshrl.u32 %v450, 7
    %v452 = vsub.s32 0, %v451
    %v453 = vrot.slane %v448, %v452
    %v454 = vlaneseq
    %v455 = vshrl.u32 %v454, 7
    %v456 = vsub.s32 1, %v455
    %v457 = vrot.slane %v448, %v456
    %v458 = vlaneseq
    %v459 = vshrl.u32 %v458, 7
    %v460 = vsub.s32 2, %v459
    %v461 = vrot.slane %v448, %v460
    %v462 = vlaneseq
    %v463 = vshrl.u32 %v462, 7
    %v464 = vsub.s32 3, %v463
    %v465 = vrot.slane %v448, %v464
    %v466 = vlaneseq
    %v467 = vshrl.u32 %v466, 7
    %v468 = vsub.s32 4, %v467
    %v469 = vrot.slane %v448, %v468
    %v470 = vlaneseq
    %v471 = vshrl.u32 %v470, 7
    %v472 = vsub.s32 5, %v471
    %v473 = vrot.slane %v448, %v472
    %v474 = vlaneseq
    %v475 = vshrl.u32 %v474, 7
    %v476 = vsub.s32 6, %v475
    %v477 = vrot.slane %v448, %v476
    %v478 = vlaneseq
    %v479 = vshrl.u32 %v478, 7
    %v480 = vsub.s32 7, %v479
    %v481 = vrot.slane %v448, %v480
    %v490 = vadd.f32 %v440, %v453
    %v491 = vadd.f32 %v441, %v457
    %v492 = vadd.f32 %v442, %v461
    %v493 = vadd.f32 %v443, %v465
    %v494 = vadd.f32 %v444, %v469
    %v495 = vadd.f32 %v445, %v473
    %v496 = vadd.f32 %v446, %v477
    %v497 = vadd.f32 %v447, %v481
    %v498 = vrot.slane %v490, 4
    %v499 = vadd.f32 %v490, %v498
    %v500 = vrot.slane %v499, 2
    %v501 = vadd.f32 %v499, %v500
    %v502 = vrot.slane %v501, 1
    %v503 = vadd.f32 %v501, %v502
    %v504 = vrot.slane %v491, 4
    %v505 = vadd.f32 %v491, %v504
    %v506 = vrot.slane %v505, 2
    %v507 = vadd.f32 %v505, %v506
    %v508 = vrot.slane %v507, 1
    %v509 = vadd.f32 %v507, %v508
    %v510 = vrot.slane %v492, 4
    %v511 = vadd.f32 %v492, %v510
    %v512 = vrot.slane %v511, 2
    %v513 = vadd.f32 %v511, %v512
    %v514 = vrot.slane %v513, 1
    %v515 = vadd.f32 %v513, %v514
    %v516 = vrot.slane %v493, 4
    %v517 = vadd.f32 %v493, %v516
    %v518 = vrot.slane %v517, 2
    %v519 = vadd.f32 %v517, %v518
    %v520 = vrot.slane %v519, 1
    %v521 = vadd.f32 %v519, %v520
    %v522 = vrot.slane %v494, 4
    %v523 = vadd.f32 %v494, %v522
    %v524 = vrot.slane %v523, 2
    %v525 = vadd.f32 %v523, %v524
    %v526 = vrot.slane %v525, 1
    %v527 = vadd.f32 %v525, %v526
    %v528 = vrot.slane %v495, 4
    %v529 = vadd.f32 %v495, %v528
    %v530 = vrot.slane %v529, 2
    %v531 = vadd.f32 %v529, %v530
    %v532 = vrot.slane %v531, 1
    %v533 = vadd.f32 %v531, %v532
    %v534 = vrot.slane %v496, 4
    %v535 = vadd.f32 %v496, %v534
    %v536 = vrot.slane %v535, 2
    %v537 = vadd.f32 %v535, %v536
    %v538 = vrot.slane %v537, 1
    %v539 = vadd.f32 %v537, %v538
    %v540 = vrot.slane %v497, 4
    %v541 = vadd.f32 %v497, %v540
    %v542 = vrot.slane %v541, 2
    %v543 = vadd.f32 %v541, %v542
    %v544 = vrot.slane %v543, 1
    %v545 = vadd.f32 %v543, %v544
    %v546 = vrcp.pop 8.0
    %v547 = vmul.f32 %v503, %v546
    %v548 = vmul.f32 %v509, %v546
    %v549 = vmul.f32 %v515, %v546
    %v550 = vmul.f32 %v521, %v546
    %v551 = vmul.f32 %v527, %v546
    %v552 = vmul.f32 %v533, %v546
    %v553 = vmul.f32 %v539, %v546
    %v554 = vmul.f32 %v545, %v546
    %v555 = vsub.f32 %v490, %v547
    %v556 = vsub.f32 %v491, %v548
    %v557 = vsub.f32 %v492, %v549
    %v558 = vsub.f32 %v493, %v550
    %v559 = vsub.f32 %v494, %v551
    %v560 = vsub.f32 %v495, %v552
    %v561 = vsub.f32 %v496, %v553
    %v562 = vsub.f32 %v497, %v554
    %v563 = vmul.f32 %v555, %v555
    %v564 = vmul.f32 %v556, %v556
    %v565 = vmul.f32 %v557, %v557
    %v566 = vmul.f32 %v558, %v558
    %v567 = vmul.f32 %v559, %v559
    %v568 = vmul.f32 %v560, %v560
    %v569 = vmul.f32 %v561, %v561
    %v570 = vmul.f32 %v562, %v562
    %v571 = vrot.slane %v563, 4
    %v572 = vadd.f32 %v563, %v571
    %v573 = vrot.slane %v572, 2
    %v574 = vadd.f32 %v572, %v573
    %v575 = vrot.slane %v574, 1
    %v576 = vadd.f32 %v574, %v575
    %v577 = vrot.slane %v564, 4
    %v578 = vadd.f32 %v564, %v577
    %v579 = vrot.slane %v578, 2
    %v580 = vadd.f32 %v578, %v579
    %v581 = vrot.slane %v580, 1
    %v582 = vadd.f32 %v580, %v581
    %v583 = vrot.slane %v565, 4
    %v584 = vadd.f32 %v565, %v583
    %v585 = vrot.slane %v584, 2
    %v586 = vadd.f32 %v584, %v585
    %v587 = vrot.slane %v586, 1
    %v588 = vadd.f32 %v586, %v587
    %v589 = vrot.slane %v566, 4
    %v590 = vadd.f32 %v566, %v589
    %v591 = vrot.slane %v590, 2
    %v592 = vadd.f32 %v590, %v591
    %v593 = vrot.slane %v592, 1
    %v594 = vadd.f32 %v592, %v593
    %v595 = vrot.slane %v567, 4
    %v596 = vadd.f32 %v567, %v595
    %v597 = vrot.slane %v596, 2
    %v598 = vadd.f32 %v596, %v597
    %v599 = vrot.slane %v598, 1
    %v600 = vadd.f32 %v598, %v599
    %v601 = vrot.slane %v568, 4
    %v602 = vadd.f32 %v568, %v601
    %v603 = vrot.slane %v602, 2
    %v604 = vadd.f32 %v602, %v603
    %v605 = vrot.slane %v604, 1
    %v606 = vadd.f32 %v604, %v605
    %v607 = vrot.slane %v569, 4
    %v608 = vadd.f32 %v569, %v607
    %v609 = vrot.slane %v608, 2
    %v610 = vadd.f32 %v608, %v609
    %v611 = vrot.slane %v610, 1
    %v612 = vadd.f32 %v610, %v611
    %v613 = vrot.slane %v570, 4
    %v614 = vadd.f32 %v570, %v613
    %v615 = vrot.slane %v614, 2
    %v616 = vadd.f32 %v614, %v615
    %v617 = vrot.slane %v616, 1
    %v618 = vadd.f32 %v616, %v617
    %v619 = vmul.f32 %v576, %v546
    %v620 = vmul.f32 %v582, %v546
    %v621 = vmul.f32 %v588, %v546
    %v622 = vmul.f32 %v594, %v546
    %v623 = vmul.f32 %v600, %v546
    %v624 = vmul.f32 %v606, %v546
    %v625 = vmul.f32 %v612, %v546
    %v626 = vmul.f32 %v618, %v546
    %v627 = vadd.f32 %v619, 1e-05
    %v628 = vadd.f32 %v620, 1e-05
    %v629 = vadd.f32 %v621, 1e-05
    %v630 = vadd.f32 %v622, 1e-05
    %v631 = vadd.f32 %v623, 1e-05
    %v632 = vadd.f32 %v624, 1e-05
    %v633 = vadd.f32 %v625, 1e-05
    %v634 = vadd.f32 %v626, 1e-05
    %v635 = vrsqrt.pop %v627
    %v636 = vrsqrt.pop %v628
    %v637 = vrsqrt.pop %v629
    %v638 = vrsqrt.pop %v630
    %v639 = vrsqrt.pop %v631
    %v640 = vrsqrt.pop %v632
    %v641 = vrsqrt.pop %v633
    %v642 = vrsqrt.pop %v634
    %v643 = vmul.f32 %v555, %v635
    %v644 = vmul.f32 %v556, %v636
    %v645 = vmul.f32 %v557, %v637
    %v646 = vmul.f32 %v558, %v638
    %v647 = vmul.f32 %v559, %v639
    %v648 = vmul.f32 %v560, %v640
    %v649 = vmul.f32 %v561, %v641
    %v650 = vmul.f32 %v562, %v642
    %v651 = vld [vmem:[#allocation6] sm:$0xff]
    %v653 = vlaneseq
    %v654 = vshrl.u32 %v653, 7
    %v655 = vsub.s32 0, %v654
    %v656 = vrot.slane %v651, %v655
    %v657 = vlaneseq
    %v658 = vshrl.u32 %v657, 7
    %v659 = vsub.s32 1, %v658
    %v660 = vrot.slane %v651, %v659
    %v661 = vlaneseq
    %v662 = vshrl.u32 %v661, 7
    %v663 = vsub.s32 2, %v662
    %v664 = vrot.slane %v651, %v663
    %v665 = vlaneseq
    %v666 = vshrl.u32 %v665, 7
    %v667 = vsub.s32 3, %v666
    %v668 = vrot.slane %v651, %v667
    %v669 = vlaneseq
    %v670 = vshrl.u32 %v669, 7
    %v671 = vsub.s32 4, %v670
    %v672 = vrot.slane %v651, %v671
    %v673 = vlaneseq
    %v674 = vshrl.u32 %v673, 7
    %v675 = vsub.s32 5, %v674
    %v676 = vrot.slane %v651, %v675
    %v677 = vlaneseq
    %v678 = vshrl.u32 %v677, 7
    %v679 = vsub.s32 6, %v678
    %v680 = vrot.slane %v651, %v679
    %v681 = vlaneseq
    %v682 = vshrl.u32 %v681, 7
    %v683 = vsub.s32 7, %v682
    %v684 = vrot.slane %v651, %v683
    %v693 = vmul.f32 %v643, %v656
    %v694 = vmul.f32 %v644, %v660
    %v695 = vmul.f32 %v645, %v664
    %v696 = vmul.f32 %v646, %v668
    %v697 = vmul.f32 %v647, %v672
    %v698 = vmul.f32 %v648, %v676
    %v699 = vmul.f32 %v649, %v680
    %v700 = vmul.f32 %v650, %v684
    %v701 = vld [vmem:[#allocation7] sm:$0xff]
    %v703 = vlaneseq
    %v704 = vshrl.u32 %v703, 7
    %v705 = vsub.s32 0, %v704
    %v706 = vrot.slane %v701, %v705
    %v707 = vlaneseq
    %v708 = vshrl.u32 %v707, 7
    %v709 = vsub.s32 1, %v708
    %v710 = vrot.slane %v701, %v709
    %v711 = vlaneseq
    %v712 = vshrl.u32 %v711, 7
    %v713 = vsub.s32 2, %v712
    %v714 = vrot.slane %v701, %v713
    %v715 = vlaneseq
    %v716 = vshrl.u32 %v715, 7
    %v717 = vsub.s32 3, %v716
    %v718 = vrot.slane %v701, %v717
    %v719 = vlaneseq
    %v720 = vshrl.u32 %v719, 7
    %v721 = vsub.s32 4, %v720
    %v722 = vrot.slane %v701, %v721
    %v723 = vlaneseq
    %v724 = vshrl.u32 %v723, 7
    %v725 = vsub.s32 5, %v724
    %v726 = vrot.slane %v701, %v725
    %v727 = vlaneseq
    %v728 = vshrl.u32 %v727, 7
    %v729 = vsub.s32 6, %v728
    %v730 = vrot.slane %v701, %v729
    %v731 = vlaneseq
    %v732 = vshrl.u32 %v731, 7
    %v733 = vsub.s32 7, %v732
    %v734 = vrot.slane %v701, %v733
    %v743 = vadd.f32 %v693, %v706
    %v744 = vadd.f32 %v694, %v710
    %v745 = vadd.f32 %v695, %v714
    %v746 = vadd.f32 %v696, %v718
    %v747 = vadd.f32 %v697, %v722
    %v748 = vadd.f32 %v698, %v726
    %v749 = vadd.f32 %v699, %v730
    %v750 = vadd.f32 %v700, %v734
    %vm751 = vcmp.ge.f32.partialorder %v743, 0.0
    %vm752 = vcmp.ge.f32.partialorder %v744, 0.0
    %vm753 = vcmp.ge.f32.partialorder %v745, 0.0
    %vm754 = vcmp.ge.f32.partialorder %v746, 0.0
    %vm755 = vcmp.ge.f32.partialorder %v747, 0.0
    %vm756 = vcmp.ge.f32.partialorder %v748, 0.0
    %vm757 = vcmp.ge.f32.partialorder %v749, 0.0
    %vm758 = vcmp.ge.f32.partialorder %v750, 0.0
    %v759 = vmul.f32 %v743, 0.01
    %v760 = vmul.f32 %v744, 0.01
    %v761 = vmul.f32 %v745, 0.01
    %v762 = vmul.f32 %v746, 0.01
    %v763 = vmul.f32 %v747, 0.01
    %v764 = vmul.f32 %v748, 0.01
    %v765 = vmul.f32 %v749, 0.01
    %v766 = vmul.f32 %v750, 0.01
    %v767 = vsel %vm751, %v743, %v759
    %v768 = vsel %vm752, %v744, %v760
    %v769 = vsel %vm753, %v745, %v761
    %v770 = vsel %vm754, %v746, %v762
    %v771 = vsel %vm755, %v747, %v763
    %v772 = vsel %vm756, %v748, %v764
    %v773 = vsel %vm757, %v749, %v765
    %v774 = vsel %vm758, %v750, %v766
    %v775 = vpack.c.bf16 %v767, %v767
    %v776 = vpack.c.bf16 %v768, %v768
    %v777 = vpack.c.bf16 %v769, %v769
    %v778 = vpack.c.bf16 %v770, %v770
    %v779 = vpack.c.bf16 %v771, %v771
    %v780 = vpack.c.bf16 %v772, %v772
    %v781 = vpack.c.bf16 %v773, %v773
    %v782 = vpack.c.bf16 %v774, %v774
    %v783 = vld [vmem:[#allocation9] sm:$0xff]
    %v784 = vld [vmem:[#allocation9 + $0x8] sm:$0xff]
    %v785 = vld [vmem:[#allocation9 + $0x10] sm:$0xff]
    %v786 = vld [vmem:[#allocation9 + $0x18] sm:$0xff]
    %v787 = vld [vmem:[#allocation9 + $0x20] sm:$0xff]
    %v788 = vld [vmem:[#allocation9 + $0x28] sm:$0xff]
    %v789 = vld [vmem:[#allocation9 + $0x30] sm:$0xff]
    %v790 = vld [vmem:[#allocation9 + $0x38] sm:$0xff]
    %v791 = vld [vmem:[#allocation9 + $0x40] sm:$0xff]
    %v792 = vld [vmem:[#allocation9 + $0x48] sm:$0xff]
    %v793 = vld [vmem:[#allocation9 + $0x50] sm:$0xff]
    %v794 = vld [vmem:[#allocation9 + $0x58] sm:$0xff]
    %v795 = vld [vmem:[#allocation9 + $0x60] sm:$0xff]
    %v796 = vld [vmem:[#allocation9 + $0x68] sm:$0xff]
    %v797 = vld [vmem:[#allocation9 + $0x70] sm:$0xff]
    %v798 = vld [vmem:[#allocation9 + $0x78] sm:$0xff]
    %v799 = vld [vmem:[#allocation9 + $0x80] sm:$0xff]
    %v800 = vld [vmem:[#allocation9 + $0x88] sm:$0xff]
    %v801 = vld [vmem:[#allocation9 + $0x90] sm:$0xff]
    %v802 = vld [vmem:[#allocation9 + $0x98] sm:$0xff]
    %v803 = vld [vmem:[#allocation9 + $0xa0] sm:$0xff]
    %v804 = vld [vmem:[#allocation9 + $0xa8] sm:$0xff]
    %v805 = vld [vmem:[#allocation9 + $0xb0] sm:$0xff]
    %v806 = vld [vmem:[#allocation9 + $0xb8] sm:$0xff]
    %v807 = vld [vmem:[#allocation9 + $0xc0] sm:$0xff]
    %v808 = vld [vmem:[#allocation9 + $0xc8] sm:$0xff]
    %v809 = vld [vmem:[#allocation9 + $0xd0] sm:$0xff]
    %v810 = vld [vmem:[#allocation9 + $0xd8] sm:$0xff]
    %v811 = vld [vmem:[#allocation9 + $0xe0] sm:$0xff]
    %v812 = vld [vmem:[#allocation9 + $0xe8] sm:$0xff]
    %v813 = vld [vmem:[#allocation9 + $0xf0] sm:$0xff]
    %v814 = vld [vmem:[#allocation9 + $0xf8] sm:$0xff]
    %v815 = vld [vmem:[#allocation9 + $0x100] sm:$0xff]
    %v816 = vld [vmem:[#allocation9 + $0x108] sm:$0xff]
    %v817 = vld [vmem:[#allocation9 + $0x110] sm:$0xff]
    %v818 = vld [vmem:[#allocation9 + $0x118] sm:$0xff]
    %v819 = vld [vmem:[#allocation9 + $0x120] sm:$0xff]
    %v820 = vld [vmem:[#allocation9 + $0x128] sm:$0xff]
    %v821 = vld [vmem:[#allocation9 + $0x130] sm:$0xff]
    %v822 = vld [vmem:[#allocation9 + $0x138] sm:$0xff]
    %v823 = vld [vmem:[#allocation9 + $0x140] sm:$0xff]
    %v824 = vld [vmem:[#allocation9 + $0x148] sm:$0xff]
    %v825 = vld [vmem:[#allocation9 + $0x150] sm:$0xff]
    %v826 = vld [vmem:[#allocation9 + $0x158] sm:$0xff]
    %v827 = vld [vmem:[#allocation9 + $0x160] sm:$0xff]
    %v828 = vld [vmem:[#allocation9 + $0x168] sm:$0xff]
    %v829 = vld [vmem:[#allocation9 + $0x170] sm:$0xff]
    %v830 = vld [vmem:[#allocation9 + $0x178] sm:$0xff]
    %v831 = vld [vmem:[#allocation9 + $0x180] sm:$0xff]
    %v832 = vld [vmem:[#allocation9 + $0x188] sm:$0xff]
    %v833 = vld [vmem:[#allocation9 + $0x190] sm:$0xff]
    %v834 = vld [vmem:[#allocation9 + $0x198] sm:$0xff]
    %v835 = vld [vmem:[#allocation9 + $0x1a0] sm:$0xff]
    %v836 = vld [vmem:[#allocation9 + $0x1a8] sm:$0xff]
    %v837 = vld [vmem:[#allocation9 + $0x1b0] sm:$0xff]
    %v838 = vld [vmem:[#allocation9 + $0x1b8] sm:$0xff]
    %v839 = vld [vmem:[#allocation9 + $0x1c0] sm:$0xff]
    %v840 = vld [vmem:[#allocation9 + $0x1c8] sm:$0xff]
    %v841 = vld [vmem:[#allocation9 + $0x1d0] sm:$0xff]
    %v842 = vld [vmem:[#allocation9 + $0x1d8] sm:$0xff]
    %v843 = vld [vmem:[#allocation9 + $0x1e0] sm:$0xff]
    %v844 = vld [vmem:[#allocation9 + $0x1e8] sm:$0xff]
    %v845 = vld [vmem:[#allocation9 + $0x1f0] sm:$0xff]
    %v846 = vld [vmem:[#allocation9 + $0x1f8] sm:$0xff]
    %v847 = vld [vmem:[#allocation9 + $0x200] sm:$0xff]
    %v848 = vld [vmem:[#allocation9 + $0x208] sm:$0xff]
    %v849 = vld [vmem:[#allocation9 + $0x210] sm:$0xff]
    %v850 = vld [vmem:[#allocation9 + $0x218] sm:$0xff]
    %v851 = vld [vmem:[#allocation9 + $0x220] sm:$0xff]
    %v852 = vld [vmem:[#allocation9 + $0x228] sm:$0xff]
    %v853 = vld [vmem:[#allocation9 + $0x230] sm:$0xff]
    %v854 = vld [vmem:[#allocation9 + $0x238] sm:$0xff]
    %v855 = vld [vmem:[#allocation9 + $0x240] sm:$0xff]
    %v856 = vld [vmem:[#allocation9 + $0x248] sm:$0xff]
    %v857 = vld [vmem:[#allocation9 + $0x250] sm:$0xff]
    %v858 = vld [vmem:[#allocation9 + $0x258] sm:$0xff]
    %v859 = vld [vmem:[#allocation9 + $0x260] sm:$0xff]
    %v860 = vld [vmem:[#allocation9 + $0x268] sm:$0xff]
    %v861 = vld [vmem:[#allocation9 + $0x270] sm:$0xff]
    %v862 = vld [vmem:[#allocation9 + $0x278] sm:$0xff]
    %v863 = vld [vmem:[#allocation9 + $0x280] sm:$0xff]
    %v864 = vld [vmem:[#allocation9 + $0x288] sm:$0xff]
    %v865 = vld [vmem:[#allocation9 + $0x290] sm:$0xff]
    %v866 = vld [vmem:[#allocation9 + $0x298] sm:$0xff]
    %v867 = vld [vmem:[#allocation9 + $0x2a0] sm:$0xff]
    %v868 = vld [vmem:[#allocation9 + $0x2a8] sm:$0xff]
    %v869 = vld [vmem:[#allocation9 + $0x2b0] sm:$0xff]
    %v870 = vld [vmem:[#allocation9 + $0x2b8] sm:$0xff]
    %v871 = vld [vmem:[#allocation9 + $0x2c0] sm:$0xff]
    %v872 = vld [vmem:[#allocation9 + $0x2c8] sm:$0xff]
    %v873 = vld [vmem:[#allocation9 + $0x2d0] sm:$0xff]
    %v874 = vld [vmem:[#allocation9 + $0x2d8] sm:$0xff]
    %v875 = vld [vmem:[#allocation9 + $0x2e0] sm:$0xff]
    %v876 = vld [vmem:[#allocation9 + $0x2e8] sm:$0xff]
    %v877 = vld [vmem:[#allocation9 + $0x2f0] sm:$0xff]
    %v878 = vld [vmem:[#allocation9 + $0x2f8] sm:$0xff]
    %v879 = vld [vmem:[#allocation9 + $0x300] sm:$0xff]
    %v880 = vld [vmem:[#allocation9 + $0x308] sm:$0xff]
    %v881 = vld [vmem:[#allocation9 + $0x310] sm:$0xff]
    %v882 = vld [vmem:[#allocation9 + $0x318] sm:$0xff]
    %v883 = vld [vmem:[#allocation9 + $0x320] sm:$0xff]
    %v884 = vld [vmem:[#allocation9 + $0x328] sm:$0xff]
    %v885 = vld [vmem:[#allocation9 + $0x330] sm:$0xff]
    %v886 = vld [vmem:[#allocation9 + $0x338] sm:$0xff]
    %v887 = vld [vmem:[#allocation9 + $0x340] sm:$0xff]
    %v888 = vld [vmem:[#allocation9 + $0x348] sm:$0xff]
    %v889 = vld [vmem:[#allocation9 + $0x350] sm:$0xff]
    %v890 = vld [vmem:[#allocation9 + $0x358] sm:$0xff]
    %v891 = vld [vmem:[#allocation9 + $0x360] sm:$0xff]
    %v892 = vld [vmem:[#allocation9 + $0x368] sm:$0xff]
    %v893 = vld [vmem:[#allocation9 + $0x370] sm:$0xff]
    %v894 = vld [vmem:[#allocation9 + $0x378] sm:$0xff]
    %v895 = vld [vmem:[#allocation9 + $0x380] sm:$0xff]
    %v896 = vld [vmem:[#allocation9 + $0x388] sm:$0xff]
    %v897 = vld [vmem:[#allocation9 + $0x390] sm:$0xff]
    %v898 = vld [vmem:[#allocation9 + $0x398] sm:$0xff]
    %v899 = vld [vmem:[#allocation9 + $0x3a0] sm:$0xff]
    %v900 = vld [vmem:[#allocation9 + $0x3a8] sm:$0xff]
    %v901 = vld [vmem:[#allocation9 + $0x3b0] sm:$0xff]
    %v902 = vld [vmem:[#allocation9 + $0x3b8] sm:$0xff]
    %v903 = vld [vmem:[#allocation9 + $0x3c0] sm:$0xff]
    %v904 = vld [vmem:[#allocation9 + $0x3c8] sm:$0xff]
    %v905 = vld [vmem:[#allocation9 + $0x3d0] sm:$0xff]
    %v906 = vld [vmem:[#allocation9 + $0x3d8] sm:$0xff]
    %v907 = vld [vmem:[#allocation9 + $0x3e0] sm:$0xff]
    %v908 = vld [vmem:[#allocation9 + $0x3e8] sm:$0xff]
    %v909 = vld [vmem:[#allocation9 + $0x3f0] sm:$0xff]
    %v910 = vld [vmem:[#allocation9 + $0x3f8] sm:$0xff]
    %v911 = vld [vmem:[#allocation9 + $0x400] sm:$0xff]
    %v912 = vld [vmem:[#allocation9 + $0x408] sm:$0xff]
    %v913 = vld [vmem:[#allocation9 + $0x410] sm:$0xff]
    %v914 = vld [vmem:[#allocation9 + $0x418] sm:$0xff]
    %v915 = vld [vmem:[#allocation9 + $0x420] sm:$0xff]
    %v916 = vld [vmem:[#allocation9 + $0x428] sm:$0xff]
    %v917 = vld [vmem:[#allocation9 + $0x430] sm:$0xff]
    %v918 = vld [vmem:[#allocation9 + $0x438] sm:$0xff]
    %v919 = vld [vmem:[#allocation9 + $0x440] sm:$0xff]
    %v920 = vld [vmem:[#allocation9 + $0x448] sm:$0xff]
    %v921 = vld [vmem:[#allocation9 + $0x450] sm:$0xff]
    %v922 = vld [vmem:[#allocation9 + $0x458] sm:$0xff]
    %v923 = vld [vmem:[#allocation9 + $0x460] sm:$0xff]
    %v924 = vld [vmem:[#allocation9 + $0x468] sm:$0xff]
    %v925 = vld [vmem:[#allocation9 + $0x470] sm:$0xff]
    %v926 = vld [vmem:[#allocation9 + $0x478] sm:$0xff]
    %v927 = vld [vmem:[#allocation9 + $0x480] sm:$0xff]
    %v928 = vld [vmem:[#allocation9 + $0x488] sm:$0xff]
    %v929 = vld [vmem:[#allocation9 + $0x490] sm:$0xff]
    %v930 = vld [vmem:[#allocation9 + $0x498] sm:$0xff]
    %v931 = vld [vmem:[#allocation9 + $0x4a0] sm:$0xff]
    %v932 = vld [vmem:[#allocation9 + $0x4a8] sm:$0xff]
    %v933 = vld [vmem:[#allocation9 + $0x4b0] sm:$0xff]
    %v934 = vld [vmem:[#allocation9 + $0x4b8] sm:$0xff]
    %v935 = vld [vmem:[#allocation9 + $0x4c0] sm:$0xff]
    %v936 = vld [vmem:[#allocation9 + $0x4c8] sm:$0xff]
    %v937 = vld [vmem:[#allocation9 + $0x4d0] sm:$0xff]
    %v938 = vld [vmem:[#allocation9 + $0x4d8] sm:$0xff]
    %v939 = vld [vmem:[#allocation9 + $0x4e0] sm:$0xff]
    %v940 = vld [vmem:[#allocation9 + $0x4e8] sm:$0xff]
    %v941 = vld [vmem:[#allocation9 + $0x4f0] sm:$0xff]
    %v942 = vld [vmem:[#allocation9 + $0x4f8] sm:$0xff]
    %v943 = vld [vmem:[#allocation9 + $0x500] sm:$0xff]
    %v944 = vld [vmem:[#allocation9 + $0x508] sm:$0xff]
    %v945 = vld [vmem:[#allocation9 + $0x510] sm:$0xff]
    %v946 = vld [vmem:[#allocation9 + $0x518] sm:$0xff]
    %v947 = vld [vmem:[#allocation9 + $0x520] sm:$0xff]
    %v948 = vld [vmem:[#allocation9 + $0x528] sm:$0xff]
    %v949 = vld [vmem:[#allocation9 + $0x530] sm:$0xff]
    %v950 = vld [vmem:[#allocation9 + $0x538] sm:$0xff]
    %v951 = vld [vmem:[#allocation9 + $0x540] sm:$0xff]
    %v952 = vld [vmem:[#allocation9 + $0x548] sm:$0xff]
    %v953 = vld [vmem:[#allocation9 + $0x550] sm:$0xff]
    %v954 = vld [vmem:[#allocation9 + $0x558] sm:$0xff]
    %v955 = vld [vmem:[#allocation9 + $0x560] sm:$0xff]
    %v956 = vld [vmem:[#allocation9 + $0x568] sm:$0xff]
    %v957 = vld [vmem:[#allocation9 + $0x570] sm:$0xff]
    %v958 = vld [vmem:[#allocation9 + $0x578] sm:$0xff]
    %v959 = vld [vmem:[#allocation9 + $0x580] sm:$0xff]
    %v960 = vld [vmem:[#allocation9 + $0x588] sm:$0xff]
    %v961 = vld [vmem:[#allocation9 + $0x590] sm:$0xff]
    %v962 = vld [vmem:[#allocation9 + $0x598] sm:$0xff]
    %v963 = vld [vmem:[#allocation9 + $0x5a0] sm:$0xff]
    %v964 = vld [vmem:[#allocation9 + $0x5a8] sm:$0xff]
    %v965 = vld [vmem:[#allocation9 + $0x5b0] sm:$0xff]
    %v966 = vld [vmem:[#allocation9 + $0x5b8] sm:$0xff]
    %v967 = vld [vmem:[#allocation9 + $0x5c0] sm:$0xff]
    %v968 = vld [vmem:[#allocation9 + $0x5c8] sm:$0xff]
    %v969 = vld [vmem:[#allocation9 + $0x5d0] sm:$0xff]
    %v970 = vld [vmem:[#allocation9 + $0x5d8] sm:$0xff]
    %v971 = vld [vmem:[#allocation9 + $0x5e0] sm:$0xff]
    %v972 = vld [vmem:[#allocation9 + $0x5e8] sm:$0xff]
    %v973 = vld [vmem:[#allocation9 + $0x5f0] sm:$0xff]
    %v974 = vld [vmem:[#allocation9 + $0x5f8] sm:$0xff]
    %v975 = vld [vmem:[#allocation9 + $0x600] sm:$0xff]
    %v976 = vld [vmem:[#allocation9 + $0x608] sm:$0xff]
    %v977 = vld [vmem:[#allocation9 + $0x610] sm:$0xff]
    %v978 = vld [vmem:[#allocation9 + $0x618] sm:$0xff]
    %v979 = vld [vmem:[#allocation9 + $0x620] sm:$0xff]
    %v980 = vld [vmem:[#allocation9 + $0x628] sm:$0xff]
    %v981 = vld [vmem:[#allocation9 + $0x630] sm:$0xff]
    %v982 = vld [vmem:[#allocation9 + $0x638] sm:$0xff]
    %v983 = vld [vmem:[#allocation9 + $0x640] sm:$0xff]
    %v984 = vld [vmem:[#allocation9 + $0x648] sm:$0xff]
    %v985 = vld [vmem:[#allocation9 + $0x650] sm:$0xff]
    %v986 = vld [vmem:[#allocation9 + $0x658] sm:$0xff]
    %v987 = vld [vmem:[#allocation9 + $0x660] sm:$0xff]
    %v988 = vld [vmem:[#allocation9 + $0x668] sm:$0xff]
    %v989 = vld [vmem:[#allocation9 + $0x670] sm:$0xff]
    %v990 = vld [vmem:[#allocation9 + $0x678] sm:$0xff]
    %v991 = vld [vmem:[#allocation9 + $0x680] sm:$0xff]
    %v992 = vld [vmem:[#allocation9 + $0x688] sm:$0xff]
    %v993 = vld [vmem:[#allocation9 + $0x690] sm:$0xff]
    %v994 = vld [vmem:[#allocation9 + $0x698] sm:$0xff]
    %v995 = vld [vmem:[#allocation9 + $0x6a0] sm:$0xff]
    %v996 = vld [vmem:[#allocation9 + $0x6a8] sm:$0xff]
    %v997 = vld [vmem:[#allocation9 + $0x6b0] sm:$0xff]
    %v998 = vld [vmem:[#allocation9 + $0x6b8] sm:$0xff]
    %v999 = vld [vmem:[#allocation9 + $0x6c0] sm:$0xff]
    %v1000 = vld [vmem:[#allocation9 + $0x6c8] sm:$0xff]
    %v1001 = vld [vmem:[#allocation9 + $0x6d0] sm:$0xff]
    %v1002 = vld [vmem:[#allocation9 + $0x6d8] sm:$0xff]
    %v1003 = vld [vmem:[#allocation9 + $0x6e0] sm:$0xff]
    %v1004 = vld [vmem:[#allocation9 + $0x6e8] sm:$0xff]
    %v1005 = vld [vmem:[#allocation9 + $0x6f0] sm:$0xff]
    %v1006 = vld [vmem:[#allocation9 + $0x6f8] sm:$0xff]
    %v1007 = vld [vmem:[#allocation9 + $0x700] sm:$0xff]
    %v1008 = vld [vmem:[#allocation9 + $0x708] sm:$0xff]
    %v1009 = vld [vmem:[#allocation9 + $0x710] sm:$0xff]
    %v1010 = vld [vmem:[#allocation9 + $0x718] sm:$0xff]
    %v1011 = vld [vmem:[#allocation9 + $0x720] sm:$0xff]
    %v1012 = vld [vmem:[#allocation9 + $0x728] sm:$0xff]
    %v1013 = vld [vmem:[#allocation9 + $0x730] sm:$0xff]
    %v1014 = vld [vmem:[#allocation9 + $0x738] sm:$0xff]
    %v1015 = vld [vmem:[#allocation9 + $0x740] sm:$0xff]
    %v1016 = vld [vmem:[#allocation9 + $0x748] sm:$0xff]
    %v1017 = vld [vmem:[#allocation9 + $0x750] sm:$0xff]
    %v1018 = vld [vmem:[#allocation9 + $0x758] sm:$0xff]
    %v1019 = vld [vmem:[#allocation9 + $0x760] sm:$0xff]
    %v1020 = vld [vmem:[#allocation9 + $0x768] sm:$0xff]
    %v1021 = vld [vmem:[#allocation9 + $0x770] sm:$0xff]
    %v1022 = vld [vmem:[#allocation9 + $0x778] sm:$0xff]
    %v1023 = vld [vmem:[#allocation9 + $0x780] sm:$0xff]
    %v1024 = vld [vmem:[#allocation9 + $0x788] sm:$0xff]
    %v1025 = vld [vmem:[#allocation9 + $0x790] sm:$0xff]
    %v1026 = vld [vmem:[#allocation9 + $0x798] sm:$0xff]
    %v1027 = vld [vmem:[#allocation9 + $0x7a0] sm:$0xff]
    %v1028 = vld [vmem:[#allocation9 + $0x7a8] sm:$0xff]
    %v1029 = vld [vmem:[#allocation9 + $0x7b0] sm:$0xff]
    %v1030 = vld [vmem:[#allocation9 + $0x7b8] sm:$0xff]
    %v1031 = vld [vmem:[#allocation9 + $0x7c0] sm:$0xff]
    %v1032 = vld [vmem:[#allocation9 + $0x7c8] sm:$0xff]
    %v1033 = vld [vmem:[#allocation9 + $0x7d0] sm:$0xff]
    %v1034 = vld [vmem:[#allocation9 + $0x7d8] sm:$0xff]
    %v1035 = vld [vmem:[#allocation9 + $0x7e0] sm:$0xff]
    %v1036 = vld [vmem:[#allocation9 + $0x7e8] sm:$0xff]
    %v1037 = vld [vmem:[#allocation9 + $0x7f0] sm:$0xff]
    %v1038 = vld [vmem:[#allocation9 + $0x7f8] sm:$0xff]
    %v1039 = vld [vmem:[#allocation9 + $0x800] sm:$0xff]
    %v1040 = vld [vmem:[#allocation9 + $0x808] sm:$0xff]
    %v1041 = vld [vmem:[#allocation9 + $0x810] sm:$0xff]
    %v1042 = vld [vmem:[#allocation9 + $0x818] sm:$0xff]
    %v1043 = vld [vmem:[#allocation9 + $0x820] sm:$0xff]
    %v1044 = vld [vmem:[#allocation9 + $0x828] sm:$0xff]
    %v1045 = vld [vmem:[#allocation9 + $0x830] sm:$0xff]
    %v1046 = vld [vmem:[#allocation9 + $0x838] sm:$0xff]
    %v1047 = vld [vmem:[#allocation9 + $0x840] sm:$0xff]
    %v1048 = vld [vmem:[#allocation9 + $0x848] sm:$0xff]
    %v1049 = vld [vmem:[#allocation9 + $0x850] sm:$0xff]
    %v1050 = vld [vmem:[#allocation9 + $0x858] sm:$0xff]
    %v1051 = vld [vmem:[#allocation9 + $0x860] sm:$0xff]
    %v1052 = vld [vmem:[#allocation9 + $0x868] sm:$0xff]
    %v1053 = vld [vmem:[#allocation9 + $0x870] sm:$0xff]
    %v1054 = vld [vmem:[#allocation9 + $0x878] sm:$0xff]
    %v1055 = vld [vmem:[#allocation9 + $0x880] sm:$0xff]
    %v1056 = vld [vmem:[#allocation9 + $0x888] sm:$0xff]
    %v1057 = vld [vmem:[#allocation9 + $0x890] sm:$0xff]
    %v1058 = vld [vmem:[#allocation9 + $0x898] sm:$0xff]
    %v1059 = vld [vmem:[#allocation9 + $0x8a0] sm:$0xff]
    %v1060 = vld [vmem:[#allocation9 + $0x8a8] sm:$0xff]
    %v1061 = vld [vmem:[#allocation9 + $0x8b0] sm:$0xff]
    %v1062 = vld [vmem:[#allocation9 + $0x8b8] sm:$0xff]
    %v1063 = vld [vmem:[#allocation9 + $0x8c0] sm:$0xff]
    %v1064 = vld [vmem:[#allocation9 + $0x8c8] sm:$0xff]
    %v1065 = vld [vmem:[#allocation9 + $0x8d0] sm:$0xff]
    %v1066 = vld [vmem:[#allocation9 + $0x8d8] sm:$0xff]
    %v1067 = vld [vmem:[#allocation9 + $0x8e0] sm:$0xff]
    %v1068 = vld [vmem:[#allocation9 + $0x8e8] sm:$0xff]
    %v1069 = vld [vmem:[#allocation9 + $0x8f0] sm:$0xff]
    %v1070 = vld [vmem:[#allocation9 + $0x8f8] sm:$0xff]
    %v1071 = vld [vmem:[#allocation9 + $0x900] sm:$0xff]
    %v1072 = vld [vmem:[#allocation9 + $0x908] sm:$0xff]
    %v1073 = vld [vmem:[#allocation9 + $0x910] sm:$0xff]
    %v1074 = vld [vmem:[#allocation9 + $0x918] sm:$0xff]
    %v1075 = vld [vmem:[#allocation9 + $0x920] sm:$0xff]
    %v1076 = vld [vmem:[#allocation9 + $0x928] sm:$0xff]
    %v1077 = vld [vmem:[#allocation9 + $0x930] sm:$0xff]
    %v1078 = vld [vmem:[#allocation9 + $0x938] sm:$0xff]
    %v1079 = vld [vmem:[#allocation9 + $0x940] sm:$0xff]
    %v1080 = vld [vmem:[#allocation9 + $0x948] sm:$0xff]
    %v1081 = vld [vmem:[#allocation9 + $0x950] sm:$0xff]
    %v1082 = vld [vmem:[#allocation9 + $0x958] sm:$0xff]
    %v1083 = vld [vmem:[#allocation9 + $0x960] sm:$0xff]
    %v1084 = vld [vmem:[#allocation9 + $0x968] sm:$0xff]
    %v1085 = vld [vmem:[#allocation9 + $0x970] sm:$0xff]
    %v1086 = vld [vmem:[#allocation9 + $0x978] sm:$0xff]
    %v1087 = vld [vmem:[#allocation9 + $0x980] sm:$0xff]
    %v1088 = vld [vmem:[#allocation9 + $0x988] sm:$0xff]
    %v1089 = vld [vmem:[#allocation9 + $0x990] sm:$0xff]
    %v1090 = vld [vmem:[#allocation9 + $0x998] sm:$0xff]
    %v1091 = vld [vmem:[#allocation9 + $0x9a0] sm:$0xff]
    %v1092 = vld [vmem:[#allocation9 + $0x9a8] sm:$0xff]
    %v1093 = vld [vmem:[#allocation9 + $0x9b0] sm:$0xff]
    %v1094 = vld [vmem:[#allocation9 + $0x9b8] sm:$0xff]
    %v1095 = vld [vmem:[#allocation9 + $0x9c0] sm:$0xff]
    %v1096 = vld [vmem:[#allocation9 + $0x9c8] sm:$0xff]
    %v1097 = vld [vmem:[#allocation9 + $0x9d0] sm:$0xff]
    %v1098 = vld [vmem:[#allocation9 + $0x9d8] sm:$0xff]
    %v1099 = vld [vmem:[#allocation9 + $0x9e0] sm:$0xff]
    %v1100 = vld [vmem:[#allocation9 + $0x9e8] sm:$0xff]
    %v1101 = vld [vmem:[#allocation9 + $0x9f0] sm:$0xff]
    %v1102 = vld [vmem:[#allocation9 + $0x9f8] sm:$0xff]
    %v1103 = vld [vmem:[#allocation9 + $0xa00] sm:$0xff]
    %v1104 = vld [vmem:[#allocation9 + $0xa08] sm:$0xff]
    %v1105 = vld [vmem:[#allocation9 + $0xa10] sm:$0xff]
    %v1106 = vld [vmem:[#allocation9 + $0xa18] sm:$0xff]
    %v1107 = vld [vmem:[#allocation9 + $0xa20] sm:$0xff]
    %v1108 = vld [vmem:[#allocation9 + $0xa28] sm:$0xff]
    %v1109 = vld [vmem:[#allocation9 + $0xa30] sm:$0xff]
    %v1110 = vld [vmem:[#allocation9 + $0xa38] sm:$0xff]
    %v1111 = vld [vmem:[#allocation9 + $0xa40] sm:$0xff]
    %v1112 = vld [vmem:[#allocation9 + $0xa48] sm:$0xff]
    %v1113 = vld [vmem:[#allocation9 + $0xa50] sm:$0xff]
    %v1114 = vld [vmem:[#allocation9 + $0xa58] sm:$0xff]
    %v1115 = vld [vmem:[#allocation9 + $0xa60] sm:$0xff]
    %v1116 = vld [vmem:[#allocation9 + $0xa68] sm:$0xff]
    %v1117 = vld [vmem:[#allocation9 + $0xa70] sm:$0xff]
    %v1118 = vld [vmem:[#allocation9 + $0xa78] sm:$0xff]
    %v1119 = vld [vmem:[#allocation9 + $0xa80] sm:$0xff]
    %v1120 = vld [vmem:[#allocation9 + $0xa88] sm:$0xff]
    %v1121 = vld [vmem:[#allocation9 + $0xa90] sm:$0xff]
    %v1122 = vld [vmem:[#allocation9 + $0xa98] sm:$0xff]
    %v1123 = vld [vmem:[#allocation9 + $0xaa0] sm:$0xff]
    %v1124 = vld [vmem:[#allocation9 + $0xaa8] sm:$0xff]
    %v1125 = vld [vmem:[#allocation9 + $0xab0] sm:$0xff]
    %v1126 = vld [vmem:[#allocation9 + $0xab8] sm:$0xff]
    %v1127 = vld [vmem:[#allocation9 + $0xac0] sm:$0xff]
    %v1128 = vld [vmem:[#allocation9 + $0xac8] sm:$0xff]
    %v1129 = vld [vmem:[#allocation9 + $0xad0] sm:$0xff]
    %v1130 = vld [vmem:[#allocation9 + $0xad8] sm:$0xff]
    %v1131 = vld [vmem:[#allocation9 + $0xae0] sm:$0xff]
    %v1132 = vld [vmem:[#allocation9 + $0xae8] sm:$0xff]
    %v1133 = vld [vmem:[#allocation9 + $0xaf0] sm:$0xff]
    %v1134 = vld [vmem:[#allocation9 + $0xaf8] sm:$0xff]
    %v1135 = vld [vmem:[#allocation9 + $0xb00] sm:$0xff]
    %v1136 = vld [vmem:[#allocation9 + $0xb08] sm:$0xff]
    %v1137 = vld [vmem:[#allocation9 + $0xb10] sm:$0xff]
    %v1138 = vld [vmem:[#allocation9 + $0xb18] sm:$0xff]
    %v1139 = vld [vmem:[#allocation9 + $0xb20] sm:$0xff]
    %v1140 = vld [vmem:[#allocation9 + $0xb28] sm:$0xff]
    %v1141 = vld [vmem:[#allocation9 + $0xb30] sm:$0xff]
    %v1142 = vld [vmem:[#allocation9 + $0xb38] sm:$0xff]
    %v1143 = vld [vmem:[#allocation9 + $0xb40] sm:$0xff]
    %v1144 = vld [vmem:[#allocation9 + $0xb48] sm:$0xff]
    %v1145 = vld [vmem:[#allocation9 + $0xb50] sm:$0xff]
    %v1146 = vld [vmem:[#allocation9 + $0xb58] sm:$0xff]
    %v1147 = vld [vmem:[#allocation9 + $0xb60] sm:$0xff]
    %v1148 = vld [vmem:[#allocation9 + $0xb68] sm:$0xff]
    %v1149 = vld [vmem:[#allocation9 + $0xb70] sm:$0xff]
    %v1150 = vld [vmem:[#allocation9 + $0xb78] sm:$0xff]
    %v1151 = vld [vmem:[#allocation9 + $0xb80] sm:$0xff]
    %v1152 = vld [vmem:[#allocation9 + $0xb88] sm:$0xff]
    %v1153 = vld [vmem:[#allocation9 + $0xb90] sm:$0xff]
    %v1154 = vld [vmem:[#allocation9 + $0xb98] sm:$0xff]
    %v1155 = vld [vmem:[#allocation9 + $0xba0] sm:$0xff]
    %v1156 = vld [vmem:[#allocation9 + $0xba8] sm:$0xff]
    %v1157 = vld [vmem:[#allocation9 + $0xbb0] sm:$0xff]
    %v1158 = vld [vmem:[#allocation9 + $0xbb8] sm:$0xff]
    %v1159 = vld [vmem:[#allocation9 + $0xbc0] sm:$0xff]
    %v1160 = vld [vmem:[#allocation9 + $0xbc8] sm:$0xff]
    %v1161 = vld [vmem:[#allocation9 + $0xbd0] sm:$0xff]
    %v1162 = vld [vmem:[#allocation9 + $0xbd8] sm:$0xff]
    %v1163 = vld [vmem:[#allocation9 + $0xbe0] sm:$0xff]
    %v1164 = vld [vmem:[#allocation9 + $0xbe8] sm:$0xff]
    %v1165 = vld [vmem:[#allocation9 + $0xbf0] sm:$0xff]
    %v1166 = vld [vmem:[#allocation9 + $0xbf8] sm:$0xff]
    %v1167 = vld [vmem:[#allocation9 + $0xc00] sm:$0xff]
    %v1168 = vld [vmem:[#allocation9 + $0xc08] sm:$0xff]
    %v1169 = vld [vmem:[#allocation9 + $0xc10] sm:$0xff]
    %v1170 = vld [vmem:[#allocation9 + $0xc18] sm:$0xff]
    %v1171 = vld [vmem:[#allocation9 + $0xc20] sm:$0xff]
    %v1172 = vld [vmem:[#allocation9 + $0xc28] sm:$0xff]
    %v1173 = vld [vmem:[#allocation9 + $0xc30] sm:$0xff]
    %v1174 = vld [vmem:[#allocation9 + $0xc38] sm:$0xff]
    %v1175 = vld [vmem:[#allocation9 + $0xc40] sm:$0xff]
    %v1176 = vld [vmem:[#allocation9 + $0xc48] sm:$0xff]
    %v1177 = vld [vmem:[#allocation9 + $0xc50] sm:$0xff]
    %v1178 = vld [vmem:[#allocation9 + $0xc58] sm:$0xff]
    %v1179 = vld [vmem:[#allocation9 + $0xc60] sm:$0xff]
    %v1180 = vld [vmem:[#allocation9 + $0xc68] sm:$0xff]
    %v1181 = vld [vmem:[#allocation9 + $0xc70] sm:$0xff]
    %v1182 = vld [vmem:[#allocation9 + $0xc78] sm:$0xff]
    %v1183 = vld [vmem:[#allocation9 + $0xc80] sm:$0xff]
    %v1184 = vld [vmem:[#allocation9 + $0xc88] sm:$0xff]
    %v1185 = vld [vmem:[#allocation9 + $0xc90] sm:$0xff]
    %v1186 = vld [vmem:[#allocation9 + $0xc98] sm:$0xff]
    %v1187 = vld [vmem:[#allocation9 + $0xca0] sm:$0xff]
    %v1188 = vld [vmem:[#allocation9 + $0xca8] sm:$0xff]
    %v1189 = vld [vmem:[#allocation9 + $0xcb0] sm:$0xff]
    %v1190 = vld [vmem:[#allocation9 + $0xcb8] sm:$0xff]
    %v1191 = vld [vmem:[#allocation9 + $0xcc0] sm:$0xff]
    %v1192 = vld [vmem:[#allocation9 + $0xcc8] sm:$0xff]
    %v1193 = vld [vmem:[#allocation9 + $0xcd0] sm:$0xff]
    %v1194 = vld [vmem:[#allocation9 + $0xcd8] sm:$0xff]
    %v1195 = vld [vmem:[#allocation9 + $0xce0] sm:$0xff]
    %v1196 = vld [vmem:[#allocation9 + $0xce8] sm:$0xff]
    %v1197 = vld [vmem:[#allocation9 + $0xcf0] sm:$0xff]
    %v1198 = vld [vmem:[#allocation9 + $0xcf8] sm:$0xff]
    %v1199 = vld [vmem:[#allocation9 + $0xd00] sm:$0xff]
    %v1200 = vld [vmem:[#allocation9 + $0xd08] sm:$0xff]
    %v1201 = vld [vmem:[#allocation9 + $0xd10] sm:$0xff]
    %v1202 = vld [vmem:[#allocation9 + $0xd18] sm:$0xff]
    %v1203 = vld [vmem:[#allocation9 + $0xd20] sm:$0xff]
    %v1204 = vld [vmem:[#allocation9 + $0xd28] sm:$0xff]
    %v1205 = vld [vmem:[#allocation9 + $0xd30] sm:$0xff]
    %v1206 = vld [vmem:[#allocation9 + $0xd38] sm:$0xff]
    %v1207 = vld [vmem:[#allocation9 + $0xd40] sm:$0xff]
    %v1208 = vld [vmem:[#allocation9 + $0xd48] sm:$0xff]
    %v1209 = vld [vmem:[#allocation9 + $0xd50] sm:$0xff]
    %v1210 = vld [vmem:[#allocation9 + $0xd58] sm:$0xff]
    %v1211 = vld [vmem:[#allocation9 + $0xd60] sm:$0xff]
    %v1212 = vld [vmem:[#allocation9 + $0xd68] sm:$0xff]
    %v1213 = vld [vmem:[#allocation9 + $0xd70] sm:$0xff]
    %v1214 = vld [vmem:[#allocation9 + $0xd78] sm:$0xff]
    %v1215 = vld [vmem:[#allocation9 + $0xd80] sm:$0xff]
    %v1216 = vld [vmem:[#allocation9 + $0xd88] sm:$0xff]
    %v1217 = vld [vmem:[#allocation9 + $0xd90] sm:$0xff]
    %v1218 = vld [vmem:[#allocation9 + $0xd98] sm:$0xff]
    %v1219 = vld [vmem:[#allocation9 + $0xda0] sm:$0xff]
    %v1220 = vld [vmem:[#allocation9 + $0xda8] sm:$0xff]
    %v1221 = vld [vmem:[#allocation9 + $0xdb0] sm:$0xff]
    %v1222 = vld [vmem:[#allocation9 + $0xdb8] sm:$0xff]
    %v1223 = vld [vmem:[#allocation9 + $0xdc0] sm:$0xff]
    %v1224 = vld [vmem:[#allocation9 + $0xdc8] sm:$0xff]
    %v1225 = vld [vmem:[#allocation9 + $0xdd0] sm:$0xff]
    %v1226 = vld [vmem:[#allocation9 + $0xdd8] sm:$0xff]
    %v1227 = vld [vmem:[#allocation9 + $0xde0] sm:$0xff]
    %v1228 = vld [vmem:[#allocation9 + $0xde8] sm:$0xff]
    %v1229 = vld [vmem:[#allocation9 + $0xdf0] sm:$0xff]
    %v1230 = vld [vmem:[#allocation9 + $0xdf8] sm:$0xff]
    %v1231 = vld [vmem:[#allocation9 + $0xe00] sm:$0xff]
    %v1232 = vld [vmem:[#allocation9 + $0xe08] sm:$0xff]
    %v1233 = vld [vmem:[#allocation9 + $0xe10] sm:$0xff]
    %v1234 = vld [vmem:[#allocation9 + $0xe18] sm:$0xff]
    %v1235 = vld [vmem:[#allocation9 + $0xe20] sm:$0xff]
    %v1236 = vld [vmem:[#allocation9 + $0xe28] sm:$0xff]
    %v1237 = vld [vmem:[#allocation9 + $0xe30] sm:$0xff]
    %v1238 = vld [vmem:[#allocation9 + $0xe38] sm:$0xff]
    %v1239 = vld [vmem:[#allocation9 + $0xe40] sm:$0xff]
    %v1240 = vld [vmem:[#allocation9 + $0xe48] sm:$0xff]
    %v1241 = vld [vmem:[#allocation9 + $0xe50] sm:$0xff]
    %v1242 = vld [vmem:[#allocation9 + $0xe58] sm:$0xff]
    %v1243 = vld [vmem:[#allocation9 + $0xe60] sm:$0xff]
    %v1244 = vld [vmem:[#allocation9 + $0xe68] sm:$0xff]
    %v1245 = vld [vmem:[#allocation9 + $0xe70] sm:$0xff]
    %v1246 = vld [vmem:[#allocation9 + $0xe78] sm:$0xff]
    %v1247 = vld [vmem:[#allocation9 + $0xe80] sm:$0xff]
    %v1248 = vld [vmem:[#allocation9 + $0xe88] sm:$0xff]
    %v1249 = vld [vmem:[#allocation9 + $0xe90] sm:$0xff]
    %v1250 = vld [vmem:[#allocation9 + $0xe98] sm:$0xff]
    %v1251 = vld [vmem:[#allocation9 + $0xea0] sm:$0xff]
    %v1252 = vld [vmem:[#allocation9 + $0xea8] sm:$0xff]
    %v1253 = vld [vmem:[#allocation9 + $0xeb0] sm:$0xff]
    %v1254 = vld [vmem:[#allocation9 + $0xeb8] sm:$0xff]
    %v1255 = vld [vmem:[#allocation9 + $0xec0] sm:$0xff]
    %v1256 = vld [vmem:[#allocation9 + $0xec8] sm:$0xff]
    %v1257 = vld [vmem:[#allocation9 + $0xed0] sm:$0xff]
    %v1258 = vld [vmem:[#allocation9 + $0xed8] sm:$0xff]
    %v1259 = vld [vmem:[#allocation9 + $0xee0] sm:$0xff]
    %v1260 = vld [vmem:[#allocation9 + $0xee8] sm:$0xff]
    %v1261 = vld [vmem:[#allocation9 + $0xef0] sm:$0xff]
    %v1262 = vld [vmem:[#allocation9 + $0xef8] sm:$0xff]
    %v1263 = vld [vmem:[#allocation9 + $0xf00] sm:$0xff]
    %v1264 = vld [vmem:[#allocation9 + $0xf08] sm:$0xff]
    %v1265 = vld [vmem:[#allocation9 + $0xf10] sm:$0xff]
    %v1266 = vld [vmem:[#allocation9 + $0xf18] sm:$0xff]
    %v1267 = vld [vmem:[#allocation9 + $0xf20] sm:$0xff]
    %v1268 = vld [vmem:[#allocation9 + $0xf28] sm:$0xff]
    %v1269 = vld [vmem:[#allocation9 + $0xf30] sm:$0xff]
    %v1270 = vld [vmem:[#allocation9 + $0xf38] sm:$0xff]
    %v1271 = vld [vmem:[#allocation9 + $0xf40] sm:$0xff]
    %v1272 = vld [vmem:[#allocation9 + $0xf48] sm:$0xff]
    %v1273 = vld [vmem:[#allocation9 + $0xf50] sm:$0xff]
    %v1274 = vld [vmem:[#allocation9 + $0xf58] sm:$0xff]
    %v1275 = vld [vmem:[#allocation9 + $0xf60] sm:$0xff]
    %v1276 = vld [vmem:[#allocation9 + $0xf68] sm:$0xff]
    %v1277 = vld [vmem:[#allocation9 + $0xf70] sm:$0xff]
    %v1278 = vld [vmem:[#allocation9 + $0xf78] sm:$0xff]
    %v1279 = vld [vmem:[#allocation9 + $0xf80] sm:$0xff]
    %v1280 = vld [vmem:[#allocation9 + $0xf88] sm:$0xff]
    %v1281 = vld [vmem:[#allocation9 + $0xf90] sm:$0xff]
    %v1282 = vld [vmem:[#allocation9 + $0xf98] sm:$0xff]
    %v1283 = vld [vmem:[#allocation9 + $0xfa0] sm:$0xff]
    %v1284 = vld [vmem:[#allocation9 + $0xfa8] sm:$0xff]
    %v1285 = vld [vmem:[#allocation9 + $0xfb0] sm:$0xff]
    %v1286 = vld [vmem:[#allocation9 + $0xfb8] sm:$0xff]
    %v1287 = vld [vmem:[#allocation9 + $0xfc0] sm:$0xff]
    %v1288 = vld [vmem:[#allocation9 + $0xfc8] sm:$0xff]
    %v1289 = vld [vmem:[#allocation9 + $0xfd0] sm:$0xff]
    %v1290 = vld [vmem:[#allocation9 + $0xfd8] sm:$0xff]
    %v1291 = vld [vmem:[#allocation9 + $0xfe0] sm:$0xff]
    %v1292 = vld [vmem:[#allocation9 + $0xfe8] sm:$0xff]
    %v1293 = vld [vmem:[#allocation9 + $0xff0] sm:$0xff]
    %v1294 = vld [vmem:[#allocation9 + $0xff8] sm:$0xff]
    %v1295 = vld [vmem:[#allocation10] sm:$0xff]
    %v1297 = vlaneseq
    %v1298 = vshrl.u32 %v1297, 7
    %v1299 = vsub.s32 0, %v1298
    %v1300 = vrot.slane %v1295, %v1299
    %v1301 = vlaneseq
    %v1302 = vshrl.u32 %v1301, 7
    %v1303 = vsub.s32 1, %v1302
    %v1304 = vrot.slane %v1295, %v1303
    %v1305 = vlaneseq
    %v1306 = vshrl.u32 %v1305, 7
    %v1307 = vsub.s32 2, %v1306
    %v1308 = vrot.slane %v1295, %v1307
    %v1309 = vlaneseq
    %v1310 = vshrl.u32 %v1309, 7
    %v1311 = vsub.s32 3, %v1310
    %v1312 = vrot.slane %v1295, %v1311
    %v1313 = vlaneseq
    %v1314 = vshrl.u32 %v1313, 7
    %v1315 = vsub.s32 4, %v1314
    %v1316 = vrot.slane %v1295, %v1315
    %v1317 = vlaneseq
    %v1318 = vshrl.u32 %v1317, 7
    %v1319 = vsub.s32 5, %v1318
    %v1320 = vrot.slane %v1295, %v1319
    %v1321 = vlaneseq
    %v1322 = vshrl.u32 %v1321, 7
    %v1323 = vsub.s32 6, %v1322
    %v1324 = vrot.slane %v1295, %v1323
    %v1325 = vlaneseq
    %v1326 = vshrl.u32 %v1325, 7
    %v1327 = vsub.s32 7, %v1326
    %v1328 = vrot.slane %v1295, %v1327
    %v1849 = vunpack.c.l.b16 %v783
    %v1850 = vunpack.c.h.b16 %v783
    %v1851 = vunpack.c.l.b16 %v784
    %v1852 = vunpack.c.h.b16 %v784
    %v1853 = vunpack.c.l.b16 %v785
    %v1854 = vunpack.c.h.b16 %v785
    %v1855 = vunpack.c.l.b16 %v786
    %v1856 = vunpack.c.h.b16 %v786
    %v1857 = vunpack.c.l.b16 %v787
    %v1858 = vunpack.c.h.b16 %v787
    %v1859 = vunpack.c.l.b16 %v788
    %v1860 = vunpack.c.h.b16 %v788
    %v1861 = vunpack.c.l.b16 %v789
    %v1862 = vunpack.c.h.b16 %v789
    %v1863 = vunpack.c.l.b16 %v790
    %v1864 = vunpack.c.h.b16 %v790
    %v1865 = vunpack.c.l.b16 %v791
    %v1866 = vunpack.c.h.b16 %v791
    %v1867 = vunpack.c.l.b16 %v792
    %v1868 = vunpack.c.h.b16 %v792
    %v1869 = vunpack.c.l.b16 %v793
    %v1870 = vunpack.c.h.b16 %v793
    %v1871 = vunpack.c.l.b16 %v794
    %v1872 = vunpack.c.h.b16 %v794
    %v1873 = vunpack.c.l.b16 %v795
    %v1874 = vunpack.c.h.b16 %v795
    %v1875 = vunpack.c.l.b16 %v796
    %v1876 = vunpack.c.h.b16 %v796
    %v1877 = vunpack.c.l.b16 %v797
    %v1878 = vunpack.c.h.b16 %v797
    %v1879 = vunpack.c.l.b16 %v798
    %v1880 = vunpack.c.h.b16 %v798
    %v1881 = vunpack.c.l.b16 %v799
    %v1882 = vunpack.c.h.b16 %v799
    %v1883 = vunpack.c.l.b16 %v800
    %v1884 = vunpack.c.h.b16 %v800
    %v1885 = vunpack.c.l.b16 %v801
    %v1886 = vunpack.c.h.b16 %v801
    %v1887 = vunpack.c.l.b16 %v802
    %v1888 = vunpack.c.h.b16 %v802
    %v1889 = vunpack.c.l.b16 %v803
    %v1890 = vunpack.c.h.b16 %v803
    %v1891 = vunpack.c.l.b16 %v804
    %v1892 = vunpack.c.h.b16 %v804
    %v1893 = vunpack.c.l.b16 %v805
    %v1894 = vunpack.c.h.b16 %v805
    %v1895 = vunpack.c.l.b16 %v806
    %v1896 = vunpack.c.h.b16 %v806
    %v1897 = vunpack.c.l.b16 %v807
    %v1898 = vunpack.c.h.b16 %v807
    %v1899 = vunpack.c.l.b16 %v808
    %v1900 = vunpack.c.h.b16 %v808
    %v1901 = vunpack.c.l.b16 %v809
    %v1902 = vunpack.c.h.b16 %v809
    %v1903 = vunpack.c.l.b16 %v810
    %v1904 = vunpack.c.h.b16 %v810
    %v1905 = vunpack.c.l.b16 %v811
    %v1906 = vunpack.c.h.b16 %v811
    %v1907 = vunpack.c.l.b16 %v812
    %v1908 = vunpack.c.h.b16 %v812
    %v1909 = vunpack.c.l.b16 %v813
    %v1910 = vunpack.c.h.b16 %v813
    %v1911 = vunpack.c.l.b16 %v814
    %v1912 = vunpack.c.h.b16 %v814
    %v1913 = vunpack.c.l.b16 %v815
    %v1914 = vunpack.c.h.b16 %v815
    %v1915 = vunpack.c.l.b16 %v816
    %v1916 = vunpack.c.h.b16 %v816
    %v1917 = vunpack.c.l.b16 %v817
    %v1918 = vunpack.c.h.b16 %v817
    %v1919 = vunpack.c.l.b16 %v818
    %v1920 = vunpack.c.h.b16 %v818
    %v1921 = vunpack.c.l.b16 %v819
    %v1922 = vunpack.c.h.b16 %v819
    %v1923 = vunpack.c.l.b16 %v820
    %v1924 = vunpack.c.h.b16 %v820
    %v1925 = vunpack.c.l.b16 %v821
    %v1926 = vunpack.c.h.b16 %v821
    %v1927 = vunpack.c.l.b16 %v822
    %v1928 = vunpack.c.h.b16 %v822
    %v1929 = vunpack.c.l.b16 %v823
    %v1930 = vunpack.c.h.b16 %v823
    %v1931 = vunpack.c.l.b16 %v824
    %v1932 = vunpack.c.h.b16 %v824
    %v1933 = vunpack.c.l.b16 %v825
    %v1934 = vunpack.c.h.b16 %v825
    %v1935 = vunpack.c.l.b16 %v826
    %v1936 = vunpack.c.h.b16 %v826
    %v1937 = vunpack.c.l.b16 %v827
    %v1938 = vunpack.c.h.b16 %v827
    %v1939 = vunpack.c.l.b16 %v828
    %v1940 = vunpack.c.h.b16 %v828
    %v1941 = vunpack.c.l.b16 %v829
    %v1942 = vunpack.c.h.b16 %v829
    %v1943 = vunpack.c.l.b16 %v830
    %v1944 = vunpack.c.h.b16 %v830
    %v1945 = vunpack.c.l.b16 %v831
    %v1946 = vunpack.c.h.b16 %v831
    %v1947 = vunpack.c.l.b16 %v832
    %v1948 = vunpack.c.h.b16 %v832
    %v1949 = vunpack.c.l.b16 %v833
    %v1950 = vunpack.c.h.b16 %v833
    %v1951 = vunpack.c.l.b16 %v834
    %v1952 = vunpack.c.h.b16 %v834
    %v1953 = vunpack.c.l.b16 %v835
    %v1954 = vunpack.c.h.b16 %v835
    %v1955 = vunpack.c.l.b16 %v836
    %v1956 = vunpack.c.h.b16 %v836
    %v1957 = vunpack.c.l.b16 %v837
    %v1958 = vunpack.c.h.b16 %v837
    %v1959 = vunpack.c.l.b16 %v838
    %v1960 = vunpack.c.h.b16 %v838
    %v1961 = vunpack.c.l.b16 %v839
    %v1962 = vunpack.c.h.b16 %v839
    %v1963 = vunpack.c.l.b16 %v840
    %v1964 = vunpack.c.h.b16 %v840
    %v1965 = vunpack.c.l.b16 %v841
    %v1966 = vunpack.c.h.b16 %v841
    %v1967 = vunpack.c.l.b16 %v842
    %v1968 = vunpack.c.h.b16 %v842
    %v1969 = vunpack.c.l.b16 %v843
    %v1970 = vunpack.c.h.b16 %v843
    %v1971 = vunpack.c.l.b16 %v844
    %v1972 = vunpack.c.h.b16 %v844
    %v1973 = vunpack.c.l.b16 %v845
    %v1974 = vunpack.c.h.b16 %v845
    %v1975 = vunpack.c.l.b16 %v846
    %v1976 = vunpack.c.h.b16 %v846
    %v1977 = vunpack.c.l.b16 %v847
    %v1978 = vunpack.c.h.b16 %v847
    %v1979 = vunpack.c.l.b16 %v848
    %v1980 = vunpack.c.h.b16 %v848
    %v1981 = vunpack.c.l.b16 %v849
    %v1982 = vunpack.c.h.b16 %v849
    %v1983 = vunpack.c.l.b16 %v850
    %v1984 = vunpack.c.h.b16 %v850
    %v1985 = vunpack.c.l.b16 %v851
    %v1986 = vunpack.c.h.b16 %v851
    %v1987 = vunpack.c.l.b16 %v852
    %v1988 = vunpack.c.h.b16 %v852
    %v1989 = vunpack.c.l.b16 %v853
    %v1990 = vunpack.c.h.b16 %v853
    %v1991 = vunpack.c.l.b16 %v854
    %v1992 = vunpack.c.h.b16 %v854
    %v1993 = vunpack.c.l.b16 %v855
    %v1994 = vunpack.c.h.b16 %v855
    %v1995 = vunpack.c.l.b16 %v856
    %v1996 = vunpack.c.h.b16 %v856
    %v1997 = vunpack.c.l.b16 %v857
    %v1998 = vunpack.c.h.b16 %v857
    %v1999 = vunpack.c.l.b16 %v858
    %v2000 = vunpack.c.h.b16 %v858
    %v2001 = vunpack.c.l.b16 %v859
    %v2002 = vunpack.c.h.b16 %v859
    %v2003 = vunpack.c.l.b16 %v860
    %v2004 = vunpack.c.h.b16 %v860
    %v2005 = vunpack.c.l.b16 %v861
    %v2006 = vunpack.c.h.b16 %v861
    %v2007 = vunpack.c.l.b16 %v862
    %v2008 = vunpack.c.h.b16 %v862
    %v2009 = vunpack.c.l.b16 %v863
    %v2010 = vunpack.c.h.b16 %v863
    %v2011 = vunpack.c.l.b16 %v864
    %v2012 = vunpack.c.h.b16 %v864
    %v2013 = vunpack.c.l.b16 %v865
    %v2014 = vunpack.c.h.b16 %v865
    %v2015 = vunpack.c.l.b16 %v866
    %v2016 = vunpack.c.h.b16 %v866
    %v2017 = vunpack.c.l.b16 %v867
    %v2018 = vunpack.c.h.b16 %v867
    %v2019 = vunpack.c.l.b16 %v868
    %v2020 = vunpack.c.h.b16 %v868
    %v2021 = vunpack.c.l.b16 %v869
    %v2022 = vunpack.c.h.b16 %v869
    %v2023 = vunpack.c.l.b16 %v870
    %v2024 = vunpack.c.h.b16 %v870
    %v2025 = vunpack.c.l.b16 %v871
    %v2026 = vunpack.c.h.b16 %v871
    %v2027 = vunpack.c.l.b16 %v872
    %v2028 = vunpack.c.h.b16 %v872
    %v2029 = vunpack.c.l.b16 %v873
    %v2030 = vunpack.c.h.b16 %v873
    %v2031 = vunpack.c.l.b16 %v874
    %v2032 = vunpack.c.h.b16 %v874
    %v2033 = vunpack.c.l.b16 %v875
    %v2034 = vunpack.c.h.b16 %v875
    %v2035 = vunpack.c.l.b16 %v876
    %v2036 = vunpack.c.h.b16 %v876
    %v2037 = vunpack.c.l.b16 %v877
    %v2038 = vunpack.c.h.b16 %v877
    %v2039 = vunpack.c.l.b16 %v878
    %v2040 = vunpack.c.h.b16 %v878
    %v2041 = vunpack.c.l.b16 %v879
    %v2042 = vunpack.c.h.b16 %v879
    %v2043 = vunpack.c.l.b16 %v880
    %v2044 = vunpack.c.h.b16 %v880
    %v2045 = vunpack.c.l.b16 %v881
    %v2046 = vunpack.c.h.b16 %v881
    %v2047 = vunpack.c.l.b16 %v882
    %v2048 = vunpack.c.h.b16 %v882
    %v2049 = vunpack.c.l.b16 %v883
    %v2050 = vunpack.c.h.b16 %v883
    %v2051 = vunpack.c.l.b16 %v884
    %v2052 = vunpack.c.h.b16 %v884
    %v2053 = vunpack.c.l.b16 %v885
    %v2054 = vunpack.c.h.b16 %v885
    %v2055 = vunpack.c.l.b16 %v886
    %v2056 = vunpack.c.h.b16 %v886
    %v2057 = vunpack.c.l.b16 %v887
    %v2058 = vunpack.c.h.b16 %v887
    %v2059 = vunpack.c.l.b16 %v888
    %v2060 = vunpack.c.h.b16 %v888
    %v2061 = vunpack.c.l.b16 %v889
    %v2062 = vunpack.c.h.b16 %v889
    %v2063 = vunpack.c.l.b16 %v890
    %v2064 = vunpack.c.h.b16 %v890
    %v2065 = vunpack.c.l.b16 %v891
    %v2066 = vunpack.c.h.b16 %v891
    %v2067 = vunpack.c.l.b16 %v892
    %v2068 = vunpack.c.h.b16 %v892
    %v2069 = vunpack.c.l.b16 %v893
    %v2070 = vunpack.c.h.b16 %v893
    %v2071 = vunpack.c.l.b16 %v894
    %v2072 = vunpack.c.h.b16 %v894
    %v2073 = vunpack.c.l.b16 %v895
    %v2074 = vunpack.c.h.b16 %v895
    %v2075 = vunpack.c.l.b16 %v896
    %v2076 = vunpack.c.h.b16 %v896
    %v2077 = vunpack.c.l.b16 %v897
    %v2078 = vunpack.c.h.b16 %v897
    %v2079 = vunpack.c.l.b16 %v898
    %v2080 = vunpack.c.h.b16 %v898
    %v2081 = vunpack.c.l.b16 %v899
    %v2082 = vunpack.c.h.b16 %v899
    %v2083 = vunpack.c.l.b16 %v900
    %v2084 = vunpack.c.h.b16 %v900
    %v2085 = vunpack.c.l.b16 %v901
    %v2086 = vunpack.c.h.b16 %v901
    %v2087 = vunpack.c.l.b16 %v902
    %v2088 = vunpack.c.h.b16 %v902
    %v2089 = vunpack.c.l.b16 %v903
    %v2090 = vunpack.c.h.b16 %v903
    %v2091 = vunpack.c.l.b16 %v904
    %v2092 = vunpack.c.h.b16 %v904
    %v2093 = vunpack.c.l.b16 %v905
    %v2094 = vunpack.c.h.b16 %v905
    %v2095 = vunpack.c.l.b16 %v906
    %v2096 = vunpack.c.h.b16 %v906
    %v2097 = vunpack.c.l.b16 %v907
    %v2098 = vunpack.c.h.b16 %v907
    %v2099 = vunpack.c.l.b16 %v908
    %v2100 = vunpack.c.h.b16 %v908
    %v2101 = vunpack.c.l.b16 %v909
    %v2102 = vunpack.c.h.b16 %v909
    %v2103 = vunpack.c.l.b16 %v910
    %v2104 = vunpack.c.h.b16 %v910
    %v2105 = vunpack.c.l.b16 %v911
    %v2106 = vunpack.c.h.b16 %v911
    %v2107 = vunpack.c.l.b16 %v912
    %v2108 = vunpack.c.h.b16 %v912
    %v2109 = vunpack.c.l.b16 %v913
    %v2110 = vunpack.c.h.b16 %v913
    %v2111 = vunpack.c.l.b16 %v914
    %v2112 = vunpack.c.h.b16 %v914
    %v2113 = vunpack.c.l.b16 %v915
    %v2114 = vunpack.c.h.b16 %v915
    %v2115 = vunpack.c.l.b16 %v916
    %v2116 = vunpack.c.h.b16 %v916
    %v2117 = vunpack.c.l.b16 %v917
    %v2118 = vunpack.c.h.b16 %v917
    %v2119 = vunpack.c.l.b16 %v918
    %v2120 = vunpack.c.h.b16 %v918
    %v2121 = vunpack.c.l.b16 %v919
    %v2122 = vunpack.c.h.b16 %v919
    %v2123 = vunpack.c.l.b16 %v920
    %v2124 = vunpack.c.h.b16 %v920
    %v2125 = vunpack.c.l.b16 %v921
    %v2126 = vunpack.c.h.b16 %v921
    %v2127 = vunpack.c.l.b16 %v922
    %v2128 = vunpack.c.h.b16 %v922
    %v2129 = vunpack.c.l.b16 %v923
    %v2130 = vunpack.c.h.b16 %v923
    %v2131 = vunpack.c.l.b16 %v924
    %v2132 = vunpack.c.h.b16 %v924
    %v2133 = vunpack.c.l.b16 %v925
    %v2134 = vunpack.c.h.b16 %v925
    %v2135 = vunpack.c.l.b16 %v926
    %v2136 = vunpack.c.h.b16 %v926
    %v2137 = vunpack.c.l.b16 %v927
    %v2138 = vunpack.c.h.b16 %v927
    %v2139 = vunpack.c.l.b16 %v928
    %v2140 = vunpack.c.h.b16 %v928
    %v2141 = vunpack.c.l.b16 %v929
    %v2142 = vunpack.c.h.b16 %v929
    %v2143 = vunpack.c.l.b16 %v930
    %v2144 = vunpack.c.h.b16 %v930
    %v2145 = vunpack.c.l.b16 %v931
    %v2146 = vunpack.c.h.b16 %v931
    %v2147 = vunpack.c.l.b16 %v932
    %v2148 = vunpack.c.h.b16 %v932
    %v2149 = vunpack.c.l.b16 %v933
    %v2150 = vunpack.c.h.b16 %v933
    %v2151 = vunpack.c.l.b16 %v934
    %v2152 = vunpack.c.h.b16 %v934
    %v2153 = vunpack.c.l.b16 %v935
    %v2154 = vunpack.c.h.b16 %v935
    %v2155 = vunpack.c.l.b16 %v936
    %v2156 = vunpack.c.h.b16 %v936
    %v2157 = vunpack.c.l.b16 %v937
    %v2158 = vunpack.c.h.b16 %v937
    %v2159 = vunpack.c.l.b16 %v938
    %v2160 = vunpack.c.h.b16 %v938
    %v2161 = vunpack.c.l.b16 %v939
    %v2162 = vunpack.c.h.b16 %v939
    %v2163 = vunpack.c.l.b16 %v940
    %v2164 = vunpack.c.h.b16 %v940
    %v2165 = vunpack.c.l.b16 %v941
    %v2166 = vunpack.c.h.b16 %v941
    %v2167 = vunpack.c.l.b16 %v942
    %v2168 = vunpack.c.h.b16 %v942
    %v2169 = vunpack.c.l.b16 %v943
    %v2170 = vunpack.c.h.b16 %v943
    %v2171 = vunpack.c.l.b16 %v944
    %v2172 = vunpack.c.h.b16 %v944
    %v2173 = vunpack.c.l.b16 %v945
    %v2174 = vunpack.c.h.b16 %v945
    %v2175 = vunpack.c.l.b16 %v946
    %v2176 = vunpack.c.h.b16 %v946
    %v2177 = vunpack.c.l.b16 %v947
    %v2178 = vunpack.c.h.b16 %v947
    %v2179 = vunpack.c.l.b16 %v948
    %v2180 = vunpack.c.h.b16 %v948
    %v2181 = vunpack.c.l.b16 %v949
    %v2182 = vunpack.c.h.b16 %v949
    %v2183 = vunpack.c.l.b16 %v950
    %v2184 = vunpack.c.h.b16 %v950
    %v2185 = vunpack.c.l.b16 %v951
    %v2186 = vunpack.c.h.b16 %v951
    %v2187 = vunpack.c.l.b16 %v952
    %v2188 = vunpack.c.h.b16 %v952
    %v2189 = vunpack.c.l.b16 %v953
    %v2190 = vunpack.c.h.b16 %v953
    %v2191 = vunpack.c.l.b16 %v954
    %v2192 = vunpack.c.h.b16 %v954
    %v2193 = vunpack.c.l.b16 %v955
    %v2194 = vunpack.c.h.b16 %v955
    %v2195 = vunpack.c.l.b16 %v956
    %v2196 = vunpack.c.h.b16 %v956
    %v2197 = vunpack.c.l.b16 %v957
    %v2198 = vunpack.c.h.b16 %v957
    %v2199 = vunpack.c.l.b16 %v958
    %v2200 = vunpack.c.h.b16 %v958
    %v2201 = vunpack.c.l.b16 %v959
    %v2202 = vunpack.c.h.b16 %v959
    %v2203 = vunpack.c.l.b16 %v960
    %v2204 = vunpack.c.h.b16 %v960
    %v2205 = vunpack.c.l.b16 %v961
    %v2206 = vunpack.c.h.b16 %v961
    %v2207 = vunpack.c.l.b16 %v962
    %v2208 = vunpack.c.h.b16 %v962
    %v2209 = vunpack.c.l.b16 %v963
    %v2210 = vunpack.c.h.b16 %v963
    %v2211 = vunpack.c.l.b16 %v964
    %v2212 = vunpack.c.h.b16 %v964
    %v2213 = vunpack.c.l.b16 %v965
    %v2214 = vunpack.c.h.b16 %v965
    %v2215 = vunpack.c.l.b16 %v966
    %v2216 = vunpack.c.h.b16 %v966
    %v2217 = vunpack.c.l.b16 %v967
    %v2218 = vunpack.c.h.b16 %v967
    %v2219 = vunpack.c.l.b16 %v968
    %v2220 = vunpack.c.h.b16 %v968
    %v2221 = vunpack.c.l.b16 %v969
    %v2222 = vunpack.c.h.b16 %v969
    %v2223 = vunpack.c.l.b16 %v970
    %v2224 = vunpack.c.h.b16 %v970
    %v2225 = vunpack.c.l.b16 %v971
    %v2226 = vunpack.c.h.b16 %v971
    %v2227 = vunpack.c.l.b16 %v972
    %v2228 = vunpack.c.h.b16 %v972
    %v2229 = vunpack.c.l.b16 %v973
    %v2230 = vunpack.c.h.b16 %v973
    %v2231 = vunpack.c.l.b16 %v974
    %v2232 = vunpack.c.h.b16 %v974
    %v2233 = vunpack.c.l.b16 %v975
    %v2234 = vunpack.c.h.b16 %v975
    %v2235 = vunpack.c.l.b16 %v976
    %v2236 = vunpack.c.h.b16 %v976
    %v2237 = vunpack.c.l.b16 %v977
    %v2238 = vunpack.c.h.b16 %v977
    %v2239 = vunpack.c.l.b16 %v978
    %v2240 = vunpack.c.h.b16 %v978
    %v2241 = vunpack.c.l.b16 %v979
    %v2242 = vunpack.c.h.b16 %v979
    %v2243 = vunpack.c.l.b16 %v980
    %v2244 = vunpack.c.h.b16 %v980
    %v2245 = vunpack.c.l.b16 %v981
    %v2246 = vunpack.c.h.b16 %v981
    %v2247 = vunpack.c.l.b16 %v982
    %v2248 = vunpack.c.h.b16 %v982
    %v2249 = vunpack.c.l.b16 %v983
    %v2250 = vunpack.c.h.b16 %v983
    %v2251 = vunpack.c.l.b16 %v984
    %v2252 = vunpack.c.h.b16 %v984
    %v2253 = vunpack.c.l.b16 %v985
    %v2254 = vunpack.c.h.b16 %v985
    %v2255 = vunpack.c.l.b16 %v986
    %v2256 = vunpack.c.h.b16 %v986
    %v2257 = vunpack.c.l.b16 %v987
    %v2258 = vunpack.c.h.b16 %v987
    %v2259 = vunpack.c.l.b16 %v988
    %v2260 = vunpack.c.h.b16 %v988
    %v2261 = vunpack.c.l.b16 %v989
    %v2262 = vunpack.c.h.b16 %v989
    %v2263 = vunpack.c.l.b16 %v990
    %v2264 = vunpack.c.h.b16 %v990
    %v2265 = vunpack.c.l.b16 %v991
    %v2266 = vunpack.c.h.b16 %v991
    %v2267 = vunpack.c.l.b16 %v992
    %v2268 = vunpack.c.h.b16 %v992
    %v2269 = vunpack.c.l.b16 %v993
    %v2270 = vunpack.c.h.b16 %v993
    %v2271 = vunpack.c.l.b16 %v994
    %v2272 = vunpack.c.h.b16 %v994
    %v2273 = vunpack.c.l.b16 %v995
    %v2274 = vunpack.c.h.b16 %v995
    %v2275 = vunpack.c.l.b16 %v996
    %v2276 = vunpack.c.h.b16 %v996
    %v2277 = vunpack.c.l.b16 %v997
    %v2278 = vunpack.c.h.b16 %v997
    %v2279 = vunpack.c.l.b16 %v998
    %v2280 = vunpack.c.h.b16 %v998
    %v2281 = vunpack.c.l.b16 %v999
    %v2282 = vunpack.c.h.b16 %v999
    %v2283 = vunpack.c.l.b16 %v1000
    %v2284 = vunpack.c.h.b16 %v1000
    %v2285 = vunpack.c.l.b16 %v1001
    %v2286 = vunpack.c.h.b16 %v1001
    %v2287 = vunpack.c.l.b16 %v1002
    %v2288 = vunpack.c.h.b16 %v1002
    %v2289 = vunpack.c.l.b16 %v1003
    %v2290 = vunpack.c.h.b16 %v1003
    %v2291 = vunpack.c.l.b16 %v1004
    %v2292 = vunpack.c.h.b16 %v1004
    %v2293 = vunpack.c.l.b16 %v1005
    %v2294 = vunpack.c.h.b16 %v1005
    %v2295 = vunpack.c.l.b16 %v1006
    %v2296 = vunpack.c.h.b16 %v1006
    %v2297 = vunpack.c.l.b16 %v1007
    %v2298 = vunpack.c.h.b16 %v1007
    %v2299 = vunpack.c.l.b16 %v1008
    %v2300 = vunpack.c.h.b16 %v1008
    %v2301 = vunpack.c.l.b16 %v1009
    %v2302 = vunpack.c.h.b16 %v1009
    %v2303 = vunpack.c.l.b16 %v1010
    %v2304 = vunpack.c.h.b16 %v1010
    %v2305 = vunpack.c.l.b16 %v1011
    %v2306 = vunpack.c.h.b16 %v1011
    %v2307 = vunpack.c.l.b16 %v1012
    %v2308 = vunpack.c.h.b16 %v1012
    %v2309 = vunpack.c.l.b16 %v1013
    %v2310 = vunpack.c.h.b16 %v1013
    %v2311 = vunpack.c.l.b16 %v1014
    %v2312 = vunpack.c.h.b16 %v1014
    %v2313 = vunpack.c.l.b16 %v1015
    %v2314 = vunpack.c.h.b16 %v1015
    %v2315 = vunpack.c.l.b16 %v1016
    %v2316 = vunpack.c.h.b16 %v1016
    %v2317 = vunpack.c.l.b16 %v1017
    %v2318 = vunpack.c.h.b16 %v1017
    %v2319 = vunpack.c.l.b16 %v1018
    %v2320 = vunpack.c.h.b16 %v1018
    %v2321 = vunpack.c.l.b16 %v1019
    %v2322 = vunpack.c.h.b16 %v1019
    %v2323 = vunpack.c.l.b16 %v1020
    %v2324 = vunpack.c.h.b16 %v1020
    %v2325 = vunpack.c.l.b16 %v1021
    %v2326 = vunpack.c.h.b16 %v1021
    %v2327 = vunpack.c.l.b16 %v1022
    %v2328 = vunpack.c.h.b16 %v1022
    %v2329 = vunpack.c.l.b16 %v1023
    %v2330 = vunpack.c.h.b16 %v1023
    %v2331 = vunpack.c.l.b16 %v1024
    %v2332 = vunpack.c.h.b16 %v1024
    %v2333 = vunpack.c.l.b16 %v1025
    %v2334 = vunpack.c.h.b16 %v1025
    %v2335 = vunpack.c.l.b16 %v1026
    %v2336 = vunpack.c.h.b16 %v1026
    %v2337 = vunpack.c.l.b16 %v1027
    %v2338 = vunpack.c.h.b16 %v1027
    %v2339 = vunpack.c.l.b16 %v1028
    %v2340 = vunpack.c.h.b16 %v1028
    %v2341 = vunpack.c.l.b16 %v1029
    %v2342 = vunpack.c.h.b16 %v1029
    %v2343 = vunpack.c.l.b16 %v1030
    %v2344 = vunpack.c.h.b16 %v1030
    %v2345 = vunpack.c.l.b16 %v1031
    %v2346 = vunpack.c.h.b16 %v1031
    %v2347 = vunpack.c.l.b16 %v1032
    %v2348 = vunpack.c.h.b16 %v1032
    %v2349 = vunpack.c.l.b16 %v1033
    %v2350 = vunpack.c.h.b16 %v1033
    %v2351 = vunpack.c.l.b16 %v1034
    %v2352 = vunpack.c.h.b16 %v1034
    %v2353 = vunpack.c.l.b16 %v1035
    %v2354 = vunpack.c.h.b16 %v1035
    %v2355 = vunpack.c.l.b16 %v1036
    %v2356 = vunpack.c.h.b16 %v1036
    %v2357 = vunpack.c.l.b16 %v1037
    %v2358 = vunpack.c.h.b16 %v1037
    %v2359 = vunpack.c.l.b16 %v1038
    %v2360 = vunpack.c.h.b16 %v1038
    %v2361 = vunpack.c.l.b16 %v1039
    %v2362 = vunpack.c.h.b16 %v1039
    %v2363 = vunpack.c.l.b16 %v1040
    %v2364 = vunpack.c.h.b16 %v1040
    %v2365 = vunpack.c.l.b16 %v1041
    %v2366 = vunpack.c.h.b16 %v1041
    %v2367 = vunpack.c.l.b16 %v1042
    %v2368 = vunpack.c.h.b16 %v1042
    %v2369 = vunpack.c.l.b16 %v1043
    %v2370 = vunpack.c.h.b16 %v1043
    %v2371 = vunpack.c.l.b16 %v1044
    %v2372 = vunpack.c.h.b16 %v1044
    %v2373 = vunpack.c.l.b16 %v1045
    %v2374 = vunpack.c.h.b16 %v1045
    %v2375 = vunpack.c.l.b16 %v1046
    %v2376 = vunpack.c.h.b16 %v1046
    %v2377 = vunpack.c.l.b16 %v1047
    %v2378 = vunpack.c.h.b16 %v1047
    %v2379 = vunpack.c.l.b16 %v1048
    %v2380 = vunpack.c.h.b16 %v1048
    %v2381 = vunpack.c.l.b16 %v1049
    %v2382 = vunpack.c.h.b16 %v1049
    %v2383 = vunpack.c.l.b16 %v1050
    %v2384 = vunpack.c.h.b16 %v1050
    %v2385 = vunpack.c.l.b16 %v1051
    %v2386 = vunpack.c.h.b16 %v1051
    %v2387 = vunpack.c.l.b16 %v1052
    %v2388 = vunpack.c.h.b16 %v1052
    %v2389 = vunpack.c.l.b16 %v1053
    %v2390 = vunpack.c.h.b16 %v1053
    %v2391 = vunpack.c.l.b16 %v1054
    %v2392 = vunpack.c.h.b16 %v1054
    %v2393 = vunpack.c.l.b16 %v1055
    %v2394 = vunpack.c.h.b16 %v1055
    %v2395 = vunpack.c.l.b16 %v1056
    %v2396 = vunpack.c.h.b16 %v1056
    %v2397 = vunpack.c.l.b16 %v1057
    %v2398 = vunpack.c.h.b16 %v1057
    %v2399 = vunpack.c.l.b16 %v1058
    %v2400 = vunpack.c.h.b16 %v1058
    %v2401 = vunpack.c.l.b16 %v1059
    %v2402 = vunpack.c.h.b16 %v1059
    %v2403 = vunpack.c.l.b16 %v1060
    %v2404 = vunpack.c.h.b16 %v1060
    %v2405 = vunpack.c.l.b16 %v1061
    %v2406 = vunpack.c.h.b16 %v1061
    %v2407 = vunpack.c.l.b16 %v1062
    %v2408 = vunpack.c.h.b16 %v1062
    %v2409 = vunpack.c.l.b16 %v1063
    %v2410 = vunpack.c.h.b16 %v1063
    %v2411 = vunpack.c.l.b16 %v1064
    %v2412 = vunpack.c.h.b16 %v1064
    %v2413 = vunpack.c.l.b16 %v1065
    %v2414 = vunpack.c.h.b16 %v1065
    %v2415 = vunpack.c.l.b16 %v1066
    %v2416 = vunpack.c.h.b16 %v1066
    %v2417 = vunpack.c.l.b16 %v1067
    %v2418 = vunpack.c.h.b16 %v1067
    %v2419 = vunpack.c.l.b16 %v1068
    %v2420 = vunpack.c.h.b16 %v1068
    %v2421 = vunpack.c.l.b16 %v1069
    %v2422 = vunpack.c.h.b16 %v1069
    %v2423 = vunpack.c.l.b16 %v1070
    %v2424 = vunpack.c.h.b16 %v1070
    %v2425 = vunpack.c.l.b16 %v1071
    %v2426 = vunpack.c.h.b16 %v1071
    %v2427 = vunpack.c.l.b16 %v1072
    %v2428 = vunpack.c.h.b16 %v1072
    %v2429 = vunpack.c.l.b16 %v1073
    %v2430 = vunpack.c.h.b16 %v1073
    %v2431 = vunpack.c.l.b16 %v1074
    %v2432 = vunpack.c.h.b16 %v1074
    %v2433 = vunpack.c.l.b16 %v1075
    %v2434 = vunpack.c.h.b16 %v1075
    %v2435 = vunpack.c.l.b16 %v1076
    %v2436 = vunpack.c.h.b16 %v1076
    %v2437 = vunpack.c.l.b16 %v1077
    %v2438 = vunpack.c.h.b16 %v1077
    %v2439 = vunpack.c.l.b16 %v1078
    %v2440 = vunpack.c.h.b16 %v1078
    %v2441 = vunpack.c.l.b16 %v1079
    %v2442 = vunpack.c.h.b16 %v1079
    %v2443 = vunpack.c.l.b16 %v1080
    %v2444 = vunpack.c.h.b16 %v1080
    %v2445 = vunpack.c.l.b16 %v1081
    %v2446 = vunpack.c.h.b16 %v1081
    %v2447 = vunpack.c.l.b16 %v1082
    %v2448 = vunpack.c.h.b16 %v1082
    %v2449 = vunpack.c.l.b16 %v1083
    %v2450 = vunpack.c.h.b16 %v1083
    %v2451 = vunpack.c.l.b16 %v1084
    %v2452 = vunpack.c.h.b16 %v1084
    %v2453 = vunpack.c.l.b16 %v1085
    %v2454 = vunpack.c.h.b16 %v1085
    %v2455 = vunpack.c.l.b16 %v1086
    %v2456 = vunpack.c.h.b16 %v1086
    %v2457 = vunpack.c.l.b16 %v1087
    %v2458 = vunpack.c.h.b16 %v1087
    %v2459 = vunpack.c.l.b16 %v1088
    %v2460 = vunpack.c.h.b16 %v1088
    %v2461 = vunpack.c.l.b16 %v1089
    %v2462 = vunpack.c.h.b16 %v1089
    %v2463 = vunpack.c.l.b16 %v1090
    %v2464 = vunpack.c.h.b16 %v1090
    %v2465 = vunpack.c.l.b16 %v1091
    %v2466 = vunpack.c.h.b16 %v1091
    %v2467 = vunpack.c.l.b16 %v1092
    %v2468 = vunpack.c.h.b16 %v1092
    %v2469 = vunpack.c.l.b16 %v1093
    %v2470 = vunpack.c.h.b16 %v1093
    %v2471 = vunpack.c.l.b16 %v1094
    %v2472 = vunpack.c.h.b16 %v1094
    %v2473 = vunpack.c.l.b16 %v1095
    %v2474 = vunpack.c.h.b16 %v1095
    %v2475 = vunpack.c.l.b16 %v1096
    %v2476 = vunpack.c.h.b16 %v1096
    %v2477 = vunpack.c.l.b16 %v1097
    %v2478 = vunpack.c.h.b16 %v1097
    %v2479 = vunpack.c.l.b16 %v1098
    %v2480 = vunpack.c.h.b16 %v1098
    %v2481 = vunpack.c.l.b16 %v1099
    %v2482 = vunpack.c.h.b16 %v1099
    %v2483 = vunpack.c.l.b16 %v1100
    %v2484 = vunpack.c.h.b16 %v1100
    %v2485 = vunpack.c.l.b16 %v1101
    %v2486 = vunpack.c.h.b16 %v1101
    %v2487 = vunpack.c.l.b16 %v1102
    %v2488 = vunpack.c.h.b16 %v1102
    %v2489 = vunpack.c.l.b16 %v1103
    %v2490 = vunpack.c.h.b16 %v1103
    %v2491 = vunpack.c.l.b16 %v1104
    %v2492 = vunpack.c.h.b16 %v1104
    %v2493 = vunpack.c.l.b16 %v1105
    %v2494 = vunpack.c.h.b16 %v1105
    %v2495 = vunpack.c.l.b16 %v1106
    %v2496 = vunpack.c.h.b16 %v1106
    %v2497 = vunpack.c.l.b16 %v1107
    %v2498 = vunpack.c.h.b16 %v1107
    %v2499 = vunpack.c.l.b16 %v1108
    %v2500 = vunpack.c.h.b16 %v1108
    %v2501 = vunpack.c.l.b16 %v1109
    %v2502 = vunpack.c.h.b16 %v1109
    %v2503 = vunpack.c.l.b16 %v1110
    %v2504 = vunpack.c.h.b16 %v1110
    %v2505 = vunpack.c.l.b16 %v1111
    %v2506 = vunpack.c.h.b16 %v1111
    %v2507 = vunpack.c.l.b16 %v1112
    %v2508 = vunpack.c.h.b16 %v1112
    %v2509 = vunpack.c.l.b16 %v1113
    %v2510 = vunpack.c.h.b16 %v1113
    %v2511 = vunpack.c.l.b16 %v1114
    %v2512 = vunpack.c.h.b16 %v1114
    %v2513 = vunpack.c.l.b16 %v1115
    %v2514 = vunpack.c.h.b16 %v1115
    %v2515 = vunpack.c.l.b16 %v1116
    %v2516 = vunpack.c.h.b16 %v1116
    %v2517 = vunpack.c.l.b16 %v1117
    %v2518 = vunpack.c.h.b16 %v1117
    %v2519 = vunpack.c.l.b16 %v1118
    %v2520 = vunpack.c.h.b16 %v1118
    %v2521 = vunpack.c.l.b16 %v1119
    %v2522 = vunpack.c.h.b16 %v1119
    %v2523 = vunpack.c.l.b16 %v1120
    %v2524 = vunpack.c.h.b16 %v1120
    %v2525 = vunpack.c.l.b16 %v1121
    %v2526 = vunpack.c.h.b16 %v1121
    %v2527 = vunpack.c.l.b16 %v1122
    %v2528 = vunpack.c.h.b16 %v1122
    %v2529 = vunpack.c.l.b16 %v1123
    %v2530 = vunpack.c.h.b16 %v1123
    %v2531 = vunpack.c.l.b16 %v1124
    %v2532 = vunpack.c.h.b16 %v1124
    %v2533 = vunpack.c.l.b16 %v1125
    %v2534 = vunpack.c.h.b16 %v1125
    %v2535 = vunpack.c.l.b16 %v1126
    %v2536 = vunpack.c.h.b16 %v1126
    %v2537 = vunpack.c.l.b16 %v1127
    %v2538 = vunpack.c.h.b16 %v1127
    %v2539 = vunpack.c.l.b16 %v1128
    %v2540 = vunpack.c.h.b16 %v1128
    %v2541 = vunpack.c.l.b16 %v1129
    %v2542 = vunpack.c.h.b16 %v1129
    %v2543 = vunpack.c.l.b16 %v1130
    %v2544 = vunpack.c.h.b16 %v1130
    %v2545 = vunpack.c.l.b16 %v1131
    %v2546 = vunpack.c.h.b16 %v1131
    %v2547 = vunpack.c.l.b16 %v1132
    %v2548 = vunpack.c.h.b16 %v1132
    %v2549 = vunpack.c.l.b16 %v1133
    %v2550 = vunpack.c.h.b16 %v1133
    %v2551 = vunpack.c.l.b16 %v1134
    %v2552 = vunpack.c.h.b16 %v1134
    %v2553 = vunpack.c.l.b16 %v1135
    %v2554 = vunpack.c.h.b16 %v1135
    %v2555 = vunpack.c.l.b16 %v1136
    %v2556 = vunpack.c.h.b16 %v1136
    %v2557 = vunpack.c.l.b16 %v1137
    %v2558 = vunpack.c.h.b16 %v1137
    %v2559 = vunpack.c.l.b16 %v1138
    %v2560 = vunpack.c.h.b16 %v1138
    %v2561 = vunpack.c.l.b16 %v1139
    %v2562 = vunpack.c.h.b16 %v1139
    %v2563 = vunpack.c.l.b16 %v1140
    %v2564 = vunpack.c.h.b16 %v1140
    %v2565 = vunpack.c.l.b16 %v1141
    %v2566 = vunpack.c.h.b16 %v1141
    %v2567 = vunpack.c.l.b16 %v1142
    %v2568 = vunpack.c.h.b16 %v1142
    %v2569 = vunpack.c.l.b16 %v1143
    %v2570 = vunpack.c.h.b16 %v1143
    %v2571 = vunpack.c.l.b16 %v1144
    %v2572 = vunpack.c.h.b16 %v1144
    %v2573 = vunpack.c.l.b16 %v1145
    %v2574 = vunpack.c.h.b16 %v1145
    %v2575 = vunpack.c.l.b16 %v1146
    %v2576 = vunpack.c.h.b16 %v1146
    %v2577 = vunpack.c.l.b16 %v1147
    %v2578 = vunpack.c.h.b16 %v1147
    %v2579 = vunpack.c.l.b16 %v1148
    %v2580 = vunpack.c.h.b16 %v1148
    %v2581 = vunpack.c.l.b16 %v1149
    %v2582 = vunpack.c.h.b16 %v1149
    %v2583 = vunpack.c.l.b16 %v1150
    %v2584 = vunpack.c.h.b16 %v1150
    %v2585 = vunpack.c.l.b16 %v1151
    %v2586 = vunpack.c.h.b16 %v1151
    %v2587 = vunpack.c.l.b16 %v1152
    %v2588 = vunpack.c.h.b16 %v1152
    %v2589 = vunpack.c.l.b16 %v1153
    %v2590 = vunpack.c.h.b16 %v1153
    %v2591 = vunpack.c.l.b16 %v1154
    %v2592 = vunpack.c.h.b16 %v1154
    %v2593 = vunpack.c.l.b16 %v1155
    %v2594 = vunpack.c.h.b16 %v1155
    %v2595 = vunpack.c.l.b16 %v1156
    %v2596 = vunpack.c.h.b16 %v1156
    %v2597 = vunpack.c.l.b16 %v1157
    %v2598 = vunpack.c.h.b16 %v1157
    %v2599 = vunpack.c.l.b16 %v1158
    %v2600 = vunpack.c.h.b16 %v1158
    %v2601 = vunpack.c.l.b16 %v1159
    %v2602 = vunpack.c.h.b16 %v1159
    %v2603 = vunpack.c.l.b16 %v1160
    %v2604 = vunpack.c.h.b16 %v1160
    %v2605 = vunpack.c.l.b16 %v1161
    %v2606 = vunpack.c.h.b16 %v1161
    %v2607 = vunpack.c.l.b16 %v1162
    %v2608 = vunpack.c.h.b16 %v1162
    %v2609 = vunpack.c.l.b16 %v1163
    %v2610 = vunpack.c.h.b16 %v1163
    %v2611 = vunpack.c.l.b16 %v1164
    %v2612 = vunpack.c.h.b16 %v1164
    %v2613 = vunpack.c.l.b16 %v1165
    %v2614 = vunpack.c.h.b16 %v1165
    %v2615 = vunpack.c.l.b16 %v1166
    %v2616 = vunpack.c.h.b16 %v1166
    %v2617 = vunpack.c.l.b16 %v1167
    %v2618 = vunpack.c.h.b16 %v1167
    %v2619 = vunpack.c.l.b16 %v1168
    %v2620 = vunpack.c.h.b16 %v1168
    %v2621 = vunpack.c.l.b16 %v1169
    %v2622 = vunpack.c.h.b16 %v1169
    %v2623 = vunpack.c.l.b16 %v1170
    %v2624 = vunpack.c.h.b16 %v1170
    %v2625 = vunpack.c.l.b16 %v1171
    %v2626 = vunpack.c.h.b16 %v1171
    %v2627 = vunpack.c.l.b16 %v1172
    %v2628 = vunpack.c.h.b16 %v1172
    %v2629 = vunpack.c.l.b16 %v1173
    %v2630 = vunpack.c.h.b16 %v1173
    %v2631 = vunpack.c.l.b16 %v1174
    %v2632 = vunpack.c.h.b16 %v1174
    %v2633 = vunpack.c.l.b16 %v1175
    %v2634 = vunpack.c.h.b16 %v1175
    %v2635 = vunpack.c.l.b16 %v1176
    %v2636 = vunpack.c.h.b16 %v1176
    %v2637 = vunpack.c.l.b16 %v1177
    %v2638 = vunpack.c.h.b16 %v1177
    %v2639 = vunpack.c.l.b16 %v1178
    %v2640 = vunpack.c.h.b16 %v1178
    %v2641 = vunpack.c.l.b16 %v1179
    %v2642 = vunpack.c.h.b16 %v1179
    %v2643 = vunpack.c.l.b16 %v1180
    %v2644 = vunpack.c.h.b16 %v1180
    %v2645 = vunpack.c.l.b16 %v1181
    %v2646 = vunpack.c.h.b16 %v1181
    %v2647 = vunpack.c.l.b16 %v1182
    %v2648 = vunpack.c.h.b16 %v1182
    %v2649 = vunpack.c.l.b16 %v1183
    %v2650 = vunpack.c.h.b16 %v1183
    %v2651 = vunpack.c.l.b16 %v1184
    %v2652 = vunpack.c.h.b16 %v1184
    %v2653 = vunpack.c.l.b16 %v1185
    %v2654 = vunpack.c.h.b16 %v1185
    %v2655 = vunpack.c.l.b16 %v1186
    %v2656 = vunpack.c.h.b16 %v1186
    %v2657 = vunpack.c.l.b16 %v1187
    %v2658 = vunpack.c.h.b16 %v1187
    %v2659 = vunpack.c.l.b16 %v1188
    %v2660 = vunpack.c.h.b16 %v1188
    %v2661 = vunpack.c.l.b16 %v1189
    %v2662 = vunpack.c.h.b16 %v1189
    %v2663 = vunpack.c.l.b16 %v1190
    %v2664 = vunpack.c.h.b16 %v1190
    %v2665 = vunpack.c.l.b16 %v1191
    %v2666 = vunpack.c.h.b16 %v1191
    %v2667 = vunpack.c.l.b16 %v1192
    %v2668 = vunpack.c.h.b16 %v1192
    %v2669 = vunpack.c.l.b16 %v1193
    %v2670 = vunpack.c.h.b16 %v1193
    %v2671 = vunpack.c.l.b16 %v1194
    %v2672 = vunpack.c.h.b16 %v1194
    %v2673 = vunpack.c.l.b16 %v1195
    %v2674 = vunpack.c.h.b16 %v1195
    %v2675 = vunpack.c.l.b16 %v1196
    %v2676 = vunpack.c.h.b16 %v1196
    %v2677 = vunpack.c.l.b16 %v1197
    %v2678 = vunpack.c.h.b16 %v1197
    %v2679 = vunpack.c.l.b16 %v1198
    %v2680 = vunpack.c.h.b16 %v1198
    %v2681 = vunpack.c.l.b16 %v1199
    %v2682 = vunpack.c.h.b16 %v1199
    %v2683 = vunpack.c.l.b16 %v1200
    %v2684 = vunpack.c.h.b16 %v1200
    %v2685 = vunpack.c.l.b16 %v1201
    %v2686 = vunpack.c.h.b16 %v1201
    %v2687 = vunpack.c.l.b16 %v1202
    %v2688 = vunpack.c.h.b16 %v1202
    %v2689 = vunpack.c.l.b16 %v1203
    %v2690 = vunpack.c.h.b16 %v1203
    %v2691 = vunpack.c.l.b16 %v1204
    %v2692 = vunpack.c.h.b16 %v1204
    %v2693 = vunpack.c.l.b16 %v1205
    %v2694 = vunpack.c.h.b16 %v1205
    %v2695 = vunpack.c.l.b16 %v1206
    %v2696 = vunpack.c.h.b16 %v1206
    %v2697 = vunpack.c.l.b16 %v1207
    %v2698 = vunpack.c.h.b16 %v1207
    %v2699 = vunpack.c.l.b16 %v1208
    %v2700 = vunpack.c.h.b16 %v1208
    %v2701 = vunpack.c.l.b16 %v1209
    %v2702 = vunpack.c.h.b16 %v1209
    %v2703 = vunpack.c.l.b16 %v1210
    %v2704 = vunpack.c.h.b16 %v1210
    %v2705 = vunpack.c.l.b16 %v1211
    %v2706 = vunpack.c.h.b16 %v1211
    %v2707 = vunpack.c.l.b16 %v1212
    %v2708 = vunpack.c.h.b16 %v1212
    %v2709 = vunpack.c.l.b16 %v1213
    %v2710 = vunpack.c.h.b16 %v1213
    %v2711 = vunpack.c.l.b16 %v1214
    %v2712 = vunpack.c.h.b16 %v1214
    %v2713 = vunpack.c.l.b16 %v1215
    %v2714 = vunpack.c.h.b16 %v1215
    %v2715 = vunpack.c.l.b16 %v1216
    %v2716 = vunpack.c.h.b16 %v1216
    %v2717 = vunpack.c.l.b16 %v1217
    %v2718 = vunpack.c.h.b16 %v1217
    %v2719 = vunpack.c.l.b16 %v1218
    %v2720 = vunpack.c.h.b16 %v1218
    %v2721 = vunpack.c.l.b16 %v1219
    %v2722 = vunpack.c.h.b16 %v1219
    %v2723 = vunpack.c.l.b16 %v1220
    %v2724 = vunpack.c.h.b16 %v1220
    %v2725 = vunpack.c.l.b16 %v1221
    %v2726 = vunpack.c.h.b16 %v1221
    %v2727 = vunpack.c.l.b16 %v1222
    %v2728 = vunpack.c.h.b16 %v1222
    %v2729 = vunpack.c.l.b16 %v1223
    %v2730 = vunpack.c.h.b16 %v1223
    %v2731 = vunpack.c.l.b16 %v1224
    %v2732 = vunpack.c.h.b16 %v1224
    %v2733 = vunpack.c.l.b16 %v1225
    %v2734 = vunpack.c.h.b16 %v1225
    %v2735 = vunpack.c.l.b16 %v1226
    %v2736 = vunpack.c.h.b16 %v1226
    %v2737 = vunpack.c.l.b16 %v1227
    %v2738 = vunpack.c.h.b16 %v1227
    %v2739 = vunpack.c.l.b16 %v1228
    %v2740 = vunpack.c.h.b16 %v1228
    %v2741 = vunpack.c.l.b16 %v1229
    %v2742 = vunpack.c.h.b16 %v1229
    %v2743 = vunpack.c.l.b16 %v1230
    %v2744 = vunpack.c.h.b16 %v1230
    %v2745 = vunpack.c.l.b16 %v1231
    %v2746 = vunpack.c.h.b16 %v1231
    %v2747 = vunpack.c.l.b16 %v1232
    %v2748 = vunpack.c.h.b16 %v1232
    %v2749 = vunpack.c.l.b16 %v1233
    %v2750 = vunpack.c.h.b16 %v1233
    %v2751 = vunpack.c.l.b16 %v1234
    %v2752 = vunpack.c.h.b16 %v1234
    %v2753 = vunpack.c.l.b16 %v1235
    %v2754 = vunpack.c.h.b16 %v1235
    %v2755 = vunpack.c.l.b16 %v1236
    %v2756 = vunpack.c.h.b16 %v1236
    %v2757 = vunpack.c.l.b16 %v1237
    %v2758 = vunpack.c.h.b16 %v1237
    %v2759 = vunpack.c.l.b16 %v1238
    %v2760 = vunpack.c.h.b16 %v1238
    %v2761 = vunpack.c.l.b16 %v1239
    %v2762 = vunpack.c.h.b16 %v1239
    %v2763 = vunpack.c.l.b16 %v1240
    %v2764 = vunpack.c.h.b16 %v1240
    %v2765 = vunpack.c.l.b16 %v1241
    %v2766 = vunpack.c.h.b16 %v1241
    %v2767 = vunpack.c.l.b16 %v1242
    %v2768 = vunpack.c.h.b16 %v1242
    %v2769 = vunpack.c.l.b16 %v1243
    %v2770 = vunpack.c.h.b16 %v1243
    %v2771 = vunpack.c.l.b16 %v1244
    %v2772 = vunpack.c.h.b16 %v1244
    %v2773 = vunpack.c.l.b16 %v1245
    %v2774 = vunpack.c.h.b16 %v1245
    %v2775 = vunpack.c.l.b16 %v1246
    %v2776 = vunpack.c.h.b16 %v1246
    %v2777 = vunpack.c.l.b16 %v1247
    %v2778 = vunpack.c.h.b16 %v1247
    %v2779 = vunpack.c.l.b16 %v1248
    %v2780 = vunpack.c.h.b16 %v1248
    %v2781 = vunpack.c.l.b16 %v1249
    %v2782 = vunpack.c.h.b16 %v1249
    %v2783 = vunpack.c.l.b16 %v1250
    %v2784 = vunpack.c.h.b16 %v1250
    %v2785 = vunpack.c.l.b16 %v1251
    %v2786 = vunpack.c.h.b16 %v1251
    %v2787 = vunpack.c.l.b16 %v1252
    %v2788 = vunpack.c.h.b16 %v1252
    %v2789 = vunpack.c.l.b16 %v1253
    %v2790 = vunpack.c.h.b16 %v1253
    %v2791 = vunpack.c.l.b16 %v1254
    %v2792 = vunpack.c.h.b16 %v1254
    %v2793 = vunpack.c.l.b16 %v1255
    %v2794 = vunpack.c.h.b16 %v1255
    %v2795 = vunpack.c.l.b16 %v1256
    %v2796 = vunpack.c.h.b16 %v1256
    %v2797 = vunpack.c.l.b16 %v1257
    %v2798 = vunpack.c.h.b16 %v1257
    %v2799 = vunpack.c.l.b16 %v1258
    %v2800 = vunpack.c.h.b16 %v1258
    %v2801 = vunpack.c.l.b16 %v1259
    %v2802 = vunpack.c.h.b16 %v1259
    %v2803 = vunpack.c.l.b16 %v1260
    %v2804 = vunpack.c.h.b16 %v1260
    %v2805 = vunpack.c.l.b16 %v1261
    %v2806 = vunpack.c.h.b16 %v1261
    %v2807 = vunpack.c.l.b16 %v1262
    %v2808 = vunpack.c.h.b16 %v1262
    %v2809 = vunpack.c.l.b16 %v1263
    %v2810 = vunpack.c.h.b16 %v1263
    %v2811 = vunpack.c.l.b16 %v1264
    %v2812 = vunpack.c.h.b16 %v1264
    %v2813 = vunpack.c.l.b16 %v1265
    %v2814 = vunpack.c.h.b16 %v1265
    %v2815 = vunpack.c.l.b16 %v1266
    %v2816 = vunpack.c.h.b16 %v1266
    %v2817 = vunpack.c.l.b16 %v1267
    %v2818 = vunpack.c.h.b16 %v1267
    %v2819 = vunpack.c.l.b16 %v1268
    %v2820 = vunpack.c.h.b16 %v1268
    %v2821 = vunpack.c.l.b16 %v1269
    %v2822 = vunpack.c.h.b16 %v1269
    %v2823 = vunpack.c.l.b16 %v1270
    %v2824 = vunpack.c.h.b16 %v1270
    %v2825 = vunpack.c.l.b16 %v1271
    %v2826 = vunpack.c.h.b16 %v1271
    %v2827 = vunpack.c.l.b16 %v1272
    %v2828 = vunpack.c.h.b16 %v1272
    %v2829 = vunpack.c.l.b16 %v1273
    %v2830 = vunpack.c.h.b16 %v1273
    %v2831 = vunpack.c.l.b16 %v1274
    %v2832 = vunpack.c.h.b16 %v1274
    %v2833 = vunpack.c.l.b16 %v1275
    %v2834 = vunpack.c.h.b16 %v1275
    %v2835 = vunpack.c.l.b16 %v1276
    %v2836 = vunpack.c.h.b16 %v1276
    %v2837 = vunpack.c.l.b16 %v1277
    %v2838 = vunpack.c.h.b16 %v1277
    %v2839 = vunpack.c.l.b16 %v1278
    %v2840 = vunpack.c.h.b16 %v1278
    %v2841 = vunpack.c.l.b16 %v1279
    %v2842 = vunpack.c.h.b16 %v1279
    %v2843 = vunpack.c.l.b16 %v1280
    %v2844 = vunpack.c.h.b16 %v1280
    %v2845 = vunpack.c.l.b16 %v1281
    %v2846 = vunpack.c.h.b16 %v1281
    %v2847 = vunpack.c.l.b16 %v1282
    %v2848 = vunpack.c.h.b16 %v1282
    %v2849 = vunpack.c.l.b16 %v1283
    %v2850 = vunpack.c.h.b16 %v1283
    %v2851 = vunpack.c.l.b16 %v1284
    %v2852 = vunpack.c.h.b16 %v1284
    %v2853 = vunpack.c.l.b16 %v1285
    %v2854 = vunpack.c.h.b16 %v1285
    %v2855 = vunpack.c.l.b16 %v1286
    %v2856 = vunpack.c.h.b16 %v1286
    %v2857 = vunpack.c.l.b16 %v1287
    %v2858 = vunpack.c.h.b16 %v1287
    %v2859 = vunpack.c.l.b16 %v1288
    %v2860 = vunpack.c.h.b16 %v1288
    %v2861 = vunpack.c.l.b16 %v1289
    %v2862 = vunpack.c.h.b16 %v1289
    %v2863 = vunpack.c.l.b16 %v1290
    %v2864 = vunpack.c.h.b16 %v1290
    %v2865 = vunpack.c.l.b16 %v1291
    %v2866 = vunpack.c.h.b16 %v1291
    %v2867 = vunpack.c.l.b16 %v1292
    %v2868 = vunpack.c.h.b16 %v1292
    %v2869 = vunpack.c.l.b16 %v1293
    %v2870 = vunpack.c.h.b16 %v1293
    %v2871 = vunpack.c.l.b16 %v1294
    %v2872 = vunpack.c.h.b16 %v1294
    %v2873 = vpack.c.b16 %v1857, %v1849
    %v2874 = vpack.c.b16 %v1858, %v1850
    %v2875 = vpack.c.b16 %v1859, %v1851
    %v2876 = vpack.c.b16 %v1860, %v1852
    %v2877 = vpack.c.b16 %v1861, %v1853
    %v2878 = vpack.c.b16 %v1862, %v1854
    %v2879 = vpack.c.b16 %v1863, %v1855
    %v2880 = vpack.c.b16 %v1864, %v1856
    %v2881 = vpack.c.b16 %v1873, %v1865
    %v2882 = vpack.c.b16 %v1874, %v1866
    %v2883 = vpack.c.b16 %v1875, %v1867
    %v2884 = vpack.c.b16 %v1876, %v1868
    %v2885 = vpack.c.b16 %v1877, %v1869
    %v2886 = vpack.c.b16 %v1878, %v1870
    %v2887 = vpack.c.b16 %v1879, %v1871
    %v2888 = vpack.c.b16 %v1880, %v1872
    %v2889 = vpack.c.b16 %v1889, %v1881
    %v2890 = vpack.c.b16 %v1890, %v1882
    %v2891 = vpack.c.b16 %v1891, %v1883
    %v2892 = vpack.c.b16 %v1892, %v1884
    %v2893 = vpack.c.b16 %v1893, %v1885
    %v2894 = vpack.c.b16 %v1894, %v1886
    %v2895 = vpack.c.b16 %v1895, %v1887
    %v2896 = vpack.c.b16 %v1896, %v1888
    %v2897 = vpack.c.b16 %v1905, %v1897
    %v2898 = vpack.c.b16 %v1906, %v1898
    %v2899 = vpack.c.b16 %v1907, %v1899
    %v2900 = vpack.c.b16 %v1908, %v1900
    %v2901 = vpack.c.b16 %v1909, %v1901
    %v2902 = vpack.c.b16 %v1910, %v1902
    %v2903 = vpack.c.b16 %v1911, %v1903
    %v2904 = vpack.c.b16 %v1912, %v1904
    %v2905 = vpack.c.b16 %v1921, %v1913
    %v2906 = vpack.c.b16 %v1922, %v1914
    %v2907 = vpack.c.b16 %v1923, %v1915
    %v2908 = vpack.c.b16 %v1924, %v1916
    %v2909 = vpack.c.b16 %v1925, %v1917
    %v2910 = vpack.c.b16 %v1926, %v1918
    %v2911 = vpack.c.b16 %v1927, %v1919
    %v2912 = vpack.c.b16 %v1928, %v1920
    %v2913 = vpack.c.b16 %v1937, %v1929
    %v2914 = vpack.c.b16 %v1938, %v1930
    %v2915 = vpack.c.b16 %v1939, %v1931
    %v2916 = vpack.c.b16 %v1940, %v1932
    %v2917 = vpack.c.b16 %v1941, %v1933
    %v2918 = vpack.c.b16 %v1942, %v1934
    %v2919 = vpack.c.b16 %v1943, %v1935
    %v2920 = vpack.c.b16 %v1944, %v1936
    %v2921 = vpack.c.b16 %v1953, %v1945
    %v2922 = vpack.c.b16 %v1954, %v1946
    %v2923 = vpack.c.b16 %v1955, %v1947
    %v2924 = vpack.c.b16 %v1956, %v1948
    %v2925 = vpack.c.b16 %v1957, %v1949
    %v2926 = vpack.c.b16 %v1958, %v1950
    %v2927 = vpack.c.b16 %v1959, %v1951
    %v2928 = vpack.c.b16 %v1960, %v1952
    %v2929 = vpack.c.b16 %v1969, %v1961
    %v2930 = vpack.c.b16 %v1970, %v1962
    %v2931 = vpack.c.b16 %v1971, %v1963
    %v2932 = vpack.c.b16 %v1972, %v1964
    %v2933 = vpack.c.b16 %v1973, %v1965
    %v2934 = vpack.c.b16 %v1974, %v1966
    %v2935 = vpack.c.b16 %v1975, %v1967
    %v2936 = vpack.c.b16 %v1976, %v1968
    %v2937 = vpack.c.b16 %v1985, %v1977
    %v2938 = vpack.c.b16 %v1986, %v1978
    %v2939 = vpack.c.b16 %v1987, %v1979
    %v2940 = vpack.c.b16 %v1988, %v1980
    %v2941 = vpack.c.b16 %v1989, %v1981
    %v2942 = vpack.c.b16 %v1990, %v1982
    %v2943 = vpack.c.b16 %v1991, %v1983
    %v2944 = vpack.c.b16 %v1992, %v1984
    %v2945 = vpack.c.b16 %v2001, %v1993
    %v2946 = vpack.c.b16 %v2002, %v1994
    %v2947 = vpack.c.b16 %v2003, %v1995
    %v2948 = vpack.c.b16 %v2004, %v1996
    %v2949 = vpack.c.b16 %v2005, %v1997
    %v2950 = vpack.c.b16 %v2006, %v1998
    %v2951 = vpack.c.b16 %v2007, %v1999
    %v2952 = vpack.c.b16 %v2008, %v2000
    %v2953 = vpack.c.b16 %v2017, %v2009
    %v2954 = vpack.c.b16 %v2018, %v2010
    %v2955 = vpack.c.b16 %v2019, %v2011
    %v2956 = vpack.c.b16 %v2020, %v2012
    %v2957 = vpack.c.b16 %v2021, %v2013
    %v2958 = vpack.c.b16 %v2022, %v2014
    %v2959 = vpack.c.b16 %v2023, %v2015
    %v2960 = vpack.c.b16 %v2024, %v2016
    %v2961 = vpack.c.b16 %v2033, %v2025
    %v2962 = vpack.c.b16 %v2034, %v2026
    %v2963 = vpack.c.b16 %v2035, %v2027
    %v2964 = vpack.c.b16 %v2036, %v2028
    %v2965 = vpack.c.b16 %v2037, %v2029
    %v2966 = vpack.c.b16 %v2038, %v2030
    %v2967 = vpack.c.b16 %v2039, %v2031
    %v2968 = vpack.c.b16 %v2040, %v2032
    %v2969 = vpack.c.b16 %v2049, %v2041
    %v2970 = vpack.c.b16 %v2050, %v2042
    %v2971 = vpack.c.b16 %v2051, %v2043
    %v2972 = vpack.c.b16 %v2052, %v2044
    %v2973 = vpack.c.b16 %v2053, %v2045
    %v2974 = vpack.c.b16 %v2054, %v2046
    %v2975 = vpack.c.b16 %v2055, %v2047
    %v2976 = vpack.c.b16 %v2056, %v2048
    %v2977 = vpack.c.b16 %v2065, %v2057
    %v2978 = vpack.c.b16 %v2066, %v2058
    %v2979 = vpack.c.b16 %v2067, %v2059
    %v2980 = vpack.c.b16 %v2068, %v2060
    %v2981 = vpack.c.b16 %v2069, %v2061
    %v2982 = vpack.c.b16 %v2070, %v2062
    %v2983 = vpack.c.b16 %v2071, %v2063
    %v2984 = vpack.c.b16 %v2072, %v2064
    %v2985 = vpack.c.b16 %v2081, %v2073
    %v2986 = vpack.c.b16 %v2082, %v2074
    %v2987 = vpack.c.b16 %v2083, %v2075
    %v2988 = vpack.c.b16 %v2084, %v2076
    %v2989 = vpack.c.b16 %v2085, %v2077
    %v2990 = vpack.c.b16 %v2086, %v2078
    %v2991 = vpack.c.b16 %v2087, %v2079
    %v2992 = vpack.c.b16 %v2088, %v2080
    %v2993 = vpack.c.b16 %v2097, %v2089
    %v2994 = vpack.c.b16 %v2098, %v2090
    %v2995 = vpack.c.b16 %v2099, %v2091
    %v2996 = vpack.c.b16 %v2100, %v2092
    %v2997 = vpack.c.b16 %v2101, %v2093
    %v2998 = vpack.c.b16 %v2102, %v2094
    %v2999 = vpack.c.b16 %v2103, %v2095
    %v3000 = vpack.c.b16 %v2104, %v2096
    %v3001 = vpack.c.b16 %v2113, %v2105
    %v3002 = vpack.c.b16 %v2114, %v2106
    %v3003 = vpack.c.b16 %v2115, %v2107
    %v3004 = vpack.c.b16 %v2116, %v2108
    %v3005 = vpack.c.b16 %v2117, %v2109
    %v3006 = vpack.c.b16 %v2118, %v2110
    %v3007 = vpack.c.b16 %v2119, %v2111
    %v3008 = vpack.c.b16 %v2120, %v2112
    %v3009 = vpack.c.b16 %v2129, %v2121
    %v3010 = vpack.c.b16 %v2130, %v2122
    %v3011 = vpack.c.b16 %v2131, %v2123
    %v3012 = vpack.c.b16 %v2132, %v2124
    %v3013 = vpack.c.b16 %v2133, %v2125
    %v3014 = vpack.c.b16 %v2134, %v2126
    %v3015 = vpack.c.b16 %v2135, %v2127
    %v3016 = vpack.c.b16 %v2136, %v2128
    %v3017 = vpack.c.b16 %v2145, %v2137
    %v3018 = vpack.c.b16 %v2146, %v2138
    %v3019 = vpack.c.b16 %v2147, %v2139
    %v3020 = vpack.c.b16 %v2148, %v2140
    %v3021 = vpack.c.b16 %v2149, %v2141
    %v3022 = vpack.c.b16 %v2150, %v2142
    %v3023 = vpack.c.b16 %v2151, %v2143
    %v3024 = vpack.c.b16 %v2152, %v2144
    %v3025 = vpack.c.b16 %v2161, %v2153
    %v3026 = vpack.c.b16 %v2162, %v2154
    %v3027 = vpack.c.b16 %v2163, %v2155
    %v3028 = vpack.c.b16 %v2164, %v2156
    %v3029 = vpack.c.b16 %v2165, %v2157
    %v3030 = vpack.c.b16 %v2166, %v2158
    %v3031 = vpack.c.b16 %v2167, %v2159
    %v3032 = vpack.c.b16 %v2168, %v2160
    %v3033 = vpack.c.b16 %v2177, %v2169
    %v3034 = vpack.c.b16 %v2178, %v2170
    %v3035 = vpack.c.b16 %v2179, %v2171
    %v3036 = vpack.c.b16 %v2180, %v2172
    %v3037 = vpack.c.b16 %v2181, %v2173
    %v3038 = vpack.c.b16 %v2182, %v2174
    %v3039 = vpack.c.b16 %v2183, %v2175
    %v3040 = vpack.c.b16 %v2184, %v2176
    %v3041 = vpack.c.b16 %v2193, %v2185
    %v3042 = vpack.c.b16 %v2194, %v2186
    %v3043 = vpack.c.b16 %v2195, %v2187
    %v3044 = vpack.c.b16 %v2196, %v2188
    %v3045 = vpack.c.b16 %v2197, %v2189
    %v3046 = vpack.c.b16 %v2198, %v2190
    %v3047 = vpack.c.b16 %v2199, %v2191
    %v3048 = vpack.c.b16 %v2200, %v2192
    %v3049 = vpack.c.b16 %v2209, %v2201
    %v3050 = vpack.c.b16 %v2210, %v2202
    %v3051 = vpack.c.b16 %v2211, %v2203
    %v3052 = vpack.c.b16 %v2212, %v2204
    %v3053 = vpack.c.b16 %v2213, %v2205
    %v3054 = vpack.c.b16 %v2214, %v2206
    %v3055 = vpack.c.b16 %v2215, %v2207
    %v3056 = vpack.c.b16 %v2216, %v2208
    %v3057 = vpack.c.b16 %v2225, %v2217
    %v3058 = vpack.c.b16 %v2226, %v2218
    %v3059 = vpack.c.b16 %v2227, %v2219
    %v3060 = vpack.c.b16 %v2228, %v2220
    %v3061 = vpack.c.b16 %v2229, %v2221
    %v3062 = vpack.c.b16 %v2230, %v2222
    %v3063 = vpack.c.b16 %v2231, %v2223
    %v3064 = vpack.c.b16 %v2232, %v2224
    %v3065 = vpack.c.b16 %v2241, %v2233
    %v3066 = vpack.c.b16 %v2242, %v2234
    %v3067 = vpack.c.b16 %v2243, %v2235
    %v3068 = vpack.c.b16 %v2244, %v2236
    %v3069 = vpack.c.b16 %v2245, %v2237
    %v3070 = vpack.c.b16 %v2246, %v2238
    %v3071 = vpack.c.b16 %v2247, %v2239
    %v3072 = vpack.c.b16 %v2248, %v2240
    %v3073 = vpack.c.b16 %v2257, %v2249
    %v3074 = vpack.c.b16 %v2258, %v2250
    %v3075 = vpack.c.b16 %v2259, %v2251
    %v3076 = vpack.c.b16 %v2260, %v2252
    %v3077 = vpack.c.b16 %v2261, %v2253
    %v3078 = vpack.c.b16 %v2262, %v2254
    %v3079 = vpack.c.b16 %v2263, %v2255
    %v3080 = vpack.c.b16 %v2264, %v2256
    %v3081 = vpack.c.b16 %v2273, %v2265
    %v3082 = vpack.c.b16 %v2274, %v2266
    %v3083 = vpack.c.b16 %v2275, %v2267
    %v3084 = vpack.c.b16 %v2276, %v2268
    %v3085 = vpack.c.b16 %v2277, %v2269
    %v3086 = vpack.c.b16 %v2278, %v2270
    %v3087 = vpack.c.b16 %v2279, %v2271
    %v3088 = vpack.c.b16 %v2280, %v2272
    %v3089 = vpack.c.b16 %v2289, %v2281
    %v3090 = vpack.c.b16 %v2290, %v2282
    %v3091 = vpack.c.b16 %v2291, %v2283
    %v3092 = vpack.c.b16 %v2292, %v2284
    %v3093 = vpack.c.b16 %v2293, %v2285
    %v3094 = vpack.c.b16 %v2294, %v2286
    %v3095 = vpack.c.b16 %v2295, %v2287
    %v3096 = vpack.c.b16 %v2296, %v2288
    %v3097 = vpack.c.b16 %v2305, %v2297
    %v3098 = vpack.c.b16 %v2306, %v2298
    %v3099 = vpack.c.b16 %v2307, %v2299
    %v3100 = vpack.c.b16 %v2308, %v2300
    %v3101 = vpack.c.b16 %v2309, %v2301
    %v3102 = vpack.c.b16 %v2310, %v2302
    %v3103 = vpack.c.b16 %v2311, %v2303
    %v3104 = vpack.c.b16 %v2312, %v2304
    %v3105 = vpack.c.b16 %v2321, %v2313
    %v3106 = vpack.c.b16 %v2322, %v2314
    %v3107 = vpack.c.b16 %v2323, %v2315
    %v3108 = vpack.c.b16 %v2324, %v2316
    %v3109 = vpack.c.b16 %v2325, %v2317
    %v3110 = vpack.c.b16 %v2326, %v2318
    %v3111 = vpack.c.b16 %v2327, %v2319
    %v3112 = vpack.c.b16 %v2328, %v2320
    %v3113 = vpack.c.b16 %v2337, %v2329
    %v3114 = vpack.c.b16 %v2338, %v2330
    %v3115 = vpack.c.b16 %v2339, %v2331
    %v3116 = vpack.c.b16 %v2340, %v2332
    %v3117 = vpack.c.b16 %v2341, %v2333
    %v3118 = vpack.c.b16 %v2342, %v2334
    %v3119 = vpack.c.b16 %v2343, %v2335
    %v3120 = vpack.c.b16 %v2344, %v2336
    %v3121 = vpack.c.b16 %v2353, %v2345
    %v3122 = vpack.c.b16 %v2354, %v2346
    %v3123 = vpack.c.b16 %v2355, %v2347
    %v3124 = vpack.c.b16 %v2356, %v2348
    %v3125 = vpack.c.b16 %v2357, %v2349
    %v3126 = vpack.c.b16 %v2358, %v2350
    %v3127 = vpack.c.b16 %v2359, %v2351
    %v3128 = vpack.c.b16 %v2360, %v2352
    %v3129 = vpack.c.b16 %v2369, %v2361
    %v3130 = vpack.c.b16 %v2370, %v2362
    %v3131 = vpack.c.b16 %v2371, %v2363
    %v3132 = vpack.c.b16 %v2372, %v2364
    %v3133 = vpack.c.b16 %v2373, %v2365
    %v3134 = vpack.c.b16 %v2374, %v2366
    %v3135 = vpack.c.b16 %v2375, %v2367
    %v3136 = vpack.c.b16 %v2376, %v2368
    %v3137 = vpack.c.b16 %v2385, %v2377
    %v3138 = vpack.c.b16 %v2386, %v2378
    %v3139 = vpack.c.b16 %v2387, %v2379
    %v3140 = vpack.c.b16 %v2388, %v2380
    %v3141 = vpack.c.b16 %v2389, %v2381
    %v3142 = vpack.c.b16 %v2390, %v2382
    %v3143 = vpack.c.b16 %v2391, %v2383
    %v3144 = vpack.c.b16 %v2392, %v2384
    %v3145 = vpack.c.b16 %v2401, %v2393
    %v3146 = vpack.c.b16 %v2402, %v2394
    %v3147 = vpack.c.b16 %v2403, %v2395
    %v3148 = vpack.c.b16 %v2404, %v2396
    %v3149 = vpack.c.b16 %v2405, %v2397
    %v3150 = vpack.c.b16 %v2406, %v2398
    %v3151 = vpack.c.b16 %v2407, %v2399
    %v3152 = vpack.c.b16 %v2408, %v2400
    %v3153 = vpack.c.b16 %v2417, %v2409
    %v3154 = vpack.c.b16 %v2418, %v2410
    %v3155 = vpack.c.b16 %v2419, %v2411
    %v3156 = vpack.c.b16 %v2420, %v2412
    %v3157 = vpack.c.b16 %v2421, %v2413
    %v3158 = vpack.c.b16 %v2422, %v2414
    %v3159 = vpack.c.b16 %v2423, %v2415
    %v3160 = vpack.c.b16 %v2424, %v2416
    %v3161 = vpack.c.b16 %v2433, %v2425
    %v3162 = vpack.c.b16 %v2434, %v2426
    %v3163 = vpack.c.b16 %v2435, %v2427
    %v3164 = vpack.c.b16 %v2436, %v2428
    %v3165 = vpack.c.b16 %v2437, %v2429
    %v3166 = vpack.c.b16 %v2438, %v2430
    %v3167 = vpack.c.b16 %v2439, %v2431
    %v3168 = vpack.c.b16 %v2440, %v2432
    %v3169 = vpack.c.b16 %v2449, %v2441
    %v3170 = vpack.c.b16 %v2450, %v2442
    %v3171 = vpack.c.b16 %v2451, %v2443
    %v3172 = vpack.c.b16 %v2452, %v2444
    %v3173 = vpack.c.b16 %v2453, %v2445
    %v3174 = vpack.c.b16 %v2454, %v2446
    %v3175 = vpack.c.b16 %v2455, %v2447
    %v3176 = vpack.c.b16 %v2456, %v2448
    %v3177 = vpack.c.b16 %v2465, %v2457
    %v3178 = vpack.c.b16 %v2466, %v2458
    %v3179 = vpack.c.b16 %v2467, %v2459
    %v3180 = vpack.c.b16 %v2468, %v2460
    %v3181 = vpack.c.b16 %v2469, %v2461
    %v3182 = vpack.c.b16 %v2470, %v2462
    %v3183 = vpack.c.b16 %v2471, %v2463
    %v3184 = vpack.c.b16 %v2472, %v2464
    %v3185 = vpack.c.b16 %v2481, %v2473
    %v3186 = vpack.c.b16 %v2482, %v2474
    %v3187 = vpack.c.b16 %v2483, %v2475
    %v3188 = vpack.c.b16 %v2484, %v2476
    %v3189 = vpack.c.b16 %v2485, %v2477
    %v3190 = vpack.c.b16 %v2486, %v2478
    %v3191 = vpack.c.b16 %v2487, %v2479
    %v3192 = vpack.c.b16 %v2488, %v2480
    %v3193 = vpack.c.b16 %v2497, %v2489
    %v3194 = vpack.c.b16 %v2498, %v2490
    %v3195 = vpack.c.b16 %v2499, %v2491
    %v3196 = vpack.c.b16 %v2500, %v2492
    %v3197 = vpack.c.b16 %v2501, %v2493
    %v3198 = vpack.c.b16 %v2502, %v2494
    %v3199 = vpack.c.b16 %v2503, %v2495
    %v3200 = vpack.c.b16 %v2504, %v2496
    %v3201 = vpack.c.b16 %v2513, %v2505
    %v3202 = vpack.c.b16 %v2514, %v2506
    %v3203 = vpack.c.b16 %v2515, %v2507
    %v3204 = vpack.c.b16 %v2516, %v2508
    %v3205 = vpack.c.b16 %v2517, %v2509
    %v3206 = vpack.c.b16 %v2518, %v2510
    %v3207 = vpack.c.b16 %v2519, %v2511
    %v3208 = vpack.c.b16 %v2520, %v2512
    %v3209 = vpack.c.b16 %v2529, %v2521
    %v3210 = vpack.c.b16 %v2530, %v2522
    %v3211 = vpack.c.b16 %v2531, %v2523
    %v3212 = vpack.c.b16 %v2532, %v2524
    %v3213 = vpack.c.b16 %v2533, %v2525
    %v3214 = vpack.c.b16 %v2534, %v2526
    %v3215 = vpack.c.b16 %v2535, %v2527
    %v3216 = vpack.c.b16 %v2536, %v2528
    %v3217 = vpack.c.b16 %v2545, %v2537
    %v3218 = vpack.c.b16 %v2546, %v2538
    %v3219 = vpack.c.b16 %v2547, %v2539
    %v3220 = vpack.c.b16 %v2548, %v2540
    %v3221 = vpack.c.b16 %v2549, %v2541
    %v3222 = vpack.c.b16 %v2550, %v2542
    %v3223 = vpack.c.b16 %v2551, %v2543
    %v3224 = vpack.c.b16 %v2552, %v2544
    %v3225 = vpack.c.b16 %v2561, %v2553
    %v3226 = vpack.c.b16 %v2562, %v2554
    %v3227 = vpack.c.b16 %v2563, %v2555
    %v3228 = vpack.c.b16 %v2564, %v2556
    %v3229 = vpack.c.b16 %v2565, %v2557
    %v3230 = vpack.c.b16 %v2566, %v2558
    %v3231 = vpack.c.b16 %v2567, %v2559
    %v3232 = vpack.c.b16 %v2568, %v2560
    %v3233 = vpack.c.b16 %v2577, %v2569
    %v3234 = vpack.c.b16 %v2578, %v2570
    %v3235 = vpack.c.b16 %v2579, %v2571
    %v3236 = vpack.c.b16 %v2580, %v2572
    %v3237 = vpack.c.b16 %v2581, %v2573
    %v3238 = vpack.c.b16 %v2582, %v2574
    %v3239 = vpack.c.b16 %v2583, %v2575
    %v3240 = vpack.c.b16 %v2584, %v2576
    %v3241 = vpack.c.b16 %v2593, %v2585
    %v3242 = vpack.c.b16 %v2594, %v2586
    %v3243 = vpack.c.b16 %v2595, %v2587
    %v3244 = vpack.c.b16 %v2596, %v2588
    %v3245 = vpack.c.b16 %v2597, %v2589
    %v3246 = vpack.c.b16 %v2598, %v2590
    %v3247 = vpack.c.b16 %v2599, %v2591
    %v3248 = vpack.c.b16 %v2600, %v2592
    %v3249 = vpack.c.b16 %v2609, %v2601
    %v3250 = vpack.c.b16 %v2610, %v2602
    %v3251 = vpack.c.b16 %v2611, %v2603
    %v3252 = vpack.c.b16 %v2612, %v2604
    %v3253 = vpack.c.b16 %v2613, %v2605
    %v3254 = vpack.c.b16 %v2614, %v2606
    %v3255 = vpack.c.b16 %v2615, %v2607
    %v3256 = vpack.c.b16 %v2616, %v2608
    %v3257 = vpack.c.b16 %v2625, %v2617
    %v3258 = vpack.c.b16 %v2626, %v2618
    %v3259 = vpack.c.b16 %v2627, %v2619
    %v3260 = vpack.c.b16 %v2628, %v2620
    %v3261 = vpack.c.b16 %v2629, %v2621
    %v3262 = vpack.c.b16 %v2630, %v2622
    %v3263 = vpack.c.b16 %v2631, %v2623
    %v3264 = vpack.c.b16 %v2632, %v2624
    %v3265 = vpack.c.b16 %v2641, %v2633
    %v3266 = vpack.c.b16 %v2642, %v2634
    %v3267 = vpack.c.b16 %v2643, %v2635
    %v3268 = vpack.c.b16 %v2644, %v2636
    %v3269 = vpack.c.b16 %v2645, %v2637
    %v3270 = vpack.c.b16 %v2646, %v2638
    %v3271 = vpack.c.b16 %v2647, %v2639
    %v3272 = vpack.c.b16 %v2648, %v2640
    %v3273 = vpack.c.b16 %v2657, %v2649
    %v3274 = vpack.c.b16 %v2658, %v2650
    %v3275 = vpack.c.b16 %v2659, %v2651
    %v3276 = vpack.c.b16 %v2660, %v2652
    %v3277 = vpack.c.b16 %v2661, %v2653
    %v3278 = vpack.c.b16 %v2662, %v2654
    %v3279 = vpack.c.b16 %v2663, %v2655
    %v3280 = vpack.c.b16 %v2664, %v2656
    %v3281 = vpack.c.b16 %v2673, %v2665
    %v3282 = vpack.c.b16 %v2674, %v2666
    %v3283 = vpack.c.b16 %v2675, %v2667
    %v3284 = vpack.c.b16 %v2676, %v2668
    %v3285 = vpack.c.b16 %v2677, %v2669
    %v3286 = vpack.c.b16 %v2678, %v2670
    %v3287 = vpack.c.b16 %v2679, %v2671
    %v3288 = vpack.c.b16 %v2680, %v2672
    %v3289 = vpack.c.b16 %v2689, %v2681
    %v3290 = vpack.c.b16 %v2690, %v2682
    %v3291 = vpack.c.b16 %v2691, %v2683
    %v3292 = vpack.c.b16 %v2692, %v2684
    %v3293 = vpack.c.b16 %v2693, %v2685
    %v3294 = vpack.c.b16 %v2694, %v2686
    %v3295 = vpack.c.b16 %v2695, %v2687
    %v3296 = vpack.c.b16 %v2696, %v2688
    %v3297 = vpack.c.b16 %v2705, %v2697
    %v3298 = vpack.c.b16 %v2706, %v2698
    %v3299 = vpack.c.b16 %v2707, %v2699
    %v3300 = vpack.c.b16 %v2708, %v2700
    %v3301 = vpack.c.b16 %v2709, %v2701
    %v3302 = vpack.c.b16 %v2710, %v2702
    %v3303 = vpack.c.b16 %v2711, %v2703
    %v3304 = vpack.c.b16 %v2712, %v2704
    %v3305 = vpack.c.b16 %v2721, %v2713
    %v3306 = vpack.c.b16 %v2722, %v2714
    %v3307 = vpack.c.b16 %v2723, %v2715
    %v3308 = vpack.c.b16 %v2724, %v2716
    %v3309 = vpack.c.b16 %v2725, %v2717
    %v3310 = vpack.c.b16 %v2726, %v2718
    %v3311 = vpack.c.b16 %v2727, %v2719
    %v3312 = vpack.c.b16 %v2728, %v2720
    %v3313 = vpack.c.b16 %v2737, %v2729
    %v3314 = vpack.c.b16 %v2738, %v2730
    %v3315 = vpack.c.b16 %v2739, %v2731
    %v3316 = vpack.c.b16 %v2740, %v2732
    %v3317 = vpack.c.b16 %v2741, %v2733
    %v3318 = vpack.c.b16 %v2742, %v2734
    %v3319 = vpack.c.b16 %v2743, %v2735
    %v3320 = vpack.c.b16 %v2744, %v2736
    %v3321 = vpack.c.b16 %v2753, %v2745
    %v3322 = vpack.c.b16 %v2754, %v2746
    %v3323 = vpack.c.b16 %v2755, %v2747
    %v3324 = vpack.c.b16 %v2756, %v2748
    %v3325 = vpack.c.b16 %v2757, %v2749
    %v3326 = vpack.c.b16 %v2758, %v2750
    %v3327 = vpack.c.b16 %v2759, %v2751
    %v3328 = vpack.c.b16 %v2760, %v2752
    %v3329 = vpack.c.b16 %v2769, %v2761
    %v3330 = vpack.c.b16 %v2770, %v2762
    %v3331 = vpack.c.b16 %v2771, %v2763
    %v3332 = vpack.c.b16 %v2772, %v2764
    %v3333 = vpack.c.b16 %v2773, %v2765
    %v3334 = vpack.c.b16 %v2774, %v2766
    %v3335 = vpack.c.b16 %v2775, %v2767
    %v3336 = vpack.c.b16 %v2776, %v2768
    %v3337 = vpack.c.b16 %v2785, %v2777
    %v3338 = vpack.c.b16 %v2786, %v2778
    %v3339 = vpack.c.b16 %v2787, %v2779
    %v3340 = vpack.c.b16 %v2788, %v2780
    %v3341 = vpack.c.b16 %v2789, %v2781
    %v3342 = vpack.c.b16 %v2790, %v2782
    %v3343 = vpack.c.b16 %v2791, %v2783
    %v3344 = vpack.c.b16 %v2792, %v2784
    %v3345 = vpack.c.b16 %v2801, %v2793
    %v3346 = vpack.c.b16 %v2802, %v2794
    %v3347 = vpack.c.b16 %v2803, %v2795
    %v3348 = vpack.c.b16 %v2804, %v2796
    %v3349 = vpack.c.b16 %v2805, %v2797
    %v3350 = vpack.c.b16 %v2806, %v2798
    %v3351 = vpack.c.b16 %v2807, %v2799
    %v3352 = vpack.c.b16 %v2808, %v2800
    %v3353 = vpack.c.b16 %v2817, %v2809
    %v3354 = vpack.c.b16 %v2818, %v2810
    %v3355 = vpack.c.b16 %v2819, %v2811
    %v3356 = vpack.c.b16 %v2820, %v2812
    %v3357 = vpack.c.b16 %v2821, %v2813
    %v3358 = vpack.c.b16 %v2822, %v2814
    %v3359 = vpack.c.b16 %v2823, %v2815
    %v3360 = vpack.c.b16 %v2824, %v2816
    %v3361 = vpack.c.b16 %v2833, %v2825
    %v3362 = vpack.c.b16 %v2834, %v2826
    %v3363 = vpack.c.b16 %v2835, %v2827
    %v3364 = vpack.c.b16 %v2836, %v2828
    %v3365 = vpack.c.b16 %v2837, %v2829
    %v3366 = vpack.c.b16 %v2838, %v2830
    %v3367 = vpack.c.b16 %v2839, %v2831
    %v3368 = vpack.c.b16 %v2840, %v2832
    %v3369 = vpack.c.b16 %v2849, %v2841
    %v3370 = vpack.c.b16 %v2850, %v2842
    %v3371 = vpack.c.b16 %v2851, %v2843
    %v3372 = vpack.c.b16 %v2852, %v2844
    %v3373 = vpack.c.b16 %v2853, %v2845
    %v3374 = vpack.c.b16 %v2854, %v2846
    %v3375 = vpack.c.b16 %v2855, %v2847
    %v3376 = vpack.c.b16 %v2856, %v2848
    %v3377 = vpack.c.b16 %v2865, %v2857
    %v3378 = vpack.c.b16 %v2866, %v2858
    %v3379 = vpack.c.b16 %v2867, %v2859
    %v3380 = vpack.c.b16 %v2868, %v2860
    %v3381 = vpack.c.b16 %v2869, %v2861
    %v3382 = vpack.c.b16 %v2870, %v2862
    %v3383 = vpack.c.b16 %v2871, %v2863
    %v3384 = vpack.c.b16 %v2872, %v2864
    %3897 = vmatprep.subr.bf16.mxu0 %v2930
    %3898 = vmatpush1.bf16.msra.mxu0 %v2929
    %3899 = vmatprep.subr.bf16.mxu0 %v2922
    %3900 = vmatpush1.bf16.msra.mxu0 %v2921
    %3901 = vmatprep.subr.bf16.mxu0 %v2914
    %3902 = vmatpush1.bf16.msra.mxu0 %v2913
    %3903 = vmatprep.subr.bf16.mxu0 %v2906
    %3904 = vmatpush1.bf16.msra.mxu0 %v2905
    %3905 = vmatprep.subr.bf16.mxu0 %v2898
    %3906 = vmatpush1.bf16.msra.mxu0 %v2897
    %3907 = vmatprep.subr.bf16.mxu0 %v2890
    %3908 = vmatpush1.bf16.msra.mxu0 %v2889
    %3909 = vmatprep.subr.bf16.mxu0 %v2882
    %3910 = vmatpush1.bf16.msra.mxu0 %v2881
    %3911 = vmatprep.subr.bf16.mxu0 %v2874
    %3912 = vmatpush1.bf16.msra.mxu0 %v2873
    %3913 = vmatprep.subr.bf16.mxu0 %v2994
    %3914 = vmatpush2.bf16.msra.mxu0 %v2993
    %3915 = vmatprep.subr.bf16.mxu0 %v2986
    %3916 = vmatpush2.bf16.msra.mxu0 %v2985
    %3917 = vmatprep.subr.bf16.mxu0 %v2978
    %3918 = vmatpush2.bf16.msra.mxu0 %v2977
    %3919 = vmatprep.subr.bf16.mxu0 %v2970
    %3920 = vmatpush2.bf16.msra.mxu0 %v2969
    %3921 = vmatprep.subr.bf16.mxu0 %v2962
    %3922 = vmatpush2.bf16.msra.mxu0 %v2961
    %3923 = vmatprep.subr.bf16.mxu0 %v2954
    %3924 = vmatpush2.bf16.msra.mxu0 %v2953
    %3925 = vmatprep.subr.bf16.mxu0 %v2946
    %3926 = vmatpush2.bf16.msra.mxu0 %v2945
    %3927 = vmatprep.subr.bf16.mxu0 %v2938
    %3928 = vmatpush2.bf16.msra.mxu0 %v2937
    %3929 = vmatprep.mubr.bf16.mxu0 %v776
    %3930 = vmatmul.mubr.bf16.gmra.mxu0 %v775
    %v3931 = vpop.f32.mrf.mxu0
    %v3932 = vadd.f32 %v1300, %v3931
    %v3933 = vpop.f32.mrf.mxu0
    %v3934 = vadd.f32 %v1304, %v3933
    %v3935 = vpop.f32.mrf.mxu0
    %v3936 = vpop.f32.mrf.mxu0
    %3937 = vdwg.mxu0
    %3938 = vmatprep.subr.bf16.mxu0 %v3058
    %3939 = vmatpush1.bf16.msra.mxu0 %v3057
    %3940 = vmatprep.subr.bf16.mxu0 %v3050
    %3941 = vmatpush1.bf16.msra.mxu0 %v3049
    %3942 = vmatprep.subr.bf16.mxu0 %v3042
    %3943 = vmatpush1.bf16.msra.mxu0 %v3041
    %3944 = vmatprep.subr.bf16.mxu0 %v3034
    %3945 = vmatpush1.bf16.msra.mxu0 %v3033
    %3946 = vmatprep.subr.bf16.mxu0 %v3026
    %3947 = vmatpush1.bf16.msra.mxu0 %v3025
    %3948 = vmatprep.subr.bf16.mxu0 %v3018
    %3949 = vmatpush1.bf16.msra.mxu0 %v3017
    %3950 = vmatprep.subr.bf16.mxu0 %v3010
    %3951 = vmatpush1.bf16.msra.mxu0 %v3009
    %3952 = vmatprep.subr.bf16.mxu0 %v3002
    %3953 = vmatpush1.bf16.msra.mxu0 %v3001
    %3954 = vmatprep.subr.bf16.mxu0 %v3122
    %3955 = vmatpush2.bf16.msra.mxu0 %v3121
    %3956 = vmatprep.subr.bf16.mxu0 %v3114
    %3957 = vmatpush2.bf16.msra.mxu0 %v3113
    %3958 = vmatprep.subr.bf16.mxu0 %v3106
    %3959 = vmatpush2.bf16.msra.mxu0 %v3105
    %3960 = vmatprep.subr.bf16.mxu0 %v3098
    %3961 = vmatpush2.bf16.msra.mxu0 %v3097
    %3962 = vmatprep.subr.bf16.mxu0 %v3090
    %3963 = vmatpush2.bf16.msra.mxu0 %v3089
    %3964 = vmatprep.subr.bf16.mxu0 %v3082
    %3965 = vmatpush2.bf16.msra.mxu0 %v3081
    %3966 = vmatprep.subr.bf16.mxu0 %v3074
    %3967 = vmatpush2.bf16.msra.mxu0 %v3073
    %3968 = vmatprep.subr.bf16.mxu0 %v3066
    %3969 = vmatpush2.bf16.msra.mxu0 %v3065
    %3970 = vmatprep.mubr.bf16.mxu0 %v778
    %3971 = vmatmul.mubr.bf16.gmra.mxu0 %v777
    %v3972 = vpop.f32.mrf.mxu0
    %v3973 = vadd.f32 %v3932, %v3972
    %v3974 = vpop.f32.mrf.mxu0
    %v3975 = vadd.f32 %v3934, %v3974
    %v3976 = vpop.f32.mrf.mxu0
    %v3977 = vpop.f32.mrf.mxu0
    %3978 = vdwg.mxu0
    %3979 = vmatprep.subr.bf16.mxu0 %v3186
    %3980 = vmatpush1.bf16.msra.mxu0 %v3185
    %3981 = vmatprep.subr.bf16.mxu0 %v3178
    %3982 = vmatpush1.bf16.msra.mxu0 %v3177
    %3983 = vmatprep.subr.bf16.mxu0 %v3170
    %3984 = vmatpush1.bf16.msra.mxu0 %v3169
    %3985 = vmatprep.subr.bf16.mxu0 %v3162
    %3986 = vmatpush1.bf16.msra.mxu0 %v3161
    %3987 = vmatprep.subr.bf16.mxu0 %v3154
    %3988 = vmatpush1.bf16.msra.mxu0 %v3153
    %3989 = vmatprep.subr.bf16.mxu0 %v3146
    %3990 = vmatpush1.bf16.msra.mxu0 %v3145
    %3991 = vmatprep.subr.bf16.mxu0 %v3138
    %3992 = vmatpush1.bf16.msra.mxu0 %v3137
    %3993 = vmatprep.subr.bf16.mxu0 %v3130
    %3994 = vmatpush1.bf16.msra.mxu0 %v3129
    %3995 = vmatprep.subr.bf16.mxu0 %v3250
    %3996 = vmatpush2.bf16.msra.mxu0 %v3249
    %3997 = vmatprep.subr.bf16.mxu0 %v3242
    %3998 = vmatpush2.bf16.msra.mxu0 %v3241
    %3999 = vmatprep.subr.bf16.mxu0 %v3234
    %4000 = vmatpush2.bf16.msra.mxu0 %v3233
    %4001 = vmatprep.subr.bf16.mxu0 %v3226
    %4002 = vmatpush2.bf16.msra.mxu0 %v3225
    %4003 = vmatprep.subr.bf16.mxu0 %v3218
    %4004 = vmatpush2.bf16.msra.mxu0 %v3217
    %4005 = vmatprep.subr.bf16.mxu0 %v3210
    %4006 = vmatpush2.bf16.msra.mxu0 %v3209
    %4007 = vmatprep.subr.bf16.mxu0 %v3202
    %4008 = vmatpush2.bf16.msra.mxu0 %v3201
    %4009 = vmatprep.subr.bf16.mxu0 %v3194
    %4010 = vmatpush2.bf16.msra.mxu0 %v3193
    %4011 = vmatprep.mubr.bf16.mxu0 %v780
    %4012 = vmatmul.mubr.bf16.gmra.mxu0 %v779
    %v4013 = vpop.f32.mrf.mxu0
    %v4014 = vadd.f32 %v3973, %v4013
    %v4015 = vpop.f32.mrf.mxu0
    %v4016 = vadd.f32 %v3975, %v4015
    %v4017 = vpop.f32.mrf.mxu0
    %v4018 = vpop.f32.mrf.mxu0
    %4019 = vdwg.mxu0
    %4020 = vmatprep.subr.bf16.mxu0 %v3314
    %4021 = vmatpush1.bf16.msra.mxu0 %v3313
    %4022 = vmatprep.subr.bf16.mxu0 %v3306
    %4023 = vmatpush1.bf16.msra.mxu0 %v3305
    %4024 = vmatprep.subr.bf16.mxu0 %v3298
    %4025 = vmatpush1.bf16.msra.mxu0 %v3297
    %4026 = vmatprep.subr.bf16.mxu0 %v3290
    %4027 = vmatpush1.bf16.msra.mxu0 %v3289
    %4028 = vmatprep.subr.bf16.mxu0 %v3282
    %4029 = vmatpush1.bf16.msra.mxu0 %v3281
    %4030 = vmatprep.subr.bf16.mxu0 %v3274
    %4031 = vmatpush1.bf16.msra.mxu0 %v3273
    %4032 = vmatprep.subr.bf16.mxu0 %v3266
    %4033 = vmatpush1.bf16.msra.mxu0 %v3265
    %4034 = vmatprep.subr.bf16.mxu0 %v3258
    %4035 = vmatpush1.bf16.msra.mxu0 %v3257
    %4036 = vmatprep.subr.bf16.mxu0 %v3378
    %4037 = vmatpush2.bf16.msra.mxu0 %v3377
    %4038 = vmatprep.subr.bf16.mxu0 %v3370
    %4039 = vmatpush2.bf16.msra.mxu0 %v3369
    %4040 = vmatprep.subr.bf16.mxu0 %v3362
    %4041 = vmatpush2.bf16.msra.mxu0 %v3361
    %4042 = vmatprep.subr.bf16.mxu0 %v3354
    %4043 = vmatpush2.bf16.msra.mxu0 %v3353
    %4044 = vmatprep.subr.bf16.mxu0 %v3346
    %4045 = vmatpush2.bf16.msra.mxu0 %v3345
    %4046 = vmatprep.subr.bf16.mxu0 %v3338
    %4047 = vmatpush2.bf16.msra.mxu0 %v3337
    %4048 = vmatprep.subr.bf16.mxu0 %v3330
    %4049 = vmatpush2.bf16.msra.mxu0 %v3329
    %4050 = vmatprep.subr.bf16.mxu0 %v3322
    %4051 = vmatpush2.bf16.msra.mxu0 %v3321
    %4052 = vmatprep.mubr.bf16.mxu0 %v782
    %4053 = vmatmul.mubr.bf16.gmra.mxu0 %v781
    %v4054 = vpop.f32.mrf.mxu0
    %v4055 = vadd.f32 %v4014, %v4054
    %v4056 = vpop.f32.mrf.mxu0
    %v4057 = vadd.f32 %v4016, %v4056
    %v4058 = vpop.f32.mrf.mxu0
    %v4059 = vpop.f32.mrf.mxu0
    %4060 = vdwg.mxu0
    %4061 = vmatprep.subr.bf16.mxu0 %v2932
    %4062 = vmatpush1.bf16.msra.mxu0 %v2931
    %4063 = vmatprep.subr.bf16.mxu0 %v2924
    %4064 = vmatpush1.bf16.msra.mxu0 %v2923
    %4065 = vmatprep.subr.bf16.mxu0 %v2916
    %4066 = vmatpush1.bf16.msra.mxu0 %v2915
    %4067 = vmatprep.subr.bf16.mxu0 %v2908
    %4068 = vmatpush1.bf16.msra.mxu0 %v2907
    %4069 = vmatprep.subr.bf16.mxu0 %v2900
    %4070 = vmatpush1.bf16.msra.mxu0 %v2899
    %4071 = vmatprep.subr.bf16.mxu0 %v2892
    %4072 = vmatpush1.bf16.msra.mxu0 %v2891
    %4073 = vmatprep.subr.bf16.mxu0 %v2884
    %4074 = vmatpush1.bf16.msra.mxu0 %v2883
    %4075 = vmatprep.subr.bf16.mxu0 %v2876
    %4076 = vmatpush1.bf16.msra.mxu0 %v2875
    %4077 = vmatprep.subr.bf16.mxu0 %v2996
    %4078 = vmatpush2.bf16.msra.mxu0 %v2995
    %4079 = vmatprep.subr.bf16.mxu0 %v2988
    %4080 = vmatpush2.bf16.msra.mxu0 %v2987
    %4081 = vmatprep.subr.bf16.mxu0 %v2980
    %4082 = vmatpush2.bf16.msra.mxu0 %v2979
    %4083 = vmatprep.subr.bf16.mxu0 %v2972
    %4084 = vmatpush2.bf16.msra.mxu0 %v2971
    %4085 = vmatprep.subr.bf16.mxu0 %v2964
    %4086 = vmatpush2.bf16.msra.mxu0 %v2963
    %4087 = vmatprep.subr.bf16.mxu0 %v2956
    %4088 = vmatpush2.bf16.msra.mxu0 %v2955
    %4089 = vmatprep.subr.bf16.mxu0 %v2948
    %4090 = vmatpush2.bf16.msra.mxu0 %v2947
    %4091 = vmatprep.subr.bf16.mxu0 %v2940
    %4092 = vmatpush2.bf16.msra.mxu0 %v2939
    %4093 = vmatprep.mubr.bf16.mxu0 %v776
    %4094 = vmatmul.mubr.bf16.gmra.mxu0 %v775
    %v4095 = vpop.f32.mrf.mxu0
    %v4096 = vadd.f32 %v1308, %v4095
    %v4097 = vpop.f32.mrf.mxu0
    %v4098 = vadd.f32 %v1312, %v4097
    %v4099 = vpop.f32.mrf.mxu0
    %v4100 = vpop.f32.mrf.mxu0
    %4101 = vdwg.mxu0
    %4102 = vmatprep.subr.bf16.mxu0 %v3060
    %4103 = vmatpush1.bf16.msra.mxu0 %v3059
    %4104 = vmatprep.subr.bf16.mxu0 %v3052
    %4105 = vmatpush1.bf16.msra.mxu0 %v3051
    %4106 = vmatprep.subr.bf16.mxu0 %v3044
    %4107 = vmatpush1.bf16.msra.mxu0 %v3043
    %4108 = vmatprep.subr.bf16.mxu0 %v3036
    %4109 = vmatpush1.bf16.msra.mxu0 %v3035
    %4110 = vmatprep.subr.bf16.mxu0 %v3028
    %4111 = vmatpush1.bf16.msra.mxu0 %v3027
    %4112 = vmatprep.subr.bf16.mxu0 %v3020
    %4113 = vmatpush1.bf16.msra.mxu0 %v3019
    %4114 = vmatprep.subr.bf16.mxu0 %v3012
    %4115 = vmatpush1.bf16.msra.mxu0 %v3011
    %4116 = vmatprep.subr.bf16.mxu0 %v3004
    %4117 = vmatpush1.bf16.msra.mxu0 %v3003
    %4118 = vmatprep.subr.bf16.mxu0 %v3124
    %4119 = vmatpush2.bf16.msra.mxu0 %v3123
    %4120 = vmatprep.subr.bf16.mxu0 %v3116
    %4121 = vmatpush2.bf16.msra.mxu0 %v3115
    %4122 = vmatprep.subr.bf16.mxu0 %v3108
    %4123 = vmatpush2.bf16.msra.mxu0 %v3107
    %4124 = vmatprep.subr.bf16.mxu0 %v3100
    %4125 = vmatpush2.bf16.msra.mxu0 %v3099
    %4126 = vmatprep.subr.bf16.mxu0 %v3092
    %4127 = vmatpush2.bf16.msra.mxu0 %v3091
    %4128 = vmatprep.subr.bf16.mxu0 %v3084
    %4129 = vmatpush2.bf16.msra.mxu0 %v3083
    %4130 = vmatprep.subr.bf16.mxu0 %v3076
    %4131 = vmatpush2.bf16.msra.mxu0 %v3075
    %4132 = vmatprep.subr.bf16.mxu0 %v3068
    %4133 = vmatpush2.bf16.msra.mxu0 %v3067
    %4134 = vmatprep.mubr.bf16.mxu0 %v778
    %4135 = vmatmul.mubr.bf16.gmra.mxu0 %v777
    %v4136 = vpop.f32.mrf.mxu0
    %v4137 = vadd.f32 %v4096, %v4136
    %v4138 = vpop.f32.mrf.mxu0
    %v4139 = vadd.f32 %v4098, %v4138
    %v4140 = vpop.f32.mrf.mxu0
    %v4141 = vpop.f32.mrf.mxu0
    %4142 = vdwg.mxu0
    %4143 = vmatprep.subr.bf16.mxu0 %v3188
    %4144 = vmatpush1.bf16.msra.mxu0 %v3187
    %4145 = vmatprep.subr.bf16.mxu0 %v3180
    %4146 = vmatpush1.bf16.msra.mxu0 %v3179
    %4147 = vmatprep.subr.bf16.mxu0 %v3172
    %4148 = vmatpush1.bf16.msra.mxu0 %v3171
    %4149 = vmatprep.subr.bf16.mxu0 %v3164
    %4150 = vmatpush1.bf16.msra.mxu0 %v3163
    %4151 = vmatprep.subr.bf16.mxu0 %v3156
    %4152 = vmatpush1.bf16.msra.mxu0 %v3155
    %4153 = vmatprep.subr.bf16.mxu0 %v3148
    %4154 = vmatpush1.bf16.msra.mxu0 %v3147
    %4155 = vmatprep.subr.bf16.mxu0 %v3140
    %4156 = vmatpush1.bf16.msra.mxu0 %v3139
    %4157 = vmatprep.subr.bf16.mxu0 %v3132
    %4158 = vmatpush1.bf16.msra.mxu0 %v3131
    %4159 = vmatprep.subr.bf16.mxu0 %v3252
    %4160 = vmatpush2.bf16.msra.mxu0 %v3251
    %4161 = vmatprep.subr.bf16.mxu0 %v3244
    %4162 = vmatpush2.bf16.msra.mxu0 %v3243
    %4163 = vmatprep.subr.bf16.mxu0 %v3236
    %4164 = vmatpush2.bf16.msra.mxu0 %v3235
    %4165 = vmatprep.subr.bf16.mxu0 %v3228
    %4166 = vmatpush2.bf16.msra.mxu0 %v3227
    %4167 = vmatprep.subr.bf16.mxu0 %v3220
    %4168 = vmatpush2.bf16.msra.mxu0 %v3219
    %4169 = vmatprep.subr.bf16.mxu0 %v3212
    %4170 = vmatpush2.bf16.msra.mxu0 %v3211
    %4171 = vmatprep.subr.bf16.mxu0 %v3204
    %4172 = vmatpush2.bf16.msra.mxu0 %v3203
    %4173 = vmatprep.subr.bf16.mxu0 %v3196
    %4174 = vmatpush2.bf16.msra.mxu0 %v3195
    %4175 = vmatprep.mubr.bf16.mxu0 %v780
    %4176 = vmatmul.mubr.bf16.gmra.mxu0 %v779
    %v4177 = vpop.f32.mrf.mxu0
    %v4178 = vadd.f32 %v4137, %v4177
    %v4179 = vpop.f32.mrf.mxu0
    %v4180 = vadd.f32 %v4139, %v4179
    %v4181 = vpop.f32.mrf.mxu0
    %v4182 = vpop.f32.mrf.mxu0
    %4183 = vdwg.mxu0
    %4184 = vmatprep.subr.bf16.mxu0 %v3316
    %4185 = vmatpush1.bf16.msra.mxu0 %v3315
    %4186 = vmatprep.subr.bf16.mxu0 %v3308
    %4187 = vmatpush1.bf16.msra.mxu0 %v3307
    %4188 = vmatprep.subr.bf16.mxu0 %v3300
    %4189 = vmatpush1.bf16.msra.mxu0 %v3299
    %4190 = vmatprep.subr.bf16.mxu0 %v3292
    %4191 = vmatpush1.bf16.msra.mxu0 %v3291
    %4192 = vmatprep.subr.bf16.mxu0 %v3284
    %4193 = vmatpush1.bf16.msra.mxu0 %v3283
    %4194 = vmatprep.subr.bf16.mxu0 %v3276
    %4195 = vmatpush1.bf16.msra.mxu0 %v3275
    %4196 = vmatprep.subr.bf16.mxu0 %v3268
    %4197 = vmatpush1.bf16.msra.mxu0 %v3267
    %4198 = vmatprep.subr.bf16.mxu0 %v3260
    %4199 = vmatpush1.bf16.msra.mxu0 %v3259
    %4200 = vmatprep.subr.bf16.mxu0 %v3380
    %4201 = vmatpush2.bf16.msra.mxu0 %v3379
    %4202 = vmatprep.subr.bf16.mxu0 %v3372
    %4203 = vmatpush2.bf16.msra.mxu0 %v3371
    %4204 = vmatprep.subr.bf16.mxu0 %v3364
    %4205 = vmatpush2.bf16.msra.mxu0 %v3363
    %4206 = vmatprep.subr.bf16.mxu0 %v3356
    %4207 = vmatpush2.bf16.msra.mxu0 %v3355
    %4208 = vmatprep.subr.bf16.mxu0 %v3348
    %4209 = vmatpush2.bf16.msra.mxu0 %v3347
    %4210 = vmatprep.subr.bf16.mxu0 %v3340
    %4211 = vmatpush2.bf16.msra.mxu0 %v3339
    %4212 = vmatprep.subr.bf16.mxu0 %v3332
    %4213 = vmatpush2.bf16.msra.mxu0 %v3331
    %4214 = vmatprep.subr.bf16.mxu0 %v3324
    %4215 = vmatpush2.bf16.msra.mxu0 %v3323
    %4216 = vmatprep.mubr.bf16.mxu0 %v782
    %4217 = vmatmul.mubr.bf16.gmra.mxu0 %v781
    %v4218 = vpop.f32.mrf.mxu0
    %v4219 = vadd.f32 %v4178, %v4218
    %v4220 = vpop.f32.mrf.mxu0
    %v4221 = vadd.f32 %v4180, %v4220
    %v4222 = vpop.f32.mrf.mxu0
    %v4223 = vpop.f32.mrf.mxu0
    %4224 = vdwg.mxu0
    %4225 = vmatprep.subr.bf16.mxu0 %v2934
    %4226 = vmatpush1.bf16.msra.mxu0 %v2933
    %4227 = vmatprep.subr.bf16.mxu0 %v2926
    %4228 = vmatpush1.bf16.msra.mxu0 %v2925
    %4229 = vmatprep.subr.bf16.mxu0 %v2918
    %4230 = vmatpush1.bf16.msra.mxu0 %v2917
    %4231 = vmatprep.subr.bf16.mxu0 %v2910
    %4232 = vmatpush1.bf16.msra.mxu0 %v2909
    %4233 = vmatprep.subr.bf16.mxu0 %v2902
    %4234 = vmatpush1.bf16.msra.mxu0 %v2901
    %4235 = vmatprep.subr.bf16.mxu0 %v2894
    %4236 = vmatpush1.bf16.msra.mxu0 %v2893
    %4237 = vmatprep.subr.bf16.mxu0 %v2886
    %4238 = vmatpush1.bf16.msra.mxu0 %v2885
    %4239 = vmatprep.subr.bf16.mxu0 %v2878
    %4240 = vmatpush1.bf16.msra.mxu0 %v2877
    %4241 = vmatprep.subr.bf16.mxu0 %v2998
    %4242 = vmatpush2.bf16.msra.mxu0 %v2997
    %4243 = vmatprep.subr.bf16.mxu0 %v2990
    %4244 = vmatpush2.bf16.msra.mxu0 %v2989
    %4245 = vmatprep.subr.bf16.mxu0 %v2982
    %4246 = vmatpush2.bf16.msra.mxu0 %v2981
    %4247 = vmatprep.subr.bf16.mxu0 %v2974
    %4248 = vmatpush2.bf16.msra.mxu0 %v2973
    %4249 = vmatprep.subr.bf16.mxu0 %v2966
    %4250 = vmatpush2.bf16.msra.mxu0 %v2965
    %4251 = vmatprep.subr.bf16.mxu0 %v2958
    %4252 = vmatpush2.bf16.msra.mxu0 %v2957
    %4253 = vmatprep.subr.bf16.mxu0 %v2950
    %4254 = vmatpush2.bf16.msra.mxu0 %v2949
    %4255 = vmatprep.subr.bf16.mxu0 %v2942
    %4256 = vmatpush2.bf16.msra.mxu0 %v2941
    %4257 = vmatprep.mubr.bf16.mxu0 %v776
    %4258 = vmatmul.mubr.bf16.gmra.mxu0 %v775
    %v4259 = vpop.f32.mrf.mxu0
    %v4260 = vadd.f32 %v1316, %v4259
    %v4261 = vpop.f32.mrf.mxu0
    %v4262 = vadd.f32 %v1320, %v4261
    %v4263 = vpop.f32.mrf.mxu0
    %v4264 = vpop.f32.mrf.mxu0
    %4265 = vdwg.mxu0
    %4266 = vmatprep.subr.bf16.mxu0 %v3062
    %4267 = vmatpush1.bf16.msra.mxu0 %v3061
    %4268 = vmatprep.subr.bf16.mxu0 %v3054
    %4269 = vmatpush1.bf16.msra.mxu0 %v3053
    %4270 = vmatprep.subr.bf16.mxu0 %v3046
    %4271 = vmatpush1.bf16.msra.mxu0 %v3045
    %4272 = vmatprep.subr.bf16.mxu0 %v3038
    %4273 = vmatpush1.bf16.msra.mxu0 %v3037
    %4274 = vmatprep.subr.bf16.mxu0 %v3030
    %4275 = vmatpush1.bf16.msra.mxu0 %v3029
    %4276 = vmatprep.subr.bf16.mxu0 %v3022
    %4277 = vmatpush1.bf16.msra.mxu0 %v3021
    %4278 = vmatprep.subr.bf16.mxu0 %v3014
    %4279 = vmatpush1.bf16.msra.mxu0 %v3013
    %4280 = vmatprep.subr.bf16.mxu0 %v3006
    %4281 = vmatpush1.bf16.msra.mxu0 %v3005
    %4282 = vmatprep.subr.bf16.mxu0 %v3126
    %4283 = vmatpush2.bf16.msra.mxu0 %v3125
    %4284 = vmatprep.subr.bf16.mxu0 %v3118
    %4285 = vmatpush2.bf16.msra.mxu0 %v3117
    %4286 = vmatprep.subr.bf16.mxu0 %v3110
    %4287 = vmatpush2.bf16.msra.mxu0 %v3109
    %4288 = vmatprep.subr.bf16.mxu0 %v3102
    %4289 = vmatpush2.bf16.msra.mxu0 %v3101
    %4290 = vmatprep.subr.bf16.mxu0 %v3094
    %4291 = vmatpush2.bf16.msra.mxu0 %v3093
    %4292 = vmatprep.subr.bf16.mxu0 %v3086
    %4293 = vmatpush2.bf16.msra.mxu0 %v3085
    %4294 = vmatprep.subr.bf16.mxu0 %v3078
    %4295 = vmatpush2.bf16.msra.mxu0 %v3077
    %4296 = vmatprep.subr.bf16.mxu0 %v3070
    %4297 = vmatpush2.bf16.msra.mxu0 %v3069
    %4298 = vmatprep.mubr.bf16.mxu0 %v778
    %4299 = vmatmul.mubr.bf16.gmra.mxu0 %v777
    %v4300 = vpop.f32.mrf.mxu0
    %v4301 = vadd.f32 %v4260, %v4300
    %v4302 = vpop.f32.mrf.mxu0
    %v4303 = vadd.f32 %v4262, %v4302
    %v4304 = vpop.f32.mrf.mxu0
    %v4305 = vpop.f32.mrf.mxu0
    %4306 = vdwg.mxu0
    %4307 = vmatprep.subr.bf16.mxu0 %v3190
    %4308 = vmatpush1.bf16.msra.mxu0 %v3189
    %4309 = vmatprep.subr.bf16.mxu0 %v3182
    %4310 = vmatpush1.bf16.msra.mxu0 %v3181
    %4311 = vmatprep.subr.bf16.mxu0 %v3174
    %4312 = vmatpush1.bf16.msra.mxu0 %v3173
    %4313 = vmatprep.subr.bf16.mxu0 %v3166
    %4314 = vmatpush1.bf16.msra.mxu0 %v3165
    %4315 = vmatprep.subr.bf16.mxu0 %v3158
    %4316 = vmatpush1.bf16.msra.mxu0 %v3157
    %4317 = vmatprep.subr.bf16.mxu0 %v3150
    %4318 = vmatpush1.bf16.msra.mxu0 %v3149
    %4319 = vmatprep.subr.bf16.mxu0 %v3142
    %4320 = vmatpush1.bf16.msra.mxu0 %v3141
    %4321 = vmatprep.subr.bf16.mxu0 %v3134
    %4322 = vmatpush1.bf16.msra.mxu0 %v3133
    %4323 = vmatprep.subr.bf16.mxu0 %v3254
    %4324 = vmatpush2.bf16.msra.mxu0 %v3253
    %4325 = vmatprep.subr.bf16.mxu0 %v3246
    %4326 = vmatpush2.bf16.msra.mxu0 %v3245
    %4327 = vmatprep.subr.bf16.mxu0 %v3238
    %4328 = vmatpush2.bf16.msra.mxu0 %v3237
    %4329 = vmatprep.subr.bf16.mxu0 %v3230
    %4330 = vmatpush2.bf16.msra.mxu0 %v3229
    %4331 = vmatprep.subr.bf16.mxu0 %v3222
    %4332 = vmatpush2.bf16.msra.mxu0 %v3221
    %4333 = vmatprep.subr.bf16.mxu0 %v3214
    %4334 = vmatpush2.bf16.msra.mxu0 %v3213
    %4335 = vmatprep.subr.bf16.mxu0 %v3206
    %4336 = vmatpush2.bf16.msra.mxu0 %v3205
    %4337 = vmatprep.subr.bf16.mxu0 %v3198
    %4338 = vmatpush2.bf16.msra.mxu0 %v3197
    %4339 = vmatprep.mubr.bf16.mxu0 %v780
    %4340 = vmatmul.mubr.bf16.gmra.mxu0 %v779
    %v4341 = vpop.f32.mrf.mxu0
    %v4342 = vadd.f32 %v4301, %v4341
    %v4343 = vpop.f32.mrf.mxu0
    %v4344 = vadd.f32 %v4303, %v4343
    %v4345 = vpop.f32.mrf.mxu0
    %v4346 = vpop.f32.mrf.mxu0
    %4347 = vdwg.mxu0
    %4348 = vmatprep.subr.bf16.mxu0 %v3318
    %4349 = vmatpush1.bf16.msra.mxu0 %v3317
    %4350 = vmatprep.subr.bf16.mxu0 %v3310
    %4351 = vmatpush1.bf16.msra.mxu0 %v3309
    %4352 = vmatprep.subr.bf16.mxu0 %v3302
    %4353 = vmatpush1.bf16.msra.mxu0 %v3301
    %4354 = vmatprep.subr.bf16.mxu0 %v3294
    %4355 = vmatpush1.bf16.msra.mxu0 %v3293
    %4356 = vmatprep.subr.bf16.mxu0 %v3286
    %4357 = vmatpush1.bf16.msra.mxu0 %v3285
    %4358 = vmatprep.subr.bf16.mxu0 %v3278
    %4359 = vmatpush1.bf16.msra.mxu0 %v3277
    %4360 = vmatprep.subr.bf16.mxu0 %v3270
    %4361 = vmatpush1.bf16.msra.mxu0 %v3269
    %4362 = vmatprep.subr.bf16.mxu0 %v3262
    %4363 = vmatpush1.bf16.msra.mxu0 %v3261
    %4364 = vmatprep.subr.bf16.mxu0 %v3382
    %4365 = vmatpush2.bf16.msra.mxu0 %v3381
    %4366 = vmatprep.subr.bf16.mxu0 %v3374
    %4367 = vmatpush2.bf16.msra.mxu0 %v3373
    %4368 = vmatprep.subr.bf16.mxu0 %v3366
    %4369 = vmatpush2.bf16.msra.mxu0 %v3365
    %4370 = vmatprep.subr.bf16.mxu0 %v3358
    %4371 = vmatpush2.bf16.msra.mxu0 %v3357
    %4372 = vmatprep.subr.bf16.mxu0 %v3350
    %4373 = vmatpush2.bf16.msra.mxu0 %v3349
    %4374 = vmatprep.subr.bf16.mxu0 %v3342
    %4375 = vmatpush2.bf16.msra.mxu0 %v3341
    %4376 = vmatprep.subr.bf16.mxu0 %v3334
    %4377 = vmatpush2.bf16.msra.mxu0 %v3333
    %4378 = vmatprep.subr.bf16.mxu0 %v3326
    %4379 = vmatpush2.bf16.msra.mxu0 %v3325
    %4380 = vmatprep.mubr.bf16.mxu0 %v782
    %4381 = vmatmul.mubr.bf16.gmra.mxu0 %v781
    %v4382 = vpop.f32.mrf.mxu0
    %v4383 = vadd.f32 %v4342, %v4382
    %v4384 = vpop.f32.mrf.mxu0
    %v4385 = vadd.f32 %v4344, %v4384
    %v4386 = vpop.f32.mrf.mxu0
    %v4387 = vpop.f32.mrf.mxu0
    %4388 = vdwg.mxu0
    %4389 = vmatprep.subr.bf16.mxu0 %v2936
    %4390 = vmatpush1.bf16.msra.mxu0 %v2935
    %4391 = vmatprep.subr.bf16.mxu0 %v2928
    %4392 = vmatpush1.bf16.msra.mxu0 %v2927
    %4393 = vmatprep.subr.bf16.mxu0 %v2920
    %4394 = vmatpush1.bf16.msra.mxu0 %v2919
    %4395 = vmatprep.subr.bf16.mxu0 %v2912
    %4396 = vmatpush1.bf16.msra.mxu0 %v2911
    %4397 = vmatprep.subr.bf16.mxu0 %v2904
    %4398 = vmatpush1.bf16.msra.mxu0 %v2903
    %4399 = vmatprep.subr.bf16.mxu0 %v2896
    %4400 = vmatpush1.bf16.msra.mxu0 %v2895
    %4401 = vmatprep.subr.bf16.mxu0 %v2888
    %4402 = vmatpush1.bf16.msra.mxu0 %v2887
    %4403 = vmatprep.subr.bf16.mxu0 %v2880
    %4404 = vmatpush1.bf16.msra.mxu0 %v2879
    %4405 = vmatprep.subr.bf16.mxu0 %v3000
    %4406 = vmatpush2.bf16.msra.mxu0 %v2999
    %4407 = vmatprep.subr.bf16.mxu0 %v2992
    %4408 = vmatpush2.bf16.msra.mxu0 %v2991
    %4409 = vmatprep.subr.bf16.mxu0 %v2984
    %4410 = vmatpush2.bf16.msra.mxu0 %v2983
    %4411 = vmatprep.subr.bf16.mxu0 %v2976
    %4412 = vmatpush2.bf16.msra.mxu0 %v2975
    %4413 = vmatprep.subr.bf16.mxu0 %v2968
    %4414 = vmatpush2.bf16.msra.mxu0 %v2967
    %4415 = vmatprep.subr.bf16.mxu0 %v2960
    %4416 = vmatpush2.bf16.msra.mxu0 %v2959
    %4417 = vmatprep.subr.bf16.mxu0 %v2952
    %4418 = vmatpush2.bf16.msra.mxu0 %v2951
    %4419 = vmatprep.subr.bf16.mxu0 %v2944
    %4420 = vmatpush2.bf16.msra.mxu0 %v2943
    %4421 = vmatprep.mubr.bf16.mxu0 %v776
    %4422 = vmatmul.mubr.bf16.gmra.mxu0 %v775
    %v4423 = vpop.f32.mrf.mxu0
    %v4424 = vadd.f32 %v1324, %v4423
    %v4425 = vpop.f32.mrf.mxu0
    %v4426 = vadd.f32 %v1328, %v4425
    %v4427 = vpop.f32.mrf.mxu0
    %v4428 = vpop.f32.mrf.mxu0
    %4429 = vdwg.mxu0
    %4430 = vmatprep.subr.bf16.mxu0 %v3064
    %4431 = vmatpush1.bf16.msra.mxu0 %v3063
    %4432 = vmatprep.subr.bf16.mxu0 %v3056
    %4433 = vmatpush1.bf16.msra.mxu0 %v3055
    %4434 = vmatprep.subr.bf16.mxu0 %v3048
    %4435 = vmatpush1.bf16.msra.mxu0 %v3047
    %4436 = vmatprep.subr.bf16.mxu0 %v3040
    %4437 = vmatpush1.bf16.msra.mxu0 %v3039
    %4438 = vmatprep.subr.bf16.mxu0 %v3032
    %4439 = vmatpush1.bf16.msra.mxu0 %v3031
    %4440 = vmatprep.subr.bf16.mxu0 %v3024
    %4441 = vmatpush1.bf16.msra.mxu0 %v3023
    %4442 = vmatprep.subr.bf16.mxu0 %v3016
    %4443 = vmatpush1.bf16.msra.mxu0 %v3015
    %4444 = vmatprep.subr.bf16.mxu0 %v3008
    %4445 = vmatpush1.bf16.msra.mxu0 %v3007
    %4446 = vmatprep.subr.bf16.mxu0 %v3128
    %4447 = vmatpush2.bf16.msra.mxu0 %v3127
    %4448 = vmatprep.subr.bf16.mxu0 %v3120
    %4449 = vmatpush2.bf16.msra.mxu0 %v3119
    %4450 = vmatprep.subr.bf16.mxu0 %v3112
    %4451 = vmatpush2.bf16.msra.mxu0 %v3111
    %4452 = vmatprep.subr.bf16.mxu0 %v3104
    %4453 = vmatpush2.bf16.msra.mxu0 %v3103
    %4454 = vmatprep.subr.bf16.mxu0 %v3096
    %4455 = vmatpush2.bf16.msra.mxu0 %v3095
    %4456 = vmatprep.subr.bf16.mxu0 %v3088
    %4457 = vmatpush2.bf16.msra.mxu0 %v3087
    %4458 = vmatprep.subr.bf16.mxu0 %v3080
    %4459 = vmatpush2.bf16.msra.mxu0 %v3079
    %4460 = vmatprep.subr.bf16.mxu0 %v3072
    %4461 = vmatpush2.bf16.msra.mxu0 %v3071
    %4462 = vmatprep.mubr.bf16.mxu0 %v778
    %4463 = vmatmul.mubr.bf16.gmra.mxu0 %v777
    %v4464 = vpop.f32.mrf.mxu0
    %v4465 = vadd.f32 %v4424, %v4464
    %v4466 = vpop.f32.mrf.mxu0
    %v4467 = vadd.f32 %v4426, %v4466
    %v4468 = vpop.f32.mrf.mxu0
    %v4469 = vpop.f32.mrf.mxu0
    %4470 = vdwg.mxu0
    %4471 = vmatprep.subr.bf16.mxu0 %v3192
    %4472 = vmatpush1.bf16.msra.mxu0 %v3191
    %4473 = vmatprep.subr.bf16.mxu0 %v3184
    %4474 = vmatpush1.bf16.msra.mxu0 %v3183
    %4475 = vmatprep.subr.bf16.mxu0 %v3176
    %4476 = vmatpush1.bf16.msra.mxu0 %v3175
    %4477 = vmatprep.subr.bf16.mxu0 %v3168
    %4478 = vmatpush1.bf16.msra.mxu0 %v3167
    %4479 = vmatprep.subr.bf16.mxu0 %v3160
    %4480 = vmatpush1.bf16.msra.mxu0 %v3159
    %4481 = vmatprep.subr.bf16.mxu0 %v3152
    %4482 = vmatpush1.bf16.msra.mxu0 %v3151
    %4483 = vmatprep.subr.bf16.mxu0 %v3144
    %4484 = vmatpush1.bf16.msra.mxu0 %v3143
    %4485 = vmatprep.subr.bf16.mxu0 %v3136
    %4486 = vmatpush1.bf16.msra.mxu0 %v3135
    %4487 = vmatprep.subr.bf16.mxu0 %v3256
    %4488 = vmatpush2.bf16.msra.mxu0 %v3255
    %4489 = vmatprep.subr.bf16.mxu0 %v3248
    %4490 = vmatpush2.bf16.msra.mxu0 %v3247
    %4491 = vmatprep.subr.bf16.mxu0 %v3240
    %4492 = vmatpush2.bf16.msra.mxu0 %v3239
    %4493 = vmatprep.subr.bf16.mxu0 %v3232
    %4494 = vmatpush2.bf16.msra.mxu0 %v3231
    %4495 = vmatprep.subr.bf16.mxu0 %v3224
    %4496 = vmatpush2.bf16.msra.mxu0 %v3223
    %4497 = vmatprep.subr.bf16.mxu0 %v3216
    %4498 = vmatpush2.bf16.msra.mxu0 %v3215
    %4499 = vmatprep.subr.bf16.mxu0 %v3208
    %4500 = vmatpush2.bf16.msra.mxu0 %v3207
    %4501 = vmatprep.subr.bf16.mxu0 %v3200
    %4502 = vmatpush2.bf16.msra.mxu0 %v3199
    %4503 = vmatprep.mubr.bf16.mxu0 %v780
    %4504 = vmatmul.mubr.bf16.gmra.mxu0 %v779
    %v4505 = vpop.f32.mrf.mxu0
    %v4506 = vadd.f32 %v4465, %v4505
    %v4507 = vpop.f32.mrf.mxu0
    %v4508 = vadd.f32 %v4467, %v4507
    %v4509 = vpop.f32.mrf.mxu0
    %v4510 = vpop.f32.mrf.mxu0
    %4511 = vdwg.mxu0
    %4512 = vmatprep.subr.bf16.mxu0 %v3320
    %4513 = vmatpush1.bf16.msra.mxu0 %v3319
    %4514 = vmatprep.subr.bf16.mxu0 %v3312
    %4515 = vmatpush1.bf16.msra.mxu0 %v3311
    %4516 = vmatprep.subr.bf16.mxu0 %v3304
    %4517 = vmatpush1.bf16.msra.mxu0 %v3303
    %4518 = vmatprep.subr.bf16.mxu0 %v3296
    %4519 = vmatpush1.bf16.msra.mxu0 %v3295
    %4520 = vmatprep.subr.bf16.mxu0 %v3288
    %4521 = vmatpush1.bf16.msra.mxu0 %v3287
    %4522 = vmatprep.subr.bf16.mxu0 %v3280
    %4523 = vmatpush1.bf16.msra.mxu0 %v3279
    %4524 = vmatprep.subr.bf16.mxu0 %v3272
    %4525 = vmatpush1.bf16.msra.mxu0 %v3271
    %4526 = vmatprep.subr.bf16.mxu0 %v3264
    %4527 = vmatpush1.bf16.msra.mxu0 %v3263
    %4528 = vmatprep.subr.bf16.mxu0 %v3384
    %4529 = vmatpush2.bf16.msra.mxu0 %v3383
    %4530 = vmatprep.subr.bf16.mxu0 %v3376
    %4531 = vmatpush2.bf16.msra.mxu0 %v3375
    %4532 = vmatprep.subr.bf16.mxu0 %v3368
    %4533 = vmatpush2.bf16.msra.mxu0 %v3367
    %4534 = vmatprep.subr.bf16.mxu0 %v3360
    %4535 = vmatpush2.bf16.msra.mxu0 %v3359
    %4536 = vmatprep.subr.bf16.mxu0 %v3352
    %4537 = vmatpush2.bf16.msra.mxu0 %v3351
    %4538 = vmatprep.subr.bf16.mxu0 %v3344
    %4539 = vmatpush2.bf16.msra.mxu0 %v3343
    %4540 = vmatprep.subr.bf16.mxu0 %v3336
    %4541 = vmatpush2.bf16.msra.mxu0 %v3335
    %4542 = vmatprep.subr.bf16.mxu0 %v3328
    %4543 = vmatpush2.bf16.msra.mxu0 %v3327
    %4544 = vmatprep.mubr.bf16.mxu0 %v782
    %4545 = vmatmul.mubr.bf16.gmra.mxu0 %v781
    %v4546 = vpop.f32.mrf.mxu0
    %v4547 = vadd.f32 %v4506, %v4546
    %v4548 = vpop.f32.mrf.mxu0
    %v4549 = vadd.f32 %v4508, %v4548
    %v4550 = vpop.f32.mrf.mxu0
    %v4551 = vpop.f32.mrf.mxu0
    %4552 = vdwg.mxu0
    %v4553 = vrot.slane %v4055, 4
    %v4554 = vadd.f32 %v4055, %v4553
    %v4555 = vrot.slane %v4554, 2
    %v4556 = vadd.f32 %v4554, %v4555
    %v4557 = vrot.slane %v4556, 1
    %v4558 = vadd.f32 %v4556, %v4557
    %v4559 = vrot.slane %v4057, 4
    %v4560 = vadd.f32 %v4057, %v4559
    %v4561 = vrot.slane %v4560, 2
    %v4562 = vadd.f32 %v4560, %v4561
    %v4563 = vrot.slane %v4562, 1
    %v4564 = vadd.f32 %v4562, %v4563
    %v4565 = vrot.slane %v4219, 4
    %v4566 = vadd.f32 %v4219, %v4565
    %v4567 = vrot.slane %v4566, 2
    %v4568 = vadd.f32 %v4566, %v4567
    %v4569 = vrot.slane %v4568, 1
    %v4570 = vadd.f32 %v4568, %v4569
    %v4571 = vrot.slane %v4221, 4
    %v4572 = vadd.f32 %v4221, %v4571
    %v4573 = vrot.slane %v4572, 2
    %v4574 = vadd.f32 %v4572, %v4573
    %v4575 = vrot.slane %v4574, 1
    %v4576 = vadd.f32 %v4574, %v4575
    %v4577 = vrot.slane %v4383, 4
    %v4578 = vadd.f32 %v4383, %v4577
    %v4579 = vrot.slane %v4578, 2
    %v4580 = vadd.f32 %v4578, %v4579
    %v4581 = vrot.slane %v4580, 1
    %v4582 = vadd.f32 %v4580, %v4581
    %v4583 = vrot.slane %v4385, 4
    %v4584 = vadd.f32 %v4385, %v4583
    %v4585 = vrot.slane %v4584, 2
    %v4586 = vadd.f32 %v4584, %v4585
    %v4587 = vrot.slane %v4586, 1
    %v4588 = vadd.f32 %v4586, %v4587
    %v4589 = vrot.slane %v4547, 4
    %v4590 = vadd.f32 %v4547, %v4589
    %v4591 = vrot.slane %v4590, 2
    %v4592 = vadd.f32 %v4590, %v4591
    %v4593 = vrot.slane %v4592, 1
    %v4594 = vadd.f32 %v4592, %v4593
    %v4595 = vrot.slane %v4549, 4
    %v4596 = vadd.f32 %v4549, %v4595
    %v4597 = vrot.slane %v4596, 2
    %v4598 = vadd.f32 %v4596, %v4597
    %v4599 = vrot.slane %v4598, 1
    %v4600 = vadd.f32 %v4598, %v4599
    %v4601 = vmul.f32 %v4558, %v546
    %v4602 = vmul.f32 %v4564, %v546
    %v4603 = vmul.f32 %v4570, %v546
    %v4604 = vmul.f32 %v4576, %v546
    %v4605 = vmul.f32 %v4582, %v546
    %v4606 = vmul.f32 %v4588, %v546
    %v4607 = vmul.f32 %v4594, %v546
    %v4608 = vmul.f32 %v4600, %v546
    %v4609 = vsub.f32 %v4055, %v4601
    %v4610 = vsub.f32 %v4057, %v4602
    %v4611 = vsub.f32 %v4219, %v4603
    %v4612 = vsub.f32 %v4221, %v4604
    %v4613 = vsub.f32 %v4383, %v4605
    %v4614 = vsub.f32 %v4385, %v4606
    %v4615 = vsub.f32 %v4547, %v4607
    %v4616 = vsub.f32 %v4549, %v4608
    %v4617 = vmul.f32 %v4609, %v4609
    %v4618 = vmul.f32 %v4610, %v4610
    %v4619 = vmul.f32 %v4611, %v4611
    %v4620 = vmul.f32 %v4612, %v4612
    %v4621 = vmul.f32 %v4613, %v4613
    %v4622 = vmul.f32 %v4614, %v4614
    %v4623 = vmul.f32 %v4615, %v4615
    %v4624 = vmul.f32 %v4616, %v4616
    %v4625 = vrot.slane %v4617, 4
    %v4626 = vadd.f32 %v4617, %v4625
    %v4627 = vrot.slane %v4626, 2
    %v4628 = vadd.f32 %v4626, %v4627
    %v4629 = vrot.slane %v4628, 1
    %v4630 = vadd.f32 %v4628, %v4629
    %v4631 = vrot.slane %v4618, 4
    %v4632 = vadd.f32 %v4618, %v4631
    %v4633 = vrot.slane %v4632, 2
    %v4634 = vadd.f32 %v4632, %v4633
    %v4635 = vrot.slane %v4634, 1
    %v4636 = vadd.f32 %v4634, %v4635
    %v4637 = vrot.slane %v4619, 4
    %v4638 = vadd.f32 %v4619, %v4637
    %v4639 = vrot.slane %v4638, 2
    %v4640 = vadd.f32 %v4638, %v4639
    %v4641 = vrot.slane %v4640, 1
    %v4642 = vadd.f32 %v4640, %v4641
    %v4643 = vrot.slane %v4620, 4
    %v4644 = vadd.f32 %v4620, %v4643
    %v4645 = vrot.slane %v4644, 2
    %v4646 = vadd.f32 %v4644, %v4645
    %v4647 = vrot.slane %v4646, 1
    %v4648 = vadd.f32 %v4646, %v4647
    %v4649 = vrot.slane %v4621, 4
    %v4650 = vadd.f32 %v4621, %v4649
    %v4651 = vrot.slane %v4650, 2
    %v4652 = vadd.f32 %v4650, %v4651
    %v4653 = vrot.slane %v4652, 1
    %v4654 = vadd.f32 %v4652, %v4653
    %v4655 = vrot.slane %v4622, 4
    %v4656 = vadd.f32 %v4622, %v4655
    %v4657 = vrot.slane %v4656, 2
    %v4658 = vadd.f32 %v4656, %v4657
    %v4659 = vrot.slane %v4658, 1
    %v4660 = vadd.f32 %v4658, %v4659
    %v4661 = vrot.slane %v4623, 4
    %v4662 = vadd.f32 %v4623, %v4661
    %v4663 = vrot.slane %v4662, 2
    %v4664 = vadd.f32 %v4662, %v4663
    %v4665 = vrot.slane %v4664, 1
    %v4666 = vadd.f32 %v4664, %v4665
    %v4667 = vrot.slane %v4624, 4
    %v4668 = vadd.f32 %v4624, %v4667
    %v4669 = vrot.slane %v4668, 2
    %v4670 = vadd.f32 %v4668, %v4669
    %v4671 = vrot.slane %v4670, 1
    %v4672 = vadd.f32 %v4670, %v4671
    %v4673 = vmul.f32 %v4630, %v546
    %v4674 = vmul.f32 %v4636, %v546
    %v4675 = vmul.f32 %v4642, %v546
    %v4676 = vmul.f32 %v4648, %v546
    %v4677 = vmul.f32 %v4654, %v546
    %v4678 = vmul.f32 %v4660, %v546
    %v4679 = vmul.f32 %v4666, %v546
    %v4680 = vmul.f32 %v4672, %v546
    %v4681 = vadd.f32 %v4673, 1e-05
    %v4682 = vadd.f32 %v4674, 1e-05
    %v4683 = vadd.f32 %v4675, 1e-05
    %v4684 = vadd.f32 %v4676, 1e-05
    %v4685 = vadd.f32 %v4677, 1e-05
    %v4686 = vadd.f32 %v4678, 1e-05
    %v4687 = vadd.f32 %v4679, 1e-05
    %v4688 = vadd.f32 %v4680, 1e-05
    %v4689 = vrsqrt.pop %v4681
    %v4690 = vrsqrt.pop %v4682
    %v4691 = vrsqrt.pop %v4683
    %v4692 = vrsqrt.pop %v4684
    %v4693 = vrsqrt.pop %v4685
    %v4694 = vrsqrt.pop %v4686
    %v4695 = vrsqrt.pop %v4687
    %v4696 = vrsqrt.pop %v4688
    %v4697 = vmul.f32 %v4609, %v4689
    %v4698 = vmul.f32 %v4610, %v4690
    %v4699 = vmul.f32 %v4611, %v4691
    %v4700 = vmul.f32 %v4612, %v4692
    %v4701 = vmul.f32 %v4613, %v4693
    %v4702 = vmul.f32 %v4614, %v4694
    %v4703 = vmul.f32 %v4615, %v4695
    %v4704 = vmul.f32 %v4616, %v4696
    %v4705 = vld [vmem:[#allocation12] sm:$0xff]
    %v4707 = vlaneseq
    %v4708 = vshrl.u32 %v4707, 7
    %v4709 = vsub.s32 0, %v4708
    %v4710 = vrot.slane %v4705, %v4709
    %v4711 = vlaneseq
    %v4712 = vshrl.u32 %v4711, 7
    %v4713 = vsub.s32 1, %v4712
    %v4714 = vrot.slane %v4705, %v4713
    %v4715 = vlaneseq
    %v4716 = vshrl.u32 %v4715, 7
    %v4717 = vsub.s32 2, %v4716
    %v4718 = vrot.slane %v4705, %v4717
    %v4719 = vlaneseq
    %v4720 = vshrl.u32 %v4719, 7
    %v4721 = vsub.s32 3, %v4720
    %v4722 = vrot.slane %v4705, %v4721
    %v4723 = vlaneseq
    %v4724 = vshrl.u32 %v4723, 7
    %v4725 = vsub.s32 4, %v4724
    %v4726 = vrot.slane %v4705, %v4725
    %v4727 = vlaneseq
    %v4728 = vshrl.u32 %v4727, 7
    %v4729 = vsub.s32 5, %v4728
    %v4730 = vrot.slane %v4705, %v4729
    %v4731 = vlaneseq
    %v4732 = vshrl.u32 %v4731, 7
    %v4733 = vsub.s32 6, %v4732
    %v4734 = vrot.slane %v4705, %v4733
    %v4735 = vlaneseq
    %v4736 = vshrl.u32 %v4735, 7
    %v4737 = vsub.s32 7, %v4736
    %v4738 = vrot.slane %v4705, %v4737
    %v4747 = vmul.f32 %v4697, %v4710
    %v4748 = vmul.f32 %v4698, %v4714
    %v4749 = vmul.f32 %v4699, %v4718
    %v4750 = vmul.f32 %v4700, %v4722
    %v4751 = vmul.f32 %v4701, %v4726
    %v4752 = vmul.f32 %v4702, %v4730
    %v4753 = vmul.f32 %v4703, %v4734
    %v4754 = vmul.f32 %v4704, %v4738
    %v4755 = vld [vmem:[#allocation13] sm:$0xff]
    %v4757 = vlaneseq
    %v4758 = vshrl.u32 %v4757, 7
    %v4759 = vsub.s32 0, %v4758
    %v4760 = vrot.slane %v4755, %v4759
    %v4761 = vlaneseq
    %v4762 = vshrl.u32 %v4761, 7
    %v4763 = vsub.s32 1, %v4762
    %v4764 = vrot.slane %v4755, %v4763
    %v4765 = vlaneseq
    %v4766 = vshrl.u32 %v4765, 7
    %v4767 = vsub.s32 2, %v4766
    %v4768 = vrot.slane %v4755, %v4767
    %v4769 = vlaneseq
    %v4770 = vshrl.u32 %v4769, 7
    %v4771 = vsub.s32 3, %v4770
    %v4772 = vrot.slane %v4755, %v4771
    %v4773 = vlaneseq
    %v4774 = vshrl.u32 %v4773, 7
    %v4775 = vsub.s32 4, %v4774
    %v4776 = vrot.slane %v4755, %v4775
    %v4777 = vlaneseq
    %v4778 = vshrl.u32 %v4777, 7
    %v4779 = vsub.s32 5, %v4778
    %v4780 = vrot.slane %v4755, %v4779
    %v4781 = vlaneseq
    %v4782 = vshrl.u32 %v4781, 7
    %v4783 = vsub.s32 6, %v4782
    %v4784 = vrot.slane %v4755, %v4783
    %v4785 = vlaneseq
    %v4786 = vshrl.u32 %v4785, 7
    %v4787 = vsub.s32 7, %v4786
    %v4788 = vrot.slane %v4755, %v4787
    %v4797 = vadd.f32 %v4747, %v4760
    %v4798 = vadd.f32 %v4748, %v4764
    %v4799 = vadd.f32 %v4749, %v4768
    %v4800 = vadd.f32 %v4750, %v4772
    %v4801 = vadd.f32 %v4751, %v4776
    %v4802 = vadd.f32 %v4752, %v4780
    %v4803 = vadd.f32 %v4753, %v4784
    %v4804 = vadd.f32 %v4754, %v4788
    %vm4805 = vcmp.ge.f32.partialorder %v4797, 0.0
    %vm4806 = vcmp.ge.f32.partialorder %v4798, 0.0
    %vm4807 = vcmp.ge.f32.partialorder %v4799, 0.0
    %vm4808 = vcmp.ge.f32.partialorder %v4800, 0.0
    %vm4809 = vcmp.ge.f32.partialorder %v4801, 0.0
    %vm4810 = vcmp.ge.f32.partialorder %v4802, 0.0
    %vm4811 = vcmp.ge.f32.partialorder %v4803, 0.0
    %vm4812 = vcmp.ge.f32.partialorder %v4804, 0.0
    %v4813 = vmul.f32 %v4797, 0.01
    %v4814 = vmul.f32 %v4798, 0.01
    %v4815 = vmul.f32 %v4799, 0.01
    %v4816 = vmul.f32 %v4800, 0.01
    %v4817 = vmul.f32 %v4801, 0.01
    %v4818 = vmul.f32 %v4802, 0.01
    %v4819 = vmul.f32 %v4803, 0.01
    %v4820 = vmul.f32 %v4804, 0.01
    %v4821 = vsel %vm4805, %v4797, %v4813
    %v4822 = vsel %vm4806, %v4798, %v4814
    %v4823 = vsel %vm4807, %v4799, %v4815
    %v4824 = vsel %vm4808, %v4800, %v4816
    %v4825 = vsel %vm4809, %v4801, %v4817
    %v4826 = vsel %vm4810, %v4802, %v4818
    %v4827 = vsel %vm4811, %v4803, %v4819
    %v4828 = vsel %vm4812, %v4804, %v4820
    %v4829 = vpack.c.bf16 %v4821, %v4821
    %v4830 = vpack.c.bf16 %v4822, %v4822
    %v4831 = vpack.c.bf16 %v4823, %v4823
    %v4832 = vpack.c.bf16 %v4824, %v4824
    %v4833 = vpack.c.bf16 %v4825, %v4825
    %v4834 = vpack.c.bf16 %v4826, %v4826
    %v4835 = vpack.c.bf16 %v4827, %v4827
    %v4836 = vpack.c.bf16 %v4828, %v4828
    %v4837 = vld [vmem:[#allocation15] sm:$0xff]
    %v4838 = vld [vmem:[#allocation15 + $0x8] sm:$0xff]
    %v4839 = vld [vmem:[#allocation15 + $0x10] sm:$0xff]
    %v4840 = vld [vmem:[#allocation15 + $0x18] sm:$0xff]
    %v4841 = vld [vmem:[#allocation15 + $0x20] sm:$0xff]
    %v4842 = vld [vmem:[#allocation15 + $0x28] sm:$0xff]
    %v4843 = vld [vmem:[#allocation15 + $0x30] sm:$0xff]
    %v4844 = vld [vmem:[#allocation15 + $0x38] sm:$0xff]
    %v4845 = vld [vmem:[#allocation15 + $0x40] sm:$0xff]
    %v4846 = vld [vmem:[#allocation15 + $0x48] sm:$0xff]
    %v4847 = vld [vmem:[#allocation15 + $0x50] sm:$0xff]
    %v4848 = vld [vmem:[#allocation15 + $0x58] sm:$0xff]
    %v4849 = vld [vmem:[#allocation15 + $0x60] sm:$0xff]
    %v4850 = vld [vmem:[#allocation15 + $0x68] sm:$0xff]
    %v4851 = vld [vmem:[#allocation15 + $0x70] sm:$0xff]
    %v4852 = vld [vmem:[#allocation15 + $0x78] sm:$0xff]
    %v4853 = vld [vmem:[#allocation15 + $0x80] sm:$0xff]
    %v4854 = vld [vmem:[#allocation15 + $0x88] sm:$0xff]
    %v4855 = vld [vmem:[#allocation15 + $0x90] sm:$0xff]
    %v4856 = vld [vmem:[#allocation15 + $0x98] sm:$0xff]
    %v4857 = vld [vmem:[#allocation15 + $0xa0] sm:$0xff]
    %v4858 = vld [vmem:[#allocation15 + $0xa8] sm:$0xff]
    %v4859 = vld [vmem:[#allocation15 + $0xb0] sm:$0xff]
    %v4860 = vld [vmem:[#allocation15 + $0xb8] sm:$0xff]
    %v4861 = vld [vmem:[#allocation15 + $0xc0] sm:$0xff]
    %v4862 = vld [vmem:[#allocation15 + $0xc8] sm:$0xff]
    %v4863 = vld [vmem:[#allocation15 + $0xd0] sm:$0xff]
    %v4864 = vld [vmem:[#allocation15 + $0xd8] sm:$0xff]
    %v4865 = vld [vmem:[#allocation15 + $0xe0] sm:$0xff]
    %v4866 = vld [vmem:[#allocation15 + $0xe8] sm:$0xff]
    %v4867 = vld [vmem:[#allocation15 + $0xf0] sm:$0xff]
    %v4868 = vld [vmem:[#allocation15 + $0xf8] sm:$0xff]
    %v4869 = vld [vmem:[#allocation15 + $0x100] sm:$0xff]
    %v4870 = vld [vmem:[#allocation15 + $0x108] sm:$0xff]
    %v4871 = vld [vmem:[#allocation15 + $0x110] sm:$0xff]
    %v4872 = vld [vmem:[#allocation15 + $0x118] sm:$0xff]
    %v4873 = vld [vmem:[#allocation15 + $0x120] sm:$0xff]
    %v4874 = vld [vmem:[#allocation15 + $0x128] sm:$0xff]
    %v4875 = vld [vmem:[#allocation15 + $0x130] sm:$0xff]
    %v4876 = vld [vmem:[#allocation15 + $0x138] sm:$0xff]
    %v4877 = vld [vmem:[#allocation15 + $0x140] sm:$0xff]
    %v4878 = vld [vmem:[#allocation15 + $0x148] sm:$0xff]
    %v4879 = vld [vmem:[#allocation15 + $0x150] sm:$0xff]
    %v4880 = vld [vmem:[#allocation15 + $0x158] sm:$0xff]
    %v4881 = vld [vmem:[#allocation15 + $0x160] sm:$0xff]
    %v4882 = vld [vmem:[#allocation15 + $0x168] sm:$0xff]
    %v4883 = vld [vmem:[#allocation15 + $0x170] sm:$0xff]
    %v4884 = vld [vmem:[#allocation15 + $0x178] sm:$0xff]
    %v4885 = vld [vmem:[#allocation15 + $0x180] sm:$0xff]
    %v4886 = vld [vmem:[#allocation15 + $0x188] sm:$0xff]
    %v4887 = vld [vmem:[#allocation15 + $0x190] sm:$0xff]
    %v4888 = vld [vmem:[#allocation15 + $0x198] sm:$0xff]
    %v4889 = vld [vmem:[#allocation15 + $0x1a0] sm:$0xff]
    %v4890 = vld [vmem:[#allocation15 + $0x1a8] sm:$0xff]
    %v4891 = vld [vmem:[#allocation15 + $0x1b0] sm:$0xff]
    %v4892 = vld [vmem:[#allocation15 + $0x1b8] sm:$0xff]
    %v4893 = vld [vmem:[#allocation15 + $0x1c0] sm:$0xff]
    %v4894 = vld [vmem:[#allocation15 + $0x1c8] sm:$0xff]
    %v4895 = vld [vmem:[#allocation15 + $0x1d0] sm:$0xff]
    %v4896 = vld [vmem:[#allocation15 + $0x1d8] sm:$0xff]
    %v4897 = vld [vmem:[#allocation15 + $0x1e0] sm:$0xff]
    %v4898 = vld [vmem:[#allocation15 + $0x1e8] sm:$0xff]
    %v4899 = vld [vmem:[#allocation15 + $0x1f0] sm:$0xff]
    %v4900 = vld [vmem:[#allocation15 + $0x1f8] sm:$0xff]
    %v4901 = vld [vmem:[#allocation15 + $0x200] sm:$0xff]
    %v4902 = vld [vmem:[#allocation15 + $0x208] sm:$0xff]
    %v4903 = vld [vmem:[#allocation15 + $0x210] sm:$0xff]
    %v4904 = vld [vmem:[#allocation15 + $0x218] sm:$0xff]
    %v4905 = vld [vmem:[#allocation15 + $0x220] sm:$0xff]
    %v4906 = vld [vmem:[#allocation15 + $0x228] sm:$0xff]
    %v4907 = vld [vmem:[#allocation15 + $0x230] sm:$0xff]
    %v4908 = vld [vmem:[#allocation15 + $0x238] sm:$0xff]
    %v4909 = vld [vmem:[#allocation15 + $0x240] sm:$0xff]
    %v4910 = vld [vmem:[#allocation15 + $0x248] sm:$0xff]
    %v4911 = vld [vmem:[#allocation15 + $0x250] sm:$0xff]
    %v4912 = vld [vmem:[#allocation15 + $0x258] sm:$0xff]
    %v4913 = vld [vmem:[#allocation15 + $0x260] sm:$0xff]
    %v4914 = vld [vmem:[#allocation15 + $0x268] sm:$0xff]
    %v4915 = vld [vmem:[#allocation15 + $0x270] sm:$0xff]
    %v4916 = vld [vmem:[#allocation15 + $0x278] sm:$0xff]
    %v4917 = vld [vmem:[#allocation15 + $0x280] sm:$0xff]
    %v4918 = vld [vmem:[#allocation15 + $0x288] sm:$0xff]
    %v4919 = vld [vmem:[#allocation15 + $0x290] sm:$0xff]
    %v4920 = vld [vmem:[#allocation15 + $0x298] sm:$0xff]
    %v4921 = vld [vmem:[#allocation15 + $0x2a0] sm:$0xff]
    %v4922 = vld [vmem:[#allocation15 + $0x2a8] sm:$0xff]
    %v4923 = vld [vmem:[#allocation15 + $0x2b0] sm:$0xff]
    %v4924 = vld [vmem:[#allocation15 + $0x2b8] sm:$0xff]
    %v4925 = vld [vmem:[#allocation15 + $0x2c0] sm:$0xff]
    %v4926 = vld [vmem:[#allocation15 + $0x2c8] sm:$0xff]
    %v4927 = vld [vmem:[#allocation15 + $0x2d0] sm:$0xff]
    %v4928 = vld [vmem:[#allocation15 + $0x2d8] sm:$0xff]
    %v4929 = vld [vmem:[#allocation15 + $0x2e0] sm:$0xff]
    %v4930 = vld [vmem:[#allocation15 + $0x2e8] sm:$0xff]
    %v4931 = vld [vmem:[#allocation15 + $0x2f0] sm:$0xff]
    %v4932 = vld [vmem:[#allocation15 + $0x2f8] sm:$0xff]
    %v4933 = vld [vmem:[#allocation15 + $0x300] sm:$0xff]
    %v4934 = vld [vmem:[#allocation15 + $0x308] sm:$0xff]
    %v4935 = vld [vmem:[#allocation15 + $0x310] sm:$0xff]
    %v4936 = vld [vmem:[#allocation15 + $0x318] sm:$0xff]
    %v4937 = vld [vmem:[#allocation15 + $0x320] sm:$0xff]
    %v4938 = vld [vmem:[#allocation15 + $0x328] sm:$0xff]
    %v4939 = vld [vmem:[#allocation15 + $0x330] sm:$0xff]
    %v4940 = vld [vmem:[#allocation15 + $0x338] sm:$0xff]
    %v4941 = vld [vmem:[#allocation15 + $0x340] sm:$0xff]
    %v4942 = vld [vmem:[#allocation15 + $0x348] sm:$0xff]
    %v4943 = vld [vmem:[#allocation15 + $0x350] sm:$0xff]
    %v4944 = vld [vmem:[#allocation15 + $0x358] sm:$0xff]
    %v4945 = vld [vmem:[#allocation15 + $0x360] sm:$0xff]
    %v4946 = vld [vmem:[#allocation15 + $0x368] sm:$0xff]
    %v4947 = vld [vmem:[#allocation15 + $0x370] sm:$0xff]
    %v4948 = vld [vmem:[#allocation15 + $0x378] sm:$0xff]
    %v4949 = vld [vmem:[#allocation15 + $0x380] sm:$0xff]
    %v4950 = vld [vmem:[#allocation15 + $0x388] sm:$0xff]
    %v4951 = vld [vmem:[#allocation15 + $0x390] sm:$0xff]
    %v4952 = vld [vmem:[#allocation15 + $0x398] sm:$0xff]
    %v4953 = vld [vmem:[#allocation15 + $0x3a0] sm:$0xff]
    %v4954 = vld [vmem:[#allocation15 + $0x3a8] sm:$0xff]
    %v4955 = vld [vmem:[#allocation15 + $0x3b0] sm:$0xff]
    %v4956 = vld [vmem:[#allocation15 + $0x3b8] sm:$0xff]
    %v4957 = vld [vmem:[#allocation15 + $0x3c0] sm:$0xff]
    %v4958 = vld [vmem:[#allocation15 + $0x3c8] sm:$0xff]
    %v4959 = vld [vmem:[#allocation15 + $0x3d0] sm:$0xff]
    %v4960 = vld [vmem:[#allocation15 + $0x3d8] sm:$0xff]
    %v4961 = vld [vmem:[#allocation15 + $0x3e0] sm:$0xff]
    %v4962 = vld [vmem:[#allocation15 + $0x3e8] sm:$0xff]
    %v4963 = vld [vmem:[#allocation15 + $0x3f0] sm:$0xff]
    %v4964 = vld [vmem:[#allocation15 + $0x3f8] sm:$0xff]
    %v4965 = vld [vmem:[#allocation15 + $0x400] sm:$0xff]
    %v4966 = vld [vmem:[#allocation15 + $0x408] sm:$0xff]
    %v4967 = vld [vmem:[#allocation15 + $0x410] sm:$0xff]
    %v4968 = vld [vmem:[#allocation15 + $0x418] sm:$0xff]
    %v4969 = vld [vmem:[#allocation15 + $0x420] sm:$0xff]
    %v4970 = vld [vmem:[#allocation15 + $0x428] sm:$0xff]
    %v4971 = vld [vmem:[#allocation15 + $0x430] sm:$0xff]
    %v4972 = vld [vmem:[#allocation15 + $0x438] sm:$0xff]
    %v4973 = vld [vmem:[#allocation15 + $0x440] sm:$0xff]
    %v4974 = vld [vmem:[#allocation15 + $0x448] sm:$0xff]
    %v4975 = vld [vmem:[#allocation15 + $0x450] sm:$0xff]
    %v4976 = vld [vmem:[#allocation15 + $0x458] sm:$0xff]
    %v4977 = vld [vmem:[#allocation15 + $0x460] sm:$0xff]
    %v4978 = vld [vmem:[#allocation15 + $0x468] sm:$0xff]
    %v4979 = vld [vmem:[#allocation15 + $0x470] sm:$0xff]
    %v4980 = vld [vmem:[#allocation15 + $0x478] sm:$0xff]
    %v4981 = vld [vmem:[#allocation15 + $0x480] sm:$0xff]
    %v4982 = vld [vmem:[#allocation15 + $0x488] sm:$0xff]
    %v4983 = vld [vmem:[#allocation15 + $0x490] sm:$0xff]
    %v4984 = vld [vmem:[#allocation15 + $0x498] sm:$0xff]
    %v4985 = vld [vmem:[#allocation15 + $0x4a0] sm:$0xff]
    %v4986 = vld [vmem:[#allocation15 + $0x4a8] sm:$0xff]
    %v4987 = vld [vmem:[#allocation15 + $0x4b0] sm:$0xff]
    %v4988 = vld [vmem:[#allocation15 + $0x4b8] sm:$0xff]
    %v4989 = vld [vmem:[#allocation15 + $0x4c0] sm:$0xff]
    %v4990 = vld [vmem:[#allocation15 + $0x4c8] sm:$0xff]
    %v4991 = vld [vmem:[#allocation15 + $0x4d0] sm:$0xff]
    %v4992 = vld [vmem:[#allocation15 + $0x4d8] sm:$0xff]
    %v4993 = vld [vmem:[#allocation15 + $0x4e0] sm:$0xff]
    %v4994 = vld [vmem:[#allocation15 + $0x4e8] sm:$0xff]
    %v4995 = vld [vmem:[#allocation15 + $0x4f0] sm:$0xff]
    %v4996 = vld [vmem:[#allocation15 + $0x4f8] sm:$0xff]
    %v4997 = vld [vmem:[#allocation15 + $0x500] sm:$0xff]
    %v4998 = vld [vmem:[#allocation15 + $0x508] sm:$0xff]
    %v4999 = vld [vmem:[#allocation15 + $0x510] sm:$0xff]
    %v5000 = vld [vmem:[#allocation15 + $0x518] sm:$0xff]
    %v5001 = vld [vmem:[#allocation15 + $0x520] sm:$0xff]
    %v5002 = vld [vmem:[#allocation15 + $0x528] sm:$0xff]
    %v5003 = vld [vmem:[#allocation15 + $0x530] sm:$0xff]
    %v5004 = vld [vmem:[#allocation15 + $0x538] sm:$0xff]
    %v5005 = vld [vmem:[#allocation15 + $0x540] sm:$0xff]
    %v5006 = vld [vmem:[#allocation15 + $0x548] sm:$0xff]
    %v5007 = vld [vmem:[#allocation15 + $0x550] sm:$0xff]
    %v5008 = vld [vmem:[#allocation15 + $0x558] sm:$0xff]
    %v5009 = vld [vmem:[#allocation15 + $0x560] sm:$0xff]
    %v5010 = vld [vmem:[#allocation15 + $0x568] sm:$0xff]
    %v5011 = vld [vmem:[#allocation15 + $0x570] sm:$0xff]
    %v5012 = vld [vmem:[#allocation15 + $0x578] sm:$0xff]
    %v5013 = vld [vmem:[#allocation15 + $0x580] sm:$0xff]
    %v5014 = vld [vmem:[#allocation15 + $0x588] sm:$0xff]
    %v5015 = vld [vmem:[#allocation15 + $0x590] sm:$0xff]
    %v5016 = vld [vmem:[#allocation15 + $0x598] sm:$0xff]
    %v5017 = vld [vmem:[#allocation15 + $0x5a0] sm:$0xff]
    %v5018 = vld [vmem:[#allocation15 + $0x5a8] sm:$0xff]
    %v5019 = vld [vmem:[#allocation15 + $0x5b0] sm:$0xff]
    %v5020 = vld [vmem:[#allocation15 + $0x5b8] sm:$0xff]
    %v5021 = vld [vmem:[#allocation15 + $0x5c0] sm:$0xff]
    %v5022 = vld [vmem:[#allocation15 + $0x5c8] sm:$0xff]
    %v5023 = vld [vmem:[#allocation15 + $0x5d0] sm:$0xff]
    %v5024 = vld [vmem:[#allocation15 + $0x5d8] sm:$0xff]
    %v5025 = vld [vmem:[#allocation15 + $0x5e0] sm:$0xff]
    %v5026 = vld [vmem:[#allocation15 + $0x5e8] sm:$0xff]
    %v5027 = vld [vmem:[#allocation15 + $0x5f0] sm:$0xff]
    %v5028 = vld [vmem:[#allocation15 + $0x5f8] sm:$0xff]
    %v5029 = vld [vmem:[#allocation15 + $0x600] sm:$0xff]
    %v5030 = vld [vmem:[#allocation15 + $0x608] sm:$0xff]
    %v5031 = vld [vmem:[#allocation15 + $0x610] sm:$0xff]
    %v5032 = vld [vmem:[#allocation15 + $0x618] sm:$0xff]
    %v5033 = vld [vmem:[#allocation15 + $0x620] sm:$0xff]
    %v5034 = vld [vmem:[#allocation15 + $0x628] sm:$0xff]
    %v5035 = vld [vmem:[#allocation15 + $0x630] sm:$0xff]
    %v5036 = vld [vmem:[#allocation15 + $0x638] sm:$0xff]
    %v5037 = vld [vmem:[#allocation15 + $0x640] sm:$0xff]
    %v5038 = vld [vmem:[#allocation15 + $0x648] sm:$0xff]
    %v5039 = vld [vmem:[#allocation15 + $0x650] sm:$0xff]
    %v5040 = vld [vmem:[#allocation15 + $0x658] sm:$0xff]
    %v5041 = vld [vmem:[#allocation15 + $0x660] sm:$0xff]
    %v5042 = vld [vmem:[#allocation15 + $0x668] sm:$0xff]
    %v5043 = vld [vmem:[#allocation15 + $0x670] sm:$0xff]
    %v5044 = vld [vmem:[#allocation15 + $0x678] sm:$0xff]
    %v5045 = vld [vmem:[#allocation15 + $0x680] sm:$0xff]
    %v5046 = vld [vmem:[#allocation15 + $0x688] sm:$0xff]
    %v5047 = vld [vmem:[#allocation15 + $0x690] sm:$0xff]
    %v5048 = vld [vmem:[#allocation15 + $0x698] sm:$0xff]
    %v5049 = vld [vmem:[#allocation15 + $0x6a0] sm:$0xff]
    %v5050 = vld [vmem:[#allocation15 + $0x6a8] sm:$0xff]
    %v5051 = vld [vmem:[#allocation15 + $0x6b0] sm:$0xff]
    %v5052 = vld [vmem:[#allocation15 + $0x6b8] sm:$0xff]
    %v5053 = vld [vmem:[#allocation15 + $0x6c0] sm:$0xff]
    %v5054 = vld [vmem:[#allocation15 + $0x6c8] sm:$0xff]
    %v5055 = vld [vmem:[#allocation15 + $0x6d0] sm:$0xff]
    %v5056 = vld [vmem:[#allocation15 + $0x6d8] sm:$0xff]
    %v5057 = vld [vmem:[#allocation15 + $0x6e0] sm:$0xff]
    %v5058 = vld [vmem:[#allocation15 + $0x6e8] sm:$0xff]
    %v5059 = vld [vmem:[#allocation15 + $0x6f0] sm:$0xff]
    %v5060 = vld [vmem:[#allocation15 + $0x6f8] sm:$0xff]
    %v5061 = vld [vmem:[#allocation15 + $0x700] sm:$0xff]
    %v5062 = vld [vmem:[#allocation15 + $0x708] sm:$0xff]
    %v5063 = vld [vmem:[#allocation15 + $0x710] sm:$0xff]
    %v5064 = vld [vmem:[#allocation15 + $0x718] sm:$0xff]
    %v5065 = vld [vmem:[#allocation15 + $0x720] sm:$0xff]
    %v5066 = vld [vmem:[#allocation15 + $0x728] sm:$0xff]
    %v5067 = vld [vmem:[#allocation15 + $0x730] sm:$0xff]
    %v5068 = vld [vmem:[#allocation15 + $0x738] sm:$0xff]
    %v5069 = vld [vmem:[#allocation15 + $0x740] sm:$0xff]
    %v5070 = vld [vmem:[#allocation15 + $0x748] sm:$0xff]
    %v5071 = vld [vmem:[#allocation15 + $0x750] sm:$0xff]
    %v5072 = vld [vmem:[#allocation15 + $0x758] sm:$0xff]
    %v5073 = vld [vmem:[#allocation15 + $0x760] sm:$0xff]
    %v5074 = vld [vmem:[#allocation15 + $0x768] sm:$0xff]
    %v5075 = vld [vmem:[#allocation15 + $0x770] sm:$0xff]
    %v5076 = vld [vmem:[#allocation15 + $0x778] sm:$0xff]
    %v5077 = vld [vmem:[#allocation15 + $0x780] sm:$0xff]
    %v5078 = vld [vmem:[#allocation15 + $0x788] sm:$0xff]
    %v5079 = vld [vmem:[#allocation15 + $0x790] sm:$0xff]
    %v5080 = vld [vmem:[#allocation15 + $0x798] sm:$0xff]
    %v5081 = vld [vmem:[#allocation15 + $0x7a0] sm:$0xff]
    %v5082 = vld [vmem:[#allocation15 + $0x7a8] sm:$0xff]
    %v5083 = vld [vmem:[#allocation15 + $0x7b0] sm:$0xff]
    %v5084 = vld [vmem:[#allocation15 + $0x7b8] sm:$0xff]
    %v5085 = vld [vmem:[#allocation15 + $0x7c0] sm:$0xff]
    %v5086 = vld [vmem:[#allocation15 + $0x7c8] sm:$0xff]
    %v5087 = vld [vmem:[#allocation15 + $0x7d0] sm:$0xff]
    %v5088 = vld [vmem:[#allocation15 + $0x7d8] sm:$0xff]
    %v5089 = vld [vmem:[#allocation15 + $0x7e0] sm:$0xff]
    %v5090 = vld [vmem:[#allocation15 + $0x7e8] sm:$0xff]
    %v5091 = vld [vmem:[#allocation15 + $0x7f0] sm:$0xff]
    %v5092 = vld [vmem:[#allocation15 + $0x7f8] sm:$0xff]
    %v5093 = vld [vmem:[#allocation15 + $0x800] sm:$0xff]
    %v5094 = vld [vmem:[#allocation15 + $0x808] sm:$0xff]
    %v5095 = vld [vmem:[#allocation15 + $0x810] sm:$0xff]
    %v5096 = vld [vmem:[#allocation15 + $0x818] sm:$0xff]
    %v5097 = vld [vmem:[#allocation15 + $0x820] sm:$0xff]
    %v5098 = vld [vmem:[#allocation15 + $0x828] sm:$0xff]
    %v5099 = vld [vmem:[#allocation15 + $0x830] sm:$0xff]
    %v5100 = vld [vmem:[#allocation15 + $0x838] sm:$0xff]
    %v5101 = vld [vmem:[#allocation15 + $0x840] sm:$0xff]
    %v5102 = vld [vmem:[#allocation15 + $0x848] sm:$0xff]
    %v5103 = vld [vmem:[#allocation15 + $0x850] sm:$0xff]
    %v5104 = vld [vmem:[#allocation15 + $0x858] sm:$0xff]
    %v5105 = vld [vmem:[#allocation15 + $0x860] sm:$0xff]
    %v5106 = vld [vmem:[#allocation15 + $0x868] sm:$0xff]
    %v5107 = vld [vmem:[#allocation15 + $0x870] sm:$0xff]
    %v5108 = vld [vmem:[#allocation15 + $0x878] sm:$0xff]
    %v5109 = vld [vmem:[#allocation15 + $0x880] sm:$0xff]
    %v5110 = vld [vmem:[#allocation15 + $0x888] sm:$0xff]
    %v5111 = vld [vmem:[#allocation15 + $0x890] sm:$0xff]
    %v5112 = vld [vmem:[#allocation15 + $0x898] sm:$0xff]
    %v5113 = vld [vmem:[#allocation15 + $0x8a0] sm:$0xff]
    %v5114 = vld [vmem:[#allocation15 + $0x8a8] sm:$0xff]
    %v5115 = vld [vmem:[#allocation15 + $0x8b0] sm:$0xff]
    %v5116 = vld [vmem:[#allocation15 + $0x8b8] sm:$0xff]
    %v5117 = vld [vmem:[#allocation15 + $0x8c0] sm:$0xff]
    %v5118 = vld [vmem:[#allocation15 + $0x8c8] sm:$0xff]
    %v5119 = vld [vmem:[#allocation15 + $0x8d0] sm:$0xff]
    %v5120 = vld [vmem:[#allocation15 + $0x8d8] sm:$0xff]
    %v5121 = vld [vmem:[#allocation15 + $0x8e0] sm:$0xff]
    %v5122 = vld [vmem:[#allocation15 + $0x8e8] sm:$0xff]
    %v5123 = vld [vmem:[#allocation15 + $0x8f0] sm:$0xff]
    %v5124 = vld [vmem:[#allocation15 + $0x8f8] sm:$0xff]
    %v5125 = vld [vmem:[#allocation15 + $0x900] sm:$0xff]
    %v5126 = vld [vmem:[#allocation15 + $0x908] sm:$0xff]
    %v5127 = vld [vmem:[#allocation15 + $0x910] sm:$0xff]
    %v5128 = vld [vmem:[#allocation15 + $0x918] sm:$0xff]
    %v5129 = vld [vmem:[#allocation15 + $0x920] sm:$0xff]
    %v5130 = vld [vmem:[#allocation15 + $0x928] sm:$0xff]
    %v5131 = vld [vmem:[#allocation15 + $0x930] sm:$0xff]
    %v5132 = vld [vmem:[#allocation15 + $0x938] sm:$0xff]
    %v5133 = vld [vmem:[#allocation15 + $0x940] sm:$0xff]
    %v5134 = vld [vmem:[#allocation15 + $0x948] sm:$0xff]
    %v5135 = vld [vmem:[#allocation15 + $0x950] sm:$0xff]
    %v5136 = vld [vmem:[#allocation15 + $0x958] sm:$0xff]
    %v5137 = vld [vmem:[#allocation15 + $0x960] sm:$0xff]
    %v5138 = vld [vmem:[#allocation15 + $0x968] sm:$0xff]
    %v5139 = vld [vmem:[#allocation15 + $0x970] sm:$0xff]
    %v5140 = vld [vmem:[#allocation15 + $0x978] sm:$0xff]
    %v5141 = vld [vmem:[#allocation15 + $0x980] sm:$0xff]
    %v5142 = vld [vmem:[#allocation15 + $0x988] sm:$0xff]
    %v5143 = vld [vmem:[#allocation15 + $0x990] sm:$0xff]
    %v5144 = vld [vmem:[#allocation15 + $0x998] sm:$0xff]
    %v5145 = vld [vmem:[#allocation15 + $0x9a0] sm:$0xff]
    %v5146 = vld [vmem:[#allocation15 + $0x9a8] sm:$0xff]
    %v5147 = vld [vmem:[#allocation15 + $0x9b0] sm:$0xff]
    %v5148 = vld [vmem:[#allocation15 + $0x9b8] sm:$0xff]
    %v5149 = vld [vmem:[#allocation15 + $0x9c0] sm:$0xff]
    %v5150 = vld [vmem:[#allocation15 + $0x9c8] sm:$0xff]
    %v5151 = vld [vmem:[#allocation15 + $0x9d0] sm:$0xff]
    %v5152 = vld [vmem:[#allocation15 + $0x9d8] sm:$0xff]
    %v5153 = vld [vmem:[#allocation15 + $0x9e0] sm:$0xff]
    %v5154 = vld [vmem:[#allocation15 + $0x9e8] sm:$0xff]
    %v5155 = vld [vmem:[#allocation15 + $0x9f0] sm:$0xff]
    %v5156 = vld [vmem:[#allocation15 + $0x9f8] sm:$0xff]
    %v5157 = vld [vmem:[#allocation15 + $0xa00] sm:$0xff]
    %v5158 = vld [vmem:[#allocation15 + $0xa08] sm:$0xff]
    %v5159 = vld [vmem:[#allocation15 + $0xa10] sm:$0xff]
    %v5160 = vld [vmem:[#allocation15 + $0xa18] sm:$0xff]
    %v5161 = vld [vmem:[#allocation15 + $0xa20] sm:$0xff]
    %v5162 = vld [vmem:[#allocation15 + $0xa28] sm:$0xff]
    %v5163 = vld [vmem:[#allocation15 + $0xa30] sm:$0xff]
    %v5164 = vld [vmem:[#allocation15 + $0xa38] sm:$0xff]
    %v5165 = vld [vmem:[#allocation15 + $0xa40] sm:$0xff]
    %v5166 = vld [vmem:[#allocation15 + $0xa48] sm:$0xff]
    %v5167 = vld [vmem:[#allocation15 + $0xa50] sm:$0xff]
    %v5168 = vld [vmem:[#allocation15 + $0xa58] sm:$0xff]
    %v5169 = vld [vmem:[#allocation15 + $0xa60] sm:$0xff]
    %v5170 = vld [vmem:[#allocation15 + $0xa68] sm:$0xff]
    %v5171 = vld [vmem:[#allocation15 + $0xa70] sm:$0xff]
    %v5172 = vld [vmem:[#allocation15 + $0xa78] sm:$0xff]
    %v5173 = vld [vmem:[#allocation15 + $0xa80] sm:$0xff]
    %v5174 = vld [vmem:[#allocation15 + $0xa88] sm:$0xff]
    %v5175 = vld [vmem:[#allocation15 + $0xa90] sm:$0xff]
    %v5176 = vld [vmem:[#allocation15 + $0xa98] sm:$0xff]
    %v5177 = vld [vmem:[#allocation15 + $0xaa0] sm:$0xff]
    %v5178 = vld [vmem:[#allocation15 + $0xaa8] sm:$0xff]
    %v5179 = vld [vmem:[#allocation15 + $0xab0] sm:$0xff]
    %v5180 = vld [vmem:[#allocation15 + $0xab8] sm:$0xff]
    %v5181 = vld [vmem:[#allocation15 + $0xac0] sm:$0xff]
    %v5182 = vld [vmem:[#allocation15 + $0xac8] sm:$0xff]
    %v5183 = vld [vmem:[#allocation15 + $0xad0] sm:$0xff]
    %v5184 = vld [vmem:[#allocation15 + $0xad8] sm:$0xff]
    %v5185 = vld [vmem:[#allocation15 + $0xae0] sm:$0xff]
    %v5186 = vld [vmem:[#allocation15 + $0xae8] sm:$0xff]
    %v5187 = vld [vmem:[#allocation15 + $0xaf0] sm:$0xff]
    %v5188 = vld [vmem:[#allocation15 + $0xaf8] sm:$0xff]
    %v5189 = vld [vmem:[#allocation15 + $0xb00] sm:$0xff]
    %v5190 = vld [vmem:[#allocation15 + $0xb08] sm:$0xff]
    %v5191 = vld [vmem:[#allocation15 + $0xb10] sm:$0xff]
    %v5192 = vld [vmem:[#allocation15 + $0xb18] sm:$0xff]
    %v5193 = vld [vmem:[#allocation15 + $0xb20] sm:$0xff]
    %v5194 = vld [vmem:[#allocation15 + $0xb28] sm:$0xff]
    %v5195 = vld [vmem:[#allocation15 + $0xb30] sm:$0xff]
    %v5196 = vld [vmem:[#allocation15 + $0xb38] sm:$0xff]
    %v5197 = vld [vmem:[#allocation15 + $0xb40] sm:$0xff]
    %v5198 = vld [vmem:[#allocation15 + $0xb48] sm:$0xff]
    %v5199 = vld [vmem:[#allocation15 + $0xb50] sm:$0xff]
    %v5200 = vld [vmem:[#allocation15 + $0xb58] sm:$0xff]
    %v5201 = vld [vmem:[#allocation15 + $0xb60] sm:$0xff]
    %v5202 = vld [vmem:[#allocation15 + $0xb68] sm:$0xff]
    %v5203 = vld [vmem:[#allocation15 + $0xb70] sm:$0xff]
    %v5204 = vld [vmem:[#allocation15 + $0xb78] sm:$0xff]
    %v5205 = vld [vmem:[#allocation15 + $0xb80] sm:$0xff]
    %v5206 = vld [vmem:[#allocation15 + $0xb88] sm:$0xff]
    %v5207 = vld [vmem:[#allocation15 + $0xb90] sm:$0xff]
    %v5208 = vld [vmem:[#allocation15 + $0xb98] sm:$0xff]
    %v5209 = vld [vmem:[#allocation15 + $0xba0] sm:$0xff]
    %v5210 = vld [vmem:[#allocation15 + $0xba8] sm:$0xff]
    %v5211 = vld [vmem:[#allocation15 + $0xbb0] sm:$0xff]
    %v5212 = vld [vmem:[#allocation15 + $0xbb8] sm:$0xff]
    %v5213 = vld [vmem:[#allocation15 + $0xbc0] sm:$0xff]
    %v5214 = vld [vmem:[#allocation15 + $0xbc8] sm:$0xff]
    %v5215 = vld [vmem:[#allocation15 + $0xbd0] sm:$0xff]
    %v5216 = vld [vmem:[#allocation15 + $0xbd8] sm:$0xff]
    %v5217 = vld [vmem:[#allocation15 + $0xbe0] sm:$0xff]
    %v5218 = vld [vmem:[#allocation15 + $0xbe8] sm:$0xff]
    %v5219 = vld [vmem:[#allocation15 + $0xbf0] sm:$0xff]
    %v5220 = vld [vmem:[#allocation15 + $0xbf8] sm:$0xff]
    %v5221 = vld [vmem:[#allocation15 + $0xc00] sm:$0xff]
    %v5222 = vld [vmem:[#allocation15 + $0xc08] sm:$0xff]
    %v5223 = vld [vmem:[#allocation15 + $0xc10] sm:$0xff]
    %v5224 = vld [vmem:[#allocation15 + $0xc18] sm:$0xff]
    %v5225 = vld [vmem:[#allocation15 + $0xc20] sm:$0xff]
    %v5226 = vld [vmem:[#allocation15 + $0xc28] sm:$0xff]
    %v5227 = vld [vmem:[#allocation15 + $0xc30] sm:$0xff]
    %v5228 = vld [vmem:[#allocation15 + $0xc38] sm:$0xff]
    %v5229 = vld [vmem:[#allocation15 + $0xc40] sm:$0xff]
    %v5230 = vld [vmem:[#allocation15 + $0xc48] sm:$0xff]
    %v5231 = vld [vmem:[#allocation15 + $0xc50] sm:$0xff]
    %v5232 = vld [vmem:[#allocation15 + $0xc58] sm:$0xff]
    %v5233 = vld [vmem:[#allocation15 + $0xc60] sm:$0xff]
    %v5234 = vld [vmem:[#allocation15 + $0xc68] sm:$0xff]
    %v5235 = vld [vmem:[#allocation15 + $0xc70] sm:$0xff]
    %v5236 = vld [vmem:[#allocation15 + $0xc78] sm:$0xff]
    %v5237 = vld [vmem:[#allocation15 + $0xc80] sm:$0xff]
    %v5238 = vld [vmem:[#allocation15 + $0xc88] sm:$0xff]
    %v5239 = vld [vmem:[#allocation15 + $0xc90] sm:$0xff]
    %v5240 = vld [vmem:[#allocation15 + $0xc98] sm:$0xff]
    %v5241 = vld [vmem:[#allocation15 + $0xca0] sm:$0xff]
    %v5242 = vld [vmem:[#allocation15 + $0xca8] sm:$0xff]
    %v5243 = vld [vmem:[#allocation15 + $0xcb0] sm:$0xff]
    %v5244 = vld [vmem:[#allocation15 + $0xcb8] sm:$0xff]
    %v5245 = vld [vmem:[#allocation15 + $0xcc0] sm:$0xff]
    %v5246 = vld [vmem:[#allocation15 + $0xcc8] sm:$0xff]
    %v5247 = vld [vmem:[#allocation15 + $0xcd0] sm:$0xff]
    %v5248 = vld [vmem:[#allocation15 + $0xcd8] sm:$0xff]
    %v5249 = vld [vmem:[#allocation15 + $0xce0] sm:$0xff]
    %v5250 = vld [vmem:[#allocation15 + $0xce8] sm:$0xff]
    %v5251 = vld [vmem:[#allocation15 + $0xcf0] sm:$0xff]
    %v5252 = vld [vmem:[#allocation15 + $0xcf8] sm:$0xff]
    %v5253 = vld [vmem:[#allocation15 + $0xd00] sm:$0xff]
    %v5254 = vld [vmem:[#allocation15 + $0xd08] sm:$0xff]
    %v5255 = vld [vmem:[#allocation15 + $0xd10] sm:$0xff]
    %v5256 = vld [vmem:[#allocation15 + $0xd18] sm:$0xff]
    %v5257 = vld [vmem:[#allocation15 + $0xd20] sm:$0xff]
    %v5258 = vld [vmem:[#allocation15 + $0xd28] sm:$0xff]
    %v5259 = vld [vmem:[#allocation15 + $0xd30] sm:$0xff]
    %v5260 = vld [vmem:[#allocation15 + $0xd38] sm:$0xff]
    %v5261 = vld [vmem:[#allocation15 + $0xd40] sm:$0xff]
    %v5262 = vld [vmem:[#allocation15 + $0xd48] sm:$0xff]
    %v5263 = vld [vmem:[#allocation15 + $0xd50] sm:$0xff]
    %v5264 = vld [vmem:[#allocation15 + $0xd58] sm:$0xff]
    %v5265 = vld [vmem:[#allocation15 + $0xd60] sm:$0xff]
    %v5266 = vld [vmem:[#allocation15 + $0xd68] sm:$0xff]
    %v5267 = vld [vmem:[#allocation15 + $0xd70] sm:$0xff]
    %v5268 = vld [vmem:[#allocation15 + $0xd78] sm:$0xff]
    %v5269 = vld [vmem:[#allocation15 + $0xd80] sm:$0xff]
    %v5270 = vld [vmem:[#allocation15 + $0xd88] sm:$0xff]
    %v5271 = vld [vmem:[#allocation15 + $0xd90] sm:$0xff]
    %v5272 = vld [vmem:[#allocation15 + $0xd98] sm:$0xff]
    %v5273 = vld [vmem:[#allocation15 + $0xda0] sm:$0xff]
    %v5274 = vld [vmem:[#allocation15 + $0xda8] sm:$0xff]
    %v5275 = vld [vmem:[#allocation15 + $0xdb0] sm:$0xff]
    %v5276 = vld [vmem:[#allocation15 + $0xdb8] sm:$0xff]
    %v5277 = vld [vmem:[#allocation15 + $0xdc0] sm:$0xff]
    %v5278 = vld [vmem:[#allocation15 + $0xdc8] sm:$0xff]
    %v5279 = vld [vmem:[#allocation15 + $0xdd0] sm:$0xff]
    %v5280 = vld [vmem:[#allocation15 + $0xdd8] sm:$0xff]
    %v5281 = vld [vmem:[#allocation15 + $0xde0] sm:$0xff]
    %v5282 = vld [vmem:[#allocation15 + $0xde8] sm:$0xff]
    %v5283 = vld [vmem:[#allocation15 + $0xdf0] sm:$0xff]
    %v5284 = vld [vmem:[#allocation15 + $0xdf8] sm:$0xff]
    %v5285 = vld [vmem:[#allocation15 + $0xe00] sm:$0xff]
    %v5286 = vld [vmem:[#allocation15 + $0xe08] sm:$0xff]
    %v5287 = vld [vmem:[#allocation15 + $0xe10] sm:$0xff]
    %v5288 = vld [vmem:[#allocation15 + $0xe18] sm:$0xff]
    %v5289 = vld [vmem:[#allocation15 + $0xe20] sm:$0xff]
    %v5290 = vld [vmem:[#allocation15 + $0xe28] sm:$0xff]
    %v5291 = vld [vmem:[#allocation15 + $0xe30] sm:$0xff]
    %v5292 = vld [vmem:[#allocation15 + $0xe38] sm:$0xff]
    %v5293 = vld [vmem:[#allocation15 + $0xe40] sm:$0xff]
    %v5294 = vld [vmem:[#allocation15 + $0xe48] sm:$0xff]
    %v5295 = vld [vmem:[#allocation15 + $0xe50] sm:$0xff]
    %v5296 = vld [vmem:[#allocation15 + $0xe58] sm:$0xff]
    %v5297 = vld [vmem:[#allocation15 + $0xe60] sm:$0xff]
    %v5298 = vld [vmem:[#allocation15 + $0xe68] sm:$0xff]
    %v5299 = vld [vmem:[#allocation15 + $0xe70] sm:$0xff]
    %v5300 = vld [vmem:[#allocation15 + $0xe78] sm:$0xff]
    %v5301 = vld [vmem:[#allocation15 + $0xe80] sm:$0xff]
    %v5302 = vld [vmem:[#allocation15 + $0xe88] sm:$0xff]
    %v5303 = vld [vmem:[#allocation15 + $0xe90] sm:$0xff]
    %v5304 = vld [vmem:[#allocation15 + $0xe98] sm:$0xff]
    %v5305 = vld [vmem:[#allocation15 + $0xea0] sm:$0xff]
    %v5306 = vld [vmem:[#allocation15 + $0xea8] sm:$0xff]
    %v5307 = vld [vmem:[#allocation15 + $0xeb0] sm:$0xff]
    %v5308 = vld [vmem:[#allocation15 + $0xeb8] sm:$0xff]
    %v5309 = vld [vmem:[#allocation15 + $0xec0] sm:$0xff]
    %v5310 = vld [vmem:[#allocation15 + $0xec8] sm:$0xff]
    %v5311 = vld [vmem:[#allocation15 + $0xed0] sm:$0xff]
    %v5312 = vld [vmem:[#allocation15 + $0xed8] sm:$0xff]
    %v5313 = vld [vmem:[#allocation15 + $0xee0] sm:$0xff]
    %v5314 = vld [vmem:[#allocation15 + $0xee8] sm:$0xff]
    %v5315 = vld [vmem:[#allocation15 + $0xef0] sm:$0xff]
    %v5316 = vld [vmem:[#allocation15 + $0xef8] sm:$0xff]
    %v5317 = vld [vmem:[#allocation15 + $0xf00] sm:$0xff]
    %v5318 = vld [vmem:[#allocation15 + $0xf08] sm:$0xff]
    %v5319 = vld [vmem:[#allocation15 + $0xf10] sm:$0xff]
    %v5320 = vld [vmem:[#allocation15 + $0xf18] sm:$0xff]
    %v5321 = vld [vmem:[#allocation15 + $0xf20] sm:$0xff]
    %v5322 = vld [vmem:[#allocation15 + $0xf28] sm:$0xff]
    %v5323 = vld [vmem:[#allocation15 + $0xf30] sm:$0xff]
    %v5324 = vld [vmem:[#allocation15 + $0xf38] sm:$0xff]
    %v5325 = vld [vmem:[#allocation15 + $0xf40] sm:$0xff]
    %v5326 = vld [vmem:[#allocation15 + $0xf48] sm:$0xff]
    %v5327 = vld [vmem:[#allocation15 + $0xf50] sm:$0xff]
    %v5328 = vld [vmem:[#allocation15 + $0xf58] sm:$0xff]
    %v5329 = vld [vmem:[#allocation15 + $0xf60] sm:$0xff]
    %v5330 = vld [vmem:[#allocation15 + $0xf68] sm:$0xff]
    %v5331 = vld [vmem:[#allocation15 + $0xf70] sm:$0xff]
    %v5332 = vld [vmem:[#allocation15 + $0xf78] sm:$0xff]
    %v5333 = vld [vmem:[#allocation15 + $0xf80] sm:$0xff]
    %v5334 = vld [vmem:[#allocation15 + $0xf88] sm:$0xff]
    %v5335 = vld [vmem:[#allocation15 + $0xf90] sm:$0xff]
    %v5336 = vld [vmem:[#allocation15 + $0xf98] sm:$0xff]
    %v5337 = vld [vmem:[#allocation15 + $0xfa0] sm:$0xff]
    %v5338 = vld [vmem:[#allocation15 + $0xfa8] sm:$0xff]
    %v5339 = vld [vmem:[#allocation15 + $0xfb0] sm:$0xff]
    %v5340 = vld [vmem:[#allocation15 + $0xfb8] sm:$0xff]
    %v5341 = vld [vmem:[#allocation15 + $0xfc0] sm:$0xff]
    %v5342 = vld [vmem:[#allocation15 + $0xfc8] sm:$0xff]
    %v5343 = vld [vmem:[#allocation15 + $0xfd0] sm:$0xff]
    %v5344 = vld [vmem:[#allocation15 + $0xfd8] sm:$0xff]
    %v5345 = vld [vmem:[#allocation15 + $0xfe0] sm:$0xff]
    %v5346 = vld [vmem:[#allocation15 + $0xfe8] sm:$0xff]
    %v5347 = vld [vmem:[#allocation15 + $0xff0] sm:$0xff]
    %v5348 = vld [vmem:[#allocation15 + $0xff8] sm:$0xff]
    %v5349 = vld [vmem:[#allocation16] sm:$0xff]
    %v5351 = vlaneseq
    %v5352 = vshrl.u32 %v5351, 7
    %v5353 = vsub.s32 0, %v5352
    %v5354 = vrot.slane %v5349, %v5353
    %v5355 = vlaneseq
    %v5356 = vshrl.u32 %v5355, 7
    %v5357 = vsub.s32 1, %v5356
    %v5358 = vrot.slane %v5349, %v5357
    %v5359 = vlaneseq
    %v5360 = vshrl.u32 %v5359, 7
    %v5361 = vsub.s32 2, %v5360
    %v5362 = vrot.slane %v5349, %v5361
    %v5363 = vlaneseq
    %v5364 = vshrl.u32 %v5363, 7
    %v5365 = vsub.s32 3, %v5364
    %v5366 = vrot.slane %v5349, %v5365
    %v5367 = vlaneseq
    %v5368 = vshrl.u32 %v5367, 7
    %v5369 = vsub.s32 4, %v5368
    %v5370 = vrot.slane %v5349, %v5369
    %v5371 = vlaneseq
    %v5372 = vshrl.u32 %v5371, 7
    %v5373 = vsub.s32 5, %v5372
    %v5374 = vrot.slane %v5349, %v5373
    %v5375 = vlaneseq
    %v5376 = vshrl.u32 %v5375, 7
    %v5377 = vsub.s32 6, %v5376
    %v5378 = vrot.slane %v5349, %v5377
    %v5379 = vlaneseq
    %v5380 = vshrl.u32 %v5379, 7
    %v5381 = vsub.s32 7, %v5380
    %v5382 = vrot.slane %v5349, %v5381
    %v5903 = vunpack.c.l.b16 %v4837
    %v5904 = vunpack.c.h.b16 %v4837
    %v5905 = vunpack.c.l.b16 %v4838
    %v5906 = vunpack.c.h.b16 %v4838
    %v5907 = vunpack.c.l.b16 %v4839
    %v5908 = vunpack.c.h.b16 %v4839
    %v5909 = vunpack.c.l.b16 %v4840
    %v5910 = vunpack.c.h.b16 %v4840
    %v5911 = vunpack.c.l.b16 %v4841
    %v5912 = vunpack.c.h.b16 %v4841
    %v5913 = vunpack.c.l.b16 %v4842
    %v5914 = vunpack.c.h.b16 %v4842
    %v5915 = vunpack.c.l.b16 %v4843
    %v5916 = vunpack.c.h.b16 %v4843
    %v5917 = vunpack.c.l.b16 %v4844
    %v5918 = vunpack.c.h.b16 %v4844
    %v5919 = vunpack.c.l.b16 %v4845
    %v5920 = vunpack.c.h.b16 %v4845
    %v5921 = vunpack.c.l.b16 %v4846
    %v5922 = vunpack.c.h.b16 %v4846
    %v5923 = vunpack.c.l.b16 %v4847
    %v5924 = vunpack.c.h.b16 %v4847
    %v5925 = vunpack.c.l.b16 %v4848
    %v5926 = vunpack.c.h.b16 %v4848
    %v5927 = vunpack.c.l.b16 %v4849
    %v5928 = vunpack.c.h.b16 %v4849
    %v5929 = vunpack.c.l.b16 %v4850
    %v5930 = vunpack.c.h.b16 %v4850
    %v5931 = vunpack.c.l.b16 %v4851
    %v5932 = vunpack.c.h.b16 %v4851
    %v5933 = vunpack.c.l.b16 %v4852
    %v5934 = vunpack.c.h.b16 %v4852
    %v5935 = vunpack.c.l.b16 %v4853
    %v5936 = vunpack.c.h.b16 %v4853
    %v5937 = vunpack.c.l.b16 %v4854
    %v5938 = vunpack.c.h.b16 %v4854
    %v5939 = vunpack.c.l.b16 %v4855
    %v5940 = vunpack.c.h.b16 %v4855
    %v5941 = vunpack.c.l.b16 %v4856
    %v5942 = vunpack.c.h.b16 %v4856
    %v5943 = vunpack.c.l.b16 %v4857
    %v5944 = vunpack.c.h.b16 %v4857
    %v5945 = vunpack.c.l.b16 %v4858
    %v5946 = vunpack.c.h.b16 %v4858
    %v5947 = vunpack.c.l.b16 %v4859
    %v5948 = vunpack.c.h.b16 %v4859
    %v5949 = vunpack.c.l.b16 %v4860
    %v5950 = vunpack.c.h.b16 %v4860
    %v5951 = vunpack.c.l.b16 %v4861
    %v5952 = vunpack.c.h.b16 %v4861
    %v5953 = vunpack.c.l.b16 %v4862
    %v5954 = vunpack.c.h.b16 %v4862
    %v5955 = vunpack.c.l.b16 %v4863
    %v5956 = vunpack.c.h.b16 %v4863
    %v5957 = vunpack.c.l.b16 %v4864
    %v5958 = vunpack.c.h.b16 %v4864
    %v5959 = vunpack.c.l.b16 %v4865
    %v5960 = vunpack.c.h.b16 %v4865
    %v5961 = vunpack.c.l.b16 %v4866
    %v5962 = vunpack.c.h.b16 %v4866
    %v5963 = vunpack.c.l.b16 %v4867
    %v5964 = vunpack.c.h.b16 %v4867
    %v5965 = vunpack.c.l.b16 %v4868
    %v5966 = vunpack.c.h.b16 %v4868
    %v5967 = vunpack.c.l.b16 %v4869
    %v5968 = vunpack.c.h.b16 %v4869
    %v5969 = vunpack.c.l.b16 %v4870
    %v5970 = vunpack.c.h.b16 %v4870
    %v5971 = vunpack.c.l.b16 %v4871
    %v5972 = vunpack.c.h.b16 %v4871
    %v5973 = vunpack.c.l.b16 %v4872
    %v5974 = vunpack.c.h.b16 %v4872
    %v5975 = vunpack.c.l.b16 %v4873
    %v5976 = vunpack.c.h.b16 %v4873
    %v5977 = vunpack.c.l.b16 %v4874
    %v5978 = vunpack.c.h.b16 %v4874
    %v5979 = vunpack.c.l.b16 %v4875
    %v5980 = vunpack.c.h.b16 %v4875
    %v5981 = vunpack.c.l.b16 %v4876
    %v5982 = vunpack.c.h.b16 %v4876
    %v5983 = vunpack.c.l.b16 %v4877
    %v5984 = vunpack.c.h.b16 %v4877
    %v5985 = vunpack.c.l.b16 %v4878
    %v5986 = vunpack.c.h.b16 %v4878
    %v5987 = vunpack.c.l.b16 %v4879
    %v5988 = vunpack.c.h.b16 %v4879
    %v5989 = vunpack.c.l.b16 %v4880
    %v5990 = vunpack.c.h.b16 %v4880
    %v5991 = vunpack.c.l.b16 %v4881
    %v5992 = vunpack.c.h.b16 %v4881
    %v5993 = vunpack.c.l.b16 %v4882
    %v5994 = vunpack.c.h.b16 %v4882
    %v5995 = vunpack.c.l.b16 %v4883
    %v5996 = vunpack.c.h.b16 %v4883
    %v5997 = vunpack.c.l.b16 %v4884
    %v5998 = vunpack.c.h.b16 %v4884
    %v5999 = vunpack.c.l.b16 %v4885
    %v6000 = vunpack.c.h.b16 %v4885
    %v6001 = vunpack.c.l.b16 %v4886
    %v6002 = vunpack.c.h.b16 %v4886
    %v6003 = vunpack.c.l.b16 %v4887
    %v6004 = vunpack.c.h.b16 %v4887
    %v6005 = vunpack.c.l.b16 %v4888
    %v6006 = vunpack.c.h.b16 %v4888
    %v6007 = vunpack.c.l.b16 %v4889
    %v6008 = vunpack.c.h.b16 %v4889
    %v6009 = vunpack.c.l.b16 %v4890
    %v6010 = vunpack.c.h.b16 %v4890
    %v6011 = vunpack.c.l.b16 %v4891
    %v6012 = vunpack.c.h.b16 %v4891
    %v6013 = vunpack.c.l.b16 %v4892
    %v6014 = vunpack.c.h.b16 %v4892
    %v6015 = vunpack.c.l.b16 %v4893
    %v6016 = vunpack.c.h.b16 %v4893
    %v6017 = vunpack.c.l.b16 %v4894
    %v6018 = vunpack.c.h.b16 %v4894
    %v6019 = vunpack.c.l.b16 %v4895
    %v6020 = vunpack.c.h.b16 %v4895
    %v6021 = vunpack.c.l.b16 %v4896
    %v6022 = vunpack.c.h.b16 %v4896
    %v6023 = vunpack.c.l.b16 %v4897
    %v6024 = vunpack.c.h.b16 %v4897
    %v6025 = vunpack.c.l.b16 %v4898
    %v6026 = vunpack.c.h.b16 %v4898
    %v6027 = vunpack.c.l.b16 %v4899
    %v6028 = vunpack.c.h.b16 %v4899
    %v6029 = vunpack.c.l.b16 %v4900
    %v6030 = vunpack.c.h.b16 %v4900
    %v6031 = vunpack.c.l.b16 %v4901
    %v6032 = vunpack.c.h.b16 %v4901
    %v6033 = vunpack.c.l.b16 %v4902
    %v6034 = vunpack.c.h.b16 %v4902
    %v6035 = vunpack.c.l.b16 %v4903
    %v6036 = vunpack.c.h.b16 %v4903
    %v6037 = vunpack.c.l.b16 %v4904
    %v6038 = vunpack.c.h.b16 %v4904
    %v6039 = vunpack.c.l.b16 %v4905
    %v6040 = vunpack.c.h.b16 %v4905
    %v6041 = vunpack.c.l.b16 %v4906
    %v6042 = vunpack.c.h.b16 %v4906
    %v6043 = vunpack.c.l.b16 %v4907
    %v6044 = vunpack.c.h.b16 %v4907
    %v6045 = vunpack.c.l.b16 %v4908
    %v6046 = vunpack.c.h.b16 %v4908
    %v6047 = vunpack.c.l.b16 %v4909
    %v6048 = vunpack.c.h.b16 %v4909
    %v6049 = vunpack.c.l.b16 %v4910
    %v6050 = vunpack.c.h.b16 %v4910
    %v6051 = vunpack.c.l.b16 %v4911
    %v6052 = vunpack.c.h.b16 %v4911
    %v6053 = vunpack.c.l.b16 %v4912
    %v6054 = vunpack.c.h.b16 %v4912
    %v6055 = vunpack.c.l.b16 %v4913
    %v6056 = vunpack.c.h.b16 %v4913
    %v6057 = vunpack.c.l.b16 %v4914
    %v6058 = vunpack.c.h.b16 %v4914
    %v6059 = vunpack.c.l.b16 %v4915
    %v6060 = vunpack.c.h.b16 %v4915
    %v6061 = vunpack.c.l.b16 %v4916
    %v6062 = vunpack.c.h.b16 %v4916
    %v6063 = vunpack.c.l.b16 %v4917
    %v6064 = vunpack.c.h.b16 %v4917
    %v6065 = vunpack.c.l.b16 %v4918
    %v6066 = vunpack.c.h.b16 %v4918
    %v6067 = vunpack.c.l.b16 %v4919
    %v6068 = vunpack.c.h.b16 %v4919
    %v6069 = vunpack.c.l.b16 %v4920
    %v6070 = vunpack.c.h.b16 %v4920
    %v6071 = vunpack.c.l.b16 %v4921
    %v6072 = vunpack.c.h.b16 %v4921
    %v6073 = vunpack.c.l.b16 %v4922
    %v6074 = vunpack.c.h.b16 %v4922
    %v6075 = vunpack.c.l.b16 %v4923
    %v6076 = vunpack.c.h.b16 %v4923
    %v6077 = vunpack.c.l.b16 %v4924
    %v6078 = vunpack.c.h.b16 %v4924
    %v6079 = vunpack.c.l.b16 %v4925
    %v6080 = vunpack.c.h.b16 %v4925
    %v6081 = vunpack.c.l.b16 %v4926
    %v6082 = vunpack.c.h.b16 %v4926
    %v6083 = vunpack.c.l.b16 %v4927
    %v6084 = vunpack.c.h.b16 %v4927
    %v6085 = vunpack.c.l.b16 %v4928
    %v6086 = vunpack.c.h.b16 %v4928
    %v6087 = vunpack.c.l.b16 %v4929
    %v6088 = vunpack.c.h.b16 %v4929
    %v6089 = vunpack.c.l.b16 %v4930
    %v6090 = vunpack.c.h.b16 %v4930
    %v6091 = vunpack.c.l.b16 %v4931
    %v6092 = vunpack.c.h.b16 %v4931
    %v6093 = vunpack.c.l.b16 %v4932
    %v6094 = vunpack.c.h.b16 %v4932
    %v6095 = vunpack.c.l.b16 %v4933
    %v6096 = vunpack.c.h.b16 %v4933
    %v6097 = vunpack.c.l.b16 %v4934
    %v6098 = vunpack.c.h.b16 %v4934
    %v6099 = vunpack.c.l.b16 %v4935
    %v6100 = vunpack.c.h.b16 %v4935
    %v6101 = vunpack.c.l.b16 %v4936
    %v6102 = vunpack.c.h.b16 %v4936
    %v6103 = vunpack.c.l.b16 %v4937
    %v6104 = vunpack.c.h.b16 %v4937
    %v6105 = vunpack.c.l.b16 %v4938
    %v6106 = vunpack.c.h.b16 %v4938
    %v6107 = vunpack.c.l.b16 %v4939
    %v6108 = vunpack.c.h.b16 %v4939
    %v6109 = vunpack.c.l.b16 %v4940
    %v6110 = vunpack.c.h.b16 %v4940
    %v6111 = vunpack.c.l.b16 %v4941
    %v6112 = vunpack.c.h.b16 %v4941
    %v6113 = vunpack.c.l.b16 %v4942
    %v6114 = vunpack.c.h.b16 %v4942
    %v6115 = vunpack.c.l.b16 %v4943
    %v6116 = vunpack.c.h.b16 %v4943
    %v6117 = vunpack.c.l.b16 %v4944
    %v6118 = vunpack.c.h.b16 %v4944
    %v6119 = vunpack.c.l.b16 %v4945
    %v6120 = vunpack.c.h.b16 %v4945
    %v6121 = vunpack.c.l.b16 %v4946
    %v6122 = vunpack.c.h.b16 %v4946
    %v6123 = vunpack.c.l.b16 %v4947
    %v6124 = vunpack.c.h.b16 %v4947
    %v6125 = vunpack.c.l.b16 %v4948
    %v6126 = vunpack.c.h.b16 %v4948
    %v6127 = vunpack.c.l.b16 %v4949
    %v6128 = vunpack.c.h.b16 %v4949
    %v6129 = vunpack.c.l.b16 %v4950
    %v6130 = vunpack.c.h.b16 %v4950
    %v6131 = vunpack.c.l.b16 %v4951
    %v6132 = vunpack.c.h.b16 %v4951
    %v6133 = vunpack.c.l.b16 %v4952
    %v6134 = vunpack.c.h.b16 %v4952
    %v6135 = vunpack.c.l.b16 %v4953
    %v6136 = vunpack.c.h.b16 %v4953
    %v6137 = vunpack.c.l.b16 %v4954
    %v6138 = vunpack.c.h.b16 %v4954
    %v6139 = vunpack.c.l.b16 %v4955
    %v6140 = vunpack.c.h.b16 %v4955
    %v6141 = vunpack.c.l.b16 %v4956
    %v6142 = vunpack.c.h.b16 %v4956
    %v6143 = vunpack.c.l.b16 %v4957
    %v6144 = vunpack.c.h.b16 %v4957
    %v6145 = vunpack.c.l.b16 %v4958
    %v6146 = vunpack.c.h.b16 %v4958
    %v6147 = vunpack.c.l.b16 %v4959
    %v6148 = vunpack.c.h.b16 %v4959
    %v6149 = vunpack.c.l.b16 %v4960
    %v6150 = vunpack.c.h.b16 %v4960
    %v6151 = vunpack.c.l.b16 %v4961
    %v6152 = vunpack.c.h.b16 %v4961
    %v6153 = vunpack.c.l.b16 %v4962
    %v6154 = vunpack.c.h.b16 %v4962
    %v6155 = vunpack.c.l.b16 %v4963
    %v6156 = vunpack.c.h.b16 %v4963
    %v6157 = vunpack.c.l.b16 %v4964
    %v6158 = vunpack.c.h.b16 %v4964
    %v6159 = vunpack.c.l.b16 %v4965
    %v6160 = vunpack.c.h.b16 %v4965
    %v6161 = vunpack.c.l.b16 %v4966
    %v6162 = vunpack.c.h.b16 %v4966
    %v6163 = vunpack.c.l.b16 %v4967
    %v6164 = vunpack.c.h.b16 %v4967
    %v6165 = vunpack.c.l.b16 %v4968
    %v6166 = vunpack.c.h.b16 %v4968
    %v6167 = vunpack.c.l.b16 %v4969
    %v6168 = vunpack.c.h.b16 %v4969
    %v6169 = vunpack.c.l.b16 %v4970
    %v6170 = vunpack.c.h.b16 %v4970
    %v6171 = vunpack.c.l.b16 %v4971
    %v6172 = vunpack.c.h.b16 %v4971
    %v6173 = vunpack.c.l.b16 %v4972
    %v6174 = vunpack.c.h.b16 %v4972
    %v6175 = vunpack.c.l.b16 %v4973
    %v6176 = vunpack.c.h.b16 %v4973
    %v6177 = vunpack.c.l.b16 %v4974
    %v6178 = vunpack.c.h.b16 %v4974
    %v6179 = vunpack.c.l.b16 %v4975
    %v6180 = vunpack.c.h.b16 %v4975
    %v6181 = vunpack.c.l.b16 %v4976
    %v6182 = vunpack.c.h.b16 %v4976
    %v6183 = vunpack.c.l.b16 %v4977
    %v6184 = vunpack.c.h.b16 %v4977
    %v6185 = vunpack.c.l.b16 %v4978
    %v6186 = vunpack.c.h.b16 %v4978
    %v6187 = vunpack.c.l.b16 %v4979
    %v6188 = vunpack.c.h.b16 %v4979
    %v6189 = vunpack.c.l.b16 %v4980
    %v6190 = vunpack.c.h.b16 %v4980
    %v6191 = vunpack.c.l.b16 %v4981
    %v6192 = vunpack.c.h.b16 %v4981
    %v6193 = vunpack.c.l.b16 %v4982
    %v6194 = vunpack.c.h.b16 %v4982
    %v6195 = vunpack.c.l.b16 %v4983
    %v6196 = vunpack.c.h.b16 %v4983
    %v6197 = vunpack.c.l.b16 %v4984
    %v6198 = vunpack.c.h.b16 %v4984
    %v6199 = vunpack.c.l.b16 %v4985
    %v6200 = vunpack.c.h.b16 %v4985
    %v6201 = vunpack.c.l.b16 %v4986
    %v6202 = vunpack.c.h.b16 %v4986
    %v6203 = vunpack.c.l.b16 %v4987
    %v6204 = vunpack.c.h.b16 %v4987
    %v6205 = vunpack.c.l.b16 %v4988
    %v6206 = vunpack.c.h.b16 %v4988
    %v6207 = vunpack.c.l.b16 %v4989
    %v6208 = vunpack.c.h.b16 %v4989
    %v6209 = vunpack.c.l.b16 %v4990
    %v6210 = vunpack.c.h.b16 %v4990
    %v6211 = vunpack.c.l.b16 %v4991
    %v6212 = vunpack.c.h.b16 %v4991
    %v6213 = vunpack.c.l.b16 %v4992
    %v6214 = vunpack.c.h.b16 %v4992
    %v6215 = vunpack.c.l.b16 %v4993
    %v6216 = vunpack.c.h.b16 %v4993
    %v6217 = vunpack.c.l.b16 %v4994
    %v6218 = vunpack.c.h.b16 %v4994
    %v6219 = vunpack.c.l.b16 %v4995
    %v6220 = vunpack.c.h.b16 %v4995
    %v6221 = vunpack.c.l.b16 %v4996
    %v6222 = vunpack.c.h.b16 %v4996
    %v6223 = vunpack.c.l.b16 %v4997
    %v6224 = vunpack.c.h.b16 %v4997
    %v6225 = vunpack.c.l.b16 %v4998
    %v6226 = vunpack.c.h.b16 %v4998
    %v6227 = vunpack.c.l.b16 %v4999
    %v6228 = vunpack.c.h.b16 %v4999
    %v6229 = vunpack.c.l.b16 %v5000
    %v6230 = vunpack.c.h.b16 %v5000
    %v6231 = vunpack.c.l.b16 %v5001
    %v6232 = vunpack.c.h.b16 %v5001
    %v6233 = vunpack.c.l.b16 %v5002
    %v6234 = vunpack.c.h.b16 %v5002
    %v6235 = vunpack.c.l.b16 %v5003
    %v6236 = vunpack.c.h.b16 %v5003
    %v6237 = vunpack.c.l.b16 %v5004
    %v6238 = vunpack.c.h.b16 %v5004
    %v6239 = vunpack.c.l.b16 %v5005
    %v6240 = vunpack.c.h.b16 %v5005
    %v6241 = vunpack.c.l.b16 %v5006
    %v6242 = vunpack.c.h.b16 %v5006
    %v6243 = vunpack.c.l.b16 %v5007
    %v6244 = vunpack.c.h.b16 %v5007
    %v6245 = vunpack.c.l.b16 %v5008
    %v6246 = vunpack.c.h.b16 %v5008
    %v6247 = vunpack.c.l.b16 %v5009
    %v6248 = vunpack.c.h.b16 %v5009
    %v6249 = vunpack.c.l.b16 %v5010
    %v6250 = vunpack.c.h.b16 %v5010
    %v6251 = vunpack.c.l.b16 %v5011
    %v6252 = vunpack.c.h.b16 %v5011
    %v6253 = vunpack.c.l.b16 %v5012
    %v6254 = vunpack.c.h.b16 %v5012
    %v6255 = vunpack.c.l.b16 %v5013
    %v6256 = vunpack.c.h.b16 %v5013
    %v6257 = vunpack.c.l.b16 %v5014
    %v6258 = vunpack.c.h.b16 %v5014
    %v6259 = vunpack.c.l.b16 %v5015
    %v6260 = vunpack.c.h.b16 %v5015
    %v6261 = vunpack.c.l.b16 %v5016
    %v6262 = vunpack.c.h.b16 %v5016
    %v6263 = vunpack.c.l.b16 %v5017
    %v6264 = vunpack.c.h.b16 %v5017
    %v6265 = vunpack.c.l.b16 %v5018
    %v6266 = vunpack.c.h.b16 %v5018
    %v6267 = vunpack.c.l.b16 %v5019
    %v6268 = vunpack.c.h.b16 %v5019
    %v6269 = vunpack.c.l.b16 %v5020
    %v6270 = vunpack.c.h.b16 %v5020
    %v6271 = vunpack.c.l.b16 %v5021
    %v6272 = vunpack.c.h.b16 %v5021
    %v6273 = vunpack.c.l.b16 %v5022
    %v6274 = vunpack.c.h.b16 %v5022
    %v6275 = vunpack.c.l.b16 %v5023
    %v6276 = vunpack.c.h.b16 %v5023
    %v6277 = vunpack.c.l.b16 %v5024
    %v6278 = vunpack.c.h.b16 %v5024
    %v6279 = vunpack.c.l.b16 %v5025
    %v6280 = vunpack.c.h.b16 %v5025
    %v6281 = vunpack.c.l.b16 %v5026
    %v6282 = vunpack.c.h.b16 %v5026
    %v6283 = vunpack.c.l.b16 %v5027
    %v6284 = vunpack.c.h.b16 %v5027
    %v6285 = vunpack.c.l.b16 %v5028
    %v6286 = vunpack.c.h.b16 %v5028
    %v6287 = vunpack.c.l.b16 %v5029
    %v6288 = vunpack.c.h.b16 %v5029
    %v6289 = vunpack.c.l.b16 %v5030
    %v6290 = vunpack.c.h.b16 %v5030
    %v6291 = vunpack.c.l.b16 %v5031
    %v6292 = vunpack.c.h.b16 %v5031
    %v6293 = vunpack.c.l.b16 %v5032
    %v6294 = vunpack.c.h.b16 %v5032
    %v6295 = vunpack.c.l.b16 %v5033
    %v6296 = vunpack.c.h.b16 %v5033
    %v6297 = vunpack.c.l.b16 %v5034
    %v6298 = vunpack.c.h.b16 %v5034
    %v6299 = vunpack.c.l.b16 %v5035
    %v6300 = vunpack.c.h.b16 %v5035
    %v6301 = vunpack.c.l.b16 %v5036
    %v6302 = vunpack.c.h.b16 %v5036
    %v6303 = vunpack.c.l.b16 %v5037
    %v6304 = vunpack.c.h.b16 %v5037
    %v6305 = vunpack.c.l.b16 %v5038
    %v6306 = vunpack.c.h.b16 %v5038
    %v6307 = vunpack.c.l.b16 %v5039
    %v6308 = vunpack.c.h.b16 %v5039
    %v6309 = vunpack.c.l.b16 %v5040
    %v6310 = vunpack.c.h.b16 %v5040
    %v6311 = vunpack.c.l.b16 %v5041
    %v6312 = vunpack.c.h.b16 %v5041
    %v6313 = vunpack.c.l.b16 %v5042
    %v6314 = vunpack.c.h.b16 %v5042
    %v6315 = vunpack.c.l.b16 %v5043
    %v6316 = vunpack.c.h.b16 %v5043
    %v6317 = vunpack.c.l.b16 %v5044
    %v6318 = vunpack.c.h.b16 %v5044
    %v6319 = vunpack.c.l.b16 %v5045
    %v6320 = vunpack.c.h.b16 %v5045
    %v6321 = vunpack.c.l.b16 %v5046
    %v6322 = vunpack.c.h.b16 %v5046
    %v6323 = vunpack.c.l.b16 %v5047
    %v6324 = vunpack.c.h.b16 %v5047
    %v6325 = vunpack.c.l.b16 %v5048
    %v6326 = vunpack.c.h.b16 %v5048
    %v6327 = vunpack.c.l.b16 %v5049
    %v6328 = vunpack.c.h.b16 %v5049
    %v6329 = vunpack.c.l.b16 %v5050
    %v6330 = vunpack.c.h.b16 %v5050
    %v6331 = vunpack.c.l.b16 %v5051
    %v6332 = vunpack.c.h.b16 %v5051
    %v6333 = vunpack.c.l.b16 %v5052
    %v6334 = vunpack.c.h.b16 %v5052
    %v6335 = vunpack.c.l.b16 %v5053
    %v6336 = vunpack.c.h.b16 %v5053
    %v6337 = vunpack.c.l.b16 %v5054
    %v6338 = vunpack.c.h.b16 %v5054
    %v6339 = vunpack.c.l.b16 %v5055
    %v6340 = vunpack.c.h.b16 %v5055
    %v6341 = vunpack.c.l.b16 %v5056
    %v6342 = vunpack.c.h.b16 %v5056
    %v6343 = vunpack.c.l.b16 %v5057
    %v6344 = vunpack.c.h.b16 %v5057
    %v6345 = vunpack.c.l.b16 %v5058
    %v6346 = vunpack.c.h.b16 %v5058
    %v6347 = vunpack.c.l.b16 %v5059
    %v6348 = vunpack.c.h.b16 %v5059
    %v6349 = vunpack.c.l.b16 %v5060
    %v6350 = vunpack.c.h.b16 %v5060
    %v6351 = vunpack.c.l.b16 %v5061
    %v6352 = vunpack.c.h.b16 %v5061
    %v6353 = vunpack.c.l.b16 %v5062
    %v6354 = vunpack.c.h.b16 %v5062
    %v6355 = vunpack.c.l.b16 %v5063
    %v6356 = vunpack.c.h.b16 %v5063
    %v6357 = vunpack.c.l.b16 %v5064
    %v6358 = vunpack.c.h.b16 %v5064
    %v6359 = vunpack.c.l.b16 %v5065
    %v6360 = vunpack.c.h.b16 %v5065
    %v6361 = vunpack.c.l.b16 %v5066
    %v6362 = vunpack.c.h.b16 %v5066
    %v6363 = vunpack.c.l.b16 %v5067
    %v6364 = vunpack.c.h.b16 %v5067
    %v6365 = vunpack.c.l.b16 %v5068
    %v6366 = vunpack.c.h.b16 %v5068
    %v6367 = vunpack.c.l.b16 %v5069
    %v6368 = vunpack.c.h.b16 %v5069
    %v6369 = vunpack.c.l.b16 %v5070
    %v6370 = vunpack.c.h.b16 %v5070
    %v6371 = vunpack.c.l.b16 %v5071
    %v6372 = vunpack.c.h.b16 %v5071
    %v6373 = vunpack.c.l.b16 %v5072
    %v6374 = vunpack.c.h.b16 %v5072
    %v6375 = vunpack.c.l.b16 %v5073
    %v6376 = vunpack.c.h.b16 %v5073
    %v6377 = vunpack.c.l.b16 %v5074
    %v6378 = vunpack.c.h.b16 %v5074
    %v6379 = vunpack.c.l.b16 %v5075
    %v6380 = vunpack.c.h.b16 %v5075
    %v6381 = vunpack.c.l.b16 %v5076
    %v6382 = vunpack.c.h.b16 %v5076
    %v6383 = vunpack.c.l.b16 %v5077
    %v6384 = vunpack.c.h.b16 %v5077
    %v6385 = vunpack.c.l.b16 %v5078
    %v6386 = vunpack.c.h.b16 %v5078
    %v6387 = vunpack.c.l.b16 %v5079
    %v6388 = vunpack.c.h.b16 %v5079
    %v6389 = vunpack.c.l.b16 %v5080
    %v6390 = vunpack.c.h.b16 %v5080
    %v6391 = vunpack.c.l.b16 %v5081
    %v6392 = vunpack.c.h.b16 %v5081
    %v6393 = vunpack.c.l.b16 %v5082
    %v6394 = vunpack.c.h.b16 %v5082
    %v6395 = vunpack.c.l.b16 %v5083
    %v6396 = vunpack.c.h.b16 %v5083
    %v6397 = vunpack.c.l.b16 %v5084
    %v6398 = vunpack.c.h.b16 %v5084
    %v6399 = vunpack.c.l.b16 %v5085
    %v6400 = vunpack.c.h.b16 %v5085
    %v6401 = vunpack.c.l.b16 %v5086
    %v6402 = vunpack.c.h.b16 %v5086
    %v6403 = vunpack.c.l.b16 %v5087
    %v6404 = vunpack.c.h.b16 %v5087
    %v6405 = vunpack.c.l.b16 %v5088
    %v6406 = vunpack.c.h.b16 %v5088
    %v6407 = vunpack.c.l.b16 %v5089
    %v6408 = vunpack.c.h.b16 %v5089
    %v6409 = vunpack.c.l.b16 %v5090
    %v6410 = vunpack.c.h.b16 %v5090
    %v6411 = vunpack.c.l.b16 %v5091
    %v6412 = vunpack.c.h.b16 %v5091
    %v6413 = vunpack.c.l.b16 %v5092
    %v6414 = vunpack.c.h.b16 %v5092
    %v6415 = vunpack.c.l.b16 %v5093
    %v6416 = vunpack.c.h.b16 %v5093
    %v6417 = vunpack.c.l.b16 %v5094
    %v6418 = vunpack.c.h.b16 %v5094
    %v6419 = vunpack.c.l.b16 %v5095
    %v6420 = vunpack.c.h.b16 %v5095
    %v6421 = vunpack.c.l.b16 %v5096
    %v6422 = vunpack.c.h.b16 %v5096
    %v6423 = vunpack.c.l.b16 %v5097
    %v6424 = vunpack.c.h.b16 %v5097
    %v6425 = vunpack.c.l.b16 %v5098
    %v6426 = vunpack.c.h.b16 %v5098
    %v6427 = vunpack.c.l.b16 %v5099
    %v6428 = vunpack.c.h.b16 %v5099
    %v6429 = vunpack.c.l.b16 %v5100
    %v6430 = vunpack.c.h.b16 %v5100
    %v6431 = vunpack.c.l.b16 %v5101
    %v6432 = vunpack.c.h.b16 %v5101
    %v6433 = vunpack.c.l.b16 %v5102
    %v6434 = vunpack.c.h.b16 %v5102
    %v6435 = vunpack.c.l.b16 %v5103
    %v6436 = vunpack.c.h.b16 %v5103
    %v6437 = vunpack.c.l.b16 %v5104
    %v6438 = vunpack.c.h.b16 %v5104
    %v6439 = vunpack.c.l.b16 %v5105
    %v6440 = vunpack.c.h.b16 %v5105
    %v6441 = vunpack.c.l.b16 %v5106
    %v6442 = vunpack.c.h.b16 %v5106
    %v6443 = vunpack.c.l.b16 %v5107
    %v6444 = vunpack.c.h.b16 %v5107
    %v6445 = vunpack.c.l.b16 %v5108
    %v6446 = vunpack.c.h.b16 %v5108
    %v6447 = vunpack.c.l.b16 %v5109
    %v6448 = vunpack.c.h.b16 %v5109
    %v6449 = vunpack.c.l.b16 %v5110
    %v6450 = vunpack.c.h.b16 %v5110
    %v6451 = vunpack.c.l.b16 %v5111
    %v6452 = vunpack.c.h.b16 %v5111
    %v6453 = vunpack.c.l.b16 %v5112
    %v6454 = vunpack.c.h.b16 %v5112
    %v6455 = vunpack.c.l.b16 %v5113
    %v6456 = vunpack.c.h.b16 %v5113
    %v6457 = vunpack.c.l.b16 %v5114
    %v6458 = vunpack.c.h.b16 %v5114
    %v6459 = vunpack.c.l.b16 %v5115
    %v6460 = vunpack.c.h.b16 %v5115
    %v6461 = vunpack.c.l.b16 %v5116
    %v6462 = vunpack.c.h.b16 %v5116
    %v6463 = vunpack.c.l.b16 %v5117
    %v6464 = vunpack.c.h.b16 %v5117
    %v6465 = vunpack.c.l.b16 %v5118
    %v6466 = vunpack.c.h.b16 %v5118
    %v6467 = vunpack.c.l.b16 %v5119
    %v6468 = vunpack.c.h.b16 %v5119
    %v6469 = vunpack.c.l.b16 %v5120
    %v6470 = vunpack.c.h.b16 %v5120
    %v6471 = vunpack.c.l.b16 %v5121
    %v6472 = vunpack.c.h.b16 %v5121
    %v6473 = vunpack.c.l.b16 %v5122
    %v6474 = vunpack.c.h.b16 %v5122
    %v6475 = vunpack.c.l.b16 %v5123
    %v6476 = vunpack.c.h.b16 %v5123
    %v6477 = vunpack.c.l.b16 %v5124
    %v6478 = vunpack.c.h.b16 %v5124
    %v6479 = vunpack.c.l.b16 %v5125
    %v6480 = vunpack.c.h.b16 %v5125
    %v6481 = vunpack.c.l.b16 %v5126
    %v6482 = vunpack.c.h.b16 %v5126
    %v6483 = vunpack.c.l.b16 %v5127
    %v6484 = vunpack.c.h.b16 %v5127
    %v6485 = vunpack.c.l.b16 %v5128
    %v6486 = vunpack.c.h.b16 %v5128
    %v6487 = vunpack.c.l.b16 %v5129
    %v6488 = vunpack.c.h.b16 %v5129
    %v6489 = vunpack.c.l.b16 %v5130
    %v6490 = vunpack.c.h.b16 %v5130
    %v6491 = vunpack.c.l.b16 %v5131
    %v6492 = vunpack.c.h.b16 %v5131
    %v6493 = vunpack.c.l.b16 %v5132
    %v6494 = vunpack.c.h.b16 %v5132
    %v6495 = vunpack.c.l.b16 %v5133
    %v6496 = vunpack.c.h.b16 %v5133
    %v6497 = vunpack.c.l.b16 %v5134
    %v6498 = vunpack.c.h.b16 %v5134
    %v6499 = vunpack.c.l.b16 %v5135
    %v6500 = vunpack.c.h.b16 %v5135
    %v6501 = vunpack.c.l.b16 %v5136
    %v6502 = vunpack.c.h.b16 %v5136
    %v6503 = vunpack.c.l.b16 %v5137
    %v6504 = vunpack.c.h.b16 %v5137
    %v6505 = vunpack.c.l.b16 %v5138
    %v6506 = vunpack.c.h.b16 %v5138
    %v6507 = vunpack.c.l.b16 %v5139
    %v6508 = vunpack.c.h.b16 %v5139
    %v6509 = vunpack.c.l.b16 %v5140
    %v6510 = vunpack.c.h.b16 %v5140
    %v6511 = vunpack.c.l.b16 %v5141
    %v6512 = vunpack.c.h.b16 %v5141
    %v6513 = vunpack.c.l.b16 %v5142
    %v6514 = vunpack.c.h.b16 %v5142
    %v6515 = vunpack.c.l.b16 %v5143
    %v6516 = vunpack.c.h.b16 %v5143
    %v6517 = vunpack.c.l.b16 %v5144
    %v6518 = vunpack.c.h.b16 %v5144
    %v6519 = vunpack.c.l.b16 %v5145
    %v6520 = vunpack.c.h.b16 %v5145
    %v6521 = vunpack.c.l.b16 %v5146
    %v6522 = vunpack.c.h.b16 %v5146
    %v6523 = vunpack.c.l.b16 %v5147
    %v6524 = vunpack.c.h.b16 %v5147
    %v6525 = vunpack.c.l.b16 %v5148
    %v6526 = vunpack.c.h.b16 %v5148
    %v6527 = vunpack.c.l.b16 %v5149
    %v6528 = vunpack.c.h.b16 %v5149
    %v6529 = vunpack.c.l.b16 %v5150
    %v6530 = vunpack.c.h.b16 %v5150
    %v6531 = vunpack.c.l.b16 %v5151
    %v6532 = vunpack.c.h.b16 %v5151
    %v6533 = vunpack.c.l.b16 %v5152
    %v6534 = vunpack.c.h.b16 %v5152
    %v6535 = vunpack.c.l.b16 %v5153
    %v6536 = vunpack.c.h.b16 %v5153
    %v6537 = vunpack.c.l.b16 %v5154
    %v6538 = vunpack.c.h.b16 %v5154
    %v6539 = vunpack.c.l.b16 %v5155
    %v6540 = vunpack.c.h.b16 %v5155
    %v6541 = vunpack.c.l.b16 %v5156
    %v6542 = vunpack.c.h.b16 %v5156
    %v6543 = vunpack.c.l.b16 %v5157
    %v6544 = vunpack.c.h.b16 %v5157
    %v6545 = vunpack.c.l.b16 %v5158
    %v6546 = vunpack.c.h.b16 %v5158
    %v6547 = vunpack.c.l.b16 %v5159
    %v6548 = vunpack.c.h.b16 %v5159
    %v6549 = vunpack.c.l.b16 %v5160
    %v6550 = vunpack.c.h.b16 %v5160
    %v6551 = vunpack.c.l.b16 %v5161
    %v6552 = vunpack.c.h.b16 %v5161
    %v6553 = vunpack.c.l.b16 %v5162
    %v6554 = vunpack.c.h.b16 %v5162
    %v6555 = vunpack.c.l.b16 %v5163
    %v6556 = vunpack.c.h.b16 %v5163
    %v6557 = vunpack.c.l.b16 %v5164
    %v6558 = vunpack.c.h.b16 %v5164
    %v6559 = vunpack.c.l.b16 %v5165
    %v6560 = vunpack.c.h.b16 %v5165
    %v6561 = vunpack.c.l.b16 %v5166
    %v6562 = vunpack.c.h.b16 %v5166
    %v6563 = vunpack.c.l.b16 %v5167
    %v6564 = vunpack.c.h.b16 %v5167
    %v6565 = vunpack.c.l.b16 %v5168
    %v6566 = vunpack.c.h.b16 %v5168
    %v6567 = vunpack.c.l.b16 %v5169
    %v6568 = vunpack.c.h.b16 %v5169
    %v6569 = vunpack.c.l.b16 %v5170
    %v6570 = vunpack.c.h.b16 %v5170
    %v6571 = vunpack.c.l.b16 %v5171
    %v6572 = vunpack.c.h.b16 %v5171
    %v6573 = vunpack.c.l.b16 %v5172
    %v6574 = vunpack.c.h.b16 %v5172
    %v6575 = vunpack.c.l.b16 %v5173
    %v6576 = vunpack.c.h.b16 %v5173
    %v6577 = vunpack.c.l.b16 %v5174
    %v6578 = vunpack.c.h.b16 %v5174
    %v6579 = vunpack.c.l.b16 %v5175
    %v6580 = vunpack.c.h.b16 %v5175
    %v6581 = vunpack.c.l.b16 %v5176
    %v6582 = vunpack.c.h.b16 %v5176
    %v6583 = vunpack.c.l.b16 %v5177
    %v6584 = vunpack.c.h.b16 %v5177
    %v6585 = vunpack.c.l.b16 %v5178
    %v6586 = vunpack.c.h.b16 %v5178
    %v6587 = vunpack.c.l.b16 %v5179
    %v6588 = vunpack.c.h.b16 %v5179
    %v6589 = vunpack.c.l.b16 %v5180
    %v6590 = vunpack.c.h.b16 %v5180
    %v6591 = vunpack.c.l.b16 %v5181
    %v6592 = vunpack.c.h.b16 %v5181
    %v6593 = vunpack.c.l.b16 %v5182
    %v6594 = vunpack.c.h.b16 %v5182
    %v6595 = vunpack.c.l.b16 %v5183
    %v6596 = vunpack.c.h.b16 %v5183
    %v6597 = vunpack.c.l.b16 %v5184
    %v6598 = vunpack.c.h.b16 %v5184
    %v6599 = vunpack.c.l.b16 %v5185
    %v6600 = vunpack.c.h.b16 %v5185
    %v6601 = vunpack.c.l.b16 %v5186
    %v6602 = vunpack.c.h.b16 %v5186
    %v6603 = vunpack.c.l.b16 %v5187
    %v6604 = vunpack.c.h.b16 %v5187
    %v6605 = vunpack.c.l.b16 %v5188
    %v6606 = vunpack.c.h.b16 %v5188
    %v6607 = vunpack.c.l.b16 %v5189
    %v6608 = vunpack.c.h.b16 %v5189
    %v6609 = vunpack.c.l.b16 %v5190
    %v6610 = vunpack.c.h.b16 %v5190
    %v6611 = vunpack.c.l.b16 %v5191
    %v6612 = vunpack.c.h.b16 %v5191
    %v6613 = vunpack.c.l.b16 %v5192
    %v6614 = vunpack.c.h.b16 %v5192
    %v6615 = vunpack.c.l.b16 %v5193
    %v6616 = vunpack.c.h.b16 %v5193
    %v6617 = vunpack.c.l.b16 %v5194
    %v6618 = vunpack.c.h.b16 %v5194
    %v6619 = vunpack.c.l.b16 %v5195
    %v6620 = vunpack.c.h.b16 %v5195
    %v6621 = vunpack.c.l.b16 %v5196
    %v6622 = vunpack.c.h.b16 %v5196
    %v6623 = vunpack.c.l.b16 %v5197
    %v6624 = vunpack.c.h.b16 %v5197
    %v6625 = vunpack.c.l.b16 %v5198
    %v6626 = vunpack.c.h.b16 %v5198
    %v6627 = vunpack.c.l.b16 %v5199
    %v6628 = vunpack.c.h.b16 %v5199
    %v6629 = vunpack.c.l.b16 %v5200
    %v6630 = vunpack.c.h.b16 %v5200
    %v6631 = vunpack.c.l.b16 %v5201
    %v6632 = vunpack.c.h.b16 %v5201
    %v6633 = vunpack.c.l.b16 %v5202
    %v6634 = vunpack.c.h.b16 %v5202
    %v6635 = vunpack.c.l.b16 %v5203
    %v6636 = vunpack.c.h.b16 %v5203
    %v6637 = vunpack.c.l.b16 %v5204
    %v6638 = vunpack.c.h.b16 %v5204
    %v6639 = vunpack.c.l.b16 %v5205
    %v6640 = vunpack.c.h.b16 %v5205
    %v6641 = vunpack.c.l.b16 %v5206
    %v6642 = vunpack.c.h.b16 %v5206
    %v6643 = vunpack.c.l.b16 %v5207
    %v6644 = vunpack.c.h.b16 %v5207
    %v6645 = vunpack.c.l.b16 %v5208
    %v6646 = vunpack.c.h.b16 %v5208
    %v6647 = vunpack.c.l.b16 %v5209
    %v6648 = vunpack.c.h.b16 %v5209
    %v6649 = vunpack.c.l.b16 %v5210
    %v6650 = vunpack.c.h.b16 %v5210
    %v6651 = vunpack.c.l.b16 %v5211
    %v6652 = vunpack.c.h.b16 %v5211
    %v6653 = vunpack.c.l.b16 %v5212
    %v6654 = vunpack.c.h.b16 %v5212
    %v6655 = vunpack.c.l.b16 %v5213
    %v6656 = vunpack.c.h.b16 %v5213
    %v6657 = vunpack.c.l.b16 %v5214
    %v6658 = vunpack.c.h.b16 %v5214
    %v6659 = vunpack.c.l.b16 %v5215
    %v6660 = vunpack.c.h.b16 %v5215
    %v6661 = vunpack.c.l.b16 %v5216
    %v6662 = vunpack.c.h.b16 %v5216
    %v6663 = vunpack.c.l.b16 %v5217
    %v6664 = vunpack.c.h.b16 %v5217
    %v6665 = vunpack.c.l.b16 %v5218
    %v6666 = vunpack.c.h.b16 %v5218
    %v6667 = vunpack.c.l.b16 %v5219
    %v6668 = vunpack.c.h.b16 %v5219
    %v6669 = vunpack.c.l.b16 %v5220
    %v6670 = vunpack.c.h.b16 %v5220
    %v6671 = vunpack.c.l.b16 %v5221
    %v6672 = vunpack.c.h.b16 %v5221
    %v6673 = vunpack.c.l.b16 %v5222
    %v6674 = vunpack.c.h.b16 %v5222
    %v6675 = vunpack.c.l.b16 %v5223
    %v6676 = vunpack.c.h.b16 %v5223
    %v6677 = vunpack.c.l.b16 %v5224
    %v6678 = vunpack.c.h.b16 %v5224
    %v6679 = vunpack.c.l.b16 %v5225
    %v6680 = vunpack.c.h.b16 %v5225
    %v6681 = vunpack.c.l.b16 %v5226
    %v6682 = vunpack.c.h.b16 %v5226
    %v6683 = vunpack.c.l.b16 %v5227
    %v6684 = vunpack.c.h.b16 %v5227
    %v6685 = vunpack.c.l.b16 %v5228
    %v6686 = vunpack.c.h.b16 %v5228
    %v6687 = vunpack.c.l.b16 %v5229
    %v6688 = vunpack.c.h.b16 %v5229
    %v6689 = vunpack.c.l.b16 %v5230
    %v6690 = vunpack.c.h.b16 %v5230
    %v6691 = vunpack.c.l.b16 %v5231
    %v6692 = vunpack.c.h.b16 %v5231
    %v6693 = vunpack.c.l.b16 %v5232
    %v6694 = vunpack.c.h.b16 %v5232
    %v6695 = vunpack.c.l.b16 %v5233
    %v6696 = vunpack.c.h.b16 %v5233
    %v6697 = vunpack.c.l.b16 %v5234
    %v6698 = vunpack.c.h.b16 %v5234
    %v6699 = vunpack.c.l.b16 %v5235
    %v6700 = vunpack.c.h.b16 %v5235
    %v6701 = vunpack.c.l.b16 %v5236
    %v6702 = vunpack.c.h.b16 %v5236
    %v6703 = vunpack.c.l.b16 %v5237
    %v6704 = vunpack.c.h.b16 %v5237
    %v6705 = vunpack.c.l.b16 %v5238
    %v6706 = vunpack.c.h.b16 %v5238
    %v6707 = vunpack.c.l.b16 %v5239
    %v6708 = vunpack.c.h.b16 %v5239
    %v6709 = vunpack.c.l.b16 %v5240
    %v6710 = vunpack.c.h.b16 %v5240
    %v6711 = vunpack.c.l.b16 %v5241
    %v6712 = vunpack.c.h.b16 %v5241
    %v6713 = vunpack.c.l.b16 %v5242
    %v6714 = vunpack.c.h.b16 %v5242
    %v6715 = vunpack.c.l.b16 %v5243
    %v6716 = vunpack.c.h.b16 %v5243
    %v6717 = vunpack.c.l.b16 %v5244
    %v6718 = vunpack.c.h.b16 %v5244
    %v6719 = vunpack.c.l.b16 %v5245
    %v6720 = vunpack.c.h.b16 %v5245
    %v6721 = vunpack.c.l.b16 %v5246
    %v6722 = vunpack.c.h.b16 %v5246
    %v6723 = vunpack.c.l.b16 %v5247
    %v6724 = vunpack.c.h.b16 %v5247
    %v6725 = vunpack.c.l.b16 %v5248
    %v6726 = vunpack.c.h.b16 %v5248
    %v6727 = vunpack.c.l.b16 %v5249
    %v6728 = vunpack.c.h.b16 %v5249
    %v6729 = vunpack.c.l.b16 %v5250
    %v6730 = vunpack.c.h.b16 %v5250
    %v6731 = vunpack.c.l.b16 %v5251
    %v6732 = vunpack.c.h.b16 %v5251
    %v6733 = vunpack.c.l.b16 %v5252
    %v6734 = vunpack.c.h.b16 %v5252
    %v6735 = vunpack.c.l.b16 %v5253
    %v6736 = vunpack.c.h.b16 %v5253
    %v6737 = vunpack.c.l.b16 %v5254
    %v6738 = vunpack.c.h.b16 %v5254
    %v6739 = vunpack.c.l.b16 %v5255
    %v6740 = vunpack.c.h.b16 %v5255
    %v6741 = vunpack.c.l.b16 %v5256
    %v6742 = vunpack.c.h.b16 %v5256
    %v6743 = vunpack.c.l.b16 %v5257
    %v6744 = vunpack.c.h.b16 %v5257
    %v6745 = vunpack.c.l.b16 %v5258
    %v6746 = vunpack.c.h.b16 %v5258
    %v6747 = vunpack.c.l.b16 %v5259
    %v6748 = vunpack.c.h.b16 %v5259
    %v6749 = vunpack.c.l.b16 %v5260
    %v6750 = vunpack.c.h.b16 %v5260
    %v6751 = vunpack.c.l.b16 %v5261
    %v6752 = vunpack.c.h.b16 %v5261
    %v6753 = vunpack.c.l.b16 %v5262
    %v6754 = vunpack.c.h.b16 %v5262
    %v6755 = vunpack.c.l.b16 %v5263
    %v6756 = vunpack.c.h.b16 %v5263
    %v6757 = vunpack.c.l.b16 %v5264
    %v6758 = vunpack.c.h.b16 %v5264
    %v6759 = vunpack.c.l.b16 %v5265
    %v6760 = vunpack.c.h.b16 %v5265
    %v6761 = vunpack.c.l.b16 %v5266
    %v6762 = vunpack.c.h.b16 %v5266
    %v6763 = vunpack.c.l.b16 %v5267
    %v6764 = vunpack.c.h.b16 %v5267
    %v6765 = vunpack.c.l.b16 %v5268
    %v6766 = vunpack.c.h.b16 %v5268
    %v6767 = vunpack.c.l.b16 %v5269
    %v6768 = vunpack.c.h.b16 %v5269
    %v6769 = vunpack.c.l.b16 %v5270
    %v6770 = vunpack.c.h.b16 %v5270
    %v6771 = vunpack.c.l.b16 %v5271
    %v6772 = vunpack.c.h.b16 %v5271
    %v6773 = vunpack.c.l.b16 %v5272
    %v6774 = vunpack.c.h.b16 %v5272
    %v6775 = vunpack.c.l.b16 %v5273
    %v6776 = vunpack.c.h.b16 %v5273
    %v6777 = vunpack.c.l.b16 %v5274
    %v6778 = vunpack.c.h.b16 %v5274
    %v6779 = vunpack.c.l.b16 %v5275
    %v6780 = vunpack.c.h.b16 %v5275
    %v6781 = vunpack.c.l.b16 %v5276
    %v6782 = vunpack.c.h.b16 %v5276
    %v6783 = vunpack.c.l.b16 %v5277
    %v6784 = vunpack.c.h.b16 %v5277
    %v6785 = vunpack.c.l.b16 %v5278
    %v6786 = vunpack.c.h.b16 %v5278
    %v6787 = vunpack.c.l.b16 %v5279
    %v6788 = vunpack.c.h.b16 %v5279
    %v6789 = vunpack.c.l.b16 %v5280
    %v6790 = vunpack.c.h.b16 %v5280
    %v6791 = vunpack.c.l.b16 %v5281
    %v6792 = vunpack.c.h.b16 %v5281
    %v6793 = vunpack.c.l.b16 %v5282
    %v6794 = vunpack.c.h.b16 %v5282
    %v6795 = vunpack.c.l.b16 %v5283
    %v6796 = vunpack.c.h.b16 %v5283
    %v6797 = vunpack.c.l.b16 %v5284
    %v6798 = vunpack.c.h.b16 %v5284
    %v6799 = vunpack.c.l.b16 %v5285
    %v6800 = vunpack.c.h.b16 %v5285
    %v6801 = vunpack.c.l.b16 %v5286
    %v6802 = vunpack.c.h.b16 %v5286
    %v6803 = vunpack.c.l.b16 %v5287
    %v6804 = vunpack.c.h.b16 %v5287
    %v6805 = vunpack.c.l.b16 %v5288
    %v6806 = vunpack.c.h.b16 %v5288
    %v6807 = vunpack.c.l.b16 %v5289
    %v6808 = vunpack.c.h.b16 %v5289
    %v6809 = vunpack.c.l.b16 %v5290
    %v6810 = vunpack.c.h.b16 %v5290
    %v6811 = vunpack.c.l.b16 %v5291
    %v6812 = vunpack.c.h.b16 %v5291
    %v6813 = vunpack.c.l.b16 %v5292
    %v6814 = vunpack.c.h.b16 %v5292
    %v6815 = vunpack.c.l.b16 %v5293
    %v6816 = vunpack.c.h.b16 %v5293
    %v6817 = vunpack.c.l.b16 %v5294
    %v6818 = vunpack.c.h.b16 %v5294
    %v6819 = vunpack.c.l.b16 %v5295
    %v6820 = vunpack.c.h.b16 %v5295
    %v6821 = vunpack.c.l.b16 %v5296
    %v6822 = vunpack.c.h.b16 %v5296
    %v6823 = vunpack.c.l.b16 %v5297
    %v6824 = vunpack.c.h.b16 %v5297
    %v6825 = vunpack.c.l.b16 %v5298
    %v6826 = vunpack.c.h.b16 %v5298
    %v6827 = vunpack.c.l.b16 %v5299
    %v6828 = vunpack.c.h.b16 %v5299
    %v6829 = vunpack.c.l.b16 %v5300
    %v6830 = vunpack.c.h.b16 %v5300
    %v6831 = vunpack.c.l.b16 %v5301
    %v6832 = vunpack.c.h.b16 %v5301
    %v6833 = vunpack.c.l.b16 %v5302
    %v6834 = vunpack.c.h.b16 %v5302
    %v6835 = vunpack.c.l.b16 %v5303
    %v6836 = vunpack.c.h.b16 %v5303
    %v6837 = vunpack.c.l.b16 %v5304
    %v6838 = vunpack.c.h.b16 %v5304
    %v6839 = vunpack.c.l.b16 %v5305
    %v6840 = vunpack.c.h.b16 %v5305
    %v6841 = vunpack.c.l.b16 %v5306
    %v6842 = vunpack.c.h.b16 %v5306
    %v6843 = vunpack.c.l.b16 %v5307
    %v6844 = vunpack.c.h.b16 %v5307
    %v6845 = vunpack.c.l.b16 %v5308
    %v6846 = vunpack.c.h.b16 %v5308
    %v6847 = vunpack.c.l.b16 %v5309
    %v6848 = vunpack.c.h.b16 %v5309
    %v6849 = vunpack.c.l.b16 %v5310
    %v6850 = vunpack.c.h.b16 %v5310
    %v6851 = vunpack.c.l.b16 %v5311
    %v6852 = vunpack.c.h.b16 %v5311
    %v6853 = vunpack.c.l.b16 %v5312
    %v6854 = vunpack.c.h.b16 %v5312
    %v6855 = vunpack.c.l.b16 %v5313
    %v6856 = vunpack.c.h.b16 %v5313
    %v6857 = vunpack.c.l.b16 %v5314
    %v6858 = vunpack.c.h.b16 %v5314
    %v6859 = vunpack.c.l.b16 %v5315
    %v6860 = vunpack.c.h.b16 %v5315
    %v6861 = vunpack.c.l.b16 %v5316
    %v6862 = vunpack.c.h.b16 %v5316
    %v6863 = vunpack.c.l.b16 %v5317
    %v6864 = vunpack.c.h.b16 %v5317
    %v6865 = vunpack.c.l.b16 %v5318
    %v6866 = vunpack.c.h.b16 %v5318
    %v6867 = vunpack.c.l.b16 %v5319
    %v6868 = vunpack.c.h.b16 %v5319
    %v6869 = vunpack.c.l.b16 %v5320
    %v6870 = vunpack.c.h.b16 %v5320
    %v6871 = vunpack.c.l.b16 %v5321
    %v6872 = vunpack.c.h.b16 %v5321
    %v6873 = vunpack.c.l.b16 %v5322
    %v6874 = vunpack.c.h.b16 %v5322
    %v6875 = vunpack.c.l.b16 %v5323
    %v6876 = vunpack.c.h.b16 %v5323
    %v6877 = vunpack.c.l.b16 %v5324
    %v6878 = vunpack.c.h.b16 %v5324
    %v6879 = vunpack.c.l.b16 %v5325
    %v6880 = vunpack.c.h.b16 %v5325
    %v6881 = vunpack.c.l.b16 %v5326
    %v6882 = vunpack.c.h.b16 %v5326
    %v6883 = vunpack.c.l.b16 %v5327
    %v6884 = vunpack.c.h.b16 %v5327
    %v6885 = vunpack.c.l.b16 %v5328
    %v6886 = vunpack.c.h.b16 %v5328
    %v6887 = vunpack.c.l.b16 %v5329
    %v6888 = vunpack.c.h.b16 %v5329
    %v6889 = vunpack.c.l.b16 %v5330
    %v6890 = vunpack.c.h.b16 %v5330
    %v6891 = vunpack.c.l.b16 %v5331
    %v6892 = vunpack.c.h.b16 %v5331
    %v6893 = vunpack.c.l.b16 %v5332
    %v6894 = vunpack.c.h.b16 %v5332
    %v6895 = vunpack.c.l.b16 %v5333
    %v6896 = vunpack.c.h.b16 %v5333
    %v6897 = vunpack.c.l.b16 %v5334
    %v6898 = vunpack.c.h.b16 %v5334
    %v6899 = vunpack.c.l.b16 %v5335
    %v6900 = vunpack.c.h.b16 %v5335
    %v6901 = vunpack.c.l.b16 %v5336
    %v6902 = vunpack.c.h.b16 %v5336
    %v6903 = vunpack.c.l.b16 %v5337
    %v6904 = vunpack.c.h.b16 %v5337
    %v6905 = vunpack.c.l.b16 %v5338
    %v6906 = vunpack.c.h.b16 %v5338
    %v6907 = vunpack.c.l.b16 %v5339
    %v6908 = vunpack.c.h.b16 %v5339
    %v6909 = vunpack.c.l.b16 %v5340
    %v6910 = vunpack.c.h.b16 %v5340
    %v6911 = vunpack.c.l.b16 %v5341
    %v6912 = vunpack.c.h.b16 %v5341
    %v6913 = vunpack.c.l.b16 %v5342
    %v6914 = vunpack.c.h.b16 %v5342
    %v6915 = vunpack.c.l.b16 %v5343
    %v6916 = vunpack.c.h.b16 %v5343
    %v6917 = vunpack.c.l.b16 %v5344
    %v6918 = vunpack.c.h.b16 %v5344
    %v6919 = vunpack.c.l.b16 %v5345
    %v6920 = vunpack.c.h.b16 %v5345
    %v6921 = vunpack.c.l.b16 %v5346
    %v6922 = vunpack.c.h.b16 %v5346
    %v6923 = vunpack.c.l.b16 %v5347
    %v6924 = vunpack.c.h.b16 %v5347
    %v6925 = vunpack.c.l.b16 %v5348
    %v6926 = vunpack.c.h.b16 %v5348
    %v6927 = vpack.c.b16 %v5911, %v5903
    %v6928 = vpack.c.b16 %v5912, %v5904
    %v6929 = vpack.c.b16 %v5913, %v5905
    %v6930 = vpack.c.b16 %v5914, %v5906
    %v6931 = vpack.c.b16 %v5915, %v5907
    %v6932 = vpack.c.b16 %v5916, %v5908
    %v6933 = vpack.c.b16 %v5917, %v5909
    %v6934 = vpack.c.b16 %v5918, %v5910
    %v6935 = vpack.c.b16 %v5927, %v5919
    %v6936 = vpack.c.b16 %v5928, %v5920
    %v6937 = vpack.c.b16 %v5929, %v5921
    %v6938 = vpack.c.b16 %v5930, %v5922
    %v6939 = vpack.c.b16 %v5931, %v5923
    %v6940 = vpack.c.b16 %v5932, %v5924
    %v6941 = vpack.c.b16 %v5933, %v5925
    %v6942 = vpack.c.b16 %v5934, %v5926
    %v6943 = vpack.c.b16 %v5943, %v5935
    %v6944 = vpack.c.b16 %v5944, %v5936
    %v6945 = vpack.c.b16 %v5945, %v5937
    %v6946 = vpack.c.b16 %v5946, %v5938
    %v6947 = vpack.c.b16 %v5947, %v5939
    %v6948 = vpack.c.b16 %v5948, %v5940
    %v6949 = vpack.c.b16 %v5949, %v5941
    %v6950 = vpack.c.b16 %v5950, %v5942
    %v6951 = vpack.c.b16 %v5959, %v5951
    %v6952 = vpack.c.b16 %v5960, %v5952
    %v6953 = vpack.c.b16 %v5961, %v5953
    %v6954 = vpack.c.b16 %v5962, %v5954
    %v6955 = vpack.c.b16 %v5963, %v5955
    %v6956 = vpack.c.b16 %v5964, %v5956
    %v6957 = vpack.c.b16 %v5965, %v5957
    %v6958 = vpack.c.b16 %v5966, %v5958
    %v6959 = vpack.c.b16 %v5975, %v5967
    %v6960 = vpack.c.b16 %v5976, %v5968
    %v6961 = vpack.c.b16 %v5977, %v5969
    %v6962 = vpack.c.b16 %v5978, %v5970
    %v6963 = vpack.c.b16 %v5979, %v5971
    %v6964 = vpack.c.b16 %v5980, %v5972
    %v6965 = vpack.c.b16 %v5981, %v5973
    %v6966 = vpack.c.b16 %v5982, %v5974
    %v6967 = vpack.c.b16 %v5991, %v5983
    %v6968 = vpack.c.b16 %v5992, %v5984
    %v6969 = vpack.c.b16 %v5993, %v5985
    %v6970 = vpack.c.b16 %v5994, %v5986
    %v6971 = vpack.c.b16 %v5995, %v5987
    %v6972 = vpack.c.b16 %v5996, %v5988
    %v6973 = vpack.c.b16 %v5997, %v5989
    %v6974 = vpack.c.b16 %v5998, %v5990
    %v6975 = vpack.c.b16 %v6007, %v5999
    %v6976 = vpack.c.b16 %v6008, %v6000
    %v6977 = vpack.c.b16 %v6009, %v6001
    %v6978 = vpack.c.b16 %v6010, %v6002
    %v6979 = vpack.c.b16 %v6011, %v6003
    %v6980 = vpack.c.b16 %v6012, %v6004
    %v6981 = vpack.c.b16 %v6013, %v6005
    %v6982 = vpack.c.b16 %v6014, %v6006
    %v6983 = vpack.c.b16 %v6023, %v6015
    %v6984 = vpack.c.b16 %v6024, %v6016
    %v6985 = vpack.c.b16 %v6025, %v6017
    %v6986 = vpack.c.b16 %v6026, %v6018
    %v6987 = vpack.c.b16 %v6027, %v6019
    %v6988 = vpack.c.b16 %v6028, %v6020
    %v6989 = vpack.c.b16 %v6029, %v6021
    %v6990 = vpack.c.b16 %v6030, %v6022
    %v6991 = vpack.c.b16 %v6039, %v6031
    %v6992 = vpack.c.b16 %v6040, %v6032
    %v6993 = vpack.c.b16 %v6041, %v6033
    %v6994 = vpack.c.b16 %v6042, %v6034
    %v6995 = vpack.c.b16 %v6043, %v6035
    %v6996 = vpack.c.b16 %v6044, %v6036
    %v6997 = vpack.c.b16 %v6045, %v6037
    %v6998 = vpack.c.b16 %v6046, %v6038
    %v6999 = vpack.c.b16 %v6055, %v6047
    %v7000 = vpack.c.b16 %v6056, %v6048
    %v7001 = vpack.c.b16 %v6057, %v6049
    %v7002 = vpack.c.b16 %v6058, %v6050
    %v7003 = vpack.c.b16 %v6059, %v6051
    %v7004 = vpack.c.b16 %v6060, %v6052
    %v7005 = vpack.c.b16 %v6061, %v6053
    %v7006 = vpack.c.b16 %v6062, %v6054
    %v7007 = vpack.c.b16 %v6071, %v6063
    %v7008 = vpack.c.b16 %v6072, %v6064
    %v7009 = vpack.c.b16 %v6073, %v6065
    %v7010 = vpack.c.b16 %v6074, %v6066
    %v7011 = vpack.c.b16 %v6075, %v6067
    %v7012 = vpack.c.b16 %v6076, %v6068
    %v7013 = vpack.c.b16 %v6077, %v6069
    %v7014 = vpack.c.b16 %v6078, %v6070
    %v7015 = vpack.c.b16 %v6087, %v6079
    %v7016 = vpack.c.b16 %v6088, %v6080
    %v7017 = vpack.c.b16 %v6089, %v6081
    %v7018 = vpack.c.b16 %v6090, %v6082
    %v7019 = vpack.c.b16 %v6091, %v6083
    %v7020 = vpack.c.b16 %v6092, %v6084
    %v7021 = vpack.c.b16 %v6093, %v6085
    %v7022 = vpack.c.b16 %v6094, %v6086
    %v7023 = vpack.c.b16 %v6103, %v6095
    %v7024 = vpack.c.b16 %v6104, %v6096
    %v7025 = vpack.c.b16 %v6105, %v6097
    %v7026 = vpack.c.b16 %v6106, %v6098
    %v7027 = vpack.c.b16 %v6107, %v6099
    %v7028 = vpack.c.b16 %v6108, %v6100
    %v7029 = vpack.c.b16 %v6109, %v6101
    %v7030 = vpack.c.b16 %v6110, %v6102
    %v7031 = vpack.c.b16 %v6119, %v6111
    %v7032 = vpack.c.b16 %v6120, %v6112
    %v7033 = vpack.c.b16 %v6121, %v6113
    %v7034 = vpack.c.b16 %v6122, %v6114
    %v7035 = vpack.c.b16 %v6123, %v6115
    %v7036 = vpack.c.b16 %v6124, %v6116
    %v7037 = vpack.c.b16 %v6125, %v6117
    %v7038 = vpack.c.b16 %v6126, %v6118
    %v7039 = vpack.c.b16 %v6135, %v6127
    %v7040 = vpack.c.b16 %v6136, %v6128
    %v7041 = vpack.c.b16 %v6137, %v6129
    %v7042 = vpack.c.b16 %v6138, %v6130
    %v7043 = vpack.c.b16 %v6139, %v6131
    %v7044 = vpack.c.b16 %v6140, %v6132
    %v7045 = vpack.c.b16 %v6141, %v6133
    %v7046 = vpack.c.b16 %v6142, %v6134
    %v7047 = vpack.c.b16 %v6151, %v6143
    %v7048 = vpack.c.b16 %v6152, %v6144
    %v7049 = vpack.c.b16 %v6153, %v6145
    %v7050 = vpack.c.b16 %v6154, %v6146
    %v7051 = vpack.c.b16 %v6155, %v6147
    %v7052 = vpack.c.b16 %v6156, %v6148
    %v7053 = vpack.c.b16 %v6157, %v6149
    %v7054 = vpack.c.b16 %v6158, %v6150
    %v7055 = vpack.c.b16 %v6167, %v6159
    %v7056 = vpack.c.b16 %v6168, %v6160
    %v7057 = vpack.c.b16 %v6169, %v6161
    %v7058 = vpack.c.b16 %v6170, %v6162
    %v7059 = vpack.c.b16 %v6171, %v6163
    %v7060 = vpack.c.b16 %v6172, %v6164
    %v7061 = vpack.c.b16 %v6173, %v6165
    %v7062 = vpack.c.b16 %v6174, %v6166
    %v7063 = vpack.c.b16 %v6183, %v6175
    %v7064 = vpack.c.b16 %v6184, %v6176
    %v7065 = vpack.c.b16 %v6185, %v6177
    %v7066 = vpack.c.b16 %v6186, %v6178
    %v7067 = vpack.c.b16 %v6187, %v6179
    %v7068 = vpack.c.b16 %v6188, %v6180
    %v7069 = vpack.c.b16 %v6189, %v6181
    %v7070 = vpack.c.b16 %v6190, %v6182
    %v7071 = vpack.c.b16 %v6199, %v6191
    %v7072 = vpack.c.b16 %v6200, %v6192
    %v7073 = vpack.c.b16 %v6201, %v6193
    %v7074 = vpack.c.b16 %v6202, %v6194
    %v7075 = vpack.c.b16 %v6203, %v6195
    %v7076 = vpack.c.b16 %v6204, %v6196
    %v7077 = vpack.c.b16 %v6205, %v6197
    %v7078 = vpack.c.b16 %v6206, %v6198
    %v7079 = vpack.c.b16 %v6215, %v6207
    %v7080 = vpack.c.b16 %v6216, %v6208
    %v7081 = vpack.c.b16 %v6217, %v6209
    %v7082 = vpack.c.b16 %v6218, %v6210
    %v7083 = vpack.c.b16 %v6219, %v6211
    %v7084 = vpack.c.b16 %v6220, %v6212
    %v7085 = vpack.c.b16 %v6221, %v6213
    %v7086 = vpack.c.b16 %v6222, %v6214
    %v7087 = vpack.c.b16 %v6231, %v6223
    %v7088 = vpack.c.b16 %v6232, %v6224
    %v7089 = vpack.c.b16 %v6233, %v6225
    %v7090 = vpack.c.b16 %v6234, %v6226
    %v7091 = vpack.c.b16 %v6235, %v6227
    %v7092 = vpack.c.b16 %v6236, %v6228
    %v7093 = vpack.c.b16 %v6237, %v6229
    %v7094 = vpack.c.b16 %v6238, %v6230
    %v7095 = vpack.c.b16 %v6247, %v6239
    %v7096 = vpack.c.b16 %v6248, %v6240
    %v7097 = vpack.c.b16 %v6249, %v6241
    %v7098 = vpack.c.b16 %v6250, %v6242
    %v7099 = vpack.c.b16 %v6251, %v6243
    %v7100 = vpack.c.b16 %v6252, %v6244
    %v7101 = vpack.c.b16 %v6253, %v6245
    %v7102 = vpack.c.b16 %v6254, %v6246
    %v7103 = vpack.c.b16 %v6263, %v6255
    %v7104 = vpack.c.b16 %v6264, %v6256
    %v7105 = vpack.c.b16 %v6265, %v6257
    %v7106 = vpack.c.b16 %v6266, %v6258
    %v7107 = vpack.c.b16 %v6267, %v6259
    %v7108 = vpack.c.b16 %v6268, %v6260
    %v7109 = vpack.c.b16 %v6269, %v6261
    %v7110 = vpack.c.b16 %v6270, %v6262
    %v7111 = vpack.c.b16 %v6279, %v6271
    %v7112 = vpack.c.b16 %v6280, %v6272
    %v7113 = vpack.c.b16 %v6281, %v6273
    %v7114 = vpack.c.b16 %v6282, %v6274
    %v7115 = vpack.c.b16 %v6283, %v6275
    %v7116 = vpack.c.b16 %v6284, %v6276
    %v7117 = vpack.c.b16 %v6285, %v6277
    %v7118 = vpack.c.b16 %v6286, %v6278
    %v7119 = vpack.c.b16 %v6295, %v6287
    %v7120 = vpack.c.b16 %v6296, %v6288
    %v7121 = vpack.c.b16 %v6297, %v6289
    %v7122 = vpack.c.b16 %v6298, %v6290
    %v7123 = vpack.c.b16 %v6299, %v6291
    %v7124 = vpack.c.b16 %v6300, %v6292
    %v7125 = vpack.c.b16 %v6301, %v6293
    %v7126 = vpack.c.b16 %v6302, %v6294
    %v7127 = vpack.c.b16 %v6311, %v6303
    %v7128 = vpack.c.b16 %v6312, %v6304
    %v7129 = vpack.c.b16 %v6313, %v6305
    %v7130 = vpack.c.b16 %v6314, %v6306
    %v7131 = vpack.c.b16 %v6315, %v6307
    %v7132 = vpack.c.b16 %v6316, %v6308
    %v7133 = vpack.c.b16 %v6317, %v6309
    %v7134 = vpack.c.b16 %v6318, %v6310
    %v7135 = vpack.c.b16 %v6327, %v6319
    %v7136 = vpack.c.b16 %v6328, %v6320
    %v7137 = vpack.c.b16 %v6329, %v6321
    %v7138 = vpack.c.b16 %v6330, %v6322
    %v7139 = vpack.c.b16 %v6331, %v6323
    %v7140 = vpack.c.b16 %v6332, %v6324
    %v7141 = vpack.c.b16 %v6333, %v6325
    %v7142 = vpack.c.b16 %v6334, %v6326
    %v7143 = vpack.c.b16 %v6343, %v6335
    %v7144 = vpack.c.b16 %v6344, %v6336
    %v7145 = vpack.c.b16 %v6345, %v6337
    %v7146 = vpack.c.b16 %v6346, %v6338
    %v7147 = vpack.c.b16 %v6347, %v6339
    %v7148 = vpack.c.b16 %v6348, %v6340
    %v7149 = vpack.c.b16 %v6349, %v6341
    %v7150 = vpack.c.b16 %v6350, %v6342
    %v7151 = vpack.c.b16 %v6359, %v6351
    %v7152 = vpack.c.b16 %v6360, %v6352
    %v7153 = vpack.c.b16 %v6361, %v6353
    %v7154 = vpack.c.b16 %v6362, %v6354
    %v7155 = vpack.c.b16 %v6363, %v6355
    %v7156 = vpack.c.b16 %v6364, %v6356
    %v7157 = vpack.c.b16 %v6365, %v6357
    %v7158 = vpack.c.b16 %v6366, %v6358
    %v7159 = vpack.c.b16 %v6375, %v6367
    %v7160 = vpack.c.b16 %v6376, %v6368
    %v7161 = vpack.c.b16 %v6377, %v6369
    %v7162 = vpack.c.b16 %v6378, %v6370
    %v7163 = vpack.c.b16 %v6379, %v6371
    %v7164 = vpack.c.b16 %v6380, %v6372
    %v7165 = vpack.c.b16 %v6381, %v6373
    %v7166 = vpack.c.b16 %v6382, %v6374
    %v7167 = vpack.c.b16 %v6391, %v6383
    %v7168 = vpack.c.b16 %v6392, %v6384
    %v7169 = vpack.c.b16 %v6393, %v6385
    %v7170 = vpack.c.b16 %v6394, %v6386
    %v7171 = vpack.c.b16 %v6395, %v6387
    %v7172 = vpack.c.b16 %v6396, %v6388
    %v7173 = vpack.c.b16 %v6397, %v6389
    %v7174 = vpack.c.b16 %v6398, %v6390
    %v7175 = vpack.c.b16 %v6407, %v6399
    %v7176 = vpack.c.b16 %v6408, %v6400
    %v7177 = vpack.c.b16 %v6409, %v6401
    %v7178 = vpack.c.b16 %v6410, %v6402
    %v7179 = vpack.c.b16 %v6411, %v6403
    %v7180 = vpack.c.b16 %v6412, %v6404
    %v7181 = vpack.c.b16 %v6413, %v6405
    %v7182 = vpack.c.b16 %v6414, %v6406
    %v7183 = vpack.c.b16 %v6423, %v6415
    %v7184 = vpack.c.b16 %v6424, %v6416
    %v7185 = vpack.c.b16 %v6425, %v6417
    %v7186 = vpack.c.b16 %v6426, %v6418
    %v7187 = vpack.c.b16 %v6427, %v6419
    %v7188 = vpack.c.b16 %v6428, %v6420
    %v7189 = vpack.c.b16 %v6429, %v6421
    %v7190 = vpack.c.b16 %v6430, %v6422
    %v7191 = vpack.c.b16 %v6439, %v6431
    %v7192 = vpack.c.b16 %v6440, %v6432
    %v7193 = vpack.c.b16 %v6441, %v6433
    %v7194 = vpack.c.b16 %v6442, %v6434
    %v7195 = vpack.c.b16 %v6443, %v6435
    %v7196 = vpack.c.b16 %v6444, %v6436
    %v7197 = vpack.c.b16 %v6445, %v6437
    %v7198 = vpack.c.b16 %v6446, %v6438
    %v7199 = vpack.c.b16 %v6455, %v6447
    %v7200 = vpack.c.b16 %v6456, %v6448
    %v7201 = vpack.c.b16 %v6457, %v6449
    %v7202 = vpack.c.b16 %v6458, %v6450
    %v7203 = vpack.c.b16 %v6459, %v6451
    %v7204 = vpack.c.b16 %v6460, %v6452
    %v7205 = vpack.c.b16 %v6461, %v6453
    %v7206 = vpack.c.b16 %v6462, %v6454
    %v7207 = vpack.c.b16 %v6471, %v6463
    %v7208 = vpack.c.b16 %v6472, %v6464
    %v7209 = vpack.c.b16 %v6473, %v6465
    %v7210 = vpack.c.b16 %v6474, %v6466
    %v7211 = vpack.c.b16 %v6475, %v6467
    %v7212 = vpack.c.b16 %v6476, %v6468
    %v7213 = vpack.c.b16 %v6477, %v6469
    %v7214 = vpack.c.b16 %v6478, %v6470
    %v7215 = vpack.c.b16 %v6487, %v6479
    %v7216 = vpack.c.b16 %v6488, %v6480
    %v7217 = vpack.c.b16 %v6489, %v6481
    %v7218 = vpack.c.b16 %v6490, %v6482
    %v7219 = vpack.c.b16 %v6491, %v6483
    %v7220 = vpack.c.b16 %v6492, %v6484
    %v7221 = vpack.c.b16 %v6493, %v6485
    %v7222 = vpack.c.b16 %v6494, %v6486
    %v7223 = vpack.c.b16 %v6503, %v6495
    %v7224 = vpack.c.b16 %v6504, %v6496
    %v7225 = vpack.c.b16 %v6505, %v6497
    %v7226 = vpack.c.b16 %v6506, %v6498
    %v7227 = vpack.c.b16 %v6507, %v6499
    %v7228 = vpack.c.b16 %v6508, %v6500
    %v7229 = vpack.c.b16 %v6509, %v6501
    %v7230 = vpack.c.b16 %v6510, %v6502
    %v7231 = vpack.c.b16 %v6519, %v6511
    %v7232 = vpack.c.b16 %v6520, %v6512
    %v7233 = vpack.c.b16 %v6521, %v6513
    %v7234 = vpack.c.b16 %v6522, %v6514
    %v7235 = vpack.c.b16 %v6523, %v6515
    %v7236 = vpack.c.b16 %v6524, %v6516
    %v7237 = vpack.c.b16 %v6525, %v6517
    %v7238 = vpack.c.b16 %v6526, %v6518
    %v7239 = vpack.c.b16 %v6535, %v6527
    %v7240 = vpack.c.b16 %v6536, %v6528
    %v7241 = vpack.c.b16 %v6537, %v6529
    %v7242 = vpack.c.b16 %v6538, %v6530
    %v7243 = vpack.c.b16 %v6539, %v6531
    %v7244 = vpack.c.b16 %v6540, %v6532
    %v7245 = vpack.c.b16 %v6541, %v6533
    %v7246 = vpack.c.b16 %v6542, %v6534
    %v7247 = vpack.c.b16 %v6551, %v6543
    %v7248 = vpack.c.b16 %v6552, %v6544
    %v7249 = vpack.c.b16 %v6553, %v6545
    %v7250 = vpack.c.b16 %v6554, %v6546
    %v7251 = vpack.c.b16 %v6555, %v6547
    %v7252 = vpack.c.b16 %v6556, %v6548
    %v7253 = vpack.c.b16 %v6557, %v6549
    %v7254 = vpack.c.b16 %v6558, %v6550
    %v7255 = vpack.c.b16 %v6567, %v6559
    %v7256 = vpack.c.b16 %v6568, %v6560
    %v7257 = vpack.c.b16 %v6569, %v6561
    %v7258 = vpack.c.b16 %v6570, %v6562
    %v7259 = vpack.c.b16 %v6571, %v6563
    %v7260 = vpack.c.b16 %v6572, %v6564
    %v7261 = vpack.c.b16 %v6573, %v6565
    %v7262 = vpack.c.b16 %v6574, %v6566
    %v7263 = vpack.c.b16 %v6583, %v6575
    %v7264 = vpack.c.b16 %v6584, %v6576
    %v7265 = vpack.c.b16 %v6585, %v6577
    %v7266 = vpack.c.b16 %v6586, %v6578
    %v7267 = vpack.c.b16 %v6587, %v6579
    %v7268 = vpack.c.b16 %v6588, %v6580
    %v7269 = vpack.c.b16 %v6589, %v6581
    %v7270 = vpack.c.b16 %v6590, %v6582
    %v7271 = vpack.c.b16 %v6599, %v6591
    %v7272 = vpack.c.b16 %v6600, %v6592
    %v7273 = vpack.c.b16 %v6601, %v6593
    %v7274 = vpack.c.b16 %v6602, %v6594
    %v7275 = vpack.c.b16 %v6603, %v6595
    %v7276 = vpack.c.b16 %v6604, %v6596
    %v7277 = vpack.c.b16 %v6605, %v6597
    %v7278 = vpack.c.b16 %v6606, %v6598
    %v7279 = vpack.c.b16 %v6615, %v6607
    %v7280 = vpack.c.b16 %v6616, %v6608
    %v7281 = vpack.c.b16 %v6617, %v6609
    %v7282 = vpack.c.b16 %v6618, %v6610
    %v7283 = vpack.c.b16 %v6619, %v6611
    %v7284 = vpack.c.b16 %v6620, %v6612
    %v7285 = vpack.c.b16 %v6621, %v6613
    %v7286 = vpack.c.b16 %v6622, %v6614
    %v7287 = vpack.c.b16 %v6631, %v6623
    %v7288 = vpack.c.b16 %v6632, %v6624
    %v7289 = vpack.c.b16 %v6633, %v6625
    %v7290 = vpack.c.b16 %v6634, %v6626
    %v7291 = vpack.c.b16 %v6635, %v6627
    %v7292 = vpack.c.b16 %v6636, %v6628
    %v7293 = vpack.c.b16 %v6637, %v6629
    %v7294 = vpack.c.b16 %v6638, %v6630
    %v7295 = vpack.c.b16 %v6647, %v6639
    %v7296 = vpack.c.b16 %v6648, %v6640
    %v7297 = vpack.c.b16 %v6649, %v6641
    %v7298 = vpack.c.b16 %v6650, %v6642
    %v7299 = vpack.c.b16 %v6651, %v6643
    %v7300 = vpack.c.b16 %v6652, %v6644
    %v7301 = vpack.c.b16 %v6653, %v6645
    %v7302 = vpack.c.b16 %v6654, %v6646
    %v7303 = vpack.c.b16 %v6663, %v6655
    %v7304 = vpack.c.b16 %v6664, %v6656
    %v7305 = vpack.c.b16 %v6665, %v6657
    %v7306 = vpack.c.b16 %v6666, %v6658
    %v7307 = vpack.c.b16 %v6667, %v6659
    %v7308 = vpack.c.b16 %v6668, %v6660
    %v7309 = vpack.c.b16 %v6669, %v6661
    %v7310 = vpack.c.b16 %v6670, %v6662
    %v7311 = vpack.c.b16 %v6679, %v6671
    %v7312 = vpack.c.b16 %v6680, %v6672
    %v7313 = vpack.c.b16 %v6681, %v6673
    %v7314 = vpack.c.b16 %v6682, %v6674
    %v7315 = vpack.c.b16 %v6683, %v6675
    %v7316 = vpack.c.b16 %v6684, %v6676
    %v7317 = vpack.c.b16 %v6685, %v6677
    %v7318 = vpack.c.b16 %v6686, %v6678
    %v7319 = vpack.c.b16 %v6695, %v6687
    %v7320 = vpack.c.b16 %v6696, %v6688
    %v7321 = vpack.c.b16 %v6697, %v6689
    %v7322 = vpack.c.b16 %v6698, %v6690
    %v7323 = vpack.c.b16 %v6699, %v6691
    %v7324 = vpack.c.b16 %v6700, %v6692
    %v7325 = vpack.c.b16 %v6701, %v6693
    %v7326 = vpack.c.b16 %v6702, %v6694
    %v7327 = vpack.c.b16 %v6711, %v6703
    %v7328 = vpack.c.b16 %v6712, %v6704
    %v7329 = vpack.c.b16 %v6713, %v6705
    %v7330 = vpack.c.b16 %v6714, %v6706
    %v7331 = vpack.c.b16 %v6715, %v6707
    %v7332 = vpack.c.b16 %v6716, %v6708
    %v7333 = vpack.c.b16 %v6717, %v6709
    %v7334 = vpack.c.b16 %v6718, %v6710
    %v7335 = vpack.c.b16 %v6727, %v6719
    %v7336 = vpack.c.b16 %v6728, %v6720
    %v7337 = vpack.c.b16 %v6729, %v6721
    %v7338 = vpack.c.b16 %v6730, %v6722
    %v7339 = vpack.c.b16 %v6731, %v6723
    %v7340 = vpack.c.b16 %v6732, %v6724
    %v7341 = vpack.c.b16 %v6733, %v6725
    %v7342 = vpack.c.b16 %v6734, %v6726
    %v7343 = vpack.c.b16 %v6743, %v6735
    %v7344 = vpack.c.b16 %v6744, %v6736
    %v7345 = vpack.c.b16 %v6745, %v6737
    %v7346 = vpack.c.b16 %v6746, %v6738
    %v7347 = vpack.c.b16 %v6747, %v6739
    %v7348 = vpack.c.b16 %v6748, %v6740
    %v7349 = vpack.c.b16 %v6749, %v6741
    %v7350 = vpack.c.b16 %v6750, %v6742
    %v7351 = vpack.c.b16 %v6759, %v6751
    %v7352 = vpack.c.b16 %v6760, %v6752
    %v7353 = vpack.c.b16 %v6761, %v6753
    %v7354 = vpack.c.b16 %v6762, %v6754
    %v7355 = vpack.c.b16 %v6763, %v6755
    %v7356 = vpack.c.b16 %v6764, %v6756
    %v7357 = vpack.c.b16 %v6765, %v6757
    %v7358 = vpack.c.b16 %v6766, %v6758
    %v7359 = vpack.c.b16 %v6775, %v6767
    %v7360 = vpack.c.b16 %v6776, %v6768
    %v7361 = vpack.c.b16 %v6777, %v6769
    %v7362 = vpack.c.b16 %v6778, %v6770
    %v7363 = vpack.c.b16 %v6779, %v6771
    %v7364 = vpack.c.b16 %v6780, %v6772
    %v7365 = vpack.c.b16 %v6781, %v6773
    %v7366 = vpack.c.b16 %v6782, %v6774
    %v7367 = vpack.c.b16 %v6791, %v6783
    %v7368 = vpack.c.b16 %v6792, %v6784
    %v7369 = vpack.c.b16 %v6793, %v6785
    %v7370 = vpack.c.b16 %v6794, %v6786
    %v7371 = vpack.c.b16 %v6795, %v6787
    %v7372 = vpack.c.b16 %v6796, %v6788
    %v7373 = vpack.c.b16 %v6797, %v6789
    %v7374 = vpack.c.b16 %v6798, %v6790
    %v7375 = vpack.c.b16 %v6807, %v6799
    %v7376 = vpack.c.b16 %v6808, %v6800
    %v7377 = vpack.c.b16 %v6809, %v6801
    %v7378 = vpack.c.b16 %v6810, %v6802
    %v7379 = vpack.c.b16 %v6811, %v6803
    %v7380 = vpack.c.b16 %v6812, %v6804
    %v7381 = vpack.c.b16 %v6813, %v6805
    %v7382 = vpack.c.b16 %v6814, %v6806
    %v7383 = vpack.c.b16 %v6823, %v6815
    %v7384 = vpack.c.b16 %v6824, %v6816
    %v7385 = vpack.c.b16 %v6825, %v6817
    %v7386 = vpack.c.b16 %v6826, %v6818
    %v7387 = vpack.c.b16 %v6827, %v6819
    %v7388 = vpack.c.b16 %v6828, %v6820
    %v7389 = vpack.c.b16 %v6829, %v6821
    %v7390 = vpack.c.b16 %v6830, %v6822
    %v7391 = vpack.c.b16 %v6839, %v6831
    %v7392 = vpack.c.b16 %v6840, %v6832
    %v7393 = vpack.c.b16 %v6841, %v6833
    %v7394 = vpack.c.b16 %v6842, %v6834
    %v7395 = vpack.c.b16 %v6843, %v6835
    %v7396 = vpack.c.b16 %v6844, %v6836
    %v7397 = vpack.c.b16 %v6845, %v6837
    %v7398 = vpack.c.b16 %v6846, %v6838
    %v7399 = vpack.c.b16 %v6855, %v6847
    %v7400 = vpack.c.b16 %v6856, %v6848
    %v7401 = vpack.c.b16 %v6857, %v6849
    %v7402 = vpack.c.b16 %v6858, %v6850
    %v7403 = vpack.c.b16 %v6859, %v6851
    %v7404 = vpack.c.b16 %v6860, %v6852
    %v7405 = vpack.c.b16 %v6861, %v6853
    %v7406 = vpack.c.b16 %v6862, %v6854
    %v7407 = vpack.c.b16 %v6871, %v6863
    %v7408 = vpack.c.b16 %v6872, %v6864
    %v7409 = vpack.c.b16 %v6873, %v6865
    %v7410 = vpack.c.b16 %v6874, %v6866
    %v7411 = vpack.c.b16 %v6875, %v6867
    %v7412 = vpack.c.b16 %v6876, %v6868
    %v7413 = vpack.c.b16 %v6877, %v6869
    %v7414 = vpack.c.b16 %v6878, %v6870
    %v7415 = vpack.c.b16 %v6887, %v6879
    %v7416 = vpack.c.b16 %v6888, %v6880
    %v7417 = vpack.c.b16 %v6889, %v6881
    %v7418 = vpack.c.b16 %v6890, %v6882
    %v7419 = vpack.c.b16 %v6891, %v6883
    %v7420 = vpack.c.b16 %v6892, %v6884
    %v7421 = vpack.c.b16 %v6893, %v6885
    %v7422 = vpack.c.b16 %v6894, %v6886
    %v7423 = vpack.c.b16 %v6903, %v6895
    %v7424 = vpack.c.b16 %v6904, %v6896
    %v7425 = vpack.c.b16 %v6905, %v6897
    %v7426 = vpack.c.b16 %v6906, %v6898
    %v7427 = vpack.c.b16 %v6907, %v6899
    %v7428 = vpack.c.b16 %v6908, %v6900
    %v7429 = vpack.c.b16 %v6909, %v6901
    %v7430 = vpack.c.b16 %v6910, %v6902
    %v7431 = vpack.c.b16 %v6919, %v6911
    %v7432 = vpack.c.b16 %v6920, %v6912
    %v7433 = vpack.c.b16 %v6921, %v6913
    %v7434 = vpack.c.b16 %v6922, %v6914
    %v7435 = vpack.c.b16 %v6923, %v6915
    %v7436 = vpack.c.b16 %v6924, %v6916
    %v7437 = vpack.c.b16 %v6925, %v6917
    %v7438 = vpack.c.b16 %v6926, %v6918
    %7951 = vmatprep.subr.bf16.mxu0 %v6984
    %7952 = vmatpush1.bf16.msra.mxu0 %v6983
    %7953 = vmatprep.subr.bf16.mxu0 %v6976
    %7954 = vmatpush1.bf16.msra.mxu0 %v6975
    %7955 = vmatprep.subr.bf16.mxu0 %v6968
    %7956 = vmatpush1.bf16.msra.mxu0 %v6967
    %7957 = vmatprep.subr.bf16.mxu0 %v6960
    %7958 = vmatpush1.bf16.msra.mxu0 %v6959
    %7959 = vmatprep.subr.bf16.mxu0 %v6952
    %7960 = vmatpush1.bf16.msra.mxu0 %v6951
    %7961 = vmatprep.subr.bf16.mxu0 %v6944
    %7962 = vmatpush1.bf16.msra.mxu0 %v6943
    %7963 = vmatprep.subr.bf16.mxu0 %v6936
    %7964 = vmatpush1.bf16.msra.mxu0 %v6935
    %7965 = vmatprep.subr.bf16.mxu0 %v6928
    %7966 = vmatpush1.bf16.msra.mxu0 %v6927
    %7967 = vmatprep.subr.bf16.mxu0 %v7048
    %7968 = vmatpush2.bf16.msra.mxu0 %v7047
    %7969 = vmatprep.subr.bf16.mxu0 %v7040
    %7970 = vmatpush2.bf16.msra.mxu0 %v7039
    %7971 = vmatprep.subr.bf16.mxu0 %v7032
    %7972 = vmatpush2.bf16.msra.mxu0 %v7031
    %7973 = vmatprep.subr.bf16.mxu0 %v7024
    %7974 = vmatpush2.bf16.msra.mxu0 %v7023
    %7975 = vmatprep.subr.bf16.mxu0 %v7016
    %7976 = vmatpush2.bf16.msra.mxu0 %v7015
    %7977 = vmatprep.subr.bf16.mxu0 %v7008
    %7978 = vmatpush2.bf16.msra.mxu0 %v7007
    %7979 = vmatprep.subr.bf16.mxu0 %v7000
    %7980 = vmatpush2.bf16.msra.mxu0 %v6999
    %7981 = vmatprep.subr.bf16.mxu0 %v6992
    %7982 = vmatpush2.bf16.msra.mxu0 %v6991
    %7983 = vmatprep.mubr.bf16.mxu0 %v4830
    %7984 = vmatmul.mubr.bf16.gmra.mxu0 %v4829
    %v7985 = vpop.f32.mrf.mxu0
    %v7986 = vadd.f32 %v5354, %v7985
    %v7987 = vpop.f32.mrf.mxu0
    %v7988 = vadd.f32 %v5358, %v7987
    %v7989 = vpop.f32.mrf.mxu0
    %v7990 = vpop.f32.mrf.mxu0
    %7991 = vdwg.mxu0
    %7992 = vmatprep.subr.bf16.mxu0 %v7112
    %7993 = vmatpush1.bf16.msra.mxu0 %v7111
    %7994 = vmatprep.subr.bf16.mxu0 %v7104
    %7995 = vmatpush1.bf16.msra.mxu0 %v7103
    %7996 = vmatprep.subr.bf16.mxu0 %v7096
    %7997 = vmatpush1.bf16.msra.mxu0 %v7095
    %7998 = vmatprep.subr.bf16.mxu0 %v7088
    %7999 = vmatpush1.bf16.msra.mxu0 %v7087
    %8000 = vmatprep.subr.bf16.mxu0 %v7080
    %8001 = vmatpush1.bf16.msra.mxu0 %v7079
    %8002 = vmatprep.subr.bf16.mxu0 %v7072
    %8003 = vmatpush1.bf16.msra.mxu0 %v7071
    %8004 = vmatprep.subr.bf16.mxu0 %v7064
    %8005 = vmatpush1.bf16.msra.mxu0 %v7063
    %8006 = vmatprep.subr.bf16.mxu0 %v7056
    %8007 = vmatpush1.bf16.msra.mxu0 %v7055
    %8008 = vmatprep.subr.bf16.mxu0 %v7176
    %8009 = vmatpush2.bf16.msra.mxu0 %v7175
    %8010 = vmatprep.subr.bf16.mxu0 %v7168
    %8011 = vmatpush2.bf16.msra.mxu0 %v7167
    %8012 = vmatprep.subr.bf16.mxu0 %v7160
    %8013 = vmatpush2.bf16.msra.mxu0 %v7159
    %8014 = vmatprep.subr.bf16.mxu0 %v7152
    %8015 = vmatpush2.bf16.msra.mxu0 %v7151
    %8016 = vmatprep.subr.bf16.mxu0 %v7144
    %8017 = vmatpush2.bf16.msra.mxu0 %v7143
    %8018 = vmatprep.subr.bf16.mxu0 %v7136
    %8019 = vmatpush2.bf16.msra.mxu0 %v7135
    %8020 = vmatprep.subr.bf16.mxu0 %v7128
    %8021 = vmatpush2.bf16.msra.mxu0 %v7127
    %8022 = vmatprep.subr.bf16.mxu0 %v7120
    %8023 = vmatpush2.bf16.msra.mxu0 %v7119
    %8024 = vmatprep.mubr.bf16.mxu0 %v4832
    %8025 = vmatmul.mubr.bf16.gmra.mxu0 %v4831
    %v8026 = vpop.f32.mrf.mxu0
    %v8027 = vadd.f32 %v7986, %v8026
    %v8028 = vpop.f32.mrf.mxu0
    %v8029 = vadd.f32 %v7988, %v8028
    %v8030 = vpop.f32.mrf.mxu0
    %v8031 = vpop.f32.mrf.mxu0
    %8032 = vdwg.mxu0
    %8033 = vmatprep.subr.bf16.mxu0 %v7240
    %8034 = vmatpush1.bf16.msra.mxu0 %v7239
    %8035 = vmatprep.subr.bf16.mxu0 %v7232
    %8036 = vmatpush1.bf16.msra.mxu0 %v7231
    %8037 = vmatprep.subr.bf16.mxu0 %v7224
    %8038 = vmatpush1.bf16.msra.mxu0 %v7223
    %8039 = vmatprep.subr.bf16.mxu0 %v7216
    %8040 = vmatpush1.bf16.msra.mxu0 %v7215
    %8041 = vmatprep.subr.bf16.mxu0 %v7208
    %8042 = vmatpush1.bf16.msra.mxu0 %v7207
    %8043 = vmatprep.subr.bf16.mxu0 %v7200
    %8044 = vmatpush1.bf16.msra.mxu0 %v7199
    %8045 = vmatprep.subr.bf16.mxu0 %v7192
    %8046 = vmatpush1.bf16.msra.mxu0 %v7191
    %8047 = vmatprep.subr.bf16.mxu0 %v7184
    %8048 = vmatpush1.bf16.msra.mxu0 %v7183
    %8049 = vmatprep.subr.bf16.mxu0 %v7304
    %8050 = vmatpush2.bf16.msra.mxu0 %v7303
    %8051 = vmatprep.subr.bf16.mxu0 %v7296
    %8052 = vmatpush2.bf16.msra.mxu0 %v7295
    %8053 = vmatprep.subr.bf16.mxu0 %v7288
    %8054 = vmatpush2.bf16.msra.mxu0 %v7287
    %8055 = vmatprep.subr.bf16.mxu0 %v7280
    %8056 = vmatpush2.bf16.msra.mxu0 %v7279
    %8057 = vmatprep.subr.bf16.mxu0 %v7272
    %8058 = vmatpush2.bf16.msra.mxu0 %v7271
    %8059 = vmatprep.subr.bf16.mxu0 %v7264
    %8060 = vmatpush2.bf16.msra.mxu0 %v7263
    %8061 = vmatprep.subr.bf16.mxu0 %v7256
    %8062 = vmatpush2.bf16.msra.mxu0 %v7255
    %8063 = vmatprep.subr.bf16.mxu0 %v7248
    %8064 = vmatpush2.bf16.msra.mxu0 %v7247
    %8065 = vmatprep.mubr.bf16.mxu0 %v4834
    %8066 = vmatmul.mubr.bf16.gmra.mxu0 %v4833
    %v8067 = vpop.f32.mrf.mxu0
    %v8068 = vadd.f32 %v8027, %v8067
    %v8069 = vpop.f32.mrf.mxu0
    %v8070 = vadd.f32 %v8029, %v8069
    %v8071 = vpop.f32.mrf.mxu0
    %v8072 = vpop.f32.mrf.mxu0
    %8073 = vdwg.mxu0
    %8074 = vmatprep.subr.bf16.mxu0 %v7368
    %8075 = vmatpush1.bf16.msra.mxu0 %v7367
    %8076 = vmatprep.subr.bf16.mxu0 %v7360
    %8077 = vmatpush1.bf16.msra.mxu0 %v7359
    %8078 = vmatprep.subr.bf16.mxu0 %v7352
    %8079 = vmatpush1.bf16.msra.mxu0 %v7351
    %8080 = vmatprep.subr.bf16.mxu0 %v7344
    %8081 = vmatpush1.bf16.msra.mxu0 %v7343
    %8082 = vmatprep.subr.bf16.mxu0 %v7336
    %8083 = vmatpush1.bf16.msra.mxu0 %v7335
    %8084 = vmatprep.subr.bf16.mxu0 %v7328
    %8085 = vmatpush1.bf16.msra.mxu0 %v7327
    %8086 = vmatprep.subr.bf16.mxu0 %v7320
    %8087 = vmatpush1.bf16.msra.mxu0 %v7319
    %8088 = vmatprep.subr.bf16.mxu0 %v7312
    %8089 = vmatpush1.bf16.msra.mxu0 %v7311
    %8090 = vmatprep.subr.bf16.mxu0 %v7432
    %8091 = vmatpush2.bf16.msra.mxu0 %v7431
    %8092 = vmatprep.subr.bf16.mxu0 %v7424
    %8093 = vmatpush2.bf16.msra.mxu0 %v7423
    %8094 = vmatprep.subr.bf16.mxu0 %v7416
    %8095 = vmatpush2.bf16.msra.mxu0 %v7415
    %8096 = vmatprep.subr.bf16.mxu0 %v7408
    %8097 = vmatpush2.bf16.msra.mxu0 %v7407
    %8098 = vmatprep.subr.bf16.mxu0 %v7400
    %8099 = vmatpush2.bf16.msra.mxu0 %v7399
    %8100 = vmatprep.subr.bf16.mxu0 %v7392
    %8101 = vmatpush2.bf16.msra.mxu0 %v7391
    %8102 = vmatprep.subr.bf16.mxu0 %v7384
    %8103 = vmatpush2.bf16.msra.mxu0 %v7383
    %8104 = vmatprep.subr.bf16.mxu0 %v7376
    %8105 = vmatpush2.bf16.msra.mxu0 %v7375
    %8106 = vmatprep.mubr.bf16.mxu0 %v4836
    %8107 = vmatmul.mubr.bf16.gmra.mxu0 %v4835
    %v8108 = vpop.f32.mrf.mxu0
    %v8109 = vadd.f32 %v8068, %v8108
    %v8110 = vpop.f32.mrf.mxu0
    %v8111 = vadd.f32 %v8070, %v8110
    %v8112 = vpop.f32.mrf.mxu0
    %v8113 = vpop.f32.mrf.mxu0
    %8114 = vdwg.mxu0
    %8115 = vmatprep.subr.bf16.mxu0 %v6986
    %8116 = vmatpush1.bf16.msra.mxu0 %v6985
    %8117 = vmatprep.subr.bf16.mxu0 %v6978
    %8118 = vmatpush1.bf16.msra.mxu0 %v6977
    %8119 = vmatprep.subr.bf16.mxu0 %v6970
    %8120 = vmatpush1.bf16.msra.mxu0 %v6969
    %8121 = vmatprep.subr.bf16.mxu0 %v6962
    %8122 = vmatpush1.bf16.msra.mxu0 %v6961
    %8123 = vmatprep.subr.bf16.mxu0 %v6954
    %8124 = vmatpush1.bf16.msra.mxu0 %v6953
    %8125 = vmatprep.subr.bf16.mxu0 %v6946
    %8126 = vmatpush1.bf16.msra.mxu0 %v6945
    %8127 = vmatprep.subr.bf16.mxu0 %v6938
    %8128 = vmatpush1.bf16.msra.mxu0 %v6937
    %8129 = vmatprep.subr.bf16.mxu0 %v6930
    %8130 = vmatpush1.bf16.msra.mxu0 %v6929
    %8131 = vmatprep.subr.bf16.mxu0 %v7050
    %8132 = vmatpush2.bf16.msra.mxu0 %v7049
    %8133 = vmatprep.subr.bf16.mxu0 %v7042
    %8134 = vmatpush2.bf16.msra.mxu0 %v7041
    %8135 = vmatprep.subr.bf16.mxu0 %v7034
    %8136 = vmatpush2.bf16.msra.mxu0 %v7033
    %8137 = vmatprep.subr.bf16.mxu0 %v7026
    %8138 = vmatpush2.bf16.msra.mxu0 %v7025
    %8139 = vmatprep.subr.bf16.mxu0 %v7018
    %8140 = vmatpush2.bf16.msra.mxu0 %v7017
    %8141 = vmatprep.subr.bf16.mxu0 %v7010
    %8142 = vmatpush2.bf16.msra.mxu0 %v7009
    %8143 = vmatprep.subr.bf16.mxu0 %v7002
    %8144 = vmatpush2.bf16.msra.mxu0 %v7001
    %8145 = vmatprep.subr.bf16.mxu0 %v6994
    %8146 = vmatpush2.bf16.msra.mxu0 %v6993
    %8147 = vmatprep.mubr.bf16.mxu0 %v4830
    %8148 = vmatmul.mubr.bf16.gmra.mxu0 %v4829
    %v8149 = vpop.f32.mrf.mxu0
    %v8150 = vadd.f32 %v5362, %v8149
    %v8151 = vpop.f32.mrf.mxu0
    %v8152 = vadd.f32 %v5366, %v8151
    %v8153 = vpop.f32.mrf.mxu0
    %v8154 = vpop.f32.mrf.mxu0
    %8155 = vdwg.mxu0
    %8156 = vmatprep.subr.bf16.mxu0 %v7114
    %8157 = vmatpush1.bf16.msra.mxu0 %v7113
    %8158 = vmatprep.subr.bf16.mxu0 %v7106
    %8159 = vmatpush1.bf16.msra.mxu0 %v7105
    %8160 = vmatprep.subr.bf16.mxu0 %v7098
    %8161 = vmatpush1.bf16.msra.mxu0 %v7097
    %8162 = vmatprep.subr.bf16.mxu0 %v7090
    %8163 = vmatpush1.bf16.msra.mxu0 %v7089
    %8164 = vmatprep.subr.bf16.mxu0 %v7082
    %8165 = vmatpush1.bf16.msra.mxu0 %v7081
    %8166 = vmatprep.subr.bf16.mxu0 %v7074
    %8167 = vmatpush1.bf16.msra.mxu0 %v7073
    %8168 = vmatprep.subr.bf16.mxu0 %v7066
    %8169 = vmatpush1.bf16.msra.mxu0 %v7065
    %8170 = vmatprep.subr.bf16.mxu0 %v7058
    %8171 = vmatpush1.bf16.msra.mxu0 %v7057
    %8172 = vmatprep.subr.bf16.mxu0 %v7178
    %8173 = vmatpush2.bf16.msra.mxu0 %v7177
    %8174 = vmatprep.subr.bf16.mxu0 %v7170
    %8175 = vmatpush2.bf16.msra.mxu0 %v7169
    %8176 = vmatprep.subr.bf16.mxu0 %v7162
    %8177 = vmatpush2.bf16.msra.mxu0 %v7161
    %8178 = vmatprep.subr.bf16.mxu0 %v7154
    %8179 = vmatpush2.bf16.msra.mxu0 %v7153
    %8180 = vmatprep.subr.bf16.mxu0 %v7146
    %8181 = vmatpush2.bf16.msra.mxu0 %v7145
    %8182 = vmatprep.subr.bf16.mxu0 %v7138
    %8183 = vmatpush2.bf16.msra.mxu0 %v7137
    %8184 = vmatprep.subr.bf16.mxu0 %v7130
    %8185 = vmatpush2.bf16.msra.mxu0 %v7129
    %8186 = vmatprep.subr.bf16.mxu0 %v7122
    %8187 = vmatpush2.bf16.msra.mxu0 %v7121
    %8188 = vmatprep.mubr.bf16.mxu0 %v4832
    %8189 = vmatmul.mubr.bf16.gmra.mxu0 %v4831
    %v8190 = vpop.f32.mrf.mxu0
    %v8191 = vadd.f32 %v8150, %v8190
    %v8192 = vpop.f32.mrf.mxu0
    %v8193 = vadd.f32 %v8152, %v8192
    %v8194 = vpop.f32.mrf.mxu0
    %v8195 = vpop.f32.mrf.mxu0
    %8196 = vdwg.mxu0
    %8197 = vmatprep.subr.bf16.mxu0 %v7242
    %8198 = vmatpush1.bf16.msra.mxu0 %v7241
    %8199 = vmatprep.subr.bf16.mxu0 %v7234
    %8200 = vmatpush1.bf16.msra.mxu0 %v7233
    %8201 = vmatprep.subr.bf16.mxu0 %v7226
    %8202 = vmatpush1.bf16.msra.mxu0 %v7225
    %8203 = vmatprep.subr.bf16.mxu0 %v7218
    %8204 = vmatpush1.bf16.msra.mxu0 %v7217
    %8205 = vmatprep.subr.bf16.mxu0 %v7210
    %8206 = vmatpush1.bf16.msra.mxu0 %v7209
    %8207 = vmatprep.subr.bf16.mxu0 %v7202
    %8208 = vmatpush1.bf16.msra.mxu0 %v7201
    %8209 = vmatprep.subr.bf16.mxu0 %v7194
    %8210 = vmatpush1.bf16.msra.mxu0 %v7193
    %8211 = vmatprep.subr.bf16.mxu0 %v7186
    %8212 = vmatpush1.bf16.msra.mxu0 %v7185
    %8213 = vmatprep.subr.bf16.mxu0 %v7306
    %8214 = vmatpush2.bf16.msra.mxu0 %v7305
    %8215 = vmatprep.subr.bf16.mxu0 %v7298
    %8216 = vmatpush2.bf16.msra.mxu0 %v7297
    %8217 = vmatprep.subr.bf16.mxu0 %v7290
    %8218 = vmatpush2.bf16.msra.mxu0 %v7289
    %8219 = vmatprep.subr.bf16.mxu0 %v7282
    %8220 = vmatpush2.bf16.msra.mxu0 %v7281
    %8221 = vmatprep.subr.bf16.mxu0 %v7274
    %8222 = vmatpush2.bf16.msra.mxu0 %v7273
    %8223 = vmatprep.subr.bf16.mxu0 %v7266
    %8224 = vmatpush2.bf16.msra.mxu0 %v7265
    %8225 = vmatprep.subr.bf16.mxu0 %v7258
    %8226 = vmatpush2.bf16.msra.mxu0 %v7257
    %8227 = vmatprep.subr.bf16.mxu0 %v7250
    %8228 = vmatpush2.bf16.msra.mxu0 %v7249
    %8229 = vmatprep.mubr.bf16.mxu0 %v4834
    %8230 = vmatmul.mubr.bf16.gmra.mxu0 %v4833
    %v8231 = vpop.f32.mrf.mxu0
    %v8232 = vadd.f32 %v8191, %v8231
    %v8233 = vpop.f32.mrf.mxu0
    %v8234 = vadd.f32 %v8193, %v8233
    %v8235 = vpop.f32.mrf.mxu0
    %v8236 = vpop.f32.mrf.mxu0
    %8237 = vdwg.mxu0
    %8238 = vmatprep.subr.bf16.mxu0 %v7370
    %8239 = vmatpush1.bf16.msra.mxu0 %v7369
    %8240 = vmatprep.subr.bf16.mxu0 %v7362
    %8241 = vmatpush1.bf16.msra.mxu0 %v7361
    %8242 = vmatprep.subr.bf16.mxu0 %v7354
    %8243 = vmatpush1.bf16.msra.mxu0 %v7353
    %8244 = vmatprep.subr.bf16.mxu0 %v7346
    %8245 = vmatpush1.bf16.msra.mxu0 %v7345
    %8246 = vmatprep.subr.bf16.mxu0 %v7338
    %8247 = vmatpush1.bf16.msra.mxu0 %v7337
    %8248 = vmatprep.subr.bf16.mxu0 %v7330
    %8249 = vmatpush1.bf16.msra.mxu0 %v7329
    %8250 = vmatprep.subr.bf16.mxu0 %v7322
    %8251 = vmatpush1.bf16.msra.mxu0 %v7321
    %8252 = vmatprep.subr.bf16.mxu0 %v7314
    %8253 = vmatpush1.bf16.msra.mxu0 %v7313
    %8254 = vmatprep.subr.bf16.mxu0 %v7434
    %8255 = vmatpush2.bf16.msra.mxu0 %v7433
    %8256 = vmatprep.subr.bf16.mxu0 %v7426
    %8257 = vmatpush2.bf16.msra.mxu0 %v7425
    %8258 = vmatprep.subr.bf16.mxu0 %v7418
    %8259 = vmatpush2.bf16.msra.mxu0 %v7417
    %8260 = vmatprep.subr.bf16.mxu0 %v7410
    %8261 = vmatpush2.bf16.msra.mxu0 %v7409
    %8262 = vmatprep.subr.bf16.mxu0 %v7402
    %8263 = vmatpush2.bf16.msra.mxu0 %v7401
    %8264 = vmatprep.subr.bf16.mxu0 %v7394
    %8265 = vmatpush2.bf16.msra.mxu0 %v7393
    %8266 = vmatprep.subr.bf16.mxu0 %v7386
    %8267 = vmatpush2.bf16.msra.mxu0 %v7385
    %8268 = vmatprep.subr.bf16.mxu0 %v7378
    %8269 = vmatpush2.bf16.msra.mxu0 %v7377
    %8270 = vmatprep.mubr.bf16.mxu0 %v4836
    %8271 = vmatmul.mubr.bf16.gmra.mxu0 %v4835
    %v8272 = vpop.f32.mrf.mxu0
    %v8273 = vadd.f32 %v8232, %v8272
    %v8274 = vpop.f32.mrf.mxu0
    %v8275 = vadd.f32 %v8234, %v8274
    %v8276 = vpop.f32.mrf.mxu0
    %v8277 = vpop.f32.mrf.mxu0
    %8278 = vdwg.mxu0
    %8279 = vmatprep.subr.bf16.mxu0 %v6988
    %8280 = vmatpush1.bf16.msra.mxu0 %v6987
    %8281 = vmatprep.subr.bf16.mxu0 %v6980
    %8282 = vmatpush1.bf16.msra.mxu0 %v6979
    %8283 = vmatprep.subr.bf16.mxu0 %v6972
    %8284 = vmatpush1.bf16.msra.mxu0 %v6971
    %8285 = vmatprep.subr.bf16.mxu0 %v6964
    %8286 = vmatpush1.bf16.msra.mxu0 %v6963
    %8287 = vmatprep.subr.bf16.mxu0 %v6956
    %8288 = vmatpush1.bf16.msra.mxu0 %v6955
    %8289 = vmatprep.subr.bf16.mxu0 %v6948
    %8290 = vmatpush1.bf16.msra.mxu0 %v6947
    %8291 = vmatprep.subr.bf16.mxu0 %v6940
    %8292 = vmatpush1.bf16.msra.mxu0 %v6939
    %8293 = vmatprep.subr.bf16.mxu0 %v6932
    %8294 = vmatpush1.bf16.msra.mxu0 %v6931
    %8295 = vmatprep.subr.bf16.mxu0 %v7052
    %8296 = vmatpush2.bf16.msra.mxu0 %v7051
    %8297 = vmatprep.subr.bf16.mxu0 %v7044
    %8298 = vmatpush2.bf16.msra.mxu0 %v7043
    %8299 = vmatprep.subr.bf16.mxu0 %v7036
    %8300 = vmatpush2.bf16.msra.mxu0 %v7035
    %8301 = vmatprep.subr.bf16.mxu0 %v7028
    %8302 = vmatpush2.bf16.msra.mxu0 %v7027
    %8303 = vmatprep.subr.bf16.mxu0 %v7020
    %8304 = vmatpush2.bf16.msra.mxu0 %v7019
    %8305 = vmatprep.subr.bf16.mxu0 %v7012
    %8306 = vmatpush2.bf16.msra.mxu0 %v7011
    %8307 = vmatprep.subr.bf16.mxu0 %v7004
    %8308 = vmatpush2.bf16.msra.mxu0 %v7003
    %8309 = vmatprep.subr.bf16.mxu0 %v6996
    %8310 = vmatpush2.bf16.msra.mxu0 %v6995
    %8311 = vmatprep.mubr.bf16.mxu0 %v4830
    %8312 = vmatmul.mubr.bf16.gmra.mxu0 %v4829
    %v8313 = vpop.f32.mrf.mxu0
    %v8314 = vadd.f32 %v5370, %v8313
    %v8315 = vpop.f32.mrf.mxu0
    %v8316 = vadd.f32 %v5374, %v8315
    %v8317 = vpop.f32.mrf.mxu0
    %v8318 = vpop.f32.mrf.mxu0
    %8319 = vdwg.mxu0
    %8320 = vmatprep.subr.bf16.mxu0 %v7116
    %8321 = vmatpush1.bf16.msra.mxu0 %v7115
    %8322 = vmatprep.subr.bf16.mxu0 %v7108
    %8323 = vmatpush1.bf16.msra.mxu0 %v7107
    %8324 = vmatprep.subr.bf16.mxu0 %v7100
    %8325 = vmatpush1.bf16.msra.mxu0 %v7099
    %8326 = vmatprep.subr.bf16.mxu0 %v7092
    %8327 = vmatpush1.bf16.msra.mxu0 %v7091
    %8328 = vmatprep.subr.bf16.mxu0 %v7084
    %8329 = vmatpush1.bf16.msra.mxu0 %v7083
    %8330 = vmatprep.subr.bf16.mxu0 %v7076
    %8331 = vmatpush1.bf16.msra.mxu0 %v7075
    %8332 = vmatprep.subr.bf16.mxu0 %v7068
    %8333 = vmatpush1.bf16.msra.mxu0 %v7067
    %8334 = vmatprep.subr.bf16.mxu0 %v7060
    %8335 = vmatpush1.bf16.msra.mxu0 %v7059
    %8336 = vmatprep.subr.bf16.mxu0 %v7180
    %8337 = vmatpush2.bf16.msra.mxu0 %v7179
    %8338 = vmatprep.subr.bf16.mxu0 %v7172
    %8339 = vmatpush2.bf16.msra.mxu0 %v7171
    %8340 = vmatprep.subr.bf16.mxu0 %v7164
    %8341 = vmatpush2.bf16.msra.mxu0 %v7163
    %8342 = vmatprep.subr.bf16.mxu0 %v7156
    %8343 = vmatpush2.bf16.msra.mxu0 %v7155
    %8344 = vmatprep.subr.bf16.mxu0 %v7148
    %8345 = vmatpush2.bf16.msra.mxu0 %v7147
    %8346 = vmatprep.subr.bf16.mxu0 %v7140
    %8347 = vmatpush2.bf16.msra.mxu0 %v7139
    %8348 = vmatprep.subr.bf16.mxu0 %v7132
    %8349 = vmatpush2.bf16.msra.mxu0 %v7131
    %8350 = vmatprep.subr.bf16.mxu0 %v7124
    %8351 = vmatpush2.bf16.msra.mxu0 %v7123
    %8352 = vmatprep.mubr.bf16.mxu0 %v4832
    %8353 = vmatmul.mubr.bf16.gmra.mxu0 %v4831
    %v8354 = vpop.f32.mrf.mxu0
    %v8355 = vadd.f32 %v8314, %v8354
    %v8356 = vpop.f32.mrf.mxu0
    %v8357 = vadd.f32 %v8316, %v8356
    %v8358 = vpop.f32.mrf.mxu0
    %v8359 = vpop.f32.mrf.mxu0
    %8360 = vdwg.mxu0
    %8361 = vmatprep.subr.bf16.mxu0 %v7244
    %8362 = vmatpush1.bf16.msra.mxu0 %v7243
    %8363 = vmatprep.subr.bf16.mxu0 %v7236
    %8364 = vmatpush1.bf16.msra.mxu0 %v7235
    %8365 = vmatprep.subr.bf16.mxu0 %v7228
    %8366 = vmatpush1.bf16.msra.mxu0 %v7227
    %8367 = vmatprep.subr.bf16.mxu0 %v7220
    %8368 = vmatpush1.bf16.msra.mxu0 %v7219
    %8369 = vmatprep.subr.bf16.mxu0 %v7212
    %8370 = vmatpush1.bf16.msra.mxu0 %v7211
    %8371 = vmatprep.subr.bf16.mxu0 %v7204
    %8372 = vmatpush1.bf16.msra.mxu0 %v7203
    %8373 = vmatprep.subr.bf16.mxu0 %v7196
    %8374 = vmatpush1.bf16.msra.mxu0 %v7195
    %8375 = vmatprep.subr.bf16.mxu0 %v7188
    %8376 = vmatpush1.bf16.msra.mxu0 %v7187
    %8377 = vmatprep.subr.bf16.mxu0 %v7308
    %8378 = vmatpush2.bf16.msra.mxu0 %v7307
    %8379 = vmatprep.subr.bf16.mxu0 %v7300
    %8380 = vmatpush2.bf16.msra.mxu0 %v7299
    %8381 = vmatprep.subr.bf16.mxu0 %v7292
    %8382 = vmatpush2.bf16.msra.mxu0 %v7291
    %8383 = vmatprep.subr.bf16.mxu0 %v7284
    %8384 = vmatpush2.bf16.msra.mxu0 %v7283
    %8385 = vmatprep.subr.bf16.mxu0 %v7276
    %8386 = vmatpush2.bf16.msra.mxu0 %v7275
    %8387 = vmatprep.subr.bf16.mxu0 %v7268
    %8388 = vmatpush2.bf16.msra.mxu0 %v7267
    %8389 = vmatprep.subr.bf16.mxu0 %v7260
    %8390 = vmatpush2.bf16.msra.mxu0 %v7259
    %8391 = vmatprep.subr.bf16.mxu0 %v7252
    %8392 = vmatpush2.bf16.msra.mxu0 %v7251
    %8393 = vmatprep.mubr.bf16.mxu0 %v4834
    %8394 = vmatmul.mubr.bf16.gmra.mxu0 %v4833
    %v8395 = vpop.f32.mrf.mxu0
    %v8396 = vadd.f32 %v8355, %v8395
    %v8397 = vpop.f32.mrf.mxu0
    %v8398 = vadd.f32 %v8357, %v8397
    %v8399 = vpop.f32.mrf.mxu0
    %v8400 = vpop.f32.mrf.mxu0
    %8401 = vdwg.mxu0
    %8402 = vmatprep.subr.bf16.mxu0 %v7372
    %8403 = vmatpush1.bf16.msra.mxu0 %v7371
    %8404 = vmatprep.subr.bf16.mxu0 %v7364
    %8405 = vmatpush1.bf16.msra.mxu0 %v7363
    %8406 = vmatprep.subr.bf16.mxu0 %v7356
    %8407 = vmatpush1.bf16.msra.mxu0 %v7355
    %8408 = vmatprep.subr.bf16.mxu0 %v7348
    %8409 = vmatpush1.bf16.msra.mxu0 %v7347
    %8410 = vmatprep.subr.bf16.mxu0 %v7340
    %8411 = vmatpush1.bf16.msra.mxu0 %v7339
    %8412 = vmatprep.subr.bf16.mxu0 %v7332
    %8413 = vmatpush1.bf16.msra.mxu0 %v7331
    %8414 = vmatprep.subr.bf16.mxu0 %v7324
    %8415 = vmatpush1.bf16.msra.mxu0 %v7323
    %8416 = vmatprep.subr.bf16.mxu0 %v7316
    %8417 = vmatpush1.bf16.msra.mxu0 %v7315
    %8418 = vmatprep.subr.bf16.mxu0 %v7436
    %8419 = vmatpush2.bf16.msra.mxu0 %v7435
    %8420 = vmatprep.subr.bf16.mxu0 %v7428
    %8421 = vmatpush2.bf16.msra.mxu0 %v7427
    %8422 = vmatprep.subr.bf16.mxu0 %v7420
    %8423 = vmatpush2.bf16.msra.mxu0 %v7419
    %8424 = vmatprep.subr.bf16.mxu0 %v7412
    %8425 = vmatpush2.bf16.msra.mxu0 %v7411
    %8426 = vmatprep.subr.bf16.mxu0 %v7404
    %8427 = vmatpush2.bf16.msra.mxu0 %v7403
    %8428 = vmatprep.subr.bf16.mxu0 %v7396
    %8429 = vmatpush2.bf16.msra.mxu0 %v7395
    %8430 = vmatprep.subr.bf16.mxu0 %v7388
    %8431 = vmatpush2.bf16.msra.mxu0 %v7387
    %8432 = vmatprep.subr.bf16.mxu0 %v7380
    %8433 = vmatpush2.bf16.msra.mxu0 %v7379
    %8434 = vmatprep.mubr.bf16.mxu0 %v4836
    %8435 = vmatmul.mubr.bf16.gmra.mxu0 %v4835
    %v8436 = vpop.f32.mrf.mxu0
    %v8437 = vadd.f32 %v8396, %v8436
    %v8438 = vpop.f32.mrf.mxu0
    %v8439 = vadd.f32 %v8398, %v8438
    %v8440 = vpop.f32.mrf.mxu0
    %v8441 = vpop.f32.mrf.mxu0
    %8442 = vdwg.mxu0
    %8443 = vmatprep.subr.bf16.mxu0 %v6990
    %8444 = vmatpush1.bf16.msra.mxu0 %v6989
    %8445 = vmatprep.subr.bf16.mxu0 %v6982
    %8446 = vmatpush1.bf16.msra.mxu0 %v6981
    %8447 = vmatprep.subr.bf16.mxu0 %v6974
    %8448 = vmatpush1.bf16.msra.mxu0 %v6973
    %8449 = vmatprep.subr.bf16.mxu0 %v6966
    %8450 = vmatpush1.bf16.msra.mxu0 %v6965
    %8451 = vmatprep.subr.bf16.mxu0 %v6958
    %8452 = vmatpush1.bf16.msra.mxu0 %v6957
    %8453 = vmatprep.subr.bf16.mxu0 %v6950
    %8454 = vmatpush1.bf16.msra.mxu0 %v6949
    %8455 = vmatprep.subr.bf16.mxu0 %v6942
    %8456 = vmatpush1.bf16.msra.mxu0 %v6941
    %8457 = vmatprep.subr.bf16.mxu0 %v6934
    %8458 = vmatpush1.bf16.msra.mxu0 %v6933
    %8459 = vmatprep.subr.bf16.mxu0 %v7054
    %8460 = vmatpush2.bf16.msra.mxu0 %v7053
    %8461 = vmatprep.subr.bf16.mxu0 %v7046
    %8462 = vmatpush2.bf16.msra.mxu0 %v7045
    %8463 = vmatprep.subr.bf16.mxu0 %v7038
    %8464 = vmatpush2.bf16.msra.mxu0 %v7037
    %8465 = vmatprep.subr.bf16.mxu0 %v7030
    %8466 = vmatpush2.bf16.msra.mxu0 %v7029
    %8467 = vmatprep.subr.bf16.mxu0 %v7022
    %8468 = vmatpush2.bf16.msra.mxu0 %v7021
    %8469 = vmatprep.subr.bf16.mxu0 %v7014
    %8470 = vmatpush2.bf16.msra.mxu0 %v7013
    %8471 = vmatprep.subr.bf16.mxu0 %v7006
    %8472 = vmatpush2.bf16.msra.mxu0 %v7005
    %8473 = vmatprep.subr.bf16.mxu0 %v6998
    %8474 = vmatpush2.bf16.msra.mxu0 %v6997
    %8475 = vmatprep.mubr.bf16.mxu0 %v4830
    %8476 = vmatmul.mubr.bf16.gmra.mxu0 %v4829
    %v8477 = vpop.f32.mrf.mxu0
    %v8478 = vadd.f32 %v5378, %v8477
    %v8479 = vpop.f32.mrf.mxu0
    %v8480 = vadd.f32 %v5382, %v8479
    %v8481 = vpop.f32.mrf.mxu0
    %v8482 = vpop.f32.mrf.mxu0
    %8483 = vdwg.mxu0
    %8484 = vmatprep.subr.bf16.mxu0 %v7118
    %8485 = vmatpush1.bf16.msra.mxu0 %v7117
    %8486 = vmatprep.subr.bf16.mxu0 %v7110
    %8487 = vmatpush1.bf16.msra.mxu0 %v7109
    %8488 = vmatprep.subr.bf16.mxu0 %v7102
    %8489 = vmatpush1.bf16.msra.mxu0 %v7101
    %8490 = vmatprep.subr.bf16.mxu0 %v7094
    %8491 = vmatpush1.bf16.msra.mxu0 %v7093
    %8492 = vmatprep.subr.bf16.mxu0 %v7086
    %8493 = vmatpush1.bf16.msra.mxu0 %v7085
    %8494 = vmatprep.subr.bf16.mxu0 %v7078
    %8495 = vmatpush1.bf16.msra.mxu0 %v7077
    %8496 = vmatprep.subr.bf16.mxu0 %v7070
    %8497 = vmatpush1.bf16.msra.mxu0 %v7069
    %8498 = vmatprep.subr.bf16.mxu0 %v7062
    %8499 = vmatpush1.bf16.msra.mxu0 %v7061
    %8500 = vmatprep.subr.bf16.mxu0 %v7182
    %8501 = vmatpush2.bf16.msra.mxu0 %v7181
    %8502 = vmatprep.subr.bf16.mxu0 %v7174
    %8503 = vmatpush2.bf16.msra.mxu0 %v7173
    %8504 = vmatprep.subr.bf16.mxu0 %v7166
    %8505 = vmatpush2.bf16.msra.mxu0 %v7165
    %8506 = vmatprep.subr.bf16.mxu0 %v7158
    %8507 = vmatpush2.bf16.msra.mxu0 %v7157
    %8508 = vmatprep.subr.bf16.mxu0 %v7150
    %8509 = vmatpush2.bf16.msra.mxu0 %v7149
    %8510 = vmatprep.subr.bf16.mxu0 %v7142
    %8511 = vmatpush2.bf16.msra.mxu0 %v7141
    %8512 = vmatprep.subr.bf16.mxu0 %v7134
    %8513 = vmatpush2.bf16.msra.mxu0 %v7133
    %8514 = vmatprep.subr.bf16.mxu0 %v7126
    %8515 = vmatpush2.bf16.msra.mxu0 %v7125
    %8516 = vmatprep.mubr.bf16.mxu0 %v4832
    %8517 = vmatmul.mubr.bf16.gmra.mxu0 %v4831
    %v8518 = vpop.f32.mrf.mxu0
    %v8519 = vadd.f32 %v8478, %v8518
    %v8520 = vpop.f32.mrf.mxu0
    %v8521 = vadd.f32 %v8480, %v8520
    %v8522 = vpop.f32.mrf.mxu0
    %v8523 = vpop.f32.mrf.mxu0
    %8524 = vdwg.mxu0
    %8525 = vmatprep.subr.bf16.mxu0 %v7246
    %8526 = vmatpush1.bf16.msra.mxu0 %v7245
    %8527 = vmatprep.subr.bf16.mxu0 %v7238
    %8528 = vmatpush1.bf16.msra.mxu0 %v7237
    %8529 = vmatprep.subr.bf16.mxu0 %v7230
    %8530 = vmatpush1.bf16.msra.mxu0 %v7229
    %8531 = vmatprep.subr.bf16.mxu0 %v7222
    %8532 = vmatpush1.bf16.msra.mxu0 %v7221
    %8533 = vmatprep.subr.bf16.mxu0 %v7214
    %8534 = vmatpush1.bf16.msra.mxu0 %v7213
    %8535 = vmatprep.subr.bf16.mxu0 %v7206
    %8536 = vmatpush1.bf16.msra.mxu0 %v7205
    %8537 = vmatprep.subr.bf16.mxu0 %v7198
    %8538 = vmatpush1.bf16.msra.mxu0 %v7197
    %8539 = vmatprep.subr.bf16.mxu0 %v7190
    %8540 = vmatpush1.bf16.msra.mxu0 %v7189
    %8541 = vmatprep.subr.bf16.mxu0 %v7310
    %8542 = vmatpush2.bf16.msra.mxu0 %v7309
    %8543 = vmatprep.subr.bf16.mxu0 %v7302
    %8544 = vmatpush2.bf16.msra.mxu0 %v7301
    %8545 = vmatprep.subr.bf16.mxu0 %v7294
    %8546 = vmatpush2.bf16.msra.mxu0 %v7293
    %8547 = vmatprep.subr.bf16.mxu0 %v7286
    %8548 = vmatpush2.bf16.msra.mxu0 %v7285
    %8549 = vmatprep.subr.bf16.mxu0 %v7278
    %8550 = vmatpush2.bf16.msra.mxu0 %v7277
    %8551 = vmatprep.subr.bf16.mxu0 %v7270
    %8552 = vmatpush2.bf16.msra.mxu0 %v7269
    %8553 = vmatprep.subr.bf16.mxu0 %v7262
    %8554 = vmatpush2.bf16.msra.mxu0 %v7261
    %8555 = vmatprep.subr.bf16.mxu0 %v7254
    %8556 = vmatpush2.bf16.msra.mxu0 %v7253
    %8557 = vmatprep.mubr.bf16.mxu0 %v4834
    %8558 = vmatmul.mubr.bf16.gmra.mxu0 %v4833
    %v8559 = vpop.f32.mrf.mxu0
    %v8560 = vadd.f32 %v8519, %v8559
    %v8561 = vpop.f32.mrf.mxu0
    %v8562 = vadd.f32 %v8521, %v8561
    %v8563 = vpop.f32.mrf.mxu0
    %v8564 = vpop.f32.mrf.mxu0
    %8565 = vdwg.mxu0
    %8566 = vmatprep.subr.bf16.mxu0 %v7374
    %8567 = vmatpush1.bf16.msra.mxu0 %v7373
    %8568 = vmatprep.subr.bf16.mxu0 %v7366
    %8569 = vmatpush1.bf16.msra.mxu0 %v7365
    %8570 = vmatprep.subr.bf16.mxu0 %v7358
    %8571 = vmatpush1.bf16.msra.mxu0 %v7357
    %8572 = vmatprep.subr.bf16.mxu0 %v7350
    %8573 = vmatpush1.bf16.msra.mxu0 %v7349
    %8574 = vmatprep.subr.bf16.mxu0 %v7342
    %8575 = vmatpush1.bf16.msra.mxu0 %v7341
    %8576 = vmatprep.subr.bf16.mxu0 %v7334
    %8577 = vmatpush1.bf16.msra.mxu0 %v7333
    %8578 = vmatprep.subr.bf16.mxu0 %v7326
    %8579 = vmatpush1.bf16.msra.mxu0 %v7325
    %8580 = vmatprep.subr.bf16.mxu0 %v7318
    %8581 = vmatpush1.bf16.msra.mxu0 %v7317
    %8582 = vmatprep.subr.bf16.mxu0 %v7438
    %8583 = vmatpush2.bf16.msra.mxu0 %v7437
    %8584 = vmatprep.subr.bf16.mxu0 %v7430
    %8585 = vmatpush2.bf16.msra.mxu0 %v7429
    %8586 = vmatprep.subr.bf16.mxu0 %v7422
    %8587 = vmatpush2.bf16.msra.mxu0 %v7421
    %8588 = vmatprep.subr.bf16.mxu0 %v7414
    %8589 = vmatpush2.bf16.msra.mxu0 %v7413
    %8590 = vmatprep.subr.bf16.mxu0 %v7406
    %8591 = vmatpush2.bf16.msra.mxu0 %v7405
    %8592 = vmatprep.subr.bf16.mxu0 %v7398
    %8593 = vmatpush2.bf16.msra.mxu0 %v7397
    %8594 = vmatprep.subr.bf16.mxu0 %v7390
    %8595 = vmatpush2.bf16.msra.mxu0 %v7389
    %8596 = vmatprep.subr.bf16.mxu0 %v7382
    %8597 = vmatpush2.bf16.msra.mxu0 %v7381
    %8598 = vmatprep.mubr.bf16.mxu0 %v4836
    %8599 = vmatmul.mubr.bf16.gmra.mxu0 %v4835
    %v8600 = vpop.f32.mrf.mxu0
    %v8601 = vadd.f32 %v8560, %v8600
    %v8602 = vpop.f32.mrf.mxu0
    %v8603 = vadd.f32 %v8562, %v8602
    %v8604 = vpop.f32.mrf.mxu0
    %v8605 = vpop.f32.mrf.mxu0
    %8606 = vdwg.mxu0
    %v8607 = vrot.slane %v8109, 4
    %v8608 = vadd.f32 %v8109, %v8607
    %v8609 = vrot.slane %v8608, 2
    %v8610 = vadd.f32 %v8608, %v8609
    %v8611 = vrot.slane %v8610, 1
    %v8612 = vadd.f32 %v8610, %v8611
    %v8613 = vrot.slane %v8111, 4
    %v8614 = vadd.f32 %v8111, %v8613
    %v8615 = vrot.slane %v8614, 2
    %v8616 = vadd.f32 %v8614, %v8615
    %v8617 = vrot.slane %v8616, 1
    %v8618 = vadd.f32 %v8616, %v8617
    %v8619 = vrot.slane %v8273, 4
    %v8620 = vadd.f32 %v8273, %v8619
    %v8621 = vrot.slane %v8620, 2
    %v8622 = vadd.f32 %v8620, %v8621
    %v8623 = vrot.slane %v8622, 1
    %v8624 = vadd.f32 %v8622, %v8623
    %v8625 = vrot.slane %v8275, 4
    %v8626 = vadd.f32 %v8275, %v8625
    %v8627 = vrot.slane %v8626, 2
    %v8628 = vadd.f32 %v8626, %v8627
    %v8629 = vrot.slane %v8628, 1
    %v8630 = vadd.f32 %v8628, %v8629
    %v8631 = vrot.slane %v8437, 4
    %v8632 = vadd.f32 %v8437, %v8631
    %v8633 = vrot.slane %v8632, 2
    %v8634 = vadd.f32 %v8632, %v8633
    %v8635 = vrot.slane %v8634, 1
    %v8636 = vadd.f32 %v8634, %v8635
    %v8637 = vrot.slane %v8439, 4
    %v8638 = vadd.f32 %v8439, %v8637
    %v8639 = vrot.slane %v8638, 2
    %v8640 = vadd.f32 %v8638, %v8639
    %v8641 = vrot.slane %v8640, 1
    %v8642 = vadd.f32 %v8640, %v8641
    %v8643 = vrot.slane %v8601, 4
    %v8644 = vadd.f32 %v8601, %v8643
    %v8645 = vrot.slane %v8644, 2
    %v8646 = vadd.f32 %v8644, %v8645
    %v8647 = vrot.slane %v8646, 1
    %v8648 = vadd.f32 %v8646, %v8647
    %v8649 = vrot.slane %v8603, 4
    %v8650 = vadd.f32 %v8603, %v8649
    %v8651 = vrot.slane %v8650, 2
    %v8652 = vadd.f32 %v8650, %v8651
    %v8653 = vrot.slane %v8652, 1
    %v8654 = vadd.f32 %v8652, %v8653
    %v8655 = vmul.f32 %v8612, %v546
    %v8656 = vmul.f32 %v8618, %v546
    %v8657 = vmul.f32 %v8624, %v546
    %v8658 = vmul.f32 %v8630, %v546
    %v8659 = vmul.f32 %v8636, %v546
    %v8660 = vmul.f32 %v8642, %v546
    %v8661 = vmul.f32 %v8648, %v546
    %v8662 = vmul.f32 %v8654, %v546
    %v8663 = vsub.f32 %v8109, %v8655
    %v8664 = vsub.f32 %v8111, %v8656
    %v8665 = vsub.f32 %v8273, %v8657
    %v8666 = vsub.f32 %v8275, %v8658
    %v8667 = vsub.f32 %v8437, %v8659
    %v8668 = vsub.f32 %v8439, %v8660
    %v8669 = vsub.f32 %v8601, %v8661
    %v8670 = vsub.f32 %v8603, %v8662
    %v8671 = vmul.f32 %v8663, %v8663
    %v8672 = vmul.f32 %v8664, %v8664
    %v8673 = vmul.f32 %v8665, %v8665
    %v8674 = vmul.f32 %v8666, %v8666
    %v8675 = vmul.f32 %v8667, %v8667
    %v8676 = vmul.f32 %v8668, %v8668
    %v8677 = vmul.f32 %v8669, %v8669
    %v8678 = vmul.f32 %v8670, %v8670
    %v8679 = vrot.slane %v8671, 4
    %v8680 = vadd.f32 %v8671, %v8679
    %v8681 = vrot.slane %v8680, 2
    %v8682 = vadd.f32 %v8680, %v8681
    %v8683 = vrot.slane %v8682, 1
    %v8684 = vadd.f32 %v8682, %v8683
    %v8685 = vrot.slane %v8672, 4
    %v8686 = vadd.f32 %v8672, %v8685
    %v8687 = vrot.slane %v8686, 2
    %v8688 = vadd.f32 %v8686, %v8687
    %v8689 = vrot.slane %v8688, 1
    %v8690 = vadd.f32 %v8688, %v8689
    %v8691 = vrot.slane %v8673, 4
    %v8692 = vadd.f32 %v8673, %v8691
    %v8693 = vrot.slane %v8692, 2
    %v8694 = vadd.f32 %v8692, %v8693
    %v8695 = vrot.slane %v8694, 1
    %v8696 = vadd.f32 %v8694, %v8695
    %v8697 = vrot.slane %v8674, 4
    %v8698 = vadd.f32 %v8674, %v8697
    %v8699 = vrot.slane %v8698, 2
    %v8700 = vadd.f32 %v8698, %v8699
    %v8701 = vrot.slane %v8700, 1
    %v8702 = vadd.f32 %v8700, %v8701
    %v8703 = vrot.slane %v8675, 4
    %v8704 = vadd.f32 %v8675, %v8703
    %v8705 = vrot.slane %v8704, 2
    %v8706 = vadd.f32 %v8704, %v8705
    %v8707 = vrot.slane %v8706, 1
    %v8708 = vadd.f32 %v8706, %v8707
    %v8709 = vrot.slane %v8676, 4
    %v8710 = vadd.f32 %v8676, %v8709
    %v8711 = vrot.slane %v8710, 2
    %v8712 = vadd.f32 %v8710, %v8711
    %v8713 = vrot.slane %v8712, 1
    %v8714 = vadd.f32 %v8712, %v8713
    %v8715 = vrot.slane %v8677, 4
    %v8716 = vadd.f32 %v8677, %v8715
    %v8717 = vrot.slane %v8716, 2
    %v8718 = vadd.f32 %v8716, %v8717
    %v8719 = vrot.slane %v8718, 1
    %v8720 = vadd.f32 %v8718, %v8719
    %v8721 = vrot.slane %v8678, 4
    %v8722 = vadd.f32 %v8678, %v8721
    %v8723 = vrot.slane %v8722, 2
    %v8724 = vadd.f32 %v8722, %v8723
    %v8725 = vrot.slane %v8724, 1
    %v8726 = vadd.f32 %v8724, %v8725
    %v8727 = vmul.f32 %v8684, %v546
    %v8728 = vmul.f32 %v8690, %v546
    %v8729 = vmul.f32 %v8696, %v546
    %v8730 = vmul.f32 %v8702, %v546
    %v8731 = vmul.f32 %v8708, %v546
    %v8732 = vmul.f32 %v8714, %v546
    %v8733 = vmul.f32 %v8720, %v546
    %v8734 = vmul.f32 %v8726, %v546
    %v8735 = vadd.f32 %v8727, 1e-05
    %v8736 = vadd.f32 %v8728, 1e-05
    %v8737 = vadd.f32 %v8729, 1e-05
    %v8738 = vadd.f32 %v8730, 1e-05
    %v8739 = vadd.f32 %v8731, 1e-05
    %v8740 = vadd.f32 %v8732, 1e-05
    %v8741 = vadd.f32 %v8733, 1e-05
    %v8742 = vadd.f32 %v8734, 1e-05
    %v8743 = vrsqrt.pop %v8735
    %v8744 = vrsqrt.pop %v8736
    %v8745 = vrsqrt.pop %v8737
    %v8746 = vrsqrt.pop %v8738
    %v8747 = vrsqrt.pop %v8739
    %v8748 = vrsqrt.pop %v8740
    %v8749 = vrsqrt.pop %v8741
    %v8750 = vrsqrt.pop %v8742
    %v8751 = vmul.f32 %v8663, %v8743
    %v8752 = vmul.f32 %v8664, %v8744
    %v8753 = vmul.f32 %v8665, %v8745
    %v8754 = vmul.f32 %v8666, %v8746
    %v8755 = vmul.f32 %v8667, %v8747
    %v8756 = vmul.f32 %v8668, %v8748
    %v8757 = vmul.f32 %v8669, %v8749
    %v8758 = vmul.f32 %v8670, %v8750
    %v8759 = vld [vmem:[#allocation18] sm:$0xff]
    %v8761 = vlaneseq
    %v8762 = vshrl.u32 %v8761, 7
    %v8763 = vsub.s32 0, %v8762
    %v8764 = vrot.slane %v8759, %v8763
    %v8765 = vlaneseq
    %v8766 = vshrl.u32 %v8765, 7
    %v8767 = vsub.s32 1, %v8766
    %v8768 = vrot.slane %v8759, %v8767
    %v8769 = vlaneseq
    %v8770 = vshrl.u32 %v8769, 7
    %v8771 = vsub.s32 2, %v8770
    %v8772 = vrot.slane %v8759, %v8771
    %v8773 = vlaneseq
    %v8774 = vshrl.u32 %v8773, 7
    %v8775 = vsub.s32 3, %v8774
    %v8776 = vrot.slane %v8759, %v8775
    %v8777 = vlaneseq
    %v8778 = vshrl.u32 %v8777, 7
    %v8779 = vsub.s32 4, %v8778
    %v8780 = vrot.slane %v8759, %v8779
    %v8781 = vlaneseq
    %v8782 = vshrl.u32 %v8781, 7
    %v8783 = vsub.s32 5, %v8782
    %v8784 = vrot.slane %v8759, %v8783
    %v8785 = vlaneseq
    %v8786 = vshrl.u32 %v8785, 7
    %v8787 = vsub.s32 6, %v8786
    %v8788 = vrot.slane %v8759, %v8787
    %v8789 = vlaneseq
    %v8790 = vshrl.u32 %v8789, 7
    %v8791 = vsub.s32 7, %v8790
    %v8792 = vrot.slane %v8759, %v8791
    %v8801 = vmul.f32 %v8751, %v8764
    %v8802 = vmul.f32 %v8752, %v8768
    %v8803 = vmul.f32 %v8753, %v8772
    %v8804 = vmul.f32 %v8754, %v8776
    %v8805 = vmul.f32 %v8755, %v8780
    %v8806 = vmul.f32 %v8756, %v8784
    %v8807 = vmul.f32 %v8757, %v8788
    %v8808 = vmul.f32 %v8758, %v8792
    %v8809 = vld [vmem:[#allocation19] sm:$0xff]
    %v8811 = vlaneseq
    %v8812 = vshrl.u32 %v8811, 7
    %v8813 = vsub.s32 0, %v8812
    %v8814 = vrot.slane %v8809, %v8813
    %v8815 = vlaneseq
    %v8816 = vshrl.u32 %v8815, 7
    %v8817 = vsub.s32 1, %v8816
    %v8818 = vrot.slane %v8809, %v8817
    %v8819 = vlaneseq
    %v8820 = vshrl.u32 %v8819, 7
    %v8821 = vsub.s32 2, %v8820
    %v8822 = vrot.slane %v8809, %v8821
    %v8823 = vlaneseq
    %v8824 = vshrl.u32 %v8823, 7
    %v8825 = vsub.s32 3, %v8824
    %v8826 = vrot.slane %v8809, %v8825
    %v8827 = vlaneseq
    %v8828 = vshrl.u32 %v8827, 7
    %v8829 = vsub.s32 4, %v8828
    %v8830 = vrot.slane %v8809, %v8829
    %v8831 = vlaneseq
    %v8832 = vshrl.u32 %v8831, 7
    %v8833 = vsub.s32 5, %v8832
    %v8834 = vrot.slane %v8809, %v8833
    %v8835 = vlaneseq
    %v8836 = vshrl.u32 %v8835, 7
    %v8837 = vsub.s32 6, %v8836
    %v8838 = vrot.slane %v8809, %v8837
    %v8839 = vlaneseq
    %v8840 = vshrl.u32 %v8839, 7
    %v8841 = vsub.s32 7, %v8840
    %v8842 = vrot.slane %v8809, %v8841
    %v8851 = vadd.f32 %v8801, %v8814
    %v8852 = vadd.f32 %v8802, %v8818
    %v8853 = vadd.f32 %v8803, %v8822
    %v8854 = vadd.f32 %v8804, %v8826
    %v8855 = vadd.f32 %v8805, %v8830
    %v8856 = vadd.f32 %v8806, %v8834
    %v8857 = vadd.f32 %v8807, %v8838
    %v8858 = vadd.f32 %v8808, %v8842
    %vm8859 = vcmp.ge.f32.partialorder %v8851, 0.0
    %vm8860 = vcmp.ge.f32.partialorder %v8852, 0.0
    %vm8861 = vcmp.ge.f32.partialorder %v8853, 0.0
    %vm8862 = vcmp.ge.f32.partialorder %v8854, 0.0
    %vm8863 = vcmp.ge.f32.partialorder %v8855, 0.0
    %vm8864 = vcmp.ge.f32.partialorder %v8856, 0.0
    %vm8865 = vcmp.ge.f32.partialorder %v8857, 0.0
    %vm8866 = vcmp.ge.f32.partialorder %v8858, 0.0
    %v8867 = vmul.f32 %v8851, 0.01
    %v8868 = vmul.f32 %v8852, 0.01
    %v8869 = vmul.f32 %v8853, 0.01
    %v8870 = vmul.f32 %v8854, 0.01
    %v8871 = vmul.f32 %v8855, 0.01
    %v8872 = vmul.f32 %v8856, 0.01
    %v8873 = vmul.f32 %v8857, 0.01
    %v8874 = vmul.f32 %v8858, 0.01
    %v8875 = vsel %vm8859, %v8851, %v8867
    %v8876 = vsel %vm8860, %v8852, %v8868
    %v8877 = vsel %vm8861, %v8853, %v8869
    %v8878 = vsel %vm8862, %v8854, %v8870
    %v8879 = vsel %vm8863, %v8855, %v8871
    %v8880 = vsel %vm8864, %v8856, %v8872
    %v8881 = vsel %vm8865, %v8857, %v8873
    %v8882 = vsel %vm8866, %v8858, %v8874
    %v8883 = vpack.c.bf16 %v8875, %v8875
    %v8884 = vpack.c.bf16 %v8876, %v8876
    %v8885 = vpack.c.bf16 %v8877, %v8877
    %v8886 = vpack.c.bf16 %v8878, %v8878
    %v8887 = vpack.c.bf16 %v8879, %v8879
    %v8888 = vpack.c.bf16 %v8880, %v8880
    %v8889 = vpack.c.bf16 %v8881, %v8881
    %v8890 = vpack.c.bf16 %v8882, %v8882
    %v8891 = vld [vmem:[#allocation21] sm:$0xff]
    %v8892 = vld [vmem:[#allocation21 + $0x8] sm:$0xff]
    %v8893 = vld [vmem:[#allocation21 + $0x10] sm:$0xff]
    %v8894 = vld [vmem:[#allocation21 + $0x18] sm:$0xff]
    %v8895 = vld [vmem:[#allocation21 + $0x20] sm:$0xff]
    %v8896 = vld [vmem:[#allocation21 + $0x28] sm:$0xff]
    %v8897 = vld [vmem:[#allocation21 + $0x30] sm:$0xff]
    %v8898 = vld [vmem:[#allocation21 + $0x38] sm:$0xff]
    %v8899 = vld [vmem:[#allocation21 + $0x40] sm:$0xff]
    %v8900 = vld [vmem:[#allocation21 + $0x48] sm:$0xff]
    %v8901 = vld [vmem:[#allocation21 + $0x50] sm:$0xff]
    %v8902 = vld [vmem:[#allocation21 + $0x58] sm:$0xff]
    %v8903 = vld [vmem:[#allocation21 + $0x60] sm:$0xff]
    %v8904 = vld [vmem:[#allocation21 + $0x68] sm:$0xff]
    %v8905 = vld [vmem:[#allocation21 + $0x70] sm:$0xff]
    %v8906 = vld [vmem:[#allocation21 + $0x78] sm:$0xff]
    %v8907 = vld [vmem:[#allocation21 + $0x80] sm:$0xff]
    %v8908 = vld [vmem:[#allocation21 + $0x88] sm:$0xff]
    %v8909 = vld [vmem:[#allocation21 + $0x90] sm:$0xff]
    %v8910 = vld [vmem:[#allocation21 + $0x98] sm:$0xff]
    %v8911 = vld [vmem:[#allocation21 + $0xa0] sm:$0xff]
    %v8912 = vld [vmem:[#allocation21 + $0xa8] sm:$0xff]
    %v8913 = vld [vmem:[#allocation21 + $0xb0] sm:$0xff]
    %v8914 = vld [vmem:[#allocation21 + $0xb8] sm:$0xff]
    %v8915 = vld [vmem:[#allocation21 + $0xc0] sm:$0xff]
    %v8916 = vld [vmem:[#allocation21 + $0xc8] sm:$0xff]
    %v8917 = vld [vmem:[#allocation21 + $0xd0] sm:$0xff]
    %v8918 = vld [vmem:[#allocation21 + $0xd8] sm:$0xff]
    %v8919 = vld [vmem:[#allocation21 + $0xe0] sm:$0xff]
    %v8920 = vld [vmem:[#allocation21 + $0xe8] sm:$0xff]
    %v8921 = vld [vmem:[#allocation21 + $0xf0] sm:$0xff]
    %v8922 = vld [vmem:[#allocation21 + $0xf8] sm:$0xff]
    %v8923 = vld [vmem:[#allocation21 + $0x100] sm:$0xff]
    %v8924 = vld [vmem:[#allocation21 + $0x108] sm:$0xff]
    %v8925 = vld [vmem:[#allocation21 + $0x110] sm:$0xff]
    %v8926 = vld [vmem:[#allocation21 + $0x118] sm:$0xff]
    %v8927 = vld [vmem:[#allocation21 + $0x120] sm:$0xff]
    %v8928 = vld [vmem:[#allocation21 + $0x128] sm:$0xff]
    %v8929 = vld [vmem:[#allocation21 + $0x130] sm:$0xff]
    %v8930 = vld [vmem:[#allocation21 + $0x138] sm:$0xff]
    %v8931 = vld [vmem:[#allocation21 + $0x140] sm:$0xff]
    %v8932 = vld [vmem:[#allocation21 + $0x148] sm:$0xff]
    %v8933 = vld [vmem:[#allocation21 + $0x150] sm:$0xff]
    %v8934 = vld [vmem:[#allocation21 + $0x158] sm:$0xff]
    %v8935 = vld [vmem:[#allocation21 + $0x160] sm:$0xff]
    %v8936 = vld [vmem:[#allocation21 + $0x168] sm:$0xff]
    %v8937 = vld [vmem:[#allocation21 + $0x170] sm:$0xff]
    %v8938 = vld [vmem:[#allocation21 + $0x178] sm:$0xff]
    %v8939 = vld [vmem:[#allocation21 + $0x180] sm:$0xff]
    %v8940 = vld [vmem:[#allocation21 + $0x188] sm:$0xff]
    %v8941 = vld [vmem:[#allocation21 + $0x190] sm:$0xff]
    %v8942 = vld [vmem:[#allocation21 + $0x198] sm:$0xff]
    %v8943 = vld [vmem:[#allocation21 + $0x1a0] sm:$0xff]
    %v8944 = vld [vmem:[#allocation21 + $0x1a8] sm:$0xff]
    %v8945 = vld [vmem:[#allocation21 + $0x1b0] sm:$0xff]
    %v8946 = vld [vmem:[#allocation21 + $0x1b8] sm:$0xff]
    %v8947 = vld [vmem:[#allocation21 + $0x1c0] sm:$0xff]
    %v8948 = vld [vmem:[#allocation21 + $0x1c8] sm:$0xff]
    %v8949 = vld [vmem:[#allocation21 + $0x1d0] sm:$0xff]
    %v8950 = vld [vmem:[#allocation21 + $0x1d8] sm:$0xff]
    %v8951 = vld [vmem:[#allocation21 + $0x1e0] sm:$0xff]
    %v8952 = vld [vmem:[#allocation21 + $0x1e8] sm:$0xff]
    %v8953 = vld [vmem:[#allocation21 + $0x1f0] sm:$0xff]
    %v8954 = vld [vmem:[#allocation21 + $0x1f8] sm:$0xff]
    %v8955 = vld [vmem:[#allocation21 + $0x200] sm:$0xff]
    %v8956 = vld [vmem:[#allocation21 + $0x208] sm:$0xff]
    %v8957 = vld [vmem:[#allocation21 + $0x210] sm:$0xff]
    %v8958 = vld [vmem:[#allocation21 + $0x218] sm:$0xff]
    %v8959 = vld [vmem:[#allocation21 + $0x220] sm:$0xff]
    %v8960 = vld [vmem:[#allocation21 + $0x228] sm:$0xff]
    %v8961 = vld [vmem:[#allocation21 + $0x230] sm:$0xff]
    %v8962 = vld [vmem:[#allocation21 + $0x238] sm:$0xff]
    %v8963 = vld [vmem:[#allocation21 + $0x240] sm:$0xff]
    %v8964 = vld [vmem:[#allocation21 + $0x248] sm:$0xff]
    %v8965 = vld [vmem:[#allocation21 + $0x250] sm:$0xff]
    %v8966 = vld [vmem:[#allocation21 + $0x258] sm:$0xff]
    %v8967 = vld [vmem:[#allocation21 + $0x260] sm:$0xff]
    %v8968 = vld [vmem:[#allocation21 + $0x268] sm:$0xff]
    %v8969 = vld [vmem:[#allocation21 + $0x270] sm:$0xff]
    %v8970 = vld [vmem:[#allocation21 + $0x278] sm:$0xff]
    %v8971 = vld [vmem:[#allocation21 + $0x280] sm:$0xff]
    %v8972 = vld [vmem:[#allocation21 + $0x288] sm:$0xff]
    %v8973 = vld [vmem:[#allocation21 + $0x290] sm:$0xff]
    %v8974 = vld [vmem:[#allocation21 + $0x298] sm:$0xff]
    %v8975 = vld [vmem:[#allocation21 + $0x2a0] sm:$0xff]
    %v8976 = vld [vmem:[#allocation21 + $0x2a8] sm:$0xff]
    %v8977 = vld [vmem:[#allocation21 + $0x2b0] sm:$0xff]
    %v8978 = vld [vmem:[#allocation21 + $0x2b8] sm:$0xff]
    %v8979 = vld [vmem:[#allocation21 + $0x2c0] sm:$0xff]
    %v8980 = vld [vmem:[#allocation21 + $0x2c8] sm:$0xff]
    %v8981 = vld [vmem:[#allocation21 + $0x2d0] sm:$0xff]
    %v8982 = vld [vmem:[#allocation21 + $0x2d8] sm:$0xff]
    %v8983 = vld [vmem:[#allocation21 + $0x2e0] sm:$0xff]
    %v8984 = vld [vmem:[#allocation21 + $0x2e8] sm:$0xff]
    %v8985 = vld [vmem:[#allocation21 + $0x2f0] sm:$0xff]
    %v8986 = vld [vmem:[#allocation21 + $0x2f8] sm:$0xff]
    %v8987 = vld [vmem:[#allocation21 + $0x300] sm:$0xff]
    %v8988 = vld [vmem:[#allocation21 + $0x308] sm:$0xff]
    %v8989 = vld [vmem:[#allocation21 + $0x310] sm:$0xff]
    %v8990 = vld [vmem:[#allocation21 + $0x318] sm:$0xff]
    %v8991 = vld [vmem:[#allocation21 + $0x320] sm:$0xff]
    %v8992 = vld [vmem:[#allocation21 + $0x328] sm:$0xff]
    %v8993 = vld [vmem:[#allocation21 + $0x330] sm:$0xff]
    %v8994 = vld [vmem:[#allocation21 + $0x338] sm:$0xff]
    %v8995 = vld [vmem:[#allocation21 + $0x340] sm:$0xff]
    %v8996 = vld [vmem:[#allocation21 + $0x348] sm:$0xff]
    %v8997 = vld [vmem:[#allocation21 + $0x350] sm:$0xff]
    %v8998 = vld [vmem:[#allocation21 + $0x358] sm:$0xff]
    %v8999 = vld [vmem:[#allocation21 + $0x360] sm:$0xff]
    %v9000 = vld [vmem:[#allocation21 + $0x368] sm:$0xff]
    %v9001 = vld [vmem:[#allocation21 + $0x370] sm:$0xff]
    %v9002 = vld [vmem:[#allocation21 + $0x378] sm:$0xff]
    %v9003 = vld [vmem:[#allocation21 + $0x380] sm:$0xff]
    %v9004 = vld [vmem:[#allocation21 + $0x388] sm:$0xff]
    %v9005 = vld [vmem:[#allocation21 + $0x390] sm:$0xff]
    %v9006 = vld [vmem:[#allocation21 + $0x398] sm:$0xff]
    %v9007 = vld [vmem:[#allocation21 + $0x3a0] sm:$0xff]
    %v9008 = vld [vmem:[#allocation21 + $0x3a8] sm:$0xff]
    %v9009 = vld [vmem:[#allocation21 + $0x3b0] sm:$0xff]
    %v9010 = vld [vmem:[#allocation21 + $0x3b8] sm:$0xff]
    %v9011 = vld [vmem:[#allocation21 + $0x3c0] sm:$0xff]
    %v9012 = vld [vmem:[#allocation21 + $0x3c8] sm:$0xff]
    %v9013 = vld [vmem:[#allocation21 + $0x3d0] sm:$0xff]
    %v9014 = vld [vmem:[#allocation21 + $0x3d8] sm:$0xff]
    %v9015 = vld [vmem:[#allocation21 + $0x3e0] sm:$0xff]
    %v9016 = vld [vmem:[#allocation21 + $0x3e8] sm:$0xff]
    %v9017 = vld [vmem:[#allocation21 + $0x3f0] sm:$0xff]
    %v9018 = vld [vmem:[#allocation21 + $0x3f8] sm:$0xff]
    %v9019 = vld [vmem:[#allocation21 + $0x400] sm:$0xff]
    %v9020 = vld [vmem:[#allocation21 + $0x408] sm:$0xff]
    %v9021 = vld [vmem:[#allocation21 + $0x410] sm:$0xff]
    %v9022 = vld [vmem:[#allocation21 + $0x418] sm:$0xff]
    %v9023 = vld [vmem:[#allocation21 + $0x420] sm:$0xff]
    %v9024 = vld [vmem:[#allocation21 + $0x428] sm:$0xff]
    %v9025 = vld [vmem:[#allocation21 + $0x430] sm:$0xff]
    %v9026 = vld [vmem:[#allocation21 + $0x438] sm:$0xff]
    %v9027 = vld [vmem:[#allocation21 + $0x440] sm:$0xff]
    %v9028 = vld [vmem:[#allocation21 + $0x448] sm:$0xff]
    %v9029 = vld [vmem:[#allocation21 + $0x450] sm:$0xff]
    %v9030 = vld [vmem:[#allocation21 + $0x458] sm:$0xff]
    %v9031 = vld [vmem:[#allocation21 + $0x460] sm:$0xff]
    %v9032 = vld [vmem:[#allocation21 + $0x468] sm:$0xff]
    %v9033 = vld [vmem:[#allocation21 + $0x470] sm:$0xff]
    %v9034 = vld [vmem:[#allocation21 + $0x478] sm:$0xff]
    %v9035 = vld [vmem:[#allocation21 + $0x480] sm:$0xff]
    %v9036 = vld [vmem:[#allocation21 + $0x488] sm:$0xff]
    %v9037 = vld [vmem:[#allocation21 + $0x490] sm:$0xff]
    %v9038 = vld [vmem:[#allocation21 + $0x498] sm:$0xff]
    %v9039 = vld [vmem:[#allocation21 + $0x4a0] sm:$0xff]
    %v9040 = vld [vmem:[#allocation21 + $0x4a8] sm:$0xff]
    %v9041 = vld [vmem:[#allocation21 + $0x4b0] sm:$0xff]
    %v9042 = vld [vmem:[#allocation21 + $0x4b8] sm:$0xff]
    %v9043 = vld [vmem:[#allocation21 + $0x4c0] sm:$0xff]
    %v9044 = vld [vmem:[#allocation21 + $0x4c8] sm:$0xff]
    %v9045 = vld [vmem:[#allocation21 + $0x4d0] sm:$0xff]
    %v9046 = vld [vmem:[#allocation21 + $0x4d8] sm:$0xff]
    %v9047 = vld [vmem:[#allocation21 + $0x4e0] sm:$0xff]
    %v9048 = vld [vmem:[#allocation21 + $0x4e8] sm:$0xff]
    %v9049 = vld [vmem:[#allocation21 + $0x4f0] sm:$0xff]
    %v9050 = vld [vmem:[#allocation21 + $0x4f8] sm:$0xff]
    %v9051 = vld [vmem:[#allocation21 + $0x500] sm:$0xff]
    %v9052 = vld [vmem:[#allocation21 + $0x508] sm:$0xff]
    %v9053 = vld [vmem:[#allocation21 + $0x510] sm:$0xff]
    %v9054 = vld [vmem:[#allocation21 + $0x518] sm:$0xff]
    %v9055 = vld [vmem:[#allocation21 + $0x520] sm:$0xff]
    %v9056 = vld [vmem:[#allocation21 + $0x528] sm:$0xff]
    %v9057 = vld [vmem:[#allocation21 + $0x530] sm:$0xff]
    %v9058 = vld [vmem:[#allocation21 + $0x538] sm:$0xff]
    %v9059 = vld [vmem:[#allocation21 + $0x540] sm:$0xff]
    %v9060 = vld [vmem:[#allocation21 + $0x548] sm:$0xff]
    %v9061 = vld [vmem:[#allocation21 + $0x550] sm:$0xff]
    %v9062 = vld [vmem:[#allocation21 + $0x558] sm:$0xff]
    %v9063 = vld [vmem:[#allocation21 + $0x560] sm:$0xff]
    %v9064 = vld [vmem:[#allocation21 + $0x568] sm:$0xff]
    %v9065 = vld [vmem:[#allocation21 + $0x570] sm:$0xff]
    %v9066 = vld [vmem:[#allocation21 + $0x578] sm:$0xff]
    %v9067 = vld [vmem:[#allocation21 + $0x580] sm:$0xff]
    %v9068 = vld [vmem:[#allocation21 + $0x588] sm:$0xff]
    %v9069 = vld [vmem:[#allocation21 + $0x590] sm:$0xff]
    %v9070 = vld [vmem:[#allocation21 + $0x598] sm:$0xff]
    %v9071 = vld [vmem:[#allocation21 + $0x5a0] sm:$0xff]
    %v9072 = vld [vmem:[#allocation21 + $0x5a8] sm:$0xff]
    %v9073 = vld [vmem:[#allocation21 + $0x5b0] sm:$0xff]
    %v9074 = vld [vmem:[#allocation21 + $0x5b8] sm:$0xff]
    %v9075 = vld [vmem:[#allocation21 + $0x5c0] sm:$0xff]
    %v9076 = vld [vmem:[#allocation21 + $0x5c8] sm:$0xff]
    %v9077 = vld [vmem:[#allocation21 + $0x5d0] sm:$0xff]
    %v9078 = vld [vmem:[#allocation21 + $0x5d8] sm:$0xff]
    %v9079 = vld [vmem:[#allocation21 + $0x5e0] sm:$0xff]
    %v9080 = vld [vmem:[#allocation21 + $0x5e8] sm:$0xff]
    %v9081 = vld [vmem:[#allocation21 + $0x5f0] sm:$0xff]
    %v9082 = vld [vmem:[#allocation21 + $0x5f8] sm:$0xff]
    %v9083 = vld [vmem:[#allocation21 + $0x600] sm:$0xff]
    %v9084 = vld [vmem:[#allocation21 + $0x608] sm:$0xff]
    %v9085 = vld [vmem:[#allocation21 + $0x610] sm:$0xff]
    %v9086 = vld [vmem:[#allocation21 + $0x618] sm:$0xff]
    %v9087 = vld [vmem:[#allocation21 + $0x620] sm:$0xff]
    %v9088 = vld [vmem:[#allocation21 + $0x628] sm:$0xff]
    %v9089 = vld [vmem:[#allocation21 + $0x630] sm:$0xff]
    %v9090 = vld [vmem:[#allocation21 + $0x638] sm:$0xff]
    %v9091 = vld [vmem:[#allocation21 + $0x640] sm:$0xff]
    %v9092 = vld [vmem:[#allocation21 + $0x648] sm:$0xff]
    %v9093 = vld [vmem:[#allocation21 + $0x650] sm:$0xff]
    %v9094 = vld [vmem:[#allocation21 + $0x658] sm:$0xff]
    %v9095 = vld [vmem:[#allocation21 + $0x660] sm:$0xff]
    %v9096 = vld [vmem:[#allocation21 + $0x668] sm:$0xff]
    %v9097 = vld [vmem:[#allocation21 + $0x670] sm:$0xff]
    %v9098 = vld [vmem:[#allocation21 + $0x678] sm:$0xff]
    %v9099 = vld [vmem:[#allocation21 + $0x680] sm:$0xff]
    %v9100 = vld [vmem:[#allocation21 + $0x688] sm:$0xff]
    %v9101 = vld [vmem:[#allocation21 + $0x690] sm:$0xff]
    %v9102 = vld [vmem:[#allocation21 + $0x698] sm:$0xff]
    %v9103 = vld [vmem:[#allocation21 + $0x6a0] sm:$0xff]
    %v9104 = vld [vmem:[#allocation21 + $0x6a8] sm:$0xff]
    %v9105 = vld [vmem:[#allocation21 + $0x6b0] sm:$0xff]
    %v9106 = vld [vmem:[#allocation21 + $0x6b8] sm:$0xff]
    %v9107 = vld [vmem:[#allocation21 + $0x6c0] sm:$0xff]
    %v9108 = vld [vmem:[#allocation21 + $0x6c8] sm:$0xff]
    %v9109 = vld [vmem:[#allocation21 + $0x6d0] sm:$0xff]
    %v9110 = vld [vmem:[#allocation21 + $0x6d8] sm:$0xff]
    %v9111 = vld [vmem:[#allocation21 + $0x6e0] sm:$0xff]
    %v9112 = vld [vmem:[#allocation21 + $0x6e8] sm:$0xff]
    %v9113 = vld [vmem:[#allocation21 + $0x6f0] sm:$0xff]
    %v9114 = vld [vmem:[#allocation21 + $0x6f8] sm:$0xff]
    %v9115 = vld [vmem:[#allocation21 + $0x700] sm:$0xff]
    %v9116 = vld [vmem:[#allocation21 + $0x708] sm:$0xff]
    %v9117 = vld [vmem:[#allocation21 + $0x710] sm:$0xff]
    %v9118 = vld [vmem:[#allocation21 + $0x718] sm:$0xff]
    %v9119 = vld [vmem:[#allocation21 + $0x720] sm:$0xff]
    %v9120 = vld [vmem:[#allocation21 + $0x728] sm:$0xff]
    %v9121 = vld [vmem:[#allocation21 + $0x730] sm:$0xff]
    %v9122 = vld [vmem:[#allocation21 + $0x738] sm:$0xff]
    %v9123 = vld [vmem:[#allocation21 + $0x740] sm:$0xff]
    %v9124 = vld [vmem:[#allocation21 + $0x748] sm:$0xff]
    %v9125 = vld [vmem:[#allocation21 + $0x750] sm:$0xff]
    %v9126 = vld [vmem:[#allocation21 + $0x758] sm:$0xff]
    %v9127 = vld [vmem:[#allocation21 + $0x760] sm:$0xff]
    %v9128 = vld [vmem:[#allocation21 + $0x768] sm:$0xff]
    %v9129 = vld [vmem:[#allocation21 + $0x770] sm:$0xff]
    %v9130 = vld [vmem:[#allocation21 + $0x778] sm:$0xff]
    %v9131 = vld [vmem:[#allocation21 + $0x780] sm:$0xff]
    %v9132 = vld [vmem:[#allocation21 + $0x788] sm:$0xff]
    %v9133 = vld [vmem:[#allocation21 + $0x790] sm:$0xff]
    %v9134 = vld [vmem:[#allocation21 + $0x798] sm:$0xff]
    %v9135 = vld [vmem:[#allocation21 + $0x7a0] sm:$0xff]
    %v9136 = vld [vmem:[#allocation21 + $0x7a8] sm:$0xff]
    %v9137 = vld [vmem:[#allocation21 + $0x7b0] sm:$0xff]
    %v9138 = vld [vmem:[#allocation21 + $0x7b8] sm:$0xff]
    %v9139 = vld [vmem:[#allocation21 + $0x7c0] sm:$0xff]
    %v9140 = vld [vmem:[#allocation21 + $0x7c8] sm:$0xff]
    %v9141 = vld [vmem:[#allocation21 + $0x7d0] sm:$0xff]
    %v9142 = vld [vmem:[#allocation21 + $0x7d8] sm:$0xff]
    %v9143 = vld [vmem:[#allocation21 + $0x7e0] sm:$0xff]
    %v9144 = vld [vmem:[#allocation21 + $0x7e8] sm:$0xff]
    %v9145 = vld [vmem:[#allocation21 + $0x7f0] sm:$0xff]
    %v9146 = vld [vmem:[#allocation21 + $0x7f8] sm:$0xff]
    %v9147 = vld [vmem:[#allocation21 + $0x800] sm:$0xff]
    %v9148 = vld [vmem:[#allocation21 + $0x808] sm:$0xff]
    %v9149 = vld [vmem:[#allocation21 + $0x810] sm:$0xff]
    %v9150 = vld [vmem:[#allocation21 + $0x818] sm:$0xff]
    %v9151 = vld [vmem:[#allocation21 + $0x820] sm:$0xff]
    %v9152 = vld [vmem:[#allocation21 + $0x828] sm:$0xff]
    %v9153 = vld [vmem:[#allocation21 + $0x830] sm:$0xff]
    %v9154 = vld [vmem:[#allocation21 + $0x838] sm:$0xff]
    %v9155 = vld [vmem:[#allocation21 + $0x840] sm:$0xff]
    %v9156 = vld [vmem:[#allocation21 + $0x848] sm:$0xff]
    %v9157 = vld [vmem:[#allocation21 + $0x850] sm:$0xff]
    %v9158 = vld [vmem:[#allocation21 + $0x858] sm:$0xff]
    %v9159 = vld [vmem:[#allocation21 + $0x860] sm:$0xff]
    %v9160 = vld [vmem:[#allocation21 + $0x868] sm:$0xff]
    %v9161 = vld [vmem:[#allocation21 + $0x870] sm:$0xff]
    %v9162 = vld [vmem:[#allocation21 + $0x878] sm:$0xff]
    %v9163 = vld [vmem:[#allocation21 + $0x880] sm:$0xff]
    %v9164 = vld [vmem:[#allocation21 + $0x888] sm:$0xff]
    %v9165 = vld [vmem:[#allocation21 + $0x890] sm:$0xff]
    %v9166 = vld [vmem:[#allocation21 + $0x898] sm:$0xff]
    %v9167 = vld [vmem:[#allocation21 + $0x8a0] sm:$0xff]
    %v9168 = vld [vmem:[#allocation21 + $0x8a8] sm:$0xff]
    %v9169 = vld [vmem:[#allocation21 + $0x8b0] sm:$0xff]
    %v9170 = vld [vmem:[#allocation21 + $0x8b8] sm:$0xff]
    %v9171 = vld [vmem:[#allocation21 + $0x8c0] sm:$0xff]
    %v9172 = vld [vmem:[#allocation21 + $0x8c8] sm:$0xff]
    %v9173 = vld [vmem:[#allocation21 + $0x8d0] sm:$0xff]
    %v9174 = vld [vmem:[#allocation21 + $0x8d8] sm:$0xff]
    %v9175 = vld [vmem:[#allocation21 + $0x8e0] sm:$0xff]
    %v9176 = vld [vmem:[#allocation21 + $0x8e8] sm:$0xff]
    %v9177 = vld [vmem:[#allocation21 + $0x8f0] sm:$0xff]
    %v9178 = vld [vmem:[#allocation21 + $0x8f8] sm:$0xff]
    %v9179 = vld [vmem:[#allocation21 + $0x900] sm:$0xff]
    %v9180 = vld [vmem:[#allocation21 + $0x908] sm:$0xff]
    %v9181 = vld [vmem:[#allocation21 + $0x910] sm:$0xff]
    %v9182 = vld [vmem:[#allocation21 + $0x918] sm:$0xff]
    %v9183 = vld [vmem:[#allocation21 + $0x920] sm:$0xff]
    %v9184 = vld [vmem:[#allocation21 + $0x928] sm:$0xff]
    %v9185 = vld [vmem:[#allocation21 + $0x930] sm:$0xff]
    %v9186 = vld [vmem:[#allocation21 + $0x938] sm:$0xff]
    %v9187 = vld [vmem:[#allocation21 + $0x940] sm:$0xff]
    %v9188 = vld [vmem:[#allocation21 + $0x948] sm:$0xff]
    %v9189 = vld [vmem:[#allocation21 + $0x950] sm:$0xff]
    %v9190 = vld [vmem:[#allocation21 + $0x958] sm:$0xff]
    %v9191 = vld [vmem:[#allocation21 + $0x960] sm:$0xff]
    %v9192 = vld [vmem:[#allocation21 + $0x968] sm:$0xff]
    %v9193 = vld [vmem:[#allocation21 + $0x970] sm:$0xff]
    %v9194 = vld [vmem:[#allocation21 + $0x978] sm:$0xff]
    %v9195 = vld [vmem:[#allocation21 + $0x980] sm:$0xff]
    %v9196 = vld [vmem:[#allocation21 + $0x988] sm:$0xff]
    %v9197 = vld [vmem:[#allocation21 + $0x990] sm:$0xff]
    %v9198 = vld [vmem:[#allocation21 + $0x998] sm:$0xff]
    %v9199 = vld [vmem:[#allocation21 + $0x9a0] sm:$0xff]
    %v9200 = vld [vmem:[#allocation21 + $0x9a8] sm:$0xff]
    %v9201 = vld [vmem:[#allocation21 + $0x9b0] sm:$0xff]
    %v9202 = vld [vmem:[#allocation21 + $0x9b8] sm:$0xff]
    %v9203 = vld [vmem:[#allocation21 + $0x9c0] sm:$0xff]
    %v9204 = vld [vmem:[#allocation21 + $0x9c8] sm:$0xff]
    %v9205 = vld [vmem:[#allocation21 + $0x9d0] sm:$0xff]
    %v9206 = vld [vmem:[#allocation21 + $0x9d8] sm:$0xff]
    %v9207 = vld [vmem:[#allocation21 + $0x9e0] sm:$0xff]
    %v9208 = vld [vmem:[#allocation21 + $0x9e8] sm:$0xff]
    %v9209 = vld [vmem:[#allocation21 + $0x9f0] sm:$0xff]
    %v9210 = vld [vmem:[#allocation21 + $0x9f8] sm:$0xff]
    %v9211 = vld [vmem:[#allocation21 + $0xa00] sm:$0xff]
    %v9212 = vld [vmem:[#allocation21 + $0xa08] sm:$0xff]
    %v9213 = vld [vmem:[#allocation21 + $0xa10] sm:$0xff]
    %v9214 = vld [vmem:[#allocation21 + $0xa18] sm:$0xff]
    %v9215 = vld [vmem:[#allocation21 + $0xa20] sm:$0xff]
    %v9216 = vld [vmem:[#allocation21 + $0xa28] sm:$0xff]
    %v9217 = vld [vmem:[#allocation21 + $0xa30] sm:$0xff]
    %v9218 = vld [vmem:[#allocation21 + $0xa38] sm:$0xff]
    %v9219 = vld [vmem:[#allocation21 + $0xa40] sm:$0xff]
    %v9220 = vld [vmem:[#allocation21 + $0xa48] sm:$0xff]
    %v9221 = vld [vmem:[#allocation21 + $0xa50] sm:$0xff]
    %v9222 = vld [vmem:[#allocation21 + $0xa58] sm:$0xff]
    %v9223 = vld [vmem:[#allocation21 + $0xa60] sm:$0xff]
    %v9224 = vld [vmem:[#allocation21 + $0xa68] sm:$0xff]
    %v9225 = vld [vmem:[#allocation21 + $0xa70] sm:$0xff]
    %v9226 = vld [vmem:[#allocation21 + $0xa78] sm:$0xff]
    %v9227 = vld [vmem:[#allocation21 + $0xa80] sm:$0xff]
    %v9228 = vld [vmem:[#allocation21 + $0xa88] sm:$0xff]
    %v9229 = vld [vmem:[#allocation21 + $0xa90] sm:$0xff]
    %v9230 = vld [vmem:[#allocation21 + $0xa98] sm:$0xff]
    %v9231 = vld [vmem:[#allocation21 + $0xaa0] sm:$0xff]
    %v9232 = vld [vmem:[#allocation21 + $0xaa8] sm:$0xff]
    %v9233 = vld [vmem:[#allocation21 + $0xab0] sm:$0xff]
    %v9234 = vld [vmem:[#allocation21 + $0xab8] sm:$0xff]
    %v9235 = vld [vmem:[#allocation21 + $0xac0] sm:$0xff]
    %v9236 = vld [vmem:[#allocation21 + $0xac8] sm:$0xff]
    %v9237 = vld [vmem:[#allocation21 + $0xad0] sm:$0xff]
    %v9238 = vld [vmem:[#allocation21 + $0xad8] sm:$0xff]
    %v9239 = vld [vmem:[#allocation21 + $0xae0] sm:$0xff]
    %v9240 = vld [vmem:[#allocation21 + $0xae8] sm:$0xff]
    %v9241 = vld [vmem:[#allocation21 + $0xaf0] sm:$0xff]
    %v9242 = vld [vmem:[#allocation21 + $0xaf8] sm:$0xff]
    %v9243 = vld [vmem:[#allocation21 + $0xb00] sm:$0xff]
    %v9244 = vld [vmem:[#allocation21 + $0xb08] sm:$0xff]
    %v9245 = vld [vmem:[#allocation21 + $0xb10] sm:$0xff]
    %v9246 = vld [vmem:[#allocation21 + $0xb18] sm:$0xff]
    %v9247 = vld [vmem:[#allocation21 + $0xb20] sm:$0xff]
    %v9248 = vld [vmem:[#allocation21 + $0xb28] sm:$0xff]
    %v9249 = vld [vmem:[#allocation21 + $0xb30] sm:$0xff]
    %v9250 = vld [vmem:[#allocation21 + $0xb38] sm:$0xff]
    %v9251 = vld [vmem:[#allocation21 + $0xb40] sm:$0xff]
    %v9252 = vld [vmem:[#allocation21 + $0xb48] sm:$0xff]
    %v9253 = vld [vmem:[#allocation21 + $0xb50] sm:$0xff]
    %v9254 = vld [vmem:[#allocation21 + $0xb58] sm:$0xff]
    %v9255 = vld [vmem:[#allocation21 + $0xb60] sm:$0xff]
    %v9256 = vld [vmem:[#allocation21 + $0xb68] sm:$0xff]
    %v9257 = vld [vmem:[#allocation21 + $0xb70] sm:$0xff]
    %v9258 = vld [vmem:[#allocation21 + $0xb78] sm:$0xff]
    %v9259 = vld [vmem:[#allocation21 + $0xb80] sm:$0xff]
    %v9260 = vld [vmem:[#allocation21 + $0xb88] sm:$0xff]
    %v9261 = vld [vmem:[#allocation21 + $0xb90] sm:$0xff]
    %v9262 = vld [vmem:[#allocation21 + $0xb98] sm:$0xff]
    %v9263 = vld [vmem:[#allocation21 + $0xba0] sm:$0xff]
    %v9264 = vld [vmem:[#allocation21 + $0xba8] sm:$0xff]
    %v9265 = vld [vmem:[#allocation21 + $0xbb0] sm:$0xff]
    %v9266 = vld [vmem:[#allocation21 + $0xbb8] sm:$0xff]
    %v9267 = vld [vmem:[#allocation21 + $0xbc0] sm:$0xff]
    %v9268 = vld [vmem:[#allocation21 + $0xbc8] sm:$0xff]
    %v9269 = vld [vmem:[#allocation21 + $0xbd0] sm:$0xff]
    %v9270 = vld [vmem:[#allocation21 + $0xbd8] sm:$0xff]
    %v9271 = vld [vmem:[#allocation21 + $0xbe0] sm:$0xff]
    %v9272 = vld [vmem:[#allocation21 + $0xbe8] sm:$0xff]
    %v9273 = vld [vmem:[#allocation21 + $0xbf0] sm:$0xff]
    %v9274 = vld [vmem:[#allocation21 + $0xbf8] sm:$0xff]
    %v9275 = vld [vmem:[#allocation21 + $0xc00] sm:$0xff]
    %v9276 = vld [vmem:[#allocation21 + $0xc08] sm:$0xff]
    %v9277 = vld [vmem:[#allocation21 + $0xc10] sm:$0xff]
    %v9278 = vld [vmem:[#allocation21 + $0xc18] sm:$0xff]
    %v9279 = vld [vmem:[#allocation21 + $0xc20] sm:$0xff]
    %v9280 = vld [vmem:[#allocation21 + $0xc28] sm:$0xff]
    %v9281 = vld [vmem:[#allocation21 + $0xc30] sm:$0xff]
    %v9282 = vld [vmem:[#allocation21 + $0xc38] sm:$0xff]
    %v9283 = vld [vmem:[#allocation21 + $0xc40] sm:$0xff]
    %v9284 = vld [vmem:[#allocation21 + $0xc48] sm:$0xff]
    %v9285 = vld [vmem:[#allocation21 + $0xc50] sm:$0xff]
    %v9286 = vld [vmem:[#allocation21 + $0xc58] sm:$0xff]
    %v9287 = vld [vmem:[#allocation21 + $0xc60] sm:$0xff]
    %v9288 = vld [vmem:[#allocation21 + $0xc68] sm:$0xff]
    %v9289 = vld [vmem:[#allocation21 + $0xc70] sm:$0xff]
    %v9290 = vld [vmem:[#allocation21 + $0xc78] sm:$0xff]
    %v9291 = vld [vmem:[#allocation21 + $0xc80] sm:$0xff]
    %v9292 = vld [vmem:[#allocation21 + $0xc88] sm:$0xff]
    %v9293 = vld [vmem:[#allocation21 + $0xc90] sm:$0xff]
    %v9294 = vld [vmem:[#allocation21 + $0xc98] sm:$0xff]
    %v9295 = vld [vmem:[#allocation21 + $0xca0] sm:$0xff]
    %v9296 = vld [vmem:[#allocation21 + $0xca8] sm:$0xff]
    %v9297 = vld [vmem:[#allocation21 + $0xcb0] sm:$0xff]
    %v9298 = vld [vmem:[#allocation21 + $0xcb8] sm:$0xff]
    %v9299 = vld [vmem:[#allocation21 + $0xcc0] sm:$0xff]
    %v9300 = vld [vmem:[#allocation21 + $0xcc8] sm:$0xff]
    %v9301 = vld [vmem:[#allocation21 + $0xcd0] sm:$0xff]
    %v9302 = vld [vmem:[#allocation21 + $0xcd8] sm:$0xff]
    %v9303 = vld [vmem:[#allocation21 + $0xce0] sm:$0xff]
    %v9304 = vld [vmem:[#allocation21 + $0xce8] sm:$0xff]
    %v9305 = vld [vmem:[#allocation21 + $0xcf0] sm:$0xff]
    %v9306 = vld [vmem:[#allocation21 + $0xcf8] sm:$0xff]
    %v9307 = vld [vmem:[#allocation21 + $0xd00] sm:$0xff]
    %v9308 = vld [vmem:[#allocation21 + $0xd08] sm:$0xff]
    %v9309 = vld [vmem:[#allocation21 + $0xd10] sm:$0xff]
    %v9310 = vld [vmem:[#allocation21 + $0xd18] sm:$0xff]
    %v9311 = vld [vmem:[#allocation21 + $0xd20] sm:$0xff]
    %v9312 = vld [vmem:[#allocation21 + $0xd28] sm:$0xff]
    %v9313 = vld [vmem:[#allocation21 + $0xd30] sm:$0xff]
    %v9314 = vld [vmem:[#allocation21 + $0xd38] sm:$0xff]
    %v9315 = vld [vmem:[#allocation21 + $0xd40] sm:$0xff]
    %v9316 = vld [vmem:[#allocation21 + $0xd48] sm:$0xff]
    %v9317 = vld [vmem:[#allocation21 + $0xd50] sm:$0xff]
    %v9318 = vld [vmem:[#allocation21 + $0xd58] sm:$0xff]
    %v9319 = vld [vmem:[#allocation21 + $0xd60] sm:$0xff]
    %v9320 = vld [vmem:[#allocation21 + $0xd68] sm:$0xff]
    %v9321 = vld [vmem:[#allocation21 + $0xd70] sm:$0xff]
    %v9322 = vld [vmem:[#allocation21 + $0xd78] sm:$0xff]
    %v9323 = vld [vmem:[#allocation21 + $0xd80] sm:$0xff]
    %v9324 = vld [vmem:[#allocation21 + $0xd88] sm:$0xff]
    %v9325 = vld [vmem:[#allocation21 + $0xd90] sm:$0xff]
    %v9326 = vld [vmem:[#allocation21 + $0xd98] sm:$0xff]
    %v9327 = vld [vmem:[#allocation21 + $0xda0] sm:$0xff]
    %v9328 = vld [vmem:[#allocation21 + $0xda8] sm:$0xff]
    %v9329 = vld [vmem:[#allocation21 + $0xdb0] sm:$0xff]
    %v9330 = vld [vmem:[#allocation21 + $0xdb8] sm:$0xff]
    %v9331 = vld [vmem:[#allocation21 + $0xdc0] sm:$0xff]
    %v9332 = vld [vmem:[#allocation21 + $0xdc8] sm:$0xff]
    %v9333 = vld [vmem:[#allocation21 + $0xdd0] sm:$0xff]
    %v9334 = vld [vmem:[#allocation21 + $0xdd8] sm:$0xff]
    %v9335 = vld [vmem:[#allocation21 + $0xde0] sm:$0xff]
    %v9336 = vld [vmem:[#allocation21 + $0xde8] sm:$0xff]
    %v9337 = vld [vmem:[#allocation21 + $0xdf0] sm:$0xff]
    %v9338 = vld [vmem:[#allocation21 + $0xdf8] sm:$0xff]
    %v9339 = vld [vmem:[#allocation21 + $0xe00] sm:$0xff]
    %v9340 = vld [vmem:[#allocation21 + $0xe08] sm:$0xff]
    %v9341 = vld [vmem:[#allocation21 + $0xe10] sm:$0xff]
    %v9342 = vld [vmem:[#allocation21 + $0xe18] sm:$0xff]
    %v9343 = vld [vmem:[#allocation21 + $0xe20] sm:$0xff]
    %v9344 = vld [vmem:[#allocation21 + $0xe28] sm:$0xff]
    %v9345 = vld [vmem:[#allocation21 + $0xe30] sm:$0xff]
    %v9346 = vld [vmem:[#allocation21 + $0xe38] sm:$0xff]
    %v9347 = vld [vmem:[#allocation21 + $0xe40] sm:$0xff]
    %v9348 = vld [vmem:[#allocation21 + $0xe48] sm:$0xff]
    %v9349 = vld [vmem:[#allocation21 + $0xe50] sm:$0xff]
    %v9350 = vld [vmem:[#allocation21 + $0xe58] sm:$0xff]
    %v9351 = vld [vmem:[#allocation21 + $0xe60] sm:$0xff]
    %v9352 = vld [vmem:[#allocation21 + $0xe68] sm:$0xff]
    %v9353 = vld [vmem:[#allocation21 + $0xe70] sm:$0xff]
    %v9354 = vld [vmem:[#allocation21 + $0xe78] sm:$0xff]
    %v9355 = vld [vmem:[#allocation21 + $0xe80] sm:$0xff]
    %v9356 = vld [vmem:[#allocation21 + $0xe88] sm:$0xff]
    %v9357 = vld [vmem:[#allocation21 + $0xe90] sm:$0xff]
    %v9358 = vld [vmem:[#allocation21 + $0xe98] sm:$0xff]
    %v9359 = vld [vmem:[#allocation21 + $0xea0] sm:$0xff]
    %v9360 = vld [vmem:[#allocation21 + $0xea8] sm:$0xff]
    %v9361 = vld [vmem:[#allocation21 + $0xeb0] sm:$0xff]
    %v9362 = vld [vmem:[#allocation21 + $0xeb8] sm:$0xff]
    %v9363 = vld [vmem:[#allocation21 + $0xec0] sm:$0xff]
    %v9364 = vld [vmem:[#allocation21 + $0xec8] sm:$0xff]
    %v9365 = vld [vmem:[#allocation21 + $0xed0] sm:$0xff]
    %v9366 = vld [vmem:[#allocation21 + $0xed8] sm:$0xff]
    %v9367 = vld [vmem:[#allocation21 + $0xee0] sm:$0xff]
    %v9368 = vld [vmem:[#allocation21 + $0xee8] sm:$0xff]
    %v9369 = vld [vmem:[#allocation21 + $0xef0] sm:$0xff]
    %v9370 = vld [vmem:[#allocation21 + $0xef8] sm:$0xff]
    %v9371 = vld [vmem:[#allocation21 + $0xf00] sm:$0xff]
    %v9372 = vld [vmem:[#allocation21 + $0xf08] sm:$0xff]
    %v9373 = vld [vmem:[#allocation21 + $0xf10] sm:$0xff]
    %v9374 = vld [vmem:[#allocation21 + $0xf18] sm:$0xff]
    %v9375 = vld [vmem:[#allocation21 + $0xf20] sm:$0xff]
    %v9376 = vld [vmem:[#allocation21 + $0xf28] sm:$0xff]
    %v9377 = vld [vmem:[#allocation21 + $0xf30] sm:$0xff]
    %v9378 = vld [vmem:[#allocation21 + $0xf38] sm:$0xff]
    %v9379 = vld [vmem:[#allocation21 + $0xf40] sm:$0xff]
    %v9380 = vld [vmem:[#allocation21 + $0xf48] sm:$0xff]
    %v9381 = vld [vmem:[#allocation21 + $0xf50] sm:$0xff]
    %v9382 = vld [vmem:[#allocation21 + $0xf58] sm:$0xff]
    %v9383 = vld [vmem:[#allocation21 + $0xf60] sm:$0xff]
    %v9384 = vld [vmem:[#allocation21 + $0xf68] sm:$0xff]
    %v9385 = vld [vmem:[#allocation21 + $0xf70] sm:$0xff]
    %v9386 = vld [vmem:[#allocation21 + $0xf78] sm:$0xff]
    %v9387 = vld [vmem:[#allocation21 + $0xf80] sm:$0xff]
    %v9388 = vld [vmem:[#allocation21 + $0xf88] sm:$0xff]
    %v9389 = vld [vmem:[#allocation21 + $0xf90] sm:$0xff]
    %v9390 = vld [vmem:[#allocation21 + $0xf98] sm:$0xff]
    %v9391 = vld [vmem:[#allocation21 + $0xfa0] sm:$0xff]
    %v9392 = vld [vmem:[#allocation21 + $0xfa8] sm:$0xff]
    %v9393 = vld [vmem:[#allocation21 + $0xfb0] sm:$0xff]
    %v9394 = vld [vmem:[#allocation21 + $0xfb8] sm:$0xff]
    %v9395 = vld [vmem:[#allocation21 + $0xfc0] sm:$0xff]
    %v9396 = vld [vmem:[#allocation21 + $0xfc8] sm:$0xff]
    %v9397 = vld [vmem:[#allocation21 + $0xfd0] sm:$0xff]
    %v9398 = vld [vmem:[#allocation21 + $0xfd8] sm:$0xff]
    %v9399 = vld [vmem:[#allocation21 + $0xfe0] sm:$0xff]
    %v9400 = vld [vmem:[#allocation21 + $0xfe8] sm:$0xff]
    %v9401 = vld [vmem:[#allocation21 + $0xff0] sm:$0xff]
    %v9402 = vld [vmem:[#allocation21 + $0xff8] sm:$0xff]
    %v9403 = vld [vmem:[#allocation22] sm:$0xff]
    %v9405 = vlaneseq
    %v9406 = vshrl.u32 %v9405, 7
    %v9407 = vsub.s32 0, %v9406
    %v9408 = vrot.slane %v9403, %v9407
    %v9409 = vlaneseq
    %v9410 = vshrl.u32 %v9409, 7
    %v9411 = vsub.s32 1, %v9410
    %v9412 = vrot.slane %v9403, %v9411
    %v9413 = vlaneseq
    %v9414 = vshrl.u32 %v9413, 7
    %v9415 = vsub.s32 2, %v9414
    %v9416 = vrot.slane %v9403, %v9415
    %v9417 = vlaneseq
    %v9418 = vshrl.u32 %v9417, 7
    %v9419 = vsub.s32 3, %v9418
    %v9420 = vrot.slane %v9403, %v9419
    %v9421 = vlaneseq
    %v9422 = vshrl.u32 %v9421, 7
    %v9423 = vsub.s32 4, %v9422
    %v9424 = vrot.slane %v9403, %v9423
    %v9425 = vlaneseq
    %v9426 = vshrl.u32 %v9425, 7
    %v9427 = vsub.s32 5, %v9426
    %v9428 = vrot.slane %v9403, %v9427
    %v9429 = vlaneseq
    %v9430 = vshrl.u32 %v9429, 7
    %v9431 = vsub.s32 6, %v9430
    %v9432 = vrot.slane %v9403, %v9431
    %v9433 = vlaneseq
    %v9434 = vshrl.u32 %v9433, 7
    %v9435 = vsub.s32 7, %v9434
    %v9436 = vrot.slane %v9403, %v9435
    %v9957 = vunpack.c.l.b16 %v8891
    %v9958 = vunpack.c.h.b16 %v8891
    %v9959 = vunpack.c.l.b16 %v8892
    %v9960 = vunpack.c.h.b16 %v8892
    %v9961 = vunpack.c.l.b16 %v8893
    %v9962 = vunpack.c.h.b16 %v8893
    %v9963 = vunpack.c.l.b16 %v8894
    %v9964 = vunpack.c.h.b16 %v8894
    %v9965 = vunpack.c.l.b16 %v8895
    %v9966 = vunpack.c.h.b16 %v8895
    %v9967 = vunpack.c.l.b16 %v8896
    %v9968 = vunpack.c.h.b16 %v8896
    %v9969 = vunpack.c.l.b16 %v8897
    %v9970 = vunpack.c.h.b16 %v8897
    %v9971 = vunpack.c.l.b16 %v8898
    %v9972 = vunpack.c.h.b16 %v8898
    %v9973 = vunpack.c.l.b16 %v8899
    %v9974 = vunpack.c.h.b16 %v8899
    %v9975 = vunpack.c.l.b16 %v8900
    %v9976 = vunpack.c.h.b16 %v8900
    %v9977 = vunpack.c.l.b16 %v8901
    %v9978 = vunpack.c.h.b16 %v8901
    %v9979 = vunpack.c.l.b16 %v8902
    %v9980 = vunpack.c.h.b16 %v8902
    %v9981 = vunpack.c.l.b16 %v8903
    %v9982 = vunpack.c.h.b16 %v8903
    %v9983 = vunpack.c.l.b16 %v8904
    %v9984 = vunpack.c.h.b16 %v8904
    %v9985 = vunpack.c.l.b16 %v8905
    %v9986 = vunpack.c.h.b16 %v8905
    %v9987 = vunpack.c.l.b16 %v8906
    %v9988 = vunpack.c.h.b16 %v8906
    %v9989 = vunpack.c.l.b16 %v8907
    %v9990 = vunpack.c.h.b16 %v8907
    %v9991 = vunpack.c.l.b16 %v8908
    %v9992 = vunpack.c.h.b16 %v8908
    %v9993 = vunpack.c.l.b16 %v8909
    %v9994 = vunpack.c.h.b16 %v8909
    %v9995 = vunpack.c.l.b16 %v8910
    %v9996 = vunpack.c.h.b16 %v8910
    %v9997 = vunpack.c.l.b16 %v8911
    %v9998 = vunpack.c.h.b16 %v8911
    %v9999 = vunpack.c.l.b16 %v8912
    %v10000 = vunpack.c.h.b16 %v8912
    %v10001 = vunpack.c.l.b16 %v8913
    %v10002 = vunpack.c.h.b16 %v8913
    %v10003 = vunpack.c.l.b16 %v8914
    %v10004 = vunpack.c.h.b16 %v8914
    %v10005 = vunpack.c.l.b16 %v8915
    %v10006 = vunpack.c.h.b16 %v8915
    %v10007 = vunpack.c.l.b16 %v8916
    %v10008 = vunpack.c.h.b16 %v8916
    %v10009 = vunpack.c.l.b16 %v8917
    %v10010 = vunpack.c.h.b16 %v8917
    %v10011 = vunpack.c.l.b16 %v8918
    %v10012 = vunpack.c.h.b16 %v8918
    %v10013 = vunpack.c.l.b16 %v8919
    %v10014 = vunpack.c.h.b16 %v8919
    %v10015 = vunpack.c.l.b16 %v8920
    %v10016 = vunpack.c.h.b16 %v8920
    %v10017 = vunpack.c.l.b16 %v8921
    %v10018 = vunpack.c.h.b16 %v8921
    %v10019 = vunpack.c.l.b16 %v8922
    %v10020 = vunpack.c.h.b16 %v8922
    %v10021 = vunpack.c.l.b16 %v8923
    %v10022 = vunpack.c.h.b16 %v8923
    %v10023 = vunpack.c.l.b16 %v8924
    %v10024 = vunpack.c.h.b16 %v8924
    %v10025 = vunpack.c.l.b16 %v8925
    %v10026 = vunpack.c.h.b16 %v8925
    %v10027 = vunpack.c.l.b16 %v8926
    %v10028 = vunpack.c.h.b16 %v8926
    %v10029 = vunpack.c.l.b16 %v8927
    %v10030 = vunpack.c.h.b16 %v8927
    %v10031 = vunpack.c.l.b16 %v8928
    %v10032 = vunpack.c.h.b16 %v8928
    %v10033 = vunpack.c.l.b16 %v8929
    %v10034 = vunpack.c.h.b16 %v8929
    %v10035 = vunpack.c.l.b16 %v8930
    %v10036 = vunpack.c.h.b16 %v8930
    %v10037 = vunpack.c.l.b16 %v8931
    %v10038 = vunpack.c.h.b16 %v8931
    %v10039 = vunpack.c.l.b16 %v8932
    %v10040 = vunpack.c.h.b16 %v8932
    %v10041 = vunpack.c.l.b16 %v8933
    %v10042 = vunpack.c.h.b16 %v8933
    %v10043 = vunpack.c.l.b16 %v8934
    %v10044 = vunpack.c.h.b16 %v8934
    %v10045 = vunpack.c.l.b16 %v8935
    %v10046 = vunpack.c.h.b16 %v8935
    %v10047 = vunpack.c.l.b16 %v8936
    %v10048 = vunpack.c.h.b16 %v8936
    %v10049 = vunpack.c.l.b16 %v8937
    %v10050 = vunpack.c.h.b16 %v8937
    %v10051 = vunpack.c.l.b16 %v8938
    %v10052 = vunpack.c.h.b16 %v8938
    %v10053 = vunpack.c.l.b16 %v8939
    %v10054 = vunpack.c.h.b16 %v8939
    %v10055 = vunpack.c.l.b16 %v8940
    %v10056 = vunpack.c.h.b16 %v8940
    %v10057 = vunpack.c.l.b16 %v8941
    %v10058 = vunpack.c.h.b16 %v8941
    %v10059 = vunpack.c.l.b16 %v8942
    %v10060 = vunpack.c.h.b16 %v8942
    %v10061 = vunpack.c.l.b16 %v8943
    %v10062 = vunpack.c.h.b16 %v8943
    %v10063 = vunpack.c.l.b16 %v8944
    %v10064 = vunpack.c.h.b16 %v8944
    %v10065 = vunpack.c.l.b16 %v8945
    %v10066 = vunpack.c.h.b16 %v8945
    %v10067 = vunpack.c.l.b16 %v8946
    %v10068 = vunpack.c.h.b16 %v8946
    %v10069 = vunpack.c.l.b16 %v8947
    %v10070 = vunpack.c.h.b16 %v8947
    %v10071 = vunpack.c.l.b16 %v8948
    %v10072 = vunpack.c.h.b16 %v8948
    %v10073 = vunpack.c.l.b16 %v8949
    %v10074 = vunpack.c.h.b16 %v8949
    %v10075 = vunpack.c.l.b16 %v8950
    %v10076 = vunpack.c.h.b16 %v8950
    %v10077 = vunpack.c.l.b16 %v8951
    %v10078 = vunpack.c.h.b16 %v8951
    %v10079 = vunpack.c.l.b16 %v8952
    %v10080 = vunpack.c.h.b16 %v8952
    %v10081 = vunpack.c.l.b16 %v8953
    %v10082 = vunpack.c.h.b16 %v8953
    %v10083 = vunpack.c.l.b16 %v8954
    %v10084 = vunpack.c.h.b16 %v8954
    %v10085 = vunpack.c.l.b16 %v8955
    %v10086 = vunpack.c.h.b16 %v8955
    %v10087 = vunpack.c.l.b16 %v8956
    %v10088 = vunpack.c.h.b16 %v8956
    %v10089 = vunpack.c.l.b16 %v8957
    %v10090 = vunpack.c.h.b16 %v8957
    %v10091 = vunpack.c.l.b16 %v8958
    %v10092 = vunpack.c.h.b16 %v8958
    %v10093 = vunpack.c.l.b16 %v8959
    %v10094 = vunpack.c.h.b16 %v8959
    %v10095 = vunpack.c.l.b16 %v8960
    %v10096 = vunpack.c.h.b16 %v8960
    %v10097 = vunpack.c.l.b16 %v8961
    %v10098 = vunpack.c.h.b16 %v8961
    %v10099 = vunpack.c.l.b16 %v8962
    %v10100 = vunpack.c.h.b16 %v8962
    %v10101 = vunpack.c.l.b16 %v8963
    %v10102 = vunpack.c.h.b16 %v8963
    %v10103 = vunpack.c.l.b16 %v8964
    %v10104 = vunpack.c.h.b16 %v8964
    %v10105 = vunpack.c.l.b16 %v8965
    %v10106 = vunpack.c.h.b16 %v8965
    %v10107 = vunpack.c.l.b16 %v8966
    %v10108 = vunpack.c.h.b16 %v8966
    %v10109 = vunpack.c.l.b16 %v8967
    %v10110 = vunpack.c.h.b16 %v8967
    %v10111 = vunpack.c.l.b16 %v8968
    %v10112 = vunpack.c.h.b16 %v8968
    %v10113 = vunpack.c.l.b16 %v8969
    %v10114 = vunpack.c.h.b16 %v8969
    %v10115 = vunpack.c.l.b16 %v8970
    %v10116 = vunpack.c.h.b16 %v8970
    %v10117 = vunpack.c.l.b16 %v8971
    %v10118 = vunpack.c.h.b16 %v8971
    %v10119 = vunpack.c.l.b16 %v8972
    %v10120 = vunpack.c.h.b16 %v8972
    %v10121 = vunpack.c.l.b16 %v8973
    %v10122 = vunpack.c.h.b16 %v8973
    %v10123 = vunpack.c.l.b16 %v8974
    %v10124 = vunpack.c.h.b16 %v8974
    %v10125 = vunpack.c.l.b16 %v8975
    %v10126 = vunpack.c.h.b16 %v8975
    %v10127 = vunpack.c.l.b16 %v8976
    %v10128 = vunpack.c.h.b16 %v8976
    %v10129 = vunpack.c.l.b16 %v8977
    %v10130 = vunpack.c.h.b16 %v8977
    %v10131 = vunpack.c.l.b16 %v8978
    %v10132 = vunpack.c.h.b16 %v8978
    %v10133 = vunpack.c.l.b16 %v8979
    %v10134 = vunpack.c.h.b16 %v8979
    %v10135 = vunpack.c.l.b16 %v8980
    %v10136 = vunpack.c.h.b16 %v8980
    %v10137 = vunpack.c.l.b16 %v8981
    %v10138 = vunpack.c.h.b16 %v8981
    %v10139 = vunpack.c.l.b16 %v8982
    %v10140 = vunpack.c.h.b16 %v8982
    %v10141 = vunpack.c.l.b16 %v8983
    %v10142 = vunpack.c.h.b16 %v8983
    %v10143 = vunpack.c.l.b16 %v8984
    %v10144 = vunpack.c.h.b16 %v8984
    %v10145 = vunpack.c.l.b16 %v8985
    %v10146 = vunpack.c.h.b16 %v8985
    %v10147 = vunpack.c.l.b16 %v8986
    %v10148 = vunpack.c.h.b16 %v8986
    %v10149 = vunpack.c.l.b16 %v8987
    %v10150 = vunpack.c.h.b16 %v8987
    %v10151 = vunpack.c.l.b16 %v8988
    %v10152 = vunpack.c.h.b16 %v8988
    %v10153 = vunpack.c.l.b16 %v8989
    %v10154 = vunpack.c.h.b16 %v8989
    %v10155 = vunpack.c.l.b16 %v8990
    %v10156 = vunpack.c.h.b16 %v8990
    %v10157 = vunpack.c.l.b16 %v8991
    %v10158 = vunpack.c.h.b16 %v8991
    %v10159 = vunpack.c.l.b16 %v8992
    %v10160 = vunpack.c.h.b16 %v8992
    %v10161 = vunpack.c.l.b16 %v8993
    %v10162 = vunpack.c.h.b16 %v8993
    %v10163 = vunpack.c.l.b16 %v8994
    %v10164 = vunpack.c.h.b16 %v8994
    %v10165 = vunpack.c.l.b16 %v8995
    %v10166 = vunpack.c.h.b16 %v8995
    %v10167 = vunpack.c.l.b16 %v8996
    %v10168 = vunpack.c.h.b16 %v8996
    %v10169 = vunpack.c.l.b16 %v8997
    %v10170 = vunpack.c.h.b16 %v8997
    %v10171 = vunpack.c.l.b16 %v8998
    %v10172 = vunpack.c.h.b16 %v8998
    %v10173 = vunpack.c.l.b16 %v8999
    %v10174 = vunpack.c.h.b16 %v8999
    %v10175 = vunpack.c.l.b16 %v9000
    %v10176 = vunpack.c.h.b16 %v9000
    %v10177 = vunpack.c.l.b16 %v9001
    %v10178 = vunpack.c.h.b16 %v9001
    %v10179 = vunpack.c.l.b16 %v9002
    %v10180 = vunpack.c.h.b16 %v9002
    %v10181 = vunpack.c.l.b16 %v9003
    %v10182 = vunpack.c.h.b16 %v9003
    %v10183 = vunpack.c.l.b16 %v9004
    %v10184 = vunpack.c.h.b16 %v9004
    %v10185 = vunpack.c.l.b16 %v9005
    %v10186 = vunpack.c.h.b16 %v9005
    %v10187 = vunpack.c.l.b16 %v9006
    %v10188 = vunpack.c.h.b16 %v9006
    %v10189 = vunpack.c.l.b16 %v9007
    %v10190 = vunpack.c.h.b16 %v9007
    %v10191 = vunpack.c.l.b16 %v9008
    %v10192 = vunpack.c.h.b16 %v9008
    %v10193 = vunpack.c.l.b16 %v9009
    %v10194 = vunpack.c.h.b16 %v9009
    %v10195 = vunpack.c.l.b16 %v9010
    %v10196 = vunpack.c.h.b16 %v9010
    %v10197 = vunpack.c.l.b16 %v9011
    %v10198 = vunpack.c.h.b16 %v9011
    %v10199 = vunpack.c.l.b16 %v9012
    %v10200 = vunpack.c.h.b16 %v9012
    %v10201 = vunpack.c.l.b16 %v9013
    %v10202 = vunpack.c.h.b16 %v9013
    %v10203 = vunpack.c.l.b16 %v9014
    %v10204 = vunpack.c.h.b16 %v9014
    %v10205 = vunpack.c.l.b16 %v9015
    %v10206 = vunpack.c.h.b16 %v9015
    %v10207 = vunpack.c.l.b16 %v9016
    %v10208 = vunpack.c.h.b16 %v9016
    %v10209 = vunpack.c.l.b16 %v9017
    %v10210 = vunpack.c.h.b16 %v9017
    %v10211 = vunpack.c.l.b16 %v9018
    %v10212 = vunpack.c.h.b16 %v9018
    %v10213 = vunpack.c.l.b16 %v9019
    %v10214 = vunpack.c.h.b16 %v9019
    %v10215 = vunpack.c.l.b16 %v9020
    %v10216 = vunpack.c.h.b16 %v9020
    %v10217 = vunpack.c.l.b16 %v9021
    %v10218 = vunpack.c.h.b16 %v9021
    %v10219 = vunpack.c.l.b16 %v9022
    %v10220 = vunpack.c.h.b16 %v9022
    %v10221 = vunpack.c.l.b16 %v9023
    %v10222 = vunpack.c.h.b16 %v9023
    %v10223 = vunpack.c.l.b16 %v9024
    %v10224 = vunpack.c.h.b16 %v9024
    %v10225 = vunpack.c.l.b16 %v9025
    %v10226 = vunpack.c.h.b16 %v9025
    %v10227 = vunpack.c.l.b16 %v9026
    %v10228 = vunpack.c.h.b16 %v9026
    %v10229 = vunpack.c.l.b16 %v9027
    %v10230 = vunpack.c.h.b16 %v9027
    %v10231 = vunpack.c.l.b16 %v9028
    %v10232 = vunpack.c.h.b16 %v9028
    %v10233 = vunpack.c.l.b16 %v9029
    %v10234 = vunpack.c.h.b16 %v9029
    %v10235 = vunpack.c.l.b16 %v9030
    %v10236 = vunpack.c.h.b16 %v9030
    %v10237 = vunpack.c.l.b16 %v9031
    %v10238 = vunpack.c.h.b16 %v9031
    %v10239 = vunpack.c.l.b16 %v9032
    %v10240 = vunpack.c.h.b16 %v9032
    %v10241 = vunpack.c.l.b16 %v9033
    %v10242 = vunpack.c.h.b16 %v9033
    %v10243 = vunpack.c.l.b16 %v9034
    %v10244 = vunpack.c.h.b16 %v9034
    %v10245 = vunpack.c.l.b16 %v9035
    %v10246 = vunpack.c.h.b16 %v9035
    %v10247 = vunpack.c.l.b16 %v9036
    %v10248 = vunpack.c.h.b16 %v9036
    %v10249 = vunpack.c.l.b16 %v9037
    %v10250 = vunpack.c.h.b16 %v9037
    %v10251 = vunpack.c.l.b16 %v9038
    %v10252 = vunpack.c.h.b16 %v9038
    %v10253 = vunpack.c.l.b16 %v9039
    %v10254 = vunpack.c.h.b16 %v9039
    %v10255 = vunpack.c.l.b16 %v9040
    %v10256 = vunpack.c.h.b16 %v9040
    %v10257 = vunpack.c.l.b16 %v9041
    %v10258 = vunpack.c.h.b16 %v9041
    %v10259 = vunpack.c.l.b16 %v9042
    %v10260 = vunpack.c.h.b16 %v9042
    %v10261 = vunpack.c.l.b16 %v9043
    %v10262 = vunpack.c.h.b16 %v9043
    %v10263 = vunpack.c.l.b16 %v9044
    %v10264 = vunpack.c.h.b16 %v9044
    %v10265 = vunpack.c.l.b16 %v9045
    %v10266 = vunpack.c.h.b16 %v9045
    %v10267 = vunpack.c.l.b16 %v9046
    %v10268 = vunpack.c.h.b16 %v9046
    %v10269 = vunpack.c.l.b16 %v9047
    %v10270 = vunpack.c.h.b16 %v9047
    %v10271 = vunpack.c.l.b16 %v9048
    %v10272 = vunpack.c.h.b16 %v9048
    %v10273 = vunpack.c.l.b16 %v9049
    %v10274 = vunpack.c.h.b16 %v9049
    %v10275 = vunpack.c.l.b16 %v9050
    %v10276 = vunpack.c.h.b16 %v9050
    %v10277 = vunpack.c.l.b16 %v9051
    %v10278 = vunpack.c.h.b16 %v9051
    %v10279 = vunpack.c.l.b16 %v9052
    %v10280 = vunpack.c.h.b16 %v9052
    %v10281 = vunpack.c.l.b16 %v9053
    %v10282 = vunpack.c.h.b16 %v9053
    %v10283 = vunpack.c.l.b16 %v9054
    %v10284 = vunpack.c.h.b16 %v9054
    %v10285 = vunpack.c.l.b16 %v9055
    %v10286 = vunpack.c.h.b16 %v9055
    %v10287 = vunpack.c.l.b16 %v9056
    %v10288 = vunpack.c.h.b16 %v9056
    %v10289 = vunpack.c.l.b16 %v9057
    %v10290 = vunpack.c.h.b16 %v9057
    %v10291 = vunpack.c.l.b16 %v9058
    %v10292 = vunpack.c.h.b16 %v9058
    %v10293 = vunpack.c.l.b16 %v9059
    %v10294 = vunpack.c.h.b16 %v9059
    %v10295 = vunpack.c.l.b16 %v9060
    %v10296 = vunpack.c.h.b16 %v9060
    %v10297 = vunpack.c.l.b16 %v9061
    %v10298 = vunpack.c.h.b16 %v9061
    %v10299 = vunpack.c.l.b16 %v9062
    %v10300 = vunpack.c.h.b16 %v9062
    %v10301 = vunpack.c.l.b16 %v9063
    %v10302 = vunpack.c.h.b16 %v9063
    %v10303 = vunpack.c.l.b16 %v9064
    %v10304 = vunpack.c.h.b16 %v9064
    %v10305 = vunpack.c.l.b16 %v9065
    %v10306 = vunpack.c.h.b16 %v9065
    %v10307 = vunpack.c.l.b16 %v9066
    %v10308 = vunpack.c.h.b16 %v9066
    %v10309 = vunpack.c.l.b16 %v9067
    %v10310 = vunpack.c.h.b16 %v9067
    %v10311 = vunpack.c.l.b16 %v9068
    %v10312 = vunpack.c.h.b16 %v9068
    %v10313 = vunpack.c.l.b16 %v9069
    %v10314 = vunpack.c.h.b16 %v9069
    %v10315 = vunpack.c.l.b16 %v9070
    %v10316 = vunpack.c.h.b16 %v9070
    %v10317 = vunpack.c.l.b16 %v9071
    %v10318 = vunpack.c.h.b16 %v9071
    %v10319 = vunpack.c.l.b16 %v9072
    %v10320 = vunpack.c.h.b16 %v9072
    %v10321 = vunpack.c.l.b16 %v9073
    %v10322 = vunpack.c.h.b16 %v9073
    %v10323 = vunpack.c.l.b16 %v9074
    %v10324 = vunpack.c.h.b16 %v9074
    %v10325 = vunpack.c.l.b16 %v9075
    %v10326 = vunpack.c.h.b16 %v9075
    %v10327 = vunpack.c.l.b16 %v9076
    %v10328 = vunpack.c.h.b16 %v9076
    %v10329 = vunpack.c.l.b16 %v9077
    %v10330 = vunpack.c.h.b16 %v9077
    %v10331 = vunpack.c.l.b16 %v9078
    %v10332 = vunpack.c.h.b16 %v9078
    %v10333 = vunpack.c.l.b16 %v9079
    %v10334 = vunpack.c.h.b16 %v9079
    %v10335 = vunpack.c.l.b16 %v9080
    %v10336 = vunpack.c.h.b16 %v9080
    %v10337 = vunpack.c.l.b16 %v9081
    %v10338 = vunpack.c.h.b16 %v9081
    %v10339 = vunpack.c.l.b16 %v9082
    %v10340 = vunpack.c.h.b16 %v9082
    %v10341 = vunpack.c.l.b16 %v9083
    %v10342 = vunpack.c.h.b16 %v9083
    %v10343 = vunpack.c.l.b16 %v9084
    %v10344 = vunpack.c.h.b16 %v9084
    %v10345 = vunpack.c.l.b16 %v9085
    %v10346 = vunpack.c.h.b16 %v9085
    %v10347 = vunpack.c.l.b16 %v9086
    %v10348 = vunpack.c.h.b16 %v9086
    %v10349 = vunpack.c.l.b16 %v9087
    %v10350 = vunpack.c.h.b16 %v9087
    %v10351 = vunpack.c.l.b16 %v9088
    %v10352 = vunpack.c.h.b16 %v9088
    %v10353 = vunpack.c.l.b16 %v9089
    %v10354 = vunpack.c.h.b16 %v9089
    %v10355 = vunpack.c.l.b16 %v9090
    %v10356 = vunpack.c.h.b16 %v9090
    %v10357 = vunpack.c.l.b16 %v9091
    %v10358 = vunpack.c.h.b16 %v9091
    %v10359 = vunpack.c.l.b16 %v9092
    %v10360 = vunpack.c.h.b16 %v9092
    %v10361 = vunpack.c.l.b16 %v9093
    %v10362 = vunpack.c.h.b16 %v9093
    %v10363 = vunpack.c.l.b16 %v9094
    %v10364 = vunpack.c.h.b16 %v9094
    %v10365 = vunpack.c.l.b16 %v9095
    %v10366 = vunpack.c.h.b16 %v9095
    %v10367 = vunpack.c.l.b16 %v9096
    %v10368 = vunpack.c.h.b16 %v9096
    %v10369 = vunpack.c.l.b16 %v9097
    %v10370 = vunpack.c.h.b16 %v9097
    %v10371 = vunpack.c.l.b16 %v9098
    %v10372 = vunpack.c.h.b16 %v9098
    %v10373 = vunpack.c.l.b16 %v9099
    %v10374 = vunpack.c.h.b16 %v9099
    %v10375 = vunpack.c.l.b16 %v9100
    %v10376 = vunpack.c.h.b16 %v9100
    %v10377 = vunpack.c.l.b16 %v9101
    %v10378 = vunpack.c.h.b16 %v9101
    %v10379 = vunpack.c.l.b16 %v9102
    %v10380 = vunpack.c.h.b16 %v9102
    %v10381 = vunpack.c.l.b16 %v9103
    %v10382 = vunpack.c.h.b16 %v9103
    %v10383 = vunpack.c.l.b16 %v9104
    %v10384 = vunpack.c.h.b16 %v9104
    %v10385 = vunpack.c.l.b16 %v9105
    %v10386 = vunpack.c.h.b16 %v9105
    %v10387 = vunpack.c.l.b16 %v9106
    %v10388 = vunpack.c.h.b16 %v9106
    %v10389 = vunpack.c.l.b16 %v9107
    %v10390 = vunpack.c.h.b16 %v9107
    %v10391 = vunpack.c.l.b16 %v9108
    %v10392 = vunpack.c.h.b16 %v9108
    %v10393 = vunpack.c.l.b16 %v9109
    %v10394 = vunpack.c.h.b16 %v9109
    %v10395 = vunpack.c.l.b16 %v9110
    %v10396 = vunpack.c.h.b16 %v9110
    %v10397 = vunpack.c.l.b16 %v9111
    %v10398 = vunpack.c.h.b16 %v9111
    %v10399 = vunpack.c.l.b16 %v9112
    %v10400 = vunpack.c.h.b16 %v9112
    %v10401 = vunpack.c.l.b16 %v9113
    %v10402 = vunpack.c.h.b16 %v9113
    %v10403 = vunpack.c.l.b16 %v9114
    %v10404 = vunpack.c.h.b16 %v9114
    %v10405 = vunpack.c.l.b16 %v9115
    %v10406 = vunpack.c.h.b16 %v9115
    %v10407 = vunpack.c.l.b16 %v9116
    %v10408 = vunpack.c.h.b16 %v9116
    %v10409 = vunpack.c.l.b16 %v9117
    %v10410 = vunpack.c.h.b16 %v9117
    %v10411 = vunpack.c.l.b16 %v9118
    %v10412 = vunpack.c.h.b16 %v9118
    %v10413 = vunpack.c.l.b16 %v9119
    %v10414 = vunpack.c.h.b16 %v9119
    %v10415 = vunpack.c.l.b16 %v9120
    %v10416 = vunpack.c.h.b16 %v9120
    %v10417 = vunpack.c.l.b16 %v9121
    %v10418 = vunpack.c.h.b16 %v9121
    %v10419 = vunpack.c.l.b16 %v9122
    %v10420 = vunpack.c.h.b16 %v9122
    %v10421 = vunpack.c.l.b16 %v9123
    %v10422 = vunpack.c.h.b16 %v9123
    %v10423 = vunpack.c.l.b16 %v9124
    %v10424 = vunpack.c.h.b16 %v9124
    %v10425 = vunpack.c.l.b16 %v9125
    %v10426 = vunpack.c.h.b16 %v9125
    %v10427 = vunpack.c.l.b16 %v9126
    %v10428 = vunpack.c.h.b16 %v9126
    %v10429 = vunpack.c.l.b16 %v9127
    %v10430 = vunpack.c.h.b16 %v9127
    %v10431 = vunpack.c.l.b16 %v9128
    %v10432 = vunpack.c.h.b16 %v9128
    %v10433 = vunpack.c.l.b16 %v9129
    %v10434 = vunpack.c.h.b16 %v9129
    %v10435 = vunpack.c.l.b16 %v9130
    %v10436 = vunpack.c.h.b16 %v9130
    %v10437 = vunpack.c.l.b16 %v9131
    %v10438 = vunpack.c.h.b16 %v9131
    %v10439 = vunpack.c.l.b16 %v9132
    %v10440 = vunpack.c.h.b16 %v9132
    %v10441 = vunpack.c.l.b16 %v9133
    %v10442 = vunpack.c.h.b16 %v9133
    %v10443 = vunpack.c.l.b16 %v9134
    %v10444 = vunpack.c.h.b16 %v9134
    %v10445 = vunpack.c.l.b16 %v9135
    %v10446 = vunpack.c.h.b16 %v9135
    %v10447 = vunpack.c.l.b16 %v9136
    %v10448 = vunpack.c.h.b16 %v9136
    %v10449 = vunpack.c.l.b16 %v9137
    %v10450 = vunpack.c.h.b16 %v9137
    %v10451 = vunpack.c.l.b16 %v9138
    %v10452 = vunpack.c.h.b16 %v9138
    %v10453 = vunpack.c.l.b16 %v9139
    %v10454 = vunpack.c.h.b16 %v9139
    %v10455 = vunpack.c.l.b16 %v9140
    %v10456 = vunpack.c.h.b16 %v9140
    %v10457 = vunpack.c.l.b16 %v9141
    %v10458 = vunpack.c.h.b16 %v9141
    %v10459 = vunpack.c.l.b16 %v9142
    %v10460 = vunpack.c.h.b16 %v9142
    %v10461 = vunpack.c.l.b16 %v9143
    %v10462 = vunpack.c.h.b16 %v9143
    %v10463 = vunpack.c.l.b16 %v9144
    %v10464 = vunpack.c.h.b16 %v9144
    %v10465 = vunpack.c.l.b16 %v9145
    %v10466 = vunpack.c.h.b16 %v9145
    %v10467 = vunpack.c.l.b16 %v9146
    %v10468 = vunpack.c.h.b16 %v9146
    %v10469 = vunpack.c.l.b16 %v9147
    %v10470 = vunpack.c.h.b16 %v9147
    %v10471 = vunpack.c.l.b16 %v9148
    %v10472 = vunpack.c.h.b16 %v9148
    %v10473 = vunpack.c.l.b16 %v9149
    %v10474 = vunpack.c.h.b16 %v9149
    %v10475 = vunpack.c.l.b16 %v9150
    %v10476 = vunpack.c.h.b16 %v9150
    %v10477 = vunpack.c.l.b16 %v9151
    %v10478 = vunpack.c.h.b16 %v9151
    %v10479 = vunpack.c.l.b16 %v9152
    %v10480 = vunpack.c.h.b16 %v9152
    %v10481 = vunpack.c.l.b16 %v9153
    %v10482 = vunpack.c.h.b16 %v9153
    %v10483 = vunpack.c.l.b16 %v9154
    %v10484 = vunpack.c.h.b16 %v9154
    %v10485 = vunpack.c.l.b16 %v9155
    %v10486 = vunpack.c.h.b16 %v9155
    %v10487 = vunpack.c.l.b16 %v9156
    %v10488 = vunpack.c.h.b16 %v9156
    %v10489 = vunpack.c.l.b16 %v9157
    %v10490 = vunpack.c.h.b16 %v9157
    %v10491 = vunpack.c.l.b16 %v9158
    %v10492 = vunpack.c.h.b16 %v9158
    %v10493 = vunpack.c.l.b16 %v9159
    %v10494 = vunpack.c.h.b16 %v9159
    %v10495 = vunpack.c.l.b16 %v9160
    %v10496 = vunpack.c.h.b16 %v9160
    %v10497 = vunpack.c.l.b16 %v9161
    %v10498 = vunpack.c.h.b16 %v9161
    %v10499 = vunpack.c.l.b16 %v9162
    %v10500 = vunpack.c.h.b16 %v9162
    %v10501 = vunpack.c.l.b16 %v9163
    %v10502 = vunpack.c.h.b16 %v9163
    %v10503 = vunpack.c.l.b16 %v9164
    %v10504 = vunpack.c.h.b16 %v9164
    %v10505 = vunpack.c.l.b16 %v9165
    %v10506 = vunpack.c.h.b16 %v9165
    %v10507 = vunpack.c.l.b16 %v9166
    %v10508 = vunpack.c.h.b16 %v9166
    %v10509 = vunpack.c.l.b16 %v9167
    %v10510 = vunpack.c.h.b16 %v9167
    %v10511 = vunpack.c.l.b16 %v9168
    %v10512 = vunpack.c.h.b16 %v9168
    %v10513 = vunpack.c.l.b16 %v9169
    %v10514 = vunpack.c.h.b16 %v9169
    %v10515 = vunpack.c.l.b16 %v9170
    %v10516 = vunpack.c.h.b16 %v9170
    %v10517 = vunpack.c.l.b16 %v9171
    %v10518 = vunpack.c.h.b16 %v9171
    %v10519 = vunpack.c.l.b16 %v9172
    %v10520 = vunpack.c.h.b16 %v9172
    %v10521 = vunpack.c.l.b16 %v9173
    %v10522 = vunpack.c.h.b16 %v9173
    %v10523 = vunpack.c.l.b16 %v9174
    %v10524 = vunpack.c.h.b16 %v9174
    %v10525 = vunpack.c.l.b16 %v9175
    %v10526 = vunpack.c.h.b16 %v9175
    %v10527 = vunpack.c.l.b16 %v9176
    %v10528 = vunpack.c.h.b16 %v9176
    %v10529 = vunpack.c.l.b16 %v9177
    %v10530 = vunpack.c.h.b16 %v9177
    %v10531 = vunpack.c.l.b16 %v9178
    %v10532 = vunpack.c.h.b16 %v9178
    %v10533 = vunpack.c.l.b16 %v9179
    %v10534 = vunpack.c.h.b16 %v9179
    %v10535 = vunpack.c.l.b16 %v9180
    %v10536 = vunpack.c.h.b16 %v9180
    %v10537 = vunpack.c.l.b16 %v9181
    %v10538 = vunpack.c.h.b16 %v9181
    %v10539 = vunpack.c.l.b16 %v9182
    %v10540 = vunpack.c.h.b16 %v9182
    %v10541 = vunpack.c.l.b16 %v9183
    %v10542 = vunpack.c.h.b16 %v9183
    %v10543 = vunpack.c.l.b16 %v9184
    %v10544 = vunpack.c.h.b16 %v9184
    %v10545 = vunpack.c.l.b16 %v9185
    %v10546 = vunpack.c.h.b16 %v9185
    %v10547 = vunpack.c.l.b16 %v9186
    %v10548 = vunpack.c.h.b16 %v9186
    %v10549 = vunpack.c.l.b16 %v9187
    %v10550 = vunpack.c.h.b16 %v9187
    %v10551 = vunpack.c.l.b16 %v9188
    %v10552 = vunpack.c.h.b16 %v9188
    %v10553 = vunpack.c.l.b16 %v9189
    %v10554 = vunpack.c.h.b16 %v9189
    %v10555 = vunpack.c.l.b16 %v9190
    %v10556 = vunpack.c.h.b16 %v9190
    %v10557 = vunpack.c.l.b16 %v9191
    %v10558 = vunpack.c.h.b16 %v9191
    %v10559 = vunpack.c.l.b16 %v9192
    %v10560 = vunpack.c.h.b16 %v9192
    %v10561 = vunpack.c.l.b16 %v9193
    %v10562 = vunpack.c.h.b16 %v9193
    %v10563 = vunpack.c.l.b16 %v9194
    %v10564 = vunpack.c.h.b16 %v9194
    %v10565 = vunpack.c.l.b16 %v9195
    %v10566 = vunpack.c.h.b16 %v9195
    %v10567 = vunpack.c.l.b16 %v9196
    %v10568 = vunpack.c.h.b16 %v9196
    %v10569 = vunpack.c.l.b16 %v9197
    %v10570 = vunpack.c.h.b16 %v9197
    %v10571 = vunpack.c.l.b16 %v9198
    %v10572 = vunpack.c.h.b16 %v9198
    %v10573 = vunpack.c.l.b16 %v9199
    %v10574 = vunpack.c.h.b16 %v9199
    %v10575 = vunpack.c.l.b16 %v9200
    %v10576 = vunpack.c.h.b16 %v9200
    %v10577 = vunpack.c.l.b16 %v9201
    %v10578 = vunpack.c.h.b16 %v9201
    %v10579 = vunpack.c.l.b16 %v9202
    %v10580 = vunpack.c.h.b16 %v9202
    %v10581 = vunpack.c.l.b16 %v9203
    %v10582 = vunpack.c.h.b16 %v9203
    %v10583 = vunpack.c.l.b16 %v9204
    %v10584 = vunpack.c.h.b16 %v9204
    %v10585 = vunpack.c.l.b16 %v9205
    %v10586 = vunpack.c.h.b16 %v9205
    %v10587 = vunpack.c.l.b16 %v9206
    %v10588 = vunpack.c.h.b16 %v9206
    %v10589 = vunpack.c.l.b16 %v9207
    %v10590 = vunpack.c.h.b16 %v9207
    %v10591 = vunpack.c.l.b16 %v9208
    %v10592 = vunpack.c.h.b16 %v9208
    %v10593 = vunpack.c.l.b16 %v9209
    %v10594 = vunpack.c.h.b16 %v9209
    %v10595 = vunpack.c.l.b16 %v9210
    %v10596 = vunpack.c.h.b16 %v9210
    %v10597 = vunpack.c.l.b16 %v9211
    %v10598 = vunpack.c.h.b16 %v9211
    %v10599 = vunpack.c.l.b16 %v9212
    %v10600 = vunpack.c.h.b16 %v9212
    %v10601 = vunpack.c.l.b16 %v9213
    %v10602 = vunpack.c.h.b16 %v9213
    %v10603 = vunpack.c.l.b16 %v9214
    %v10604 = vunpack.c.h.b16 %v9214
    %v10605 = vunpack.c.l.b16 %v9215
    %v10606 = vunpack.c.h.b16 %v9215
    %v10607 = vunpack.c.l.b16 %v9216
    %v10608 = vunpack.c.h.b16 %v9216
    %v10609 = vunpack.c.l.b16 %v9217
    %v10610 = vunpack.c.h.b16 %v9217
    %v10611 = vunpack.c.l.b16 %v9218
    %v10612 = vunpack.c.h.b16 %v9218
    %v10613 = vunpack.c.l.b16 %v9219
    %v10614 = vunpack.c.h.b16 %v9219
    %v10615 = vunpack.c.l.b16 %v9220
    %v10616 = vunpack.c.h.b16 %v9220
    %v10617 = vunpack.c.l.b16 %v9221
    %v10618 = vunpack.c.h.b16 %v9221
    %v10619 = vunpack.c.l.b16 %v9222
    %v10620 = vunpack.c.h.b16 %v9222
    %v10621 = vunpack.c.l.b16 %v9223
    %v10622 = vunpack.c.h.b16 %v9223
    %v10623 = vunpack.c.l.b16 %v9224
    %v10624 = vunpack.c.h.b16 %v9224
    %v10625 = vunpack.c.l.b16 %v9225
    %v10626 = vunpack.c.h.b16 %v9225
    %v10627 = vunpack.c.l.b16 %v9226
    %v10628 = vunpack.c.h.b16 %v9226
    %v10629 = vunpack.c.l.b16 %v9227
    %v10630 = vunpack.c.h.b16 %v9227
    %v10631 = vunpack.c.l.b16 %v9228
    %v10632 = vunpack.c.h.b16 %v9228
    %v10633 = vunpack.c.l.b16 %v9229
    %v10634 = vunpack.c.h.b16 %v9229
    %v10635 = vunpack.c.l.b16 %v9230
    %v10636 = vunpack.c.h.b16 %v9230
    %v10637 = vunpack.c.l.b16 %v9231
    %v10638 = vunpack.c.h.b16 %v9231
    %v10639 = vunpack.c.l.b16 %v9232
    %v10640 = vunpack.c.h.b16 %v9232
    %v10641 = vunpack.c.l.b16 %v9233
    %v10642 = vunpack.c.h.b16 %v9233
    %v10643 = vunpack.c.l.b16 %v9234
    %v10644 = vunpack.c.h.b16 %v9234
    %v10645 = vunpack.c.l.b16 %v9235
    %v10646 = vunpack.c.h.b16 %v9235
    %v10647 = vunpack.c.l.b16 %v9236
    %v10648 = vunpack.c.h.b16 %v9236
    %v10649 = vunpack.c.l.b16 %v9237
    %v10650 = vunpack.c.h.b16 %v9237
    %v10651 = vunpack.c.l.b16 %v9238
    %v10652 = vunpack.c.h.b16 %v9238
    %v10653 = vunpack.c.l.b16 %v9239
    %v10654 = vunpack.c.h.b16 %v9239
    %v10655 = vunpack.c.l.b16 %v9240
    %v10656 = vunpack.c.h.b16 %v9240
    %v10657 = vunpack.c.l.b16 %v9241
    %v10658 = vunpack.c.h.b16 %v9241
    %v10659 = vunpack.c.l.b16 %v9242
    %v10660 = vunpack.c.h.b16 %v9242
    %v10661 = vunpack.c.l.b16 %v9243
    %v10662 = vunpack.c.h.b16 %v9243
    %v10663 = vunpack.c.l.b16 %v9244
    %v10664 = vunpack.c.h.b16 %v9244
    %v10665 = vunpack.c.l.b16 %v9245
    %v10666 = vunpack.c.h.b16 %v9245
    %v10667 = vunpack.c.l.b16 %v9246
    %v10668 = vunpack.c.h.b16 %v9246
    %v10669 = vunpack.c.l.b16 %v9247
    %v10670 = vunpack.c.h.b16 %v9247
    %v10671 = vunpack.c.l.b16 %v9248
    %v10672 = vunpack.c.h.b16 %v9248
    %v10673 = vunpack.c.l.b16 %v9249
    %v10674 = vunpack.c.h.b16 %v9249
    %v10675 = vunpack.c.l.b16 %v9250
    %v10676 = vunpack.c.h.b16 %v9250
    %v10677 = vunpack.c.l.b16 %v9251
    %v10678 = vunpack.c.h.b16 %v9251
    %v10679 = vunpack.c.l.b16 %v9252
    %v10680 = vunpack.c.h.b16 %v9252
    %v10681 = vunpack.c.l.b16 %v9253
    %v10682 = vunpack.c.h.b16 %v9253
    %v10683 = vunpack.c.l.b16 %v9254
    %v10684 = vunpack.c.h.b16 %v9254
    %v10685 = vunpack.c.l.b16 %v9255
    %v10686 = vunpack.c.h.b16 %v9255
    %v10687 = vunpack.c.l.b16 %v9256
    %v10688 = vunpack.c.h.b16 %v9256
    %v10689 = vunpack.c.l.b16 %v9257
    %v10690 = vunpack.c.h.b16 %v9257
    %v10691 = vunpack.c.l.b16 %v9258
    %v10692 = vunpack.c.h.b16 %v9258
    %v10693 = vunpack.c.l.b16 %v9259
    %v10694 = vunpack.c.h.b16 %v9259
    %v10695 = vunpack.c.l.b16 %v9260
    %v10696 = vunpack.c.h.b16 %v9260
    %v10697 = vunpack.c.l.b16 %v9261
    %v10698 = vunpack.c.h.b16 %v9261
    %v10699 = vunpack.c.l.b16 %v9262
    %v10700 = vunpack.c.h.b16 %v9262
    %v10701 = vunpack.c.l.b16 %v9263
    %v10702 = vunpack.c.h.b16 %v9263
    %v10703 = vunpack.c.l.b16 %v9264
    %v10704 = vunpack.c.h.b16 %v9264
    %v10705 = vunpack.c.l.b16 %v9265
    %v10706 = vunpack.c.h.b16 %v9265
    %v10707 = vunpack.c.l.b16 %v9266
    %v10708 = vunpack.c.h.b16 %v9266
    %v10709 = vunpack.c.l.b16 %v9267
    %v10710 = vunpack.c.h.b16 %v9267
    %v10711 = vunpack.c.l.b16 %v9268
    %v10712 = vunpack.c.h.b16 %v9268
    %v10713 = vunpack.c.l.b16 %v9269
    %v10714 = vunpack.c.h.b16 %v9269
    %v10715 = vunpack.c.l.b16 %v9270
    %v10716 = vunpack.c.h.b16 %v9270
    %v10717 = vunpack.c.l.b16 %v9271
    %v10718 = vunpack.c.h.b16 %v9271
    %v10719 = vunpack.c.l.b16 %v9272
    %v10720 = vunpack.c.h.b16 %v9272
    %v10721 = vunpack.c.l.b16 %v9273
    %v10722 = vunpack.c.h.b16 %v9273
    %v10723 = vunpack.c.l.b16 %v9274
    %v10724 = vunpack.c.h.b16 %v9274
    %v10725 = vunpack.c.l.b16 %v9275
    %v10726 = vunpack.c.h.b16 %v9275
    %v10727 = vunpack.c.l.b16 %v9276
    %v10728 = vunpack.c.h.b16 %v9276
    %v10729 = vunpack.c.l.b16 %v9277
    %v10730 = vunpack.c.h.b16 %v9277
    %v10731 = vunpack.c.l.b16 %v9278
    %v10732 = vunpack.c.h.b16 %v9278
    %v10733 = vunpack.c.l.b16 %v9279
    %v10734 = vunpack.c.h.b16 %v9279
    %v10735 = vunpack.c.l.b16 %v9280
    %v10736 = vunpack.c.h.b16 %v9280
    %v10737 = vunpack.c.l.b16 %v9281
    %v10738 = vunpack.c.h.b16 %v9281
    %v10739 = vunpack.c.l.b16 %v9282
    %v10740 = vunpack.c.h.b16 %v9282
    %v10741 = vunpack.c.l.b16 %v9283
    %v10742 = vunpack.c.h.b16 %v9283
    %v10743 = vunpack.c.l.b16 %v9284
    %v10744 = vunpack.c.h.b16 %v9284
    %v10745 = vunpack.c.l.b16 %v9285
    %v10746 = vunpack.c.h.b16 %v9285
    %v10747 = vunpack.c.l.b16 %v9286
    %v10748 = vunpack.c.h.b16 %v9286
    %v10749 = vunpack.c.l.b16 %v9287
    %v10750 = vunpack.c.h.b16 %v9287
    %v10751 = vunpack.c.l.b16 %v9288
    %v10752 = vunpack.c.h.b16 %v9288
    %v10753 = vunpack.c.l.b16 %v9289
    %v10754 = vunpack.c.h.b16 %v9289
    %v10755 = vunpack.c.l.b16 %v9290
    %v10756 = vunpack.c.h.b16 %v9290
    %v10757 = vunpack.c.l.b16 %v9291
    %v10758 = vunpack.c.h.b16 %v9291
    %v10759 = vunpack.c.l.b16 %v9292
    %v10760 = vunpack.c.h.b16 %v9292
    %v10761 = vunpack.c.l.b16 %v9293
    %v10762 = vunpack.c.h.b16 %v9293
    %v10763 = vunpack.c.l.b16 %v9294
    %v10764 = vunpack.c.h.b16 %v9294
    %v10765 = vunpack.c.l.b16 %v9295
    %v10766 = vunpack.c.h.b16 %v9295
    %v10767 = vunpack.c.l.b16 %v9296
    %v10768 = vunpack.c.h.b16 %v9296
    %v10769 = vunpack.c.l.b16 %v9297
    %v10770 = vunpack.c.h.b16 %v9297
    %v10771 = vunpack.c.l.b16 %v9298
    %v10772 = vunpack.c.h.b16 %v9298
    %v10773 = vunpack.c.l.b16 %v9299
    %v10774 = vunpack.c.h.b16 %v9299
    %v10775 = vunpack.c.l.b16 %v9300
    %v10776 = vunpack.c.h.b16 %v9300
    %v10777 = vunpack.c.l.b16 %v9301
    %v10778 = vunpack.c.h.b16 %v9301
    %v10779 = vunpack.c.l.b16 %v9302
    %v10780 = vunpack.c.h.b16 %v9302
    %v10781 = vunpack.c.l.b16 %v9303
    %v10782 = vunpack.c.h.b16 %v9303
    %v10783 = vunpack.c.l.b16 %v9304
    %v10784 = vunpack.c.h.b16 %v9304
    %v10785 = vunpack.c.l.b16 %v9305
    %v10786 = vunpack.c.h.b16 %v9305
    %v10787 = vunpack.c.l.b16 %v9306
    %v10788 = vunpack.c.h.b16 %v9306
    %v10789 = vunpack.c.l.b16 %v9307
    %v10790 = vunpack.c.h.b16 %v9307
    %v10791 = vunpack.c.l.b16 %v9308
    %v10792 = vunpack.c.h.b16 %v9308
    %v10793 = vunpack.c.l.b16 %v9309
    %v10794 = vunpack.c.h.b16 %v9309
    %v10795 = vunpack.c.l.b16 %v9310
    %v10796 = vunpack.c.h.b16 %v9310
    %v10797 = vunpack.c.l.b16 %v9311
    %v10798 = vunpack.c.h.b16 %v9311
    %v10799 = vunpack.c.l.b16 %v9312
    %v10800 = vunpack.c.h.b16 %v9312
    %v10801 = vunpack.c.l.b16 %v9313
    %v10802 = vunpack.c.h.b16 %v9313
    %v10803 = vunpack.c.l.b16 %v9314
    %v10804 = vunpack.c.h.b16 %v9314
    %v10805 = vunpack.c.l.b16 %v9315
    %v10806 = vunpack.c.h.b16 %v9315
    %v10807 = vunpack.c.l.b16 %v9316
    %v10808 = vunpack.c.h.b16 %v9316
    %v10809 = vunpack.c.l.b16 %v9317
    %v10810 = vunpack.c.h.b16 %v9317
    %v10811 = vunpack.c.l.b16 %v9318
    %v10812 = vunpack.c.h.b16 %v9318
    %v10813 = vunpack.c.l.b16 %v9319
    %v10814 = vunpack.c.h.b16 %v9319
    %v10815 = vunpack.c.l.b16 %v9320
    %v10816 = vunpack.c.h.b16 %v9320
    %v10817 = vunpack.c.l.b16 %v9321
    %v10818 = vunpack.c.h.b16 %v9321
    %v10819 = vunpack.c.l.b16 %v9322
    %v10820 = vunpack.c.h.b16 %v9322
    %v10821 = vunpack.c.l.b16 %v9323
    %v10822 = vunpack.c.h.b16 %v9323
    %v10823 = vunpack.c.l.b16 %v9324
    %v10824 = vunpack.c.h.b16 %v9324
    %v10825 = vunpack.c.l.b16 %v9325
    %v10826 = vunpack.c.h.b16 %v9325
    %v10827 = vunpack.c.l.b16 %v9326
    %v10828 = vunpack.c.h.b16 %v9326
    %v10829 = vunpack.c.l.b16 %v9327
    %v10830 = vunpack.c.h.b16 %v9327
    %v10831 = vunpack.c.l.b16 %v9328
    %v10832 = vunpack.c.h.b16 %v9328
    %v10833 = vunpack.c.l.b16 %v9329
    %v10834 = vunpack.c.h.b16 %v9329
    %v10835 = vunpack.c.l.b16 %v9330
    %v10836 = vunpack.c.h.b16 %v9330
    %v10837 = vunpack.c.l.b16 %v9331
    %v10838 = vunpack.c.h.b16 %v9331
    %v10839 = vunpack.c.l.b16 %v9332
    %v10840 = vunpack.c.h.b16 %v9332
    %v10841 = vunpack.c.l.b16 %v9333
    %v10842 = vunpack.c.h.b16 %v9333
    %v10843 = vunpack.c.l.b16 %v9334
    %v10844 = vunpack.c.h.b16 %v9334
    %v10845 = vunpack.c.l.b16 %v9335
    %v10846 = vunpack.c.h.b16 %v9335
    %v10847 = vunpack.c.l.b16 %v9336
    %v10848 = vunpack.c.h.b16 %v9336
    %v10849 = vunpack.c.l.b16 %v9337
    %v10850 = vunpack.c.h.b16 %v9337
    %v10851 = vunpack.c.l.b16 %v9338
    %v10852 = vunpack.c.h.b16 %v9338
    %v10853 = vunpack.c.l.b16 %v9339
    %v10854 = vunpack.c.h.b16 %v9339
    %v10855 = vunpack.c.l.b16 %v9340
    %v10856 = vunpack.c.h.b16 %v9340
    %v10857 = vunpack.c.l.b16 %v9341
    %v10858 = vunpack.c.h.b16 %v9341
    %v10859 = vunpack.c.l.b16 %v9342
    %v10860 = vunpack.c.h.b16 %v9342
    %v10861 = vunpack.c.l.b16 %v9343
    %v10862 = vunpack.c.h.b16 %v9343
    %v10863 = vunpack.c.l.b16 %v9344
    %v10864 = vunpack.c.h.b16 %v9344
    %v10865 = vunpack.c.l.b16 %v9345
    %v10866 = vunpack.c.h.b16 %v9345
    %v10867 = vunpack.c.l.b16 %v9346
    %v10868 = vunpack.c.h.b16 %v9346
    %v10869 = vunpack.c.l.b16 %v9347
    %v10870 = vunpack.c.h.b16 %v9347
    %v10871 = vunpack.c.l.b16 %v9348
    %v10872 = vunpack.c.h.b16 %v9348
    %v10873 = vunpack.c.l.b16 %v9349
    %v10874 = vunpack.c.h.b16 %v9349
    %v10875 = vunpack.c.l.b16 %v9350
    %v10876 = vunpack.c.h.b16 %v9350
    %v10877 = vunpack.c.l.b16 %v9351
    %v10878 = vunpack.c.h.b16 %v9351
    %v10879 = vunpack.c.l.b16 %v9352
    %v10880 = vunpack.c.h.b16 %v9352
    %v10881 = vunpack.c.l.b16 %v9353
    %v10882 = vunpack.c.h.b16 %v9353
    %v10883 = vunpack.c.l.b16 %v9354
    %v10884 = vunpack.c.h.b16 %v9354
    %v10885 = vunpack.c.l.b16 %v9355
    %v10886 = vunpack.c.h.b16 %v9355
    %v10887 = vunpack.c.l.b16 %v9356
    %v10888 = vunpack.c.h.b16 %v9356
    %v10889 = vunpack.c.l.b16 %v9357
    %v10890 = vunpack.c.h.b16 %v9357
    %v10891 = vunpack.c.l.b16 %v9358
    %v10892 = vunpack.c.h.b16 %v9358
    %v10893 = vunpack.c.l.b16 %v9359
    %v10894 = vunpack.c.h.b16 %v9359
    %v10895 = vunpack.c.l.b16 %v9360
    %v10896 = vunpack.c.h.b16 %v9360
    %v10897 = vunpack.c.l.b16 %v9361
    %v10898 = vunpack.c.h.b16 %v9361
    %v10899 = vunpack.c.l.b16 %v9362
    %v10900 = vunpack.c.h.b16 %v9362
    %v10901 = vunpack.c.l.b16 %v9363
    %v10902 = vunpack.c.h.b16 %v9363
    %v10903 = vunpack.c.l.b16 %v9364
    %v10904 = vunpack.c.h.b16 %v9364
    %v10905 = vunpack.c.l.b16 %v9365
    %v10906 = vunpack.c.h.b16 %v9365
    %v10907 = vunpack.c.l.b16 %v9366
    %v10908 = vunpack.c.h.b16 %v9366
    %v10909 = vunpack.c.l.b16 %v9367
    %v10910 = vunpack.c.h.b16 %v9367
    %v10911 = vunpack.c.l.b16 %v9368
    %v10912 = vunpack.c.h.b16 %v9368
    %v10913 = vunpack.c.l.b16 %v9369
    %v10914 = vunpack.c.h.b16 %v9369
    %v10915 = vunpack.c.l.b16 %v9370
    %v10916 = vunpack.c.h.b16 %v9370
    %v10917 = vunpack.c.l.b16 %v9371
    %v10918 = vunpack.c.h.b16 %v9371
    %v10919 = vunpack.c.l.b16 %v9372
    %v10920 = vunpack.c.h.b16 %v9372
    %v10921 = vunpack.c.l.b16 %v9373
    %v10922 = vunpack.c.h.b16 %v9373
    %v10923 = vunpack.c.l.b16 %v9374
    %v10924 = vunpack.c.h.b16 %v9374
    %v10925 = vunpack.c.l.b16 %v9375
    %v10926 = vunpack.c.h.b16 %v9375
    %v10927 = vunpack.c.l.b16 %v9376
    %v10928 = vunpack.c.h.b16 %v9376
    %v10929 = vunpack.c.l.b16 %v9377
    %v10930 = vunpack.c.h.b16 %v9377
    %v10931 = vunpack.c.l.b16 %v9378
    %v10932 = vunpack.c.h.b16 %v9378
    %v10933 = vunpack.c.l.b16 %v9379
    %v10934 = vunpack.c.h.b16 %v9379
    %v10935 = vunpack.c.l.b16 %v9380
    %v10936 = vunpack.c.h.b16 %v9380
    %v10937 = vunpack.c.l.b16 %v9381
    %v10938 = vunpack.c.h.b16 %v9381
    %v10939 = vunpack.c.l.b16 %v9382
    %v10940 = vunpack.c.h.b16 %v9382
    %v10941 = vunpack.c.l.b16 %v9383
    %v10942 = vunpack.c.h.b16 %v9383
    %v10943 = vunpack.c.l.b16 %v9384
    %v10944 = vunpack.c.h.b16 %v9384
    %v10945 = vunpack.c.l.b16 %v9385
    %v10946 = vunpack.c.h.b16 %v9385
    %v10947 = vunpack.c.l.b16 %v9386
    %v10948 = vunpack.c.h.b16 %v9386
    %v10949 = vunpack.c.l.b16 %v9387
    %v10950 = vunpack.c.h.b16 %v9387
    %v10951 = vunpack.c.l.b16 %v9388
    %v10952 = vunpack.c.h.b16 %v9388
    %v10953 = vunpack.c.l.b16 %v9389
    %v10954 = vunpack.c.h.b16 %v9389
    %v10955 = vunpack.c.l.b16 %v9390
    %v10956 = vunpack.c.h.b16 %v9390
    %v10957 = vunpack.c.l.b16 %v9391
    %v10958 = vunpack.c.h.b16 %v9391
    %v10959 = vunpack.c.l.b16 %v9392
    %v10960 = vunpack.c.h.b16 %v9392
    %v10961 = vunpack.c.l.b16 %v9393
    %v10962 = vunpack.c.h.b16 %v9393
    %v10963 = vunpack.c.l.b16 %v9394
    %v10964 = vunpack.c.h.b16 %v9394
    %v10965 = vunpack.c.l.b16 %v9395
    %v10966 = vunpack.c.h.b16 %v9395
    %v10967 = vunpack.c.l.b16 %v9396
    %v10968 = vunpack.c.h.b16 %v9396
    %v10969 = vunpack.c.l.b16 %v9397
    %v10970 = vunpack.c.h.b16 %v9397
    %v10971 = vunpack.c.l.b16 %v9398
    %v10972 = vunpack.c.h.b16 %v9398
    %v10973 = vunpack.c.l.b16 %v9399
    %v10974 = vunpack.c.h.b16 %v9399
    %v10975 = vunpack.c.l.b16 %v9400
    %v10976 = vunpack.c.h.b16 %v9400
    %v10977 = vunpack.c.l.b16 %v9401
    %v10978 = vunpack.c.h.b16 %v9401
    %v10979 = vunpack.c.l.b16 %v9402
    %v10980 = vunpack.c.h.b16 %v9402
    %v10981 = vpack.c.b16 %v9965, %v9957
    %v10982 = vpack.c.b16 %v9966, %v9958
    %v10983 = vpack.c.b16 %v9967, %v9959
    %v10984 = vpack.c.b16 %v9968, %v9960
    %v10985 = vpack.c.b16 %v9969, %v9961
    %v10986 = vpack.c.b16 %v9970, %v9962
    %v10987 = vpack.c.b16 %v9971, %v9963
    %v10988 = vpack.c.b16 %v9972, %v9964
    %v10989 = vpack.c.b16 %v9981, %v9973
    %v10990 = vpack.c.b16 %v9982, %v9974
    %v10991 = vpack.c.b16 %v9983, %v9975
    %v10992 = vpack.c.b16 %v9984, %v9976
    %v10993 = vpack.c.b16 %v9985, %v9977
    %v10994 = vpack.c.b16 %v9986, %v9978
    %v10995 = vpack.c.b16 %v9987, %v9979
    %v10996 = vpack.c.b16 %v9988, %v9980
    %v10997 = vpack.c.b16 %v9997, %v9989
    %v10998 = vpack.c.b16 %v9998, %v9990
    %v10999 = vpack.c.b16 %v9999, %v9991
    %v11000 = vpack.c.b16 %v10000, %v9992
    %v11001 = vpack.c.b16 %v10001, %v9993
    %v11002 = vpack.c.b16 %v10002, %v9994
    %v11003 = vpack.c.b16 %v10003, %v9995
    %v11004 = vpack.c.b16 %v10004, %v9996
    %v11005 = vpack.c.b16 %v10013, %v10005
    %v11006 = vpack.c.b16 %v10014, %v10006
    %v11007 = vpack.c.b16 %v10015, %v10007
    %v11008 = vpack.c.b16 %v10016, %v10008
    %v11009 = vpack.c.b16 %v10017, %v10009
    %v11010 = vpack.c.b16 %v10018, %v10010
    %v11011 = vpack.c.b16 %v10019, %v10011
    %v11012 = vpack.c.b16 %v10020, %v10012
    %v11013 = vpack.c.b16 %v10029, %v10021
    %v11014 = vpack.c.b16 %v10030, %v10022
    %v11015 = vpack.c.b16 %v10031, %v10023
    %v11016 = vpack.c.b16 %v10032, %v10024
    %v11017 = vpack.c.b16 %v10033, %v10025
    %v11018 = vpack.c.b16 %v10034, %v10026
    %v11019 = vpack.c.b16 %v10035, %v10027
    %v11020 = vpack.c.b16 %v10036, %v10028
    %v11021 = vpack.c.b16 %v10045, %v10037
    %v11022 = vpack.c.b16 %v10046, %v10038
    %v11023 = vpack.c.b16 %v10047, %v10039
    %v11024 = vpack.c.b16 %v10048, %v10040
    %v11025 = vpack.c.b16 %v10049, %v10041
    %v11026 = vpack.c.b16 %v10050, %v10042
    %v11027 = vpack.c.b16 %v10051, %v10043
    %v11028 = vpack.c.b16 %v10052, %v10044
    %v11029 = vpack.c.b16 %v10061, %v10053
    %v11030 = vpack.c.b16 %v10062, %v10054
    %v11031 = vpack.c.b16 %v10063, %v10055
    %v11032 = vpack.c.b16 %v10064, %v10056
    %v11033 = vpack.c.b16 %v10065, %v10057
    %v11034 = vpack.c.b16 %v10066, %v10058
    %v11035 = vpack.c.b16 %v10067, %v10059
    %v11036 = vpack.c.b16 %v10068, %v10060
    %v11037 = vpack.c.b16 %v10077, %v10069
    %v11038 = vpack.c.b16 %v10078, %v10070
    %v11039 = vpack.c.b16 %v10079, %v10071
    %v11040 = vpack.c.b16 %v10080, %v10072
    %v11041 = vpack.c.b16 %v10081, %v10073
    %v11042 = vpack.c.b16 %v10082, %v10074
    %v11043 = vpack.c.b16 %v10083, %v10075
    %v11044 = vpack.c.b16 %v10084, %v10076
    %v11045 = vpack.c.b16 %v10093, %v10085
    %v11046 = vpack.c.b16 %v10094, %v10086
    %v11047 = vpack.c.b16 %v10095, %v10087
    %v11048 = vpack.c.b16 %v10096, %v10088
    %v11049 = vpack.c.b16 %v10097, %v10089
    %v11050 = vpack.c.b16 %v10098, %v10090
    %v11051 = vpack.c.b16 %v10099, %v10091
    %v11052 = vpack.c.b16 %v10100, %v10092
    %v11053 = vpack.c.b16 %v10109, %v10101
    %v11054 = vpack.c.b16 %v10110, %v10102
    %v11055 = vpack.c.b16 %v10111, %v10103
    %v11056 = vpack.c.b16 %v10112, %v10104
    %v11057 = vpack.c.b16 %v10113, %v10105
    %v11058 = vpack.c.b16 %v10114, %v10106
    %v11059 = vpack.c.b16 %v10115, %v10107
    %v11060 = vpack.c.b16 %v10116, %v10108
    %v11061 = vpack.c.b16 %v10125, %v10117
    %v11062 = vpack.c.b16 %v10126, %v10118
    %v11063 = vpack.c.b16 %v10127, %v10119
    %v11064 = vpack.c.b16 %v10128, %v10120
    %v11065 = vpack.c.b16 %v10129, %v10121
    %v11066 = vpack.c.b16 %v10130, %v10122
    %v11067 = vpack.c.b16 %v10131, %v10123
    %v11068 = vpack.c.b16 %v10132, %v10124
    %v11069 = vpack.c.b16 %v10141, %v10133
    %v11070 = vpack.c.b16 %v10142, %v10134
    %v11071 = vpack.c.b16 %v10143, %v10135
    %v11072 = vpack.c.b16 %v10144, %v10136
    %v11073 = vpack.c.b16 %v10145, %v10137
    %v11074 = vpack.c.b16 %v10146, %v10138
    %v11075 = vpack.c.b16 %v10147, %v10139
    %v11076 = vpack.c.b16 %v10148, %v10140
    %v11077 = vpack.c.b16 %v10157, %v10149
    %v11078 = vpack.c.b16 %v10158, %v10150
    %v11079 = vpack.c.b16 %v10159, %v10151
    %v11080 = vpack.c.b16 %v10160, %v10152
    %v11081 = vpack.c.b16 %v10161, %v10153
    %v11082 = vpack.c.b16 %v10162, %v10154
    %v11083 = vpack.c.b16 %v10163, %v10155
    %v11084 = vpack.c.b16 %v10164, %v10156
    %v11085 = vpack.c.b16 %v10173, %v10165
    %v11086 = vpack.c.b16 %v10174, %v10166
    %v11087 = vpack.c.b16 %v10175, %v10167
    %v11088 = vpack.c.b16 %v10176, %v10168
    %v11089 = vpack.c.b16 %v10177, %v10169
    %v11090 = vpack.c.b16 %v10178, %v10170
    %v11091 = vpack.c.b16 %v10179, %v10171
    %v11092 = vpack.c.b16 %v10180, %v10172
    %v11093 = vpack.c.b16 %v10189, %v10181
    %v11094 = vpack.c.b16 %v10190, %v10182
    %v11095 = vpack.c.b16 %v10191, %v10183
    %v11096 = vpack.c.b16 %v10192, %v10184
    %v11097 = vpack.c.b16 %v10193, %v10185
    %v11098 = vpack.c.b16 %v10194, %v10186
    %v11099 = vpack.c.b16 %v10195, %v10187
    %v11100 = vpack.c.b16 %v10196, %v10188
    %v11101 = vpack.c.b16 %v10205, %v10197
    %v11102 = vpack.c.b16 %v10206, %v10198
    %v11103 = vpack.c.b16 %v10207, %v10199
    %v11104 = vpack.c.b16 %v10208, %v10200
    %v11105 = vpack.c.b16 %v10209, %v10201
    %v11106 = vpack.c.b16 %v10210, %v10202
    %v11107 = vpack.c.b16 %v10211, %v10203
    %v11108 = vpack.c.b16 %v10212, %v10204
    %v11109 = vpack.c.b16 %v10221, %v10213
    %v11110 = vpack.c.b16 %v10222, %v10214
    %v11111 = vpack.c.b16 %v10223, %v10215
    %v11112 = vpack.c.b16 %v10224, %v10216
    %v11113 = vpack.c.b16 %v10225, %v10217
    %v11114 = vpack.c.b16 %v10226, %v10218
    %v11115 = vpack.c.b16 %v10227, %v10219
    %v11116 = vpack.c.b16 %v10228, %v10220
    %v11117 = vpack.c.b16 %v10237, %v10229
    %v11118 = vpack.c.b16 %v10238, %v10230
    %v11119 = vpack.c.b16 %v10239, %v10231
    %v11120 = vpack.c.b16 %v10240, %v10232
    %v11121 = vpack.c.b16 %v10241, %v10233
    %v11122 = vpack.c.b16 %v10242, %v10234
    %v11123 = vpack.c.b16 %v10243, %v10235
    %v11124 = vpack.c.b16 %v10244, %v10236
    %v11125 = vpack.c.b16 %v10253, %v10245
    %v11126 = vpack.c.b16 %v10254, %v10246
    %v11127 = vpack.c.b16 %v10255, %v10247
    %v11128 = vpack.c.b16 %v10256, %v10248
    %v11129 = vpack.c.b16 %v10257, %v10249
    %v11130 = vpack.c.b16 %v10258, %v10250
    %v11131 = vpack.c.b16 %v10259, %v10251
    %v11132 = vpack.c.b16 %v10260, %v10252
    %v11133 = vpack.c.b16 %v10269, %v10261
    %v11134 = vpack.c.b16 %v10270, %v10262
    %v11135 = vpack.c.b16 %v10271, %v10263
    %v11136 = vpack.c.b16 %v10272, %v10264
    %v11137 = vpack.c.b16 %v10273, %v10265
    %v11138 = vpack.c.b16 %v10274, %v10266
    %v11139 = vpack.c.b16 %v10275, %v10267
    %v11140 = vpack.c.b16 %v10276, %v10268
    %v11141 = vpack.c.b16 %v10285, %v10277
    %v11142 = vpack.c.b16 %v10286, %v10278
    %v11143 = vpack.c.b16 %v10287, %v10279
    %v11144 = vpack.c.b16 %v10288, %v10280
    %v11145 = vpack.c.b16 %v10289, %v10281
    %v11146 = vpack.c.b16 %v10290, %v10282
    %v11147 = vpack.c.b16 %v10291, %v10283
    %v11148 = vpack.c.b16 %v10292, %v10284
    %v11149 = vpack.c.b16 %v10301, %v10293
    %v11150 = vpack.c.b16 %v10302, %v10294
    %v11151 = vpack.c.b16 %v10303, %v10295
    %v11152 = vpack.c.b16 %v10304, %v10296
    %v11153 = vpack.c.b16 %v10305, %v10297
    %v11154 = vpack.c.b16 %v10306, %v10298
    %v11155 = vpack.c.b16 %v10307, %v10299
    %v11156 = vpack.c.b16 %v10308, %v10300
    %v11157 = vpack.c.b16 %v10317, %v10309
    %v11158 = vpack.c.b16 %v10318, %v10310
    %v11159 = vpack.c.b16 %v10319, %v10311
    %v11160 = vpack.c.b16 %v10320, %v10312
    %v11161 = vpack.c.b16 %v10321, %v10313
    %v11162 = vpack.c.b16 %v10322, %v10314
    %v11163 = vpack.c.b16 %v10323, %v10315
    %v11164 = vpack.c.b16 %v10324, %v10316
    %v11165 = vpack.c.b16 %v10333, %v10325
    %v11166 = vpack.c.b16 %v10334, %v10326
    %v11167 = vpack.c.b16 %v10335, %v10327
    %v11168 = vpack.c.b16 %v10336, %v10328
    %v11169 = vpack.c.b16 %v10337, %v10329
    %v11170 = vpack.c.b16 %v10338, %v10330
    %v11171 = vpack.c.b16 %v10339, %v10331
    %v11172 = vpack.c.b16 %v10340, %v10332
    %v11173 = vpack.c.b16 %v10349, %v10341
    %v11174 = vpack.c.b16 %v10350, %v10342
    %v11175 = vpack.c.b16 %v10351, %v10343
    %v11176 = vpack.c.b16 %v10352, %v10344
    %v11177 = vpack.c.b16 %v10353, %v10345
    %v11178 = vpack.c.b16 %v10354, %v10346
    %v11179 = vpack.c.b16 %v10355, %v10347
    %v11180 = vpack.c.b16 %v10356, %v10348
    %v11181 = vpack.c.b16 %v10365, %v10357
    %v11182 = vpack.c.b16 %v10366, %v10358
    %v11183 = vpack.c.b16 %v10367, %v10359
    %v11184 = vpack.c.b16 %v10368, %v10360
    %v11185 = vpack.c.b16 %v10369, %v10361
    %v11186 = vpack.c.b16 %v10370, %v10362
    %v11187 = vpack.c.b16 %v10371, %v10363
    %v11188 = vpack.c.b16 %v10372, %v10364
    %v11189 = vpack.c.b16 %v10381, %v10373
    %v11190 = vpack.c.b16 %v10382, %v10374
    %v11191 = vpack.c.b16 %v10383, %v10375
    %v11192 = vpack.c.b16 %v10384, %v10376
    %v11193 = vpack.c.b16 %v10385, %v10377
    %v11194 = vpack.c.b16 %v10386, %v10378
    %v11195 = vpack.c.b16 %v10387, %v10379
    %v11196 = vpack.c.b16 %v10388, %v10380
    %v11197 = vpack.c.b16 %v10397, %v10389
    %v11198 = vpack.c.b16 %v10398, %v10390
    %v11199 = vpack.c.b16 %v10399, %v10391
    %v11200 = vpack.c.b16 %v10400, %v10392
    %v11201 = vpack.c.b16 %v10401, %v10393
    %v11202 = vpack.c.b16 %v10402, %v10394
    %v11203 = vpack.c.b16 %v10403, %v10395
    %v11204 = vpack.c.b16 %v10404, %v10396
    %v11205 = vpack.c.b16 %v10413, %v10405
    %v11206 = vpack.c.b16 %v10414, %v10406
    %v11207 = vpack.c.b16 %v10415, %v10407
    %v11208 = vpack.c.b16 %v10416, %v10408
    %v11209 = vpack.c.b16 %v10417, %v10409
    %v11210 = vpack.c.b16 %v10418, %v10410
    %v11211 = vpack.c.b16 %v10419, %v10411
    %v11212 = vpack.c.b16 %v10420, %v10412
    %v11213 = vpack.c.b16 %v10429, %v10421
    %v11214 = vpack.c.b16 %v10430, %v10422
    %v11215 = vpack.c.b16 %v10431, %v10423
    %v11216 = vpack.c.b16 %v10432, %v10424
    %v11217 = vpack.c.b16 %v10433, %v10425
    %v11218 = vpack.c.b16 %v10434, %v10426
    %v11219 = vpack.c.b16 %v10435, %v10427
    %v11220 = vpack.c.b16 %v10436, %v10428
    %v11221 = vpack.c.b16 %v10445, %v10437
    %v11222 = vpack.c.b16 %v10446, %v10438
    %v11223 = vpack.c.b16 %v10447, %v10439
    %v11224 = vpack.c.b16 %v10448, %v10440
    %v11225 = vpack.c.b16 %v10449, %v10441
    %v11226 = vpack.c.b16 %v10450, %v10442
    %v11227 = vpack.c.b16 %v10451, %v10443
    %v11228 = vpack.c.b16 %v10452, %v10444
    %v11229 = vpack.c.b16 %v10461, %v10453
    %v11230 = vpack.c.b16 %v10462, %v10454
    %v11231 = vpack.c.b16 %v10463, %v10455
    %v11232 = vpack.c.b16 %v10464, %v10456
    %v11233 = vpack.c.b16 %v10465, %v10457
    %v11234 = vpack.c.b16 %v10466, %v10458
    %v11235 = vpack.c.b16 %v10467, %v10459
    %v11236 = vpack.c.b16 %v10468, %v10460
    %v11237 = vpack.c.b16 %v10477, %v10469
    %v11238 = vpack.c.b16 %v10478, %v10470
    %v11239 = vpack.c.b16 %v10479, %v10471
    %v11240 = vpack.c.b16 %v10480, %v10472
    %v11241 = vpack.c.b16 %v10481, %v10473
    %v11242 = vpack.c.b16 %v10482, %v10474
    %v11243 = vpack.c.b16 %v10483, %v10475
    %v11244 = vpack.c.b16 %v10484, %v10476
    %v11245 = vpack.c.b16 %v10493, %v10485
    %v11246 = vpack.c.b16 %v10494, %v10486
    %v11247 = vpack.c.b16 %v10495, %v10487
    %v11248 = vpack.c.b16 %v10496, %v10488
    %v11249 = vpack.c.b16 %v10497, %v10489
    %v11250 = vpack.c.b16 %v10498, %v10490
    %v11251 = vpack.c.b16 %v10499, %v10491
    %v11252 = vpack.c.b16 %v10500, %v10492
    %v11253 = vpack.c.b16 %v10509, %v10501
    %v11254 = vpack.c.b16 %v10510, %v10502
    %v11255 = vpack.c.b16 %v10511, %v10503
    %v11256 = vpack.c.b16 %v10512, %v10504
    %v11257 = vpack.c.b16 %v10513, %v10505
    %v11258 = vpack.c.b16 %v10514, %v10506
    %v11259 = vpack.c.b16 %v10515, %v10507
    %v11260 = vpack.c.b16 %v10516, %v10508
    %v11261 = vpack.c.b16 %v10525, %v10517
    %v11262 = vpack.c.b16 %v10526, %v10518
    %v11263 = vpack.c.b16 %v10527, %v10519
    %v11264 = vpack.c.b16 %v10528, %v10520
    %v11265 = vpack.c.b16 %v10529, %v10521
    %v11266 = vpack.c.b16 %v10530, %v10522
    %v11267 = vpack.c.b16 %v10531, %v10523
    %v11268 = vpack.c.b16 %v10532, %v10524
    %v11269 = vpack.c.b16 %v10541, %v10533
    %v11270 = vpack.c.b16 %v10542, %v10534
    %v11271 = vpack.c.b16 %v10543, %v10535
    %v11272 = vpack.c.b16 %v10544, %v10536
    %v11273 = vpack.c.b16 %v10545, %v10537
    %v11274 = vpack.c.b16 %v10546, %v10538
    %v11275 = vpack.c.b16 %v10547, %v10539
    %v11276 = vpack.c.b16 %v10548, %v10540
    %v11277 = vpack.c.b16 %v10557, %v10549
    %v11278 = vpack.c.b16 %v10558, %v10550
    %v11279 = vpack.c.b16 %v10559, %v10551
    %v11280 = vpack.c.b16 %v10560, %v10552
    %v11281 = vpack.c.b16 %v10561, %v10553
    %v11282 = vpack.c.b16 %v10562, %v10554
    %v11283 = vpack.c.b16 %v10563, %v10555
    %v11284 = vpack.c.b16 %v10564, %v10556
    %v11285 = vpack.c.b16 %v10573, %v10565
    %v11286 = vpack.c.b16 %v10574, %v10566
    %v11287 = vpack.c.b16 %v10575, %v10567
    %v11288 = vpack.c.b16 %v10576, %v10568
    %v11289 = vpack.c.b16 %v10577, %v10569
    %v11290 = vpack.c.b16 %v10578, %v10570
    %v11291 = vpack.c.b16 %v10579, %v10571
    %v11292 = vpack.c.b16 %v10580, %v10572
    %v11293 = vpack.c.b16 %v10589, %v10581
    %v11294 = vpack.c.b16 %v10590, %v10582
    %v11295 = vpack.c.b16 %v10591, %v10583
    %v11296 = vpack.c.b16 %v10592, %v10584
    %v11297 = vpack.c.b16 %v10593, %v10585
    %v11298 = vpack.c.b16 %v10594, %v10586
    %v11299 = vpack.c.b16 %v10595, %v10587
    %v11300 = vpack.c.b16 %v10596, %v10588
    %v11301 = vpack.c.b16 %v10605, %v10597
    %v11302 = vpack.c.b16 %v10606, %v10598
    %v11303 = vpack.c.b16 %v10607, %v10599
    %v11304 = vpack.c.b16 %v10608, %v10600
    %v11305 = vpack.c.b16 %v10609, %v10601
    %v11306 = vpack.c.b16 %v10610, %v10602
    %v11307 = vpack.c.b16 %v10611, %v10603
    %v11308 = vpack.c.b16 %v10612, %v10604
    %v11309 = vpack.c.b16 %v10621, %v10613
    %v11310 = vpack.c.b16 %v10622, %v10614
    %v11311 = vpack.c.b16 %v10623, %v10615
    %v11312 = vpack.c.b16 %v10624, %v10616
    %v11313 = vpack.c.b16 %v10625, %v10617
    %v11314 = vpack.c.b16 %v10626, %v10618
    %v11315 = vpack.c.b16 %v10627, %v10619
    %v11316 = vpack.c.b16 %v10628, %v10620
    %v11317 = vpack.c.b16 %v10637, %v10629
    %v11318 = vpack.c.b16 %v10638, %v10630
    %v11319 = vpack.c.b16 %v10639, %v10631
    %v11320 = vpack.c.b16 %v10640, %v10632
    %v11321 = vpack.c.b16 %v10641, %v10633
    %v11322 = vpack.c.b16 %v10642, %v10634
    %v11323 = vpack.c.b16 %v10643, %v10635
    %v11324 = vpack.c.b16 %v10644, %v10636
    %v11325 = vpack.c.b16 %v10653, %v10645
    %v11326 = vpack.c.b16 %v10654, %v10646
    %v11327 = vpack.c.b16 %v10655, %v10647
    %v11328 = vpack.c.b16 %v10656, %v10648
    %v11329 = vpack.c.b16 %v10657, %v10649
    %v11330 = vpack.c.b16 %v10658, %v10650
    %v11331 = vpack.c.b16 %v10659, %v10651
    %v11332 = vpack.c.b16 %v10660, %v10652
    %v11333 = vpack.c.b16 %v10669, %v10661
    %v11334 = vpack.c.b16 %v10670, %v10662
    %v11335 = vpack.c.b16 %v10671, %v10663
    %v11336 = vpack.c.b16 %v10672, %v10664
    %v11337 = vpack.c.b16 %v10673, %v10665
    %v11338 = vpack.c.b16 %v10674, %v10666
    %v11339 = vpack.c.b16 %v10675, %v10667
    %v11340 = vpack.c.b16 %v10676, %v10668
    %v11341 = vpack.c.b16 %v10685, %v10677
    %v11342 = vpack.c.b16 %v10686, %v10678
    %v11343 = vpack.c.b16 %v10687, %v10679
    %v11344 = vpack.c.b16 %v10688, %v10680
    %v11345 = vpack.c.b16 %v10689, %v10681
    %v11346 = vpack.c.b16 %v10690, %v10682
    %v11347 = vpack.c.b16 %v10691, %v10683
    %v11348 = vpack.c.b16 %v10692, %v10684
    %v11349 = vpack.c.b16 %v10701, %v10693
    %v11350 = vpack.c.b16 %v10702, %v10694
    %v11351 = vpack.c.b16 %v10703, %v10695
    %v11352 = vpack.c.b16 %v10704, %v10696
    %v11353 = vpack.c.b16 %v10705, %v10697
    %v11354 = vpack.c.b16 %v10706, %v10698
    %v11355 = vpack.c.b16 %v10707, %v10699
    %v11356 = vpack.c.b16 %v10708, %v10700
    %v11357 = vpack.c.b16 %v10717, %v10709
    %v11358 = vpack.c.b16 %v10718, %v10710
    %v11359 = vpack.c.b16 %v10719, %v10711
    %v11360 = vpack.c.b16 %v10720, %v10712
    %v11361 = vpack.c.b16 %v10721, %v10713
    %v11362 = vpack.c.b16 %v10722, %v10714
    %v11363 = vpack.c.b16 %v10723, %v10715
    %v11364 = vpack.c.b16 %v10724, %v10716
    %v11365 = vpack.c.b16 %v10733, %v10725
    %v11366 = vpack.c.b16 %v10734, %v10726
    %v11367 = vpack.c.b16 %v10735, %v10727
    %v11368 = vpack.c.b16 %v10736, %v10728
    %v11369 = vpack.c.b16 %v10737, %v10729
    %v11370 = vpack.c.b16 %v10738, %v10730
    %v11371 = vpack.c.b16 %v10739, %v10731
    %v11372 = vpack.c.b16 %v10740, %v10732
    %v11373 = vpack.c.b16 %v10749, %v10741
    %v11374 = vpack.c.b16 %v10750, %v10742
    %v11375 = vpack.c.b16 %v10751, %v10743
    %v11376 = vpack.c.b16 %v10752, %v10744
    %v11377 = vpack.c.b16 %v10753, %v10745
    %v11378 = vpack.c.b16 %v10754, %v10746
    %v11379 = vpack.c.b16 %v10755, %v10747
    %v11380 = vpack.c.b16 %v10756, %v10748
    %v11381 = vpack.c.b16 %v10765, %v10757
    %v11382 = vpack.c.b16 %v10766, %v10758
    %v11383 = vpack.c.b16 %v10767, %v10759
    %v11384 = vpack.c.b16 %v10768, %v10760
    %v11385 = vpack.c.b16 %v10769, %v10761
    %v11386 = vpack.c.b16 %v10770, %v10762
    %v11387 = vpack.c.b16 %v10771, %v10763
    %v11388 = vpack.c.b16 %v10772, %v10764
    %v11389 = vpack.c.b16 %v10781, %v10773
    %v11390 = vpack.c.b16 %v10782, %v10774
    %v11391 = vpack.c.b16 %v10783, %v10775
    %v11392 = vpack.c.b16 %v10784, %v10776
    %v11393 = vpack.c.b16 %v10785, %v10777
    %v11394 = vpack.c.b16 %v10786, %v10778
    %v11395 = vpack.c.b16 %v10787, %v10779
    %v11396 = vpack.c.b16 %v10788, %v10780
    %v11397 = vpack.c.b16 %v10797, %v10789
    %v11398 = vpack.c.b16 %v10798, %v10790
    %v11399 = vpack.c.b16 %v10799, %v10791
    %v11400 = vpack.c.b16 %v10800, %v10792
    %v11401 = vpack.c.b16 %v10801, %v10793
    %v11402 = vpack.c.b16 %v10802, %v10794
    %v11403 = vpack.c.b16 %v10803, %v10795
    %v11404 = vpack.c.b16 %v10804, %v10796
    %v11405 = vpack.c.b16 %v10813, %v10805
    %v11406 = vpack.c.b16 %v10814, %v10806
    %v11407 = vpack.c.b16 %v10815, %v10807
    %v11408 = vpack.c.b16 %v10816, %v10808
    %v11409 = vpack.c.b16 %v10817, %v10809
    %v11410 = vpack.c.b16 %v10818, %v10810
    %v11411 = vpack.c.b16 %v10819, %v10811
    %v11412 = vpack.c.b16 %v10820, %v10812
    %v11413 = vpack.c.b16 %v10829, %v10821
    %v11414 = vpack.c.b16 %v10830, %v10822
    %v11415 = vpack.c.b16 %v10831, %v10823
    %v11416 = vpack.c.b16 %v10832, %v10824
    %v11417 = vpack.c.b16 %v10833, %v10825
    %v11418 = vpack.c.b16 %v10834, %v10826
    %v11419 = vpack.c.b16 %v10835, %v10827
    %v11420 = vpack.c.b16 %v10836, %v10828
    %v11421 = vpack.c.b16 %v10845, %v10837
    %v11422 = vpack.c.b16 %v10846, %v10838
    %v11423 = vpack.c.b16 %v10847, %v10839
    %v11424 = vpack.c.b16 %v10848, %v10840
    %v11425 = vpack.c.b16 %v10849, %v10841
    %v11426 = vpack.c.b16 %v10850, %v10842
    %v11427 = vpack.c.b16 %v10851, %v10843
    %v11428 = vpack.c.b16 %v10852, %v10844
    %v11429 = vpack.c.b16 %v10861, %v10853
    %v11430 = vpack.c.b16 %v10862, %v10854
    %v11431 = vpack.c.b16 %v10863, %v10855
    %v11432 = vpack.c.b16 %v10864, %v10856
    %v11433 = vpack.c.b16 %v10865, %v10857
    %v11434 = vpack.c.b16 %v10866, %v10858
    %v11435 = vpack.c.b16 %v10867, %v10859
    %v11436 = vpack.c.b16 %v10868, %v10860
    %v11437 = vpack.c.b16 %v10877, %v10869
    %v11438 = vpack.c.b16 %v10878, %v10870
    %v11439 = vpack.c.b16 %v10879, %v10871
    %v11440 = vpack.c.b16 %v10880, %v10872
    %v11441 = vpack.c.b16 %v10881, %v10873
    %v11442 = vpack.c.b16 %v10882, %v10874
    %v11443 = vpack.c.b16 %v10883, %v10875
    %v11444 = vpack.c.b16 %v10884, %v10876
    %v11445 = vpack.c.b16 %v10893, %v10885
    %v11446 = vpack.c.b16 %v10894, %v10886
    %v11447 = vpack.c.b16 %v10895, %v10887
    %v11448 = vpack.c.b16 %v10896, %v10888
    %v11449 = vpack.c.b16 %v10897, %v10889
    %v11450 = vpack.c.b16 %v10898, %v10890
    %v11451 = vpack.c.b16 %v10899, %v10891
    %v11452 = vpack.c.b16 %v10900, %v10892
    %v11453 = vpack.c.b16 %v10909, %v10901
    %v11454 = vpack.c.b16 %v10910, %v10902
    %v11455 = vpack.c.b16 %v10911, %v10903
    %v11456 = vpack.c.b16 %v10912, %v10904
    %v11457 = vpack.c.b16 %v10913, %v10905
    %v11458 = vpack.c.b16 %v10914, %v10906
    %v11459 = vpack.c.b16 %v10915, %v10907
    %v11460 = vpack.c.b16 %v10916, %v10908
    %v11461 = vpack.c.b16 %v10925, %v10917
    %v11462 = vpack.c.b16 %v10926, %v10918
    %v11463 = vpack.c.b16 %v10927, %v10919
    %v11464 = vpack.c.b16 %v10928, %v10920
    %v11465 = vpack.c.b16 %v10929, %v10921
    %v11466 = vpack.c.b16 %v10930, %v10922
    %v11467 = vpack.c.b16 %v10931, %v10923
    %v11468 = vpack.c.b16 %v10932, %v10924
    %v11469 = vpack.c.b16 %v10941, %v10933
    %v11470 = vpack.c.b16 %v10942, %v10934
    %v11471 = vpack.c.b16 %v10943, %v10935
    %v11472 = vpack.c.b16 %v10944, %v10936
    %v11473 = vpack.c.b16 %v10945, %v10937
    %v11474 = vpack.c.b16 %v10946, %v10938
    %v11475 = vpack.c.b16 %v10947, %v10939
    %v11476 = vpack.c.b16 %v10948, %v10940
    %v11477 = vpack.c.b16 %v10957, %v10949
    %v11478 = vpack.c.b16 %v10958, %v10950
    %v11479 = vpack.c.b16 %v10959, %v10951
    %v11480 = vpack.c.b16 %v10960, %v10952
    %v11481 = vpack.c.b16 %v10961, %v10953
    %v11482 = vpack.c.b16 %v10962, %v10954
    %v11483 = vpack.c.b16 %v10963, %v10955
    %v11484 = vpack.c.b16 %v10964, %v10956
    %v11485 = vpack.c.b16 %v10973, %v10965
    %v11486 = vpack.c.b16 %v10974, %v10966
    %v11487 = vpack.c.b16 %v10975, %v10967
    %v11488 = vpack.c.b16 %v10976, %v10968
    %v11489 = vpack.c.b16 %v10977, %v10969
    %v11490 = vpack.c.b16 %v10978, %v10970
    %v11491 = vpack.c.b16 %v10979, %v10971
    %v11492 = vpack.c.b16 %v10980, %v10972
    %12005 = vmatprep.subr.bf16.mxu0 %v11038
    %12006 = vmatpush1.bf16.msra.mxu0 %v11037
    %12007 = vmatprep.subr.bf16.mxu0 %v11030
    %12008 = vmatpush1.bf16.msra.mxu0 %v11029
    %12009 = vmatprep.subr.bf16.mxu0 %v11022
    %12010 = vmatpush1.bf16.msra.mxu0 %v11021
    %12011 = vmatprep.subr.bf16.mxu0 %v11014
    %12012 = vmatpush1.bf16.msra.mxu0 %v11013
    %12013 = vmatprep.subr.bf16.mxu0 %v11006
    %12014 = vmatpush1.bf16.msra.mxu0 %v11005
    %12015 = vmatprep.subr.bf16.mxu0 %v10998
    %12016 = vmatpush1.bf16.msra.mxu0 %v10997
    %12017 = vmatprep.subr.bf16.mxu0 %v10990
    %12018 = vmatpush1.bf16.msra.mxu0 %v10989
    %12019 = vmatprep.subr.bf16.mxu0 %v10982
    %12020 = vmatpush1.bf16.msra.mxu0 %v10981
    %12021 = vmatprep.subr.bf16.mxu0 %v11102
    %12022 = vmatpush2.bf16.msra.mxu0 %v11101
    %12023 = vmatprep.subr.bf16.mxu0 %v11094
    %12024 = vmatpush2.bf16.msra.mxu0 %v11093
    %12025 = vmatprep.subr.bf16.mxu0 %v11086
    %12026 = vmatpush2.bf16.msra.mxu0 %v11085
    %12027 = vmatprep.subr.bf16.mxu0 %v11078
    %12028 = vmatpush2.bf16.msra.mxu0 %v11077
    %12029 = vmatprep.subr.bf16.mxu0 %v11070
    %12030 = vmatpush2.bf16.msra.mxu0 %v11069
    %12031 = vmatprep.subr.bf16.mxu0 %v11062
    %12032 = vmatpush2.bf16.msra.mxu0 %v11061
    %12033 = vmatprep.subr.bf16.mxu0 %v11054
    %12034 = vmatpush2.bf16.msra.mxu0 %v11053
    %12035 = vmatprep.subr.bf16.mxu0 %v11046
    %12036 = vmatpush2.bf16.msra.mxu0 %v11045
    %12037 = vmatprep.mubr.bf16.mxu0 %v8884
    %12038 = vmatmul.mubr.bf16.gmra.mxu0 %v8883
    %v12039 = vpop.f32.mrf.mxu0
    %v12040 = vadd.f32 %v9408, %v12039
    %v12041 = vpop.f32.mrf.mxu0
    %v12042 = vadd.f32 %v9412, %v12041
    %v12043 = vpop.f32.mrf.mxu0
    %v12044 = vpop.f32.mrf.mxu0
    %12045 = vdwg.mxu0
    %12046 = vmatprep.subr.bf16.mxu0 %v11166
    %12047 = vmatpush1.bf16.msra.mxu0 %v11165
    %12048 = vmatprep.subr.bf16.mxu0 %v11158
    %12049 = vmatpush1.bf16.msra.mxu0 %v11157
    %12050 = vmatprep.subr.bf16.mxu0 %v11150
    %12051 = vmatpush1.bf16.msra.mxu0 %v11149
    %12052 = vmatprep.subr.bf16.mxu0 %v11142
    %12053 = vmatpush1.bf16.msra.mxu0 %v11141
    %12054 = vmatprep.subr.bf16.mxu0 %v11134
    %12055 = vmatpush1.bf16.msra.mxu0 %v11133
    %12056 = vmatprep.subr.bf16.mxu0 %v11126
    %12057 = vmatpush1.bf16.msra.mxu0 %v11125
    %12058 = vmatprep.subr.bf16.mxu0 %v11118
    %12059 = vmatpush1.bf16.msra.mxu0 %v11117
    %12060 = vmatprep.subr.bf16.mxu0 %v11110
    %12061 = vmatpush1.bf16.msra.mxu0 %v11109
    %12062 = vmatprep.subr.bf16.mxu0 %v11230
    %12063 = vmatpush2.bf16.msra.mxu0 %v11229
    %12064 = vmatprep.subr.bf16.mxu0 %v11222
    %12065 = vmatpush2.bf16.msra.mxu0 %v11221
    %12066 = vmatprep.subr.bf16.mxu0 %v11214
    %12067 = vmatpush2.bf16.msra.mxu0 %v11213
    %12068 = vmatprep.subr.bf16.mxu0 %v11206
    %12069 = vmatpush2.bf16.msra.mxu0 %v11205
    %12070 = vmatprep.subr.bf16.mxu0 %v11198
    %12071 = vmatpush2.bf16.msra.mxu0 %v11197
    %12072 = vmatprep.subr.bf16.mxu0 %v11190
    %12073 = vmatpush2.bf16.msra.mxu0 %v11189
    %12074 = vmatprep.subr.bf16.mxu0 %v11182
    %12075 = vmatpush2.bf16.msra.mxu0 %v11181
    %12076 = vmatprep.subr.bf16.mxu0 %v11174
    %12077 = vmatpush2.bf16.msra.mxu0 %v11173
    %12078 = vmatprep.mubr.bf16.mxu0 %v8886
    %12079 = vmatmul.mubr.bf16.gmra.mxu0 %v8885
    %v12080 = vpop.f32.mrf.mxu0
    %v12081 = vadd.f32 %v12040, %v12080
    %v12082 = vpop.f32.mrf.mxu0
    %v12083 = vadd.f32 %v12042, %v12082
    %v12084 = vpop.f32.mrf.mxu0
    %v12085 = vpop.f32.mrf.mxu0
    %12086 = vdwg.mxu0
    %12087 = vmatprep.subr.bf16.mxu0 %v11294
    %12088 = vmatpush1.bf16.msra.mxu0 %v11293
    %12089 = vmatprep.subr.bf16.mxu0 %v11286
    %12090 = vmatpush1.bf16.msra.mxu0 %v11285
    %12091 = vmatprep.subr.bf16.mxu0 %v11278
    %12092 = vmatpush1.bf16.msra.mxu0 %v11277
    %12093 = vmatprep.subr.bf16.mxu0 %v11270
    %12094 = vmatpush1.bf16.msra.mxu0 %v11269
    %12095 = vmatprep.subr.bf16.mxu0 %v11262
    %12096 = vmatpush1.bf16.msra.mxu0 %v11261
    %12097 = vmatprep.subr.bf16.mxu0 %v11254
    %12098 = vmatpush1.bf16.msra.mxu0 %v11253
    %12099 = vmatprep.subr.bf16.mxu0 %v11246
    %12100 = vmatpush1.bf16.msra.mxu0 %v11245
    %12101 = vmatprep.subr.bf16.mxu0 %v11238
    %12102 = vmatpush1.bf16.msra.mxu0 %v11237
    %12103 = vmatprep.subr.bf16.mxu0 %v11358
    %12104 = vmatpush2.bf16.msra.mxu0 %v11357
    %12105 = vmatprep.subr.bf16.mxu0 %v11350
    %12106 = vmatpush2.bf16.msra.mxu0 %v11349
    %12107 = vmatprep.subr.bf16.mxu0 %v11342
    %12108 = vmatpush2.bf16.msra.mxu0 %v11341
    %12109 = vmatprep.subr.bf16.mxu0 %v11334
    %12110 = vmatpush2.bf16.msra.mxu0 %v11333
    %12111 = vmatprep.subr.bf16.mxu0 %v11326
    %12112 = vmatpush2.bf16.msra.mxu0 %v11325
    %12113 = vmatprep.subr.bf16.mxu0 %v11318
    %12114 = vmatpush2.bf16.msra.mxu0 %v11317
    %12115 = vmatprep.subr.bf16.mxu0 %v11310
    %12116 = vmatpush2.bf16.msra.mxu0 %v11309
    %12117 = vmatprep.subr.bf16.mxu0 %v11302
    %12118 = vmatpush2.bf16.msra.mxu0 %v11301
    %12119 = vmatprep.mubr.bf16.mxu0 %v8888
    %12120 = vmatmul.mubr.bf16.gmra.mxu0 %v8887
    %v12121 = vpop.f32.mrf.mxu0
    %v12122 = vadd.f32 %v12081, %v12121
    %v12123 = vpop.f32.mrf.mxu0
    %v12124 = vadd.f32 %v12083, %v12123
    %v12125 = vpop.f32.mrf.mxu0
    %v12126 = vpop.f32.mrf.mxu0
    %12127 = vdwg.mxu0
    %12128 = vmatprep.subr.bf16.mxu0 %v11422
    %12129 = vmatpush1.bf16.msra.mxu0 %v11421
    %12130 = vmatprep.subr.bf16.mxu0 %v11414
    %12131 = vmatpush1.bf16.msra.mxu0 %v11413
    %12132 = vmatprep.subr.bf16.mxu0 %v11406
    %12133 = vmatpush1.bf16.msra.mxu0 %v11405
    %12134 = vmatprep.subr.bf16.mxu0 %v11398
    %12135 = vmatpush1.bf16.msra.mxu0 %v11397
    %12136 = vmatprep.subr.bf16.mxu0 %v11390
    %12137 = vmatpush1.bf16.msra.mxu0 %v11389
    %12138 = vmatprep.subr.bf16.mxu0 %v11382
    %12139 = vmatpush1.bf16.msra.mxu0 %v11381
    %12140 = vmatprep.subr.bf16.mxu0 %v11374
    %12141 = vmatpush1.bf16.msra.mxu0 %v11373
    %12142 = vmatprep.subr.bf16.mxu0 %v11366
    %12143 = vmatpush1.bf16.msra.mxu0 %v11365
    %12144 = vmatprep.subr.bf16.mxu0 %v11486
    %12145 = vmatpush2.bf16.msra.mxu0 %v11485
    %12146 = vmatprep.subr.bf16.mxu0 %v11478
    %12147 = vmatpush2.bf16.msra.mxu0 %v11477
    %12148 = vmatprep.subr.bf16.mxu0 %v11470
    %12149 = vmatpush2.bf16.msra.mxu0 %v11469
    %12150 = vmatprep.subr.bf16.mxu0 %v11462
    %12151 = vmatpush2.bf16.msra.mxu0 %v11461
    %12152 = vmatprep.subr.bf16.mxu0 %v11454
    %12153 = vmatpush2.bf16.msra.mxu0 %v11453
    %12154 = vmatprep.subr.bf16.mxu0 %v11446
    %12155 = vmatpush2.bf16.msra.mxu0 %v11445
    %12156 = vmatprep.subr.bf16.mxu0 %v11438
    %12157 = vmatpush2.bf16.msra.mxu0 %v11437
    %12158 = vmatprep.subr.bf16.mxu0 %v11430
    %12159 = vmatpush2.bf16.msra.mxu0 %v11429
    %12160 = vmatprep.mubr.bf16.mxu0 %v8890
    %12161 = vmatmul.mubr.bf16.gmra.mxu0 %v8889
    %v12162 = vpop.f32.mrf.mxu0
    %v12163 = vadd.f32 %v12122, %v12162
    %v12164 = vpop.f32.mrf.mxu0
    %v12165 = vadd.f32 %v12124, %v12164
    %v12166 = vpop.f32.mrf.mxu0
    %v12167 = vpop.f32.mrf.mxu0
    %12168 = vdwg.mxu0
    %12169 = vmatprep.subr.bf16.mxu0 %v11040
    %12170 = vmatpush1.bf16.msra.mxu0 %v11039
    %12171 = vmatprep.subr.bf16.mxu0 %v11032
    %12172 = vmatpush1.bf16.msra.mxu0 %v11031
    %12173 = vmatprep.subr.bf16.mxu0 %v11024
    %12174 = vmatpush1.bf16.msra.mxu0 %v11023
    %12175 = vmatprep.subr.bf16.mxu0 %v11016
    %12176 = vmatpush1.bf16.msra.mxu0 %v11015
    %12177 = vmatprep.subr.bf16.mxu0 %v11008
    %12178 = vmatpush1.bf16.msra.mxu0 %v11007
    %12179 = vmatprep.subr.bf16.mxu0 %v11000
    %12180 = vmatpush1.bf16.msra.mxu0 %v10999
    %12181 = vmatprep.subr.bf16.mxu0 %v10992
    %12182 = vmatpush1.bf16.msra.mxu0 %v10991
    %12183 = vmatprep.subr.bf16.mxu0 %v10984
    %12184 = vmatpush1.bf16.msra.mxu0 %v10983
    %12185 = vmatprep.subr.bf16.mxu0 %v11104
    %12186 = vmatpush2.bf16.msra.mxu0 %v11103
    %12187 = vmatprep.subr.bf16.mxu0 %v11096
    %12188 = vmatpush2.bf16.msra.mxu0 %v11095
    %12189 = vmatprep.subr.bf16.mxu0 %v11088
    %12190 = vmatpush2.bf16.msra.mxu0 %v11087
    %12191 = vmatprep.subr.bf16.mxu0 %v11080
    %12192 = vmatpush2.bf16.msra.mxu0 %v11079
    %12193 = vmatprep.subr.bf16.mxu0 %v11072
    %12194 = vmatpush2.bf16.msra.mxu0 %v11071
    %12195 = vmatprep.subr.bf16.mxu0 %v11064
    %12196 = vmatpush2.bf16.msra.mxu0 %v11063
    %12197 = vmatprep.subr.bf16.mxu0 %v11056
    %12198 = vmatpush2.bf16.msra.mxu0 %v11055
    %12199 = vmatprep.subr.bf16.mxu0 %v11048
    %12200 = vmatpush2.bf16.msra.mxu0 %v11047
    %12201 = vmatprep.mubr.bf16.mxu0 %v8884
    %12202 = vmatmul.mubr.bf16.gmra.mxu0 %v8883
    %v12203 = vpop.f32.mrf.mxu0
    %v12204 = vadd.f32 %v9416, %v12203
    %v12205 = vpop.f32.mrf.mxu0
    %v12206 = vadd.f32 %v9420, %v12205
    %v12207 = vpop.f32.mrf.mxu0
    %v12208 = vpop.f32.mrf.mxu0
    %12209 = vdwg.mxu0
    %12210 = vmatprep.subr.bf16.mxu0 %v11168
    %12211 = vmatpush1.bf16.msra.mxu0 %v11167
    %12212 = vmatprep.subr.bf16.mxu0 %v11160
    %12213 = vmatpush1.bf16.msra.mxu0 %v11159
    %12214 = vmatprep.subr.bf16.mxu0 %v11152
    %12215 = vmatpush1.bf16.msra.mxu0 %v11151
    %12216 = vmatprep.subr.bf16.mxu0 %v11144
    %12217 = vmatpush1.bf16.msra.mxu0 %v11143
    %12218 = vmatprep.subr.bf16.mxu0 %v11136
    %12219 = vmatpush1.bf16.msra.mxu0 %v11135
    %12220 = vmatprep.subr.bf16.mxu0 %v11128
    %12221 = vmatpush1.bf16.msra.mxu0 %v11127
    %12222 = vmatprep.subr.bf16.mxu0 %v11120
    %12223 = vmatpush1.bf16.msra.mxu0 %v11119
    %12224 = vmatprep.subr.bf16.mxu0 %v11112
    %12225 = vmatpush1.bf16.msra.mxu0 %v11111
    %12226 = vmatprep.subr.bf16.mxu0 %v11232
    %12227 = vmatpush2.bf16.msra.mxu0 %v11231
    %12228 = vmatprep.subr.bf16.mxu0 %v11224
    %12229 = vmatpush2.bf16.msra.mxu0 %v11223
    %12230 = vmatprep.subr.bf16.mxu0 %v11216
    %12231 = vmatpush2.bf16.msra.mxu0 %v11215
    %12232 = vmatprep.subr.bf16.mxu0 %v11208
    %12233 = vmatpush2.bf16.msra.mxu0 %v11207
    %12234 = vmatprep.subr.bf16.mxu0 %v11200
    %12235 = vmatpush2.bf16.msra.mxu0 %v11199
    %12236 = vmatprep.subr.bf16.mxu0 %v11192
    %12237 = vmatpush2.bf16.msra.mxu0 %v11191
    %12238 = vmatprep.subr.bf16.mxu0 %v11184
    %12239 = vmatpush2.bf16.msra.mxu0 %v11183
    %12240 = vmatprep.subr.bf16.mxu0 %v11176
    %12241 = vmatpush2.bf16.msra.mxu0 %v11175
    %12242 = vmatprep.mubr.bf16.mxu0 %v8886
    %12243 = vmatmul.mubr.bf16.gmra.mxu0 %v8885
    %v12244 = vpop.f32.mrf.mxu0
    %v12245 = vadd.f32 %v12204, %v12244
    %v12246 = vpop.f32.mrf.mxu0
    %v12247 = vadd.f32 %v12206, %v12246
    %v12248 = vpop.f32.mrf.mxu0
    %v12249 = vpop.f32.mrf.mxu0
    %12250 = vdwg.mxu0
    %12251 = vmatprep.subr.bf16.mxu0 %v11296
    %12252 = vmatpush1.bf16.msra.mxu0 %v11295
    %12253 = vmatprep.subr.bf16.mxu0 %v11288
    %12254 = vmatpush1.bf16.msra.mxu0 %v11287
    %12255 = vmatprep.subr.bf16.mxu0 %v11280
    %12256 = vmatpush1.bf16.msra.mxu0 %v11279
    %12257 = vmatprep.subr.bf16.mxu0 %v11272
    %12258 = vmatpush1.bf16.msra.mxu0 %v11271
    %12259 = vmatprep.subr.bf16.mxu0 %v11264
    %12260 = vmatpush1.bf16.msra.mxu0 %v11263
    %12261 = vmatprep.subr.bf16.mxu0 %v11256
    %12262 = vmatpush1.bf16.msra.mxu0 %v11255
    %12263 = vmatprep.subr.bf16.mxu0 %v11248
    %12264 = vmatpush1.bf16.msra.mxu0 %v11247
    %12265 = vmatprep.subr.bf16.mxu0 %v11240
    %12266 = vmatpush1.bf16.msra.mxu0 %v11239
    %12267 = vmatprep.subr.bf16.mxu0 %v11360
    %12268 = vmatpush2.bf16.msra.mxu0 %v11359
    %12269 = vmatprep.subr.bf16.mxu0 %v11352
    %12270 = vmatpush2.bf16.msra.mxu0 %v11351
    %12271 = vmatprep.subr.bf16.mxu0 %v11344
    %12272 = vmatpush2.bf16.msra.mxu0 %v11343
    %12273 = vmatprep.subr.bf16.mxu0 %v11336
    %12274 = vmatpush2.bf16.msra.mxu0 %v11335
    %12275 = vmatprep.subr.bf16.mxu0 %v11328
    %12276 = vmatpush2.bf16.msra.mxu0 %v11327
    %12277 = vmatprep.subr.bf16.mxu0 %v11320
    %12278 = vmatpush2.bf16.msra.mxu0 %v11319
    %12279 = vmatprep.subr.bf16.mxu0 %v11312
    %12280 = vmatpush2.bf16.msra.mxu0 %v11311
    %12281 = vmatprep.subr.bf16.mxu0 %v11304
    %12282 = vmatpush2.bf16.msra.mxu0 %v11303
    %12283 = vmatprep.mubr.bf16.mxu0 %v8888
    %12284 = vmatmul.mubr.bf16.gmra.mxu0 %v8887
    %v12285 = vpop.f32.mrf.mxu0
    %v12286 = vadd.f32 %v12245, %v12285
    %v12287 = vpop.f32.mrf.mxu0
    %v12288 = vadd.f32 %v12247, %v12287
    %v12289 = vpop.f32.mrf.mxu0
    %v12290 = vpop.f32.mrf.mxu0
    %12291 = vdwg.mxu0
    %12292 = vmatprep.subr.bf16.mxu0 %v11424
    %12293 = vmatpush1.bf16.msra.mxu0 %v11423
    %12294 = vmatprep.subr.bf16.mxu0 %v11416
    %12295 = vmatpush1.bf16.msra.mxu0 %v11415
    %12296 = vmatprep.subr.bf16.mxu0 %v11408
    %12297 = vmatpush1.bf16.msra.mxu0 %v11407
    %12298 = vmatprep.subr.bf16.mxu0 %v11400
    %12299 = vmatpush1.bf16.msra.mxu0 %v11399
    %12300 = vmatprep.subr.bf16.mxu0 %v11392
    %12301 = vmatpush1.bf16.msra.mxu0 %v11391
    %12302 = vmatprep.subr.bf16.mxu0 %v11384
    %12303 = vmatpush1.bf16.msra.mxu0 %v11383
    %12304 = vmatprep.subr.bf16.mxu0 %v11376
    %12305 = vmatpush1.bf16.msra.mxu0 %v11375
    %12306 = vmatprep.subr.bf16.mxu0 %v11368
    %12307 = vmatpush1.bf16.msra.mxu0 %v11367
    %12308 = vmatprep.subr.bf16.mxu0 %v11488
    %12309 = vmatpush2.bf16.msra.mxu0 %v11487
    %12310 = vmatprep.subr.bf16.mxu0 %v11480
    %12311 = vmatpush2.bf16.msra.mxu0 %v11479
    %12312 = vmatprep.subr.bf16.mxu0 %v11472
    %12313 = vmatpush2.bf16.msra.mxu0 %v11471
    %12314 = vmatprep.subr.bf16.mxu0 %v11464
    %12315 = vmatpush2.bf16.msra.mxu0 %v11463
    %12316 = vmatprep.subr.bf16.mxu0 %v11456
    %12317 = vmatpush2.bf16.msra.mxu0 %v11455
    %12318 = vmatprep.subr.bf16.mxu0 %v11448
    %12319 = vmatpush2.bf16.msra.mxu0 %v11447
    %12320 = vmatprep.subr.bf16.mxu0 %v11440
    %12321 = vmatpush2.bf16.msra.mxu0 %v11439
    %12322 = vmatprep.subr.bf16.mxu0 %v11432
    %12323 = vmatpush2.bf16.msra.mxu0 %v11431
    %12324 = vmatprep.mubr.bf16.mxu0 %v8890
    %12325 = vmatmul.mubr.bf16.gmra.mxu0 %v8889
    %v12326 = vpop.f32.mrf.mxu0
    %v12327 = vadd.f32 %v12286, %v12326
    %v12328 = vpop.f32.mrf.mxu0
    %v12329 = vadd.f32 %v12288, %v12328
    %v12330 = vpop.f32.mrf.mxu0
    %v12331 = vpop.f32.mrf.mxu0
    %12332 = vdwg.mxu0
    %12333 = vmatprep.subr.bf16.mxu0 %v11042
    %12334 = vmatpush1.bf16.msra.mxu0 %v11041
    %12335 = vmatprep.subr.bf16.mxu0 %v11034
    %12336 = vmatpush1.bf16.msra.mxu0 %v11033
    %12337 = vmatprep.subr.bf16.mxu0 %v11026
    %12338 = vmatpush1.bf16.msra.mxu0 %v11025
    %12339 = vmatprep.subr.bf16.mxu0 %v11018
    %12340 = vmatpush1.bf16.msra.mxu0 %v11017
    %12341 = vmatprep.subr.bf16.mxu0 %v11010
    %12342 = vmatpush1.bf16.msra.mxu0 %v11009
    %12343 = vmatprep.subr.bf16.mxu0 %v11002
    %12344 = vmatpush1.bf16.msra.mxu0 %v11001
    %12345 = vmatprep.subr.bf16.mxu0 %v10994
    %12346 = vmatpush1.bf16.msra.mxu0 %v10993
    %12347 = vmatprep.subr.bf16.mxu0 %v10986
    %12348 = vmatpush1.bf16.msra.mxu0 %v10985
    %12349 = vmatprep.subr.bf16.mxu0 %v11106
    %12350 = vmatpush2.bf16.msra.mxu0 %v11105
    %12351 = vmatprep.subr.bf16.mxu0 %v11098
    %12352 = vmatpush2.bf16.msra.mxu0 %v11097
    %12353 = vmatprep.subr.bf16.mxu0 %v11090
    %12354 = vmatpush2.bf16.msra.mxu0 %v11089
    %12355 = vmatprep.subr.bf16.mxu0 %v11082
    %12356 = vmatpush2.bf16.msra.mxu0 %v11081
    %12357 = vmatprep.subr.bf16.mxu0 %v11074
    %12358 = vmatpush2.bf16.msra.mxu0 %v11073
    %12359 = vmatprep.subr.bf16.mxu0 %v11066
    %12360 = vmatpush2.bf16.msra.mxu0 %v11065
    %12361 = vmatprep.subr.bf16.mxu0 %v11058
    %12362 = vmatpush2.bf16.msra.mxu0 %v11057
    %12363 = vmatprep.subr.bf16.mxu0 %v11050
    %12364 = vmatpush2.bf16.msra.mxu0 %v11049
    %12365 = vmatprep.mubr.bf16.mxu0 %v8884
    %12366 = vmatmul.mubr.bf16.gmra.mxu0 %v8883
    %v12367 = vpop.f32.mrf.mxu0
    %v12368 = vadd.f32 %v9424, %v12367
    %v12369 = vpop.f32.mrf.mxu0
    %v12370 = vadd.f32 %v9428, %v12369
    %v12371 = vpop.f32.mrf.mxu0
    %v12372 = vpop.f32.mrf.mxu0
    %12373 = vdwg.mxu0
    %12374 = vmatprep.subr.bf16.mxu0 %v11170
    %12375 = vmatpush1.bf16.msra.mxu0 %v11169
    %12376 = vmatprep.subr.bf16.mxu0 %v11162
    %12377 = vmatpush1.bf16.msra.mxu0 %v11161
    %12378 = vmatprep.subr.bf16.mxu0 %v11154
    %12379 = vmatpush1.bf16.msra.mxu0 %v11153
    %12380 = vmatprep.subr.bf16.mxu0 %v11146
    %12381 = vmatpush1.bf16.msra.mxu0 %v11145
    %12382 = vmatprep.subr.bf16.mxu0 %v11138
    %12383 = vmatpush1.bf16.msra.mxu0 %v11137
    %12384 = vmatprep.subr.bf16.mxu0 %v11130
    %12385 = vmatpush1.bf16.msra.mxu0 %v11129
    %12386 = vmatprep.subr.bf16.mxu0 %v11122
    %12387 = vmatpush1.bf16.msra.mxu0 %v11121
    %12388 = vmatprep.subr.bf16.mxu0 %v11114
    %12389 = vmatpush1.bf16.msra.mxu0 %v11113
    %12390 = vmatprep.subr.bf16.mxu0 %v11234
    %12391 = vmatpush2.bf16.msra.mxu0 %v11233
    %12392 = vmatprep.subr.bf16.mxu0 %v11226
    %12393 = vmatpush2.bf16.msra.mxu0 %v11225
    %12394 = vmatprep.subr.bf16.mxu0 %v11218
    %12395 = vmatpush2.bf16.msra.mxu0 %v11217
    %12396 = vmatprep.subr.bf16.mxu0 %v11210
    %12397 = vmatpush2.bf16.msra.mxu0 %v11209
    %12398 = vmatprep.subr.bf16.mxu0 %v11202
    %12399 = vmatpush2.bf16.msra.mxu0 %v11201
    %12400 = vmatprep.subr.bf16.mxu0 %v11194
    %12401 = vmatpush2.bf16.msra.mxu0 %v11193
    %12402 = vmatprep.subr.bf16.mxu0 %v11186
    %12403 = vmatpush2.bf16.msra.mxu0 %v11185
    %12404 = vmatprep.subr.bf16.mxu0 %v11178
    %12405 = vmatpush2.bf16.msra.mxu0 %v11177
    %12406 = vmatprep.mubr.bf16.mxu0 %v8886
    %12407 = vmatmul.mubr.bf16.gmra.mxu0 %v8885
    %v12408 = vpop.f32.mrf.mxu0
    %v12409 = vadd.f32 %v12368, %v12408
    %v12410 = vpop.f32.mrf.mxu0
    %v12411 = vadd.f32 %v12370, %v12410
    %v12412 = vpop.f32.mrf.mxu0
    %v12413 = vpop.f32.mrf.mxu0
    %12414 = vdwg.mxu0
    %12415 = vmatprep.subr.bf16.mxu0 %v11298
    %12416 = vmatpush1.bf16.msra.mxu0 %v11297
    %12417 = vmatprep.subr.bf16.mxu0 %v11290
    %12418 = vmatpush1.bf16.msra.mxu0 %v11289
    %12419 = vmatprep.subr.bf16.mxu0 %v11282
    %12420 = vmatpush1.bf16.msra.mxu0 %v11281
    %12421 = vmatprep.subr.bf16.mxu0 %v11274
    %12422 = vmatpush1.bf16.msra.mxu0 %v11273
    %12423 = vmatprep.subr.bf16.mxu0 %v11266
    %12424 = vmatpush1.bf16.msra.mxu0 %v11265
    %12425 = vmatprep.subr.bf16.mxu0 %v11258
    %12426 = vmatpush1.bf16.msra.mxu0 %v11257
    %12427 = vmatprep.subr.bf16.mxu0 %v11250
    %12428 = vmatpush1.bf16.msra.mxu0 %v11249
    %12429 = vmatprep.subr.bf16.mxu0 %v11242
    %12430 = vmatpush1.bf16.msra.mxu0 %v11241
    %12431 = vmatprep.subr.bf16.mxu0 %v11362
    %12432 = vmatpush2.bf16.msra.mxu0 %v11361
    %12433 = vmatprep.subr.bf16.mxu0 %v11354
    %12434 = vmatpush2.bf16.msra.mxu0 %v11353
    %12435 = vmatprep.subr.bf16.mxu0 %v11346
    %12436 = vmatpush2.bf16.msra.mxu0 %v11345
    %12437 = vmatprep.subr.bf16.mxu0 %v11338
    %12438 = vmatpush2.bf16.msra.mxu0 %v11337
    %12439 = vmatprep.subr.bf16.mxu0 %v11330
    %12440 = vmatpush2.bf16.msra.mxu0 %v11329
    %12441 = vmatprep.subr.bf16.mxu0 %v11322
    %12442 = vmatpush2.bf16.msra.mxu0 %v11321
    %12443 = vmatprep.subr.bf16.mxu0 %v11314
    %12444 = vmatpush2.bf16.msra.mxu0 %v11313
    %12445 = vmatprep.subr.bf16.mxu0 %v11306
    %12446 = vmatpush2.bf16.msra.mxu0 %v11305
    %12447 = vmatprep.mubr.bf16.mxu0 %v8888
    %12448 = vmatmul.mubr.bf16.gmra.mxu0 %v8887
    %v12449 = vpop.f32.mrf.mxu0
    %v12450 = vadd.f32 %v12409, %v12449
    %v12451 = vpop.f32.mrf.mxu0
    %v12452 = vadd.f32 %v12411, %v12451
    %v12453 = vpop.f32.mrf.mxu0
    %v12454 = vpop.f32.mrf.mxu0
    %12455 = vdwg.mxu0
    %12456 = vmatprep.subr.bf16.mxu0 %v11426
    %12457 = vmatpush1.bf16.msra.mxu0 %v11425
    %12458 = vmatprep.subr.bf16.mxu0 %v11418
    %12459 = vmatpush1.bf16.msra.mxu0 %v11417
    %12460 = vmatprep.subr.bf16.mxu0 %v11410
    %12461 = vmatpush1.bf16.msra.mxu0 %v11409
    %12462 = vmatprep.subr.bf16.mxu0 %v11402
    %12463 = vmatpush1.bf16.msra.mxu0 %v11401
    %12464 = vmatprep.subr.bf16.mxu0 %v11394
    %12465 = vmatpush1.bf16.msra.mxu0 %v11393
    %12466 = vmatprep.subr.bf16.mxu0 %v11386
    %12467 = vmatpush1.bf16.msra.mxu0 %v11385
    %12468 = vmatprep.subr.bf16.mxu0 %v11378
    %12469 = vmatpush1.bf16.msra.mxu0 %v11377
    %12470 = vmatprep.subr.bf16.mxu0 %v11370
    %12471 = vmatpush1.bf16.msra.mxu0 %v11369
    %12472 = vmatprep.subr.bf16.mxu0 %v11490
    %12473 = vmatpush2.bf16.msra.mxu0 %v11489
    %12474 = vmatprep.subr.bf16.mxu0 %v11482
    %12475 = vmatpush2.bf16.msra.mxu0 %v11481
    %12476 = vmatprep.subr.bf16.mxu0 %v11474
    %12477 = vmatpush2.bf16.msra.mxu0 %v11473
    %12478 = vmatprep.subr.bf16.mxu0 %v11466
    %12479 = vmatpush2.bf16.msra.mxu0 %v11465
    %12480 = vmatprep.subr.bf16.mxu0 %v11458
    %12481 = vmatpush2.bf16.msra.mxu0 %v11457
    %12482 = vmatprep.subr.bf16.mxu0 %v11450
    %12483 = vmatpush2.bf16.msra.mxu0 %v11449
    %12484 = vmatprep.subr.bf16.mxu0 %v11442
    %12485 = vmatpush2.bf16.msra.mxu0 %v11441
    %12486 = vmatprep.subr.bf16.mxu0 %v11434
    %12487 = vmatpush2.bf16.msra.mxu0 %v11433
    %12488 = vmatprep.mubr.bf16.mxu0 %v8890
    %12489 = vmatmul.mubr.bf16.gmra.mxu0 %v8889
    %v12490 = vpop.f32.mrf.mxu0
    %v12491 = vadd.f32 %v12450, %v12490
    %v12492 = vpop.f32.mrf.mxu0
    %v12493 = vadd.f32 %v12452, %v12492
    %v12494 = vpop.f32.mrf.mxu0
    %v12495 = vpop.f32.mrf.mxu0
    %12496 = vdwg.mxu0
    %12497 = vmatprep.subr.bf16.mxu0 %v11044
    %12498 = vmatpush1.bf16.msra.mxu0 %v11043
    %12499 = vmatprep.subr.bf16.mxu0 %v11036
    %12500 = vmatpush1.bf16.msra.mxu0 %v11035
    %12501 = vmatprep.subr.bf16.mxu0 %v11028
    %12502 = vmatpush1.bf16.msra.mxu0 %v11027
    %12503 = vmatprep.subr.bf16.mxu0 %v11020
    %12504 = vmatpush1.bf16.msra.mxu0 %v11019
    %12505 = vmatprep.subr.bf16.mxu0 %v11012
    %12506 = vmatpush1.bf16.msra.mxu0 %v11011
    %12507 = vmatprep.subr.bf16.mxu0 %v11004
    %12508 = vmatpush1.bf16.msra.mxu0 %v11003
    %12509 = vmatprep.subr.bf16.mxu0 %v10996
    %12510 = vmatpush1.bf16.msra.mxu0 %v10995
    %12511 = vmatprep.subr.bf16.mxu0 %v10988
    %12512 = vmatpush1.bf16.msra.mxu0 %v10987
    %12513 = vmatprep.subr.bf16.mxu0 %v11108
    %12514 = vmatpush2.bf16.msra.mxu0 %v11107
    %12515 = vmatprep.subr.bf16.mxu0 %v11100
    %12516 = vmatpush2.bf16.msra.mxu0 %v11099
    %12517 = vmatprep.subr.bf16.mxu0 %v11092
    %12518 = vmatpush2.bf16.msra.mxu0 %v11091
    %12519 = vmatprep.subr.bf16.mxu0 %v11084
    %12520 = vmatpush2.bf16.msra.mxu0 %v11083
    %12521 = vmatprep.subr.bf16.mxu0 %v11076
    %12522 = vmatpush2.bf16.msra.mxu0 %v11075
    %12523 = vmatprep.subr.bf16.mxu0 %v11068
    %12524 = vmatpush2.bf16.msra.mxu0 %v11067
    %12525 = vmatprep.subr.bf16.mxu0 %v11060
    %12526 = vmatpush2.bf16.msra.mxu0 %v11059
    %12527 = vmatprep.subr.bf16.mxu0 %v11052
    %12528 = vmatpush2.bf16.msra.mxu0 %v11051
    %12529 = vmatprep.mubr.bf16.mxu0 %v8884
    %12530 = vmatmul.mubr.bf16.gmra.mxu0 %v8883
    %v12531 = vpop.f32.mrf.mxu0
    %v12532 = vadd.f32 %v9432, %v12531
    %v12533 = vpop.f32.mrf.mxu0
    %v12534 = vadd.f32 %v9436, %v12533
    %v12535 = vpop.f32.mrf.mxu0
    %v12536 = vpop.f32.mrf.mxu0
    %12537 = vdwg.mxu0
    %12538 = vmatprep.subr.bf16.mxu0 %v11172
    %12539 = vmatpush1.bf16.msra.mxu0 %v11171
    %12540 = vmatprep.subr.bf16.mxu0 %v11164
    %12541 = vmatpush1.bf16.msra.mxu0 %v11163
    %12542 = vmatprep.subr.bf16.mxu0 %v11156
    %12543 = vmatpush1.bf16.msra.mxu0 %v11155
    %12544 = vmatprep.subr.bf16.mxu0 %v11148
    %12545 = vmatpush1.bf16.msra.mxu0 %v11147
    %12546 = vmatprep.subr.bf16.mxu0 %v11140
    %12547 = vmatpush1.bf16.msra.mxu0 %v11139
    %12548 = vmatprep.subr.bf16.mxu0 %v11132
    %12549 = vmatpush1.bf16.msra.mxu0 %v11131
    %12550 = vmatprep.subr.bf16.mxu0 %v11124
    %12551 = vmatpush1.bf16.msra.mxu0 %v11123
    %12552 = vmatprep.subr.bf16.mxu0 %v11116
    %12553 = vmatpush1.bf16.msra.mxu0 %v11115
    %12554 = vmatprep.subr.bf16.mxu0 %v11236
    %12555 = vmatpush2.bf16.msra.mxu0 %v11235
    %12556 = vmatprep.subr.bf16.mxu0 %v11228
    %12557 = vmatpush2.bf16.msra.mxu0 %v11227
    %12558 = vmatprep.subr.bf16.mxu0 %v11220
    %12559 = vmatpush2.bf16.msra.mxu0 %v11219
    %12560 = vmatprep.subr.bf16.mxu0 %v11212
    %12561 = vmatpush2.bf16.msra.mxu0 %v11211
    %12562 = vmatprep.subr.bf16.mxu0 %v11204
    %12563 = vmatpush2.bf16.msra.mxu0 %v11203
    %12564 = vmatprep.subr.bf16.mxu0 %v11196
    %12565 = vmatpush2.bf16.msra.mxu0 %v11195
    %12566 = vmatprep.subr.bf16.mxu0 %v11188
    %12567 = vmatpush2.bf16.msra.mxu0 %v11187
    %12568 = vmatprep.subr.bf16.mxu0 %v11180
    %12569 = vmatpush2.bf16.msra.mxu0 %v11179
    %12570 = vmatprep.mubr.bf16.mxu0 %v8886
    %12571 = vmatmul.mubr.bf16.gmra.mxu0 %v8885
    %v12572 = vpop.f32.mrf.mxu0
    %v12573 = vadd.f32 %v12532, %v12572
    %v12574 = vpop.f32.mrf.mxu0
    %v12575 = vadd.f32 %v12534, %v12574
    %v12576 = vpop.f32.mrf.mxu0
    %v12577 = vpop.f32.mrf.mxu0
    %12578 = vdwg.mxu0
    %12579 = vmatprep.subr.bf16.mxu0 %v11300
    %12580 = vmatpush1.bf16.msra.mxu0 %v11299
    %12581 = vmatprep.subr.bf16.mxu0 %v11292
    %12582 = vmatpush1.bf16.msra.mxu0 %v11291
    %12583 = vmatprep.subr.bf16.mxu0 %v11284
    %12584 = vmatpush1.bf16.msra.mxu0 %v11283
    %12585 = vmatprep.subr.bf16.mxu0 %v11276
    %12586 = vmatpush1.bf16.msra.mxu0 %v11275
    %12587 = vmatprep.subr.bf16.mxu0 %v11268
    %12588 = vmatpush1.bf16.msra.mxu0 %v11267
    %12589 = vmatprep.subr.bf16.mxu0 %v11260
    %12590 = vmatpush1.bf16.msra.mxu0 %v11259
    %12591 = vmatprep.subr.bf16.mxu0 %v11252
    %12592 = vmatpush1.bf16.msra.mxu0 %v11251
    %12593 = vmatprep.subr.bf16.mxu0 %v11244
    %12594 = vmatpush1.bf16.msra.mxu0 %v11243
    %12595 = vmatprep.subr.bf16.mxu0 %v11364
    %12596 = vmatpush2.bf16.msra.mxu0 %v11363
    %12597 = vmatprep.subr.bf16.mxu0 %v11356
    %12598 = vmatpush2.bf16.msra.mxu0 %v11355
    %12599 = vmatprep.subr.bf16.mxu0 %v11348
    %12600 = vmatpush2.bf16.msra.mxu0 %v11347
    %12601 = vmatprep.subr.bf16.mxu0 %v11340
    %12602 = vmatpush2.bf16.msra.mxu0 %v11339
    %12603 = vmatprep.subr.bf16.mxu0 %v11332
    %12604 = vmatpush2.bf16.msra.mxu0 %v11331
    %12605 = vmatprep.subr.bf16.mxu0 %v11324
    %12606 = vmatpush2.bf16.msra.mxu0 %v11323
    %12607 = vmatprep.subr.bf16.mxu0 %v11316
    %12608 = vmatpush2.bf16.msra.mxu0 %v11315
    %12609 = vmatprep.subr.bf16.mxu0 %v11308
    %12610 = vmatpush2.bf16.msra.mxu0 %v11307
    %12611 = vmatprep.mubr.bf16.mxu0 %v8888
    %12612 = vmatmul.mubr.bf16.gmra.mxu0 %v8887
    %v12613 = vpop.f32.mrf.mxu0
    %v12614 = vadd.f32 %v12573, %v12613
    %v12615 = vpop.f32.mrf.mxu0
    %v12616 = vadd.f32 %v12575, %v12615
    %v12617 = vpop.f32.mrf.mxu0
    %v12618 = vpop.f32.mrf.mxu0
    %12619 = vdwg.mxu0
    %12620 = vmatprep.subr.bf16.mxu0 %v11428
    %12621 = vmatpush1.bf16.msra.mxu0 %v11427
    %12622 = vmatprep.subr.bf16.mxu0 %v11420
    %12623 = vmatpush1.bf16.msra.mxu0 %v11419
    %12624 = vmatprep.subr.bf16.mxu0 %v11412
    %12625 = vmatpush1.bf16.msra.mxu0 %v11411
    %12626 = vmatprep.subr.bf16.mxu0 %v11404
    %12627 = vmatpush1.bf16.msra.mxu0 %v11403
    %12628 = vmatprep.subr.bf16.mxu0 %v11396
    %12629 = vmatpush1.bf16.msra.mxu0 %v11395
    %12630 = vmatprep.subr.bf16.mxu0 %v11388
    %12631 = vmatpush1.bf16.msra.mxu0 %v11387
    %12632 = vmatprep.subr.bf16.mxu0 %v11380
    %12633 = vmatpush1.bf16.msra.mxu0 %v11379
    %12634 = vmatprep.subr.bf16.mxu0 %v11372
    %12635 = vmatpush1.bf16.msra.mxu0 %v11371
    %12636 = vmatprep.subr.bf16.mxu0 %v11492
    %12637 = vmatpush2.bf16.msra.mxu0 %v11491
    %12638 = vmatprep.subr.bf16.mxu0 %v11484
    %12639 = vmatpush2.bf16.msra.mxu0 %v11483
    %12640 = vmatprep.subr.bf16.mxu0 %v11476
    %12641 = vmatpush2.bf16.msra.mxu0 %v11475
    %12642 = vmatprep.subr.bf16.mxu0 %v11468
    %12643 = vmatpush2.bf16.msra.mxu0 %v11467
    %12644 = vmatprep.subr.bf16.mxu0 %v11460
    %12645 = vmatpush2.bf16.msra.mxu0 %v11459
    %12646 = vmatprep.subr.bf16.mxu0 %v11452
    %12647 = vmatpush2.bf16.msra.mxu0 %v11451
    %12648 = vmatprep.subr.bf16.mxu0 %v11444
    %12649 = vmatpush2.bf16.msra.mxu0 %v11443
    %12650 = vmatprep.subr.bf16.mxu0 %v11436
    %12651 = vmatpush2.bf16.msra.mxu0 %v11435
    %12652 = vmatprep.mubr.bf16.mxu0 %v8890
    %12653 = vmatmul.mubr.bf16.gmra.mxu0 %v8889
    %v12654 = vpop.f32.mrf.mxu0
    %v12655 = vadd.f32 %v12614, %v12654
    %v12656 = vpop.f32.mrf.mxu0
    %v12657 = vadd.f32 %v12616, %v12656
    %v12658 = vpop.f32.mrf.mxu0
    %v12659 = vpop.f32.mrf.mxu0
    %12660 = vdwg.mxu0
    %v12661 = vrot.slane %v12163, 4
    %v12662 = vadd.f32 %v12163, %v12661
    %v12663 = vrot.slane %v12662, 2
    %v12664 = vadd.f32 %v12662, %v12663
    %v12665 = vrot.slane %v12664, 1
    %v12666 = vadd.f32 %v12664, %v12665
    %v12667 = vrot.slane %v12165, 4
    %v12668 = vadd.f32 %v12165, %v12667
    %v12669 = vrot.slane %v12668, 2
    %v12670 = vadd.f32 %v12668, %v12669
    %v12671 = vrot.slane %v12670, 1
    %v12672 = vadd.f32 %v12670, %v12671
    %v12673 = vrot.slane %v12327, 4
    %v12674 = vadd.f32 %v12327, %v12673
    %v12675 = vrot.slane %v12674, 2
    %v12676 = vadd.f32 %v12674, %v12675
    %v12677 = vrot.slane %v12676, 1
    %v12678 = vadd.f32 %v12676, %v12677
    %v12679 = vrot.slane %v12329, 4
    %v12680 = vadd.f32 %v12329, %v12679
    %v12681 = vrot.slane %v12680, 2
    %v12682 = vadd.f32 %v12680, %v12681
    %v12683 = vrot.slane %v12682, 1
    %v12684 = vadd.f32 %v12682, %v12683
    %v12685 = vrot.slane %v12491, 4
    %v12686 = vadd.f32 %v12491, %v12685
    %v12687 = vrot.slane %v12686, 2
    %v12688 = vadd.f32 %v12686, %v12687
    %v12689 = vrot.slane %v12688, 1
    %v12690 = vadd.f32 %v12688, %v12689
    %v12691 = vrot.slane %v12493, 4
    %v12692 = vadd.f32 %v12493, %v12691
    %v12693 = vrot.slane %v12692, 2
    %v12694 = vadd.f32 %v12692, %v12693
    %v12695 = vrot.slane %v12694, 1
    %v12696 = vadd.f32 %v12694, %v12695
    %v12697 = vrot.slane %v12655, 4
    %v12698 = vadd.f32 %v12655, %v12697
    %v12699 = vrot.slane %v12698, 2
    %v12700 = vadd.f32 %v12698, %v12699
    %v12701 = vrot.slane %v12700, 1
    %v12702 = vadd.f32 %v12700, %v12701
    %v12703 = vrot.slane %v12657, 4
    %v12704 = vadd.f32 %v12657, %v12703
    %v12705 = vrot.slane %v12704, 2
    %v12706 = vadd.f32 %v12704, %v12705
    %v12707 = vrot.slane %v12706, 1
    %v12708 = vadd.f32 %v12706, %v12707
    %v12709 = vmul.f32 %v12666, %v546
    %v12710 = vmul.f32 %v12672, %v546
    %v12711 = vmul.f32 %v12678, %v546
    %v12712 = vmul.f32 %v12684, %v546
    %v12713 = vmul.f32 %v12690, %v546
    %v12714 = vmul.f32 %v12696, %v546
    %v12715 = vmul.f32 %v12702, %v546
    %v12716 = vmul.f32 %v12708, %v546
    %v12717 = vsub.f32 %v12163, %v12709
    %v12718 = vsub.f32 %v12165, %v12710
    %v12719 = vsub.f32 %v12327, %v12711
    %v12720 = vsub.f32 %v12329, %v12712
    %v12721 = vsub.f32 %v12491, %v12713
    %v12722 = vsub.f32 %v12493, %v12714
    %v12723 = vsub.f32 %v12655, %v12715
    %v12724 = vsub.f32 %v12657, %v12716
    %v12725 = vmul.f32 %v12717, %v12717
    %v12726 = vmul.f32 %v12718, %v12718
    %v12727 = vmul.f32 %v12719, %v12719
    %v12728 = vmul.f32 %v12720, %v12720
    %v12729 = vmul.f32 %v12721, %v12721
    %v12730 = vmul.f32 %v12722, %v12722
    %v12731 = vmul.f32 %v12723, %v12723
    %v12732 = vmul.f32 %v12724, %v12724
    %v12733 = vrot.slane %v12725, 4
    %v12734 = vadd.f32 %v12725, %v12733
    %v12735 = vrot.slane %v12734, 2
    %v12736 = vadd.f32 %v12734, %v12735
    %v12737 = vrot.slane %v12736, 1
    %v12738 = vadd.f32 %v12736, %v12737
    %v12739 = vrot.slane %v12726, 4
    %v12740 = vadd.f32 %v12726, %v12739
    %v12741 = vrot.slane %v12740, 2
    %v12742 = vadd.f32 %v12740, %v12741
    %v12743 = vrot.slane %v12742, 1
    %v12744 = vadd.f32 %v12742, %v12743
    %v12745 = vrot.slane %v12727, 4
    %v12746 = vadd.f32 %v12727, %v12745
    %v12747 = vrot.slane %v12746, 2
    %v12748 = vadd.f32 %v12746, %v12747
    %v12749 = vrot.slane %v12748, 1
    %v12750 = vadd.f32 %v12748, %v12749
    %v12751 = vrot.slane %v12728, 4
    %v12752 = vadd.f32 %v12728, %v12751
    %v12753 = vrot.slane %v12752, 2
    %v12754 = vadd.f32 %v12752, %v12753
    %v12755 = vrot.slane %v12754, 1
    %v12756 = vadd.f32 %v12754, %v12755
    %v12757 = vrot.slane %v12729, 4
    %v12758 = vadd.f32 %v12729, %v12757
    %v12759 = vrot.slane %v12758, 2
    %v12760 = vadd.f32 %v12758, %v12759
    %v12761 = vrot.slane %v12760, 1
    %v12762 = vadd.f32 %v12760, %v12761
    %v12763 = vrot.slane %v12730, 4
    %v12764 = vadd.f32 %v12730, %v12763
    %v12765 = vrot.slane %v12764, 2
    %v12766 = vadd.f32 %v12764, %v12765
    %v12767 = vrot.slane %v12766, 1
    %v12768 = vadd.f32 %v12766, %v12767
    %v12769 = vrot.slane %v12731, 4
    %v12770 = vadd.f32 %v12731, %v12769
    %v12771 = vrot.slane %v12770, 2
    %v12772 = vadd.f32 %v12770, %v12771
    %v12773 = vrot.slane %v12772, 1
    %v12774 = vadd.f32 %v12772, %v12773
    %v12775 = vrot.slane %v12732, 4
    %v12776 = vadd.f32 %v12732, %v12775
    %v12777 = vrot.slane %v12776, 2
    %v12778 = vadd.f32 %v12776, %v12777
    %v12779 = vrot.slane %v12778, 1
    %v12780 = vadd.f32 %v12778, %v12779
    %v12781 = vmul.f32 %v12738, %v546
    %v12782 = vmul.f32 %v12744, %v546
    %v12783 = vmul.f32 %v12750, %v546
    %v12784 = vmul.f32 %v12756, %v546
    %v12785 = vmul.f32 %v12762, %v546
    %v12786 = vmul.f32 %v12768, %v546
    %v12787 = vmul.f32 %v12774, %v546
    %v12788 = vmul.f32 %v12780, %v546
    %v12789 = vadd.f32 %v12781, 1e-05
    %v12790 = vadd.f32 %v12782, 1e-05
    %v12791 = vadd.f32 %v12783, 1e-05
    %v12792 = vadd.f32 %v12784, 1e-05
    %v12793 = vadd.f32 %v12785, 1e-05
    %v12794 = vadd.f32 %v12786, 1e-05
    %v12795 = vadd.f32 %v12787, 1e-05
    %v12796 = vadd.f32 %v12788, 1e-05
    %v12797 = vrsqrt.pop %v12789
    %v12798 = vrsqrt.pop %v12790
    %v12799 = vrsqrt.pop %v12791
    %v12800 = vrsqrt.pop %v12792
    %v12801 = vrsqrt.pop %v12793
    %v12802 = vrsqrt.pop %v12794
    %v12803 = vrsqrt.pop %v12795
    %v12804 = vrsqrt.pop %v12796
    %v12805 = vmul.f32 %v12717, %v12797
    %v12806 = vmul.f32 %v12718, %v12798
    %v12807 = vmul.f32 %v12719, %v12799
    %v12808 = vmul.f32 %v12720, %v12800
    %v12809 = vmul.f32 %v12721, %v12801
    %v12810 = vmul.f32 %v12722, %v12802
    %v12811 = vmul.f32 %v12723, %v12803
    %v12812 = vmul.f32 %v12724, %v12804
    %v12813 = vld [vmem:[#allocation24] sm:$0xff]
    %v12815 = vlaneseq
    %v12816 = vshrl.u32 %v12815, 7
    %v12817 = vsub.s32 0, %v12816
    %v12818 = vrot.slane %v12813, %v12817
    %v12819 = vlaneseq
    %v12820 = vshrl.u32 %v12819, 7
    %v12821 = vsub.s32 1, %v12820
    %v12822 = vrot.slane %v12813, %v12821
    %v12823 = vlaneseq
    %v12824 = vshrl.u32 %v12823, 7
    %v12825 = vsub.s32 2, %v12824
    %v12826 = vrot.slane %v12813, %v12825
    %v12827 = vlaneseq
    %v12828 = vshrl.u32 %v12827, 7
    %v12829 = vsub.s32 3, %v12828
    %v12830 = vrot.slane %v12813, %v12829
    %v12831 = vlaneseq
    %v12832 = vshrl.u32 %v12831, 7
    %v12833 = vsub.s32 4, %v12832
    %v12834 = vrot.slane %v12813, %v12833
    %v12835 = vlaneseq
    %v12836 = vshrl.u32 %v12835, 7
    %v12837 = vsub.s32 5, %v12836
    %v12838 = vrot.slane %v12813, %v12837
    %v12839 = vlaneseq
    %v12840 = vshrl.u32 %v12839, 7
    %v12841 = vsub.s32 6, %v12840
    %v12842 = vrot.slane %v12813, %v12841
    %v12843 = vlaneseq
    %v12844 = vshrl.u32 %v12843, 7
    %v12845 = vsub.s32 7, %v12844
    %v12846 = vrot.slane %v12813, %v12845
    %v12855 = vmul.f32 %v12805, %v12818
    %v12856 = vmul.f32 %v12806, %v12822
    %v12857 = vmul.f32 %v12807, %v12826
    %v12858 = vmul.f32 %v12808, %v12830
    %v12859 = vmul.f32 %v12809, %v12834
    %v12860 = vmul.f32 %v12810, %v12838
    %v12861 = vmul.f32 %v12811, %v12842
    %v12862 = vmul.f32 %v12812, %v12846
    %v12863 = vld [vmem:[#allocation25] sm:$0xff]
    %v12865 = vlaneseq
    %v12866 = vshrl.u32 %v12865, 7
    %v12867 = vsub.s32 0, %v12866
    %v12868 = vrot.slane %v12863, %v12867
    %v12869 = vlaneseq
    %v12870 = vshrl.u32 %v12869, 7
    %v12871 = vsub.s32 1, %v12870
    %v12872 = vrot.slane %v12863, %v12871
    %v12873 = vlaneseq
    %v12874 = vshrl.u32 %v12873, 7
    %v12875 = vsub.s32 2, %v12874
    %v12876 = vrot.slane %v12863, %v12875
    %v12877 = vlaneseq
    %v12878 = vshrl.u32 %v12877, 7
    %v12879 = vsub.s32 3, %v12878
    %v12880 = vrot.slane %v12863, %v12879
    %v12881 = vlaneseq
    %v12882 = vshrl.u32 %v12881, 7
    %v12883 = vsub.s32 4, %v12882
    %v12884 = vrot.slane %v12863, %v12883
    %v12885 = vlaneseq
    %v12886 = vshrl.u32 %v12885, 7
    %v12887 = vsub.s32 5, %v12886
    %v12888 = vrot.slane %v12863, %v12887
    %v12889 = vlaneseq
    %v12890 = vshrl.u32 %v12889, 7
    %v12891 = vsub.s32 6, %v12890
    %v12892 = vrot.slane %v12863, %v12891
    %v12893 = vlaneseq
    %v12894 = vshrl.u32 %v12893, 7
    %v12895 = vsub.s32 7, %v12894
    %v12896 = vrot.slane %v12863, %v12895
    %v12905 = vadd.f32 %v12855, %v12868
    %v12906 = vadd.f32 %v12856, %v12872
    %v12907 = vadd.f32 %v12857, %v12876
    %v12908 = vadd.f32 %v12858, %v12880
    %v12909 = vadd.f32 %v12859, %v12884
    %v12910 = vadd.f32 %v12860, %v12888
    %v12911 = vadd.f32 %v12861, %v12892
    %v12912 = vadd.f32 %v12862, %v12896
    %vm12913 = vcmp.ge.f32.partialorder %v12905, 0.0
    %vm12914 = vcmp.ge.f32.partialorder %v12906, 0.0
    %vm12915 = vcmp.ge.f32.partialorder %v12907, 0.0
    %vm12916 = vcmp.ge.f32.partialorder %v12908, 0.0
    %vm12917 = vcmp.ge.f32.partialorder %v12909, 0.0
    %vm12918 = vcmp.ge.f32.partialorder %v12910, 0.0
    %vm12919 = vcmp.ge.f32.partialorder %v12911, 0.0
    %vm12920 = vcmp.ge.f32.partialorder %v12912, 0.0
    %v12921 = vmul.f32 %v12905, 0.01
    %v12922 = vmul.f32 %v12906, 0.01
    %v12923 = vmul.f32 %v12907, 0.01
    %v12924 = vmul.f32 %v12908, 0.01
    %v12925 = vmul.f32 %v12909, 0.01
    %v12926 = vmul.f32 %v12910, 0.01
    %v12927 = vmul.f32 %v12911, 0.01
    %v12928 = vmul.f32 %v12912, 0.01
    %v12929 = vsel %vm12913, %v12905, %v12921
    %v12930 = vsel %vm12914, %v12906, %v12922
    %v12931 = vsel %vm12915, %v12907, %v12923
    %v12932 = vsel %vm12916, %v12908, %v12924
    %v12933 = vsel %vm12917, %v12909, %v12925
    %v12934 = vsel %vm12918, %v12910, %v12926
    %v12935 = vsel %vm12919, %v12911, %v12927
    %v12936 = vsel %vm12920, %v12912, %v12928
    %v12937 = vpack.c.bf16 %v12929, %v12929
    %v12938 = vpack.c.bf16 %v12930, %v12930
    %v12939 = vpack.c.bf16 %v12931, %v12931
    %v12940 = vpack.c.bf16 %v12932, %v12932
    %v12941 = vpack.c.bf16 %v12933, %v12933
    %v12942 = vpack.c.bf16 %v12934, %v12934
    %v12943 = vpack.c.bf16 %v12935, %v12935
    %v12944 = vpack.c.bf16 %v12936, %v12936
    %v12945 = vld [vmem:[%s17] sm:$0xf]
    %v12946 = vld [vmem:[%s17 + $0x4] sm:$0xf]
    %v12947 = vld [vmem:[%s17 + $0x8] sm:$0xf]
    %v12948 = vld [vmem:[%s17 + $0xc] sm:$0xf]
    %v12949 = vld [vmem:[%s17 + $0x10] sm:$0xf]
    %v12950 = vld [vmem:[%s17 + $0x14] sm:$0xf]
    %v12951 = vld [vmem:[%s17 + $0x18] sm:$0xf]
    %v12952 = vld [vmem:[%s17 + $0x1c] sm:$0xf]
    %v12953 = vld [vmem:[%s17 + $0x20] sm:$0xf]
    %v12954 = vld [vmem:[%s17 + $0x24] sm:$0xf]
    %v12955 = vld [vmem:[%s17 + $0x28] sm:$0xf]
    %v12956 = vld [vmem:[%s17 + $0x2c] sm:$0xf]
    %v12957 = vld [vmem:[%s17 + $0x30] sm:$0xf]
    %v12958 = vld [vmem:[%s17 + $0x34] sm:$0xf]
    %v12959 = vld [vmem:[%s17 + $0x38] sm:$0xf]
    %v12960 = vld [vmem:[%s17 + $0x3c] sm:$0xf]
    %v12961 = vld [vmem:[%s17 + $0x40] sm:$0xf]
    %v12962 = vld [vmem:[%s17 + $0x44] sm:$0xf]
    %v12963 = vld [vmem:[%s17 + $0x48] sm:$0xf]
    %v12964 = vld [vmem:[%s17 + $0x4c] sm:$0xf]
    %v12965 = vld [vmem:[%s17 + $0x50] sm:$0xf]
    %v12966 = vld [vmem:[%s17 + $0x54] sm:$0xf]
    %v12967 = vld [vmem:[%s17 + $0x58] sm:$0xf]
    %v12968 = vld [vmem:[%s17 + $0x5c] sm:$0xf]
    %v12969 = vld [vmem:[%s17 + $0x60] sm:$0xf]
    %v12970 = vld [vmem:[%s17 + $0x64] sm:$0xf]
    %v12971 = vld [vmem:[%s17 + $0x68] sm:$0xf]
    %v12972 = vld [vmem:[%s17 + $0x6c] sm:$0xf]
    %v12973 = vld [vmem:[%s17 + $0x70] sm:$0xf]
    %v12974 = vld [vmem:[%s17 + $0x74] sm:$0xf]
    %v12975 = vld [vmem:[%s17 + $0x78] sm:$0xf]
    %v12976 = vld [vmem:[%s17 + $0x7c] sm:$0xf]
    %v12977 = vld [vmem:[%s17 + $0x80] sm:$0xf]
    %v12978 = vld [vmem:[%s17 + $0x84] sm:$0xf]
    %v12979 = vld [vmem:[%s17 + $0x88] sm:$0xf]
    %v12980 = vld [vmem:[%s17 + $0x8c] sm:$0xf]
    %v12981 = vld [vmem:[%s17 + $0x90] sm:$0xf]
    %v12982 = vld [vmem:[%s17 + $0x94] sm:$0xf]
    %v12983 = vld [vmem:[%s17 + $0x98] sm:$0xf]
    %v12984 = vld [vmem:[%s17 + $0x9c] sm:$0xf]
    %v12985 = vld [vmem:[%s17 + $0xa0] sm:$0xf]
    %v12986 = vld [vmem:[%s17 + $0xa4] sm:$0xf]
    %v12987 = vld [vmem:[%s17 + $0xa8] sm:$0xf]
    %v12988 = vld [vmem:[%s17 + $0xac] sm:$0xf]
    %v12989 = vld [vmem:[%s17 + $0xb0] sm:$0xf]
    %v12990 = vld [vmem:[%s17 + $0xb4] sm:$0xf]
    %v12991 = vld [vmem:[%s17 + $0xb8] sm:$0xf]
    %v12992 = vld [vmem:[%s17 + $0xbc] sm:$0xf]
    %v12993 = vld [vmem:[%s17 + $0xc0] sm:$0xf]
    %v12994 = vld [vmem:[%s17 + $0xc4] sm:$0xf]
    %v12995 = vld [vmem:[%s17 + $0xc8] sm:$0xf]
    %v12996 = vld [vmem:[%s17 + $0xcc] sm:$0xf]
    %v12997 = vld [vmem:[%s17 + $0xd0] sm:$0xf]
    %v12998 = vld [vmem:[%s17 + $0xd4] sm:$0xf]
    %v12999 = vld [vmem:[%s17 + $0xd8] sm:$0xf]
    %v13000 = vld [vmem:[%s17 + $0xdc] sm:$0xf]
    %v13001 = vld [vmem:[%s17 + $0xe0] sm:$0xf]
    %v13002 = vld [vmem:[%s17 + $0xe4] sm:$0xf]
    %v13003 = vld [vmem:[%s17 + $0xe8] sm:$0xf]
    %v13004 = vld [vmem:[%s17 + $0xec] sm:$0xf]
    %v13005 = vld [vmem:[%s17 + $0xf0] sm:$0xf]
    %v13006 = vld [vmem:[%s17 + $0xf4] sm:$0xf]
    %v13007 = vld [vmem:[%s17 + $0xf8] sm:$0xf]
    %v13008 = vld [vmem:[%s17 + $0xfc] sm:$0xf]
    %v13009 = vld [vmem:[%s17 + $0x100] sm:$0xf]
    %v13010 = vld [vmem:[%s17 + $0x104] sm:$0xf]
    %v13011 = vld [vmem:[%s17 + $0x108] sm:$0xf]
    %v13012 = vld [vmem:[%s17 + $0x10c] sm:$0xf]
    %v13013 = vld [vmem:[%s17 + $0x110] sm:$0xf]
    %v13014 = vld [vmem:[%s17 + $0x114] sm:$0xf]
    %v13015 = vld [vmem:[%s17 + $0x118] sm:$0xf]
    %v13016 = vld [vmem:[%s17 + $0x11c] sm:$0xf]
    %v13017 = vld [vmem:[%s17 + $0x120] sm:$0xf]
    %v13018 = vld [vmem:[%s17 + $0x124] sm:$0xf]
    %v13019 = vld [vmem:[%s17 + $0x128] sm:$0xf]
    %v13020 = vld [vmem:[%s17 + $0x12c] sm:$0xf]
    %v13021 = vld [vmem:[%s17 + $0x130] sm:$0xf]
    %v13022 = vld [vmem:[%s17 + $0x134] sm:$0xf]
    %v13023 = vld [vmem:[%s17 + $0x138] sm:$0xf]
    %v13024 = vld [vmem:[%s17 + $0x13c] sm:$0xf]
    %v13025 = vld [vmem:[%s17 + $0x140] sm:$0xf]
    %v13026 = vld [vmem:[%s17 + $0x144] sm:$0xf]
    %v13027 = vld [vmem:[%s17 + $0x148] sm:$0xf]
    %v13028 = vld [vmem:[%s17 + $0x14c] sm:$0xf]
    %v13029 = vld [vmem:[%s17 + $0x150] sm:$0xf]
    %v13030 = vld [vmem:[%s17 + $0x154] sm:$0xf]
    %v13031 = vld [vmem:[%s17 + $0x158] sm:$0xf]
    %v13032 = vld [vmem:[%s17 + $0x15c] sm:$0xf]
    %v13033 = vld [vmem:[%s17 + $0x160] sm:$0xf]
    %v13034 = vld [vmem:[%s17 + $0x164] sm:$0xf]
    %v13035 = vld [vmem:[%s17 + $0x168] sm:$0xf]
    %v13036 = vld [vmem:[%s17 + $0x16c] sm:$0xf]
    %v13037 = vld [vmem:[%s17 + $0x170] sm:$0xf]
    %v13038 = vld [vmem:[%s17 + $0x174] sm:$0xf]
    %v13039 = vld [vmem:[%s17 + $0x178] sm:$0xf]
    %v13040 = vld [vmem:[%s17 + $0x17c] sm:$0xf]
    %v13041 = vld [vmem:[%s17 + $0x180] sm:$0xf]
    %v13042 = vld [vmem:[%s17 + $0x184] sm:$0xf]
    %v13043 = vld [vmem:[%s17 + $0x188] sm:$0xf]
    %v13044 = vld [vmem:[%s17 + $0x18c] sm:$0xf]
    %v13045 = vld [vmem:[%s17 + $0x190] sm:$0xf]
    %v13046 = vld [vmem:[%s17 + $0x194] sm:$0xf]
    %v13047 = vld [vmem:[%s17 + $0x198] sm:$0xf]
    %v13048 = vld [vmem:[%s17 + $0x19c] sm:$0xf]
    %v13049 = vld [vmem:[%s17 + $0x1a0] sm:$0xf]
    %v13050 = vld [vmem:[%s17 + $0x1a4] sm:$0xf]
    %v13051 = vld [vmem:[%s17 + $0x1a8] sm:$0xf]
    %v13052 = vld [vmem:[%s17 + $0x1ac] sm:$0xf]
    %v13053 = vld [vmem:[%s17 + $0x1b0] sm:$0xf]
    %v13054 = vld [vmem:[%s17 + $0x1b4] sm:$0xf]
    %v13055 = vld [vmem:[%s17 + $0x1b8] sm:$0xf]
    %v13056 = vld [vmem:[%s17 + $0x1bc] sm:$0xf]
    %v13057 = vld [vmem:[%s17 + $0x1c0] sm:$0xf]
    %v13058 = vld [vmem:[%s17 + $0x1c4] sm:$0xf]
    %v13059 = vld [vmem:[%s17 + $0x1c8] sm:$0xf]
    %v13060 = vld [vmem:[%s17 + $0x1cc] sm:$0xf]
    %v13061 = vld [vmem:[%s17 + $0x1d0] sm:$0xf]
    %v13062 = vld [vmem:[%s17 + $0x1d4] sm:$0xf]
    %v13063 = vld [vmem:[%s17 + $0x1d8] sm:$0xf]
    %v13064 = vld [vmem:[%s17 + $0x1dc] sm:$0xf]
    %v13065 = vld [vmem:[%s17 + $0x1e0] sm:$0xf]
    %v13066 = vld [vmem:[%s17 + $0x1e4] sm:$0xf]
    %v13067 = vld [vmem:[%s17 + $0x1e8] sm:$0xf]
    %v13068 = vld [vmem:[%s17 + $0x1ec] sm:$0xf]
    %v13069 = vld [vmem:[%s17 + $0x1f0] sm:$0xf]
    %v13070 = vld [vmem:[%s17 + $0x1f4] sm:$0xf]
    %v13071 = vld [vmem:[%s17 + $0x1f8] sm:$0xf]
    %v13072 = vld [vmem:[%s17 + $0x1fc] sm:$0xf]
    %v13073 = vld [vmem:[#allocation27] sm:$0x1]
    %v13075 = vlaneseq
    %v13076 = vshrl.u32 %v13075, 7
    %v13077 = vsub.s32 0, %v13076
    %v13078 = vrot.slane %v13073, %v13077
    %v13208 = vunpack.c.l.b16 %v12945
    %v13209 = vunpack.c.l.b16 %v12946
    %v13210 = vunpack.c.l.b16 %v12947
    %v13211 = vunpack.c.l.b16 %v12948
    %v13212 = vunpack.c.l.b16 %v12949
    %v13213 = vunpack.c.l.b16 %v12950
    %v13214 = vunpack.c.l.b16 %v12951
    %v13215 = vunpack.c.l.b16 %v12952
    %v13216 = vunpack.c.l.b16 %v12953
    %v13217 = vunpack.c.l.b16 %v12954
    %v13218 = vunpack.c.l.b16 %v12955
    %v13219 = vunpack.c.l.b16 %v12956
    %v13220 = vunpack.c.l.b16 %v12957
    %v13221 = vunpack.c.l.b16 %v12958
    %v13222 = vunpack.c.l.b16 %v12959
    %v13223 = vunpack.c.l.b16 %v12960
    %v13224 = vunpack.c.l.b16 %v12961
    %v13225 = vunpack.c.l.b16 %v12962
    %v13226 = vunpack.c.l.b16 %v12963
    %v13227 = vunpack.c.l.b16 %v12964
    %v13228 = vunpack.c.l.b16 %v12965
    %v13229 = vunpack.c.l.b16 %v12966
    %v13230 = vunpack.c.l.b16 %v12967
    %v13231 = vunpack.c.l.b16 %v12968
    %v13232 = vunpack.c.l.b16 %v12969
    %v13233 = vunpack.c.l.b16 %v12970
    %v13234 = vunpack.c.l.b16 %v12971
    %v13235 = vunpack.c.l.b16 %v12972
    %v13236 = vunpack.c.l.b16 %v12973
    %v13237 = vunpack.c.l.b16 %v12974
    %v13238 = vunpack.c.l.b16 %v12975
    %v13239 = vunpack.c.l.b16 %v12976
    %v13240 = vunpack.c.l.b16 %v12977
    %v13241 = vunpack.c.l.b16 %v12978
    %v13242 = vunpack.c.l.b16 %v12979
    %v13243 = vunpack.c.l.b16 %v12980
    %v13244 = vunpack.c.l.b16 %v12981
    %v13245 = vunpack.c.l.b16 %v12982
    %v13246 = vunpack.c.l.b16 %v12983
    %v13247 = vunpack.c.l.b16 %v12984
    %v13248 = vunpack.c.l.b16 %v12985
    %v13249 = vunpack.c.l.b16 %v12986
    %v13250 = vunpack.c.l.b16 %v12987
    %v13251 = vunpack.c.l.b16 %v12988
    %v13252 = vunpack.c.l.b16 %v12989
    %v13253 = vunpack.c.l.b16 %v12990
    %v13254 = vunpack.c.l.b16 %v12991
    %v13255 = vunpack.c.l.b16 %v12992
    %v13256 = vunpack.c.l.b16 %v12993
    %v13257 = vunpack.c.l.b16 %v12994
    %v13258 = vunpack.c.l.b16 %v12995
    %v13259 = vunpack.c.l.b16 %v12996
    %v13260 = vunpack.c.l.b16 %v12997
    %v13261 = vunpack.c.l.b16 %v12998
    %v13262 = vunpack.c.l.b16 %v12999
    %v13263 = vunpack.c.l.b16 %v13000
    %v13264 = vunpack.c.l.b16 %v13001
    %v13265 = vunpack.c.l.b16 %v13002
    %v13266 = vunpack.c.l.b16 %v13003
    %v13267 = vunpack.c.l.b16 %v13004
    %v13268 = vunpack.c.l.b16 %v13005
    %v13269 = vunpack.c.l.b16 %v13006
    %v13270 = vunpack.c.l.b16 %v13007
    %v13271 = vunpack.c.l.b16 %v13008
    %v13272 = vunpack.c.l.b16 %v13009
    %v13273 = vunpack.c.l.b16 %v13010
    %v13274 = vunpack.c.l.b16 %v13011
    %v13275 = vunpack.c.l.b16 %v13012
    %v13276 = vunpack.c.l.b16 %v13013
    %v13277 = vunpack.c.l.b16 %v13014
    %v13278 = vunpack.c.l.b16 %v13015
    %v13279 = vunpack.c.l.b16 %v13016
    %v13280 = vunpack.c.l.b16 %v13017
    %v13281 = vunpack.c.l.b16 %v13018
    %v13282 = vunpack.c.l.b16 %v13019
    %v13283 = vunpack.c.l.b16 %v13020
    %v13284 = vunpack.c.l.b16 %v13021
    %v13285 = vunpack.c.l.b16 %v13022
    %v13286 = vunpack.c.l.b16 %v13023
    %v13287 = vunpack.c.l.b16 %v13024
    %v13288 = vunpack.c.l.b16 %v13025
    %v13289 = vunpack.c.l.b16 %v13026
    %v13290 = vunpack.c.l.b16 %v13027
    %v13291 = vunpack.c.l.b16 %v13028
    %v13292 = vunpack.c.l.b16 %v13029
    %v13293 = vunpack.c.l.b16 %v13030
    %v13294 = vunpack.c.l.b16 %v13031
    %v13295 = vunpack.c.l.b16 %v13032
    %v13296 = vunpack.c.l.b16 %v13033
    %v13297 = vunpack.c.l.b16 %v13034
    %v13298 = vunpack.c.l.b16 %v13035
    %v13299 = vunpack.c.l.b16 %v13036
    %v13300 = vunpack.c.l.b16 %v13037
    %v13301 = vunpack.c.l.b16 %v13038
    %v13302 = vunpack.c.l.b16 %v13039
    %v13303 = vunpack.c.l.b16 %v13040
    %v13304 = vunpack.c.l.b16 %v13041
    %v13305 = vunpack.c.l.b16 %v13042
    %v13306 = vunpack.c.l.b16 %v13043
    %v13307 = vunpack.c.l.b16 %v13044
    %v13308 = vunpack.c.l.b16 %v13045
    %v13309 = vunpack.c.l.b16 %v13046
    %v13310 = vunpack.c.l.b16 %v13047
    %v13311 = vunpack.c.l.b16 %v13048
    %v13312 = vunpack.c.l.b16 %v13049
    %v13313 = vunpack.c.l.b16 %v13050
    %v13314 = vunpack.c.l.b16 %v13051
    %v13315 = vunpack.c.l.b16 %v13052
    %v13316 = vunpack.c.l.b16 %v13053
    %v13317 = vunpack.c.l.b16 %v13054
    %v13318 = vunpack.c.l.b16 %v13055
    %v13319 = vunpack.c.l.b16 %v13056
    %v13320 = vunpack.c.l.b16 %v13057
    %v13321 = vunpack.c.l.b16 %v13058
    %v13322 = vunpack.c.l.b16 %v13059
    %v13323 = vunpack.c.l.b16 %v13060
    %v13324 = vunpack.c.l.b16 %v13061
    %v13325 = vunpack.c.l.b16 %v13062
    %v13326 = vunpack.c.l.b16 %v13063
    %v13327 = vunpack.c.l.b16 %v13064
    %v13328 = vunpack.c.l.b16 %v13065
    %v13329 = vunpack.c.l.b16 %v13066
    %v13330 = vunpack.c.l.b16 %v13067
    %v13331 = vunpack.c.l.b16 %v13068
    %v13332 = vunpack.c.l.b16 %v13069
    %v13333 = vunpack.c.l.b16 %v13070
    %v13334 = vunpack.c.l.b16 %v13071
    %v13335 = vunpack.c.l.b16 %v13072
    %v13336 = vpack.c.b16 %v13209, %v13208
    %v13337 = vpack.c.b16 %v13211, %v13210
    %v13338 = vpack.c.b16 %v13213, %v13212
    %v13339 = vpack.c.b16 %v13215, %v13214
    %v13340 = vpack.c.b16 %v13217, %v13216
    %v13341 = vpack.c.b16 %v13219, %v13218
    %v13342 = vpack.c.b16 %v13221, %v13220
    %v13343 = vpack.c.b16 %v13223, %v13222
    %v13344 = vpack.c.b16 %v13225, %v13224
    %v13345 = vpack.c.b16 %v13227, %v13226
    %v13346 = vpack.c.b16 %v13229, %v13228
    %v13347 = vpack.c.b16 %v13231, %v13230
    %v13348 = vpack.c.b16 %v13233, %v13232
    %v13349 = vpack.c.b16 %v13235, %v13234
    %v13350 = vpack.c.b16 %v13237, %v13236
    %v13351 = vpack.c.b16 %v13239, %v13238
    %v13352 = vpack.c.b16 %v13241, %v13240
    %v13353 = vpack.c.b16 %v13243, %v13242
    %v13354 = vpack.c.b16 %v13245, %v13244
    %v13355 = vpack.c.b16 %v13247, %v13246
    %v13356 = vpack.c.b16 %v13249, %v13248
    %v13357 = vpack.c.b16 %v13251, %v13250
    %v13358 = vpack.c.b16 %v13253, %v13252
    %v13359 = vpack.c.b16 %v13255, %v13254
    %v13360 = vpack.c.b16 %v13257, %v13256
    %v13361 = vpack.c.b16 %v13259, %v13258
    %v13362 = vpack.c.b16 %v13261, %v13260
    %v13363 = vpack.c.b16 %v13263, %v13262
    %v13364 = vpack.c.b16 %v13265, %v13264
    %v13365 = vpack.c.b16 %v13267, %v13266
    %v13366 = vpack.c.b16 %v13269, %v13268
    %v13367 = vpack.c.b16 %v13271, %v13270
    %v13368 = vpack.c.b16 %v13273, %v13272
    %v13369 = vpack.c.b16 %v13275, %v13274
    %v13370 = vpack.c.b16 %v13277, %v13276
    %v13371 = vpack.c.b16 %v13279, %v13278
    %v13372 = vpack.c.b16 %v13281, %v13280
    %v13373 = vpack.c.b16 %v13283, %v13282
    %v13374 = vpack.c.b16 %v13285, %v13284
    %v13375 = vpack.c.b16 %v13287, %v13286
    %v13376 = vpack.c.b16 %v13289, %v13288
    %v13377 = vpack.c.b16 %v13291, %v13290
    %v13378 = vpack.c.b16 %v13293, %v13292
    %v13379 = vpack.c.b16 %v13295, %v13294
    %v13380 = vpack.c.b16 %v13297, %v13296
    %v13381 = vpack.c.b16 %v13299, %v13298
    %v13382 = vpack.c.b16 %v13301, %v13300
    %v13383 = vpack.c.b16 %v13303, %v13302
    %v13384 = vpack.c.b16 %v13305, %v13304
    %v13385 = vpack.c.b16 %v13307, %v13306
    %v13386 = vpack.c.b16 %v13309, %v13308
    %v13387 = vpack.c.b16 %v13311, %v13310
    %v13388 = vpack.c.b16 %v13313, %v13312
    %v13389 = vpack.c.b16 %v13315, %v13314
    %v13390 = vpack.c.b16 %v13317, %v13316
    %v13391 = vpack.c.b16 %v13319, %v13318
    %v13392 = vpack.c.b16 %v13321, %v13320
    %v13393 = vpack.c.b16 %v13323, %v13322
    %v13394 = vpack.c.b16 %v13325, %v13324
    %v13395 = vpack.c.b16 %v13327, %v13326
    %v13396 = vpack.c.b16 %v13329, %v13328
    %v13397 = vpack.c.b16 %v13331, %v13330
    %v13398 = vpack.c.b16 %v13333, %v13332
    %v13399 = vpack.c.b16 %v13335, %v13334
    %13464 = vmatprep.subr.bf16.mxu0 0
    %13465 = vmatpush1.bf16.msra.mxu0 %v13343
    %13466 = vmatprep.subr.bf16.mxu0 0
    %13467 = vmatpush1.bf16.msra.mxu0 %v13342
    %13468 = vmatprep.subr.bf16.mxu0 0
    %13469 = vmatpush1.bf16.msra.mxu0 %v13341
    %13470 = vmatprep.subr.bf16.mxu0 0
    %13471 = vmatpush1.bf16.msra.mxu0 %v13340
    %13472 = vmatprep.subr.bf16.mxu0 0
    %13473 = vmatpush1.bf16.msra.mxu0 %v13339
    %13474 = vmatprep.subr.bf16.mxu0 0
    %13475 = vmatpush1.bf16.msra.mxu0 %v13338
    %13476 = vmatprep.subr.bf16.mxu0 0
    %13477 = vmatpush1.bf16.msra.mxu0 %v13337
    %13478 = vmatprep.subr.bf16.mxu0 0
    %13479 = vmatpush1.bf16.msra.mxu0 %v13336
    %13480 = vmatprep.subr.bf16.mxu0 0
    %13481 = vmatpush2.bf16.msra.mxu0 %v13351
    %13482 = vmatprep.subr.bf16.mxu0 0
    %13483 = vmatpush2.bf16.msra.mxu0 %v13350
    %13484 = vmatprep.subr.bf16.mxu0 0
    %13485 = vmatpush2.bf16.msra.mxu0 %v13349
    %13486 = vmatprep.subr.bf16.mxu0 0
    %13487 = vmatpush2.bf16.msra.mxu0 %v13348
    %13488 = vmatprep.subr.bf16.mxu0 0
    %13489 = vmatpush2.bf16.msra.mxu0 %v13347
    %13490 = vmatprep.subr.bf16.mxu0 0
    %13491 = vmatpush2.bf16.msra.mxu0 %v13346
    %13492 = vmatprep.subr.bf16.mxu0 0
    %13493 = vmatpush2.bf16.msra.mxu0 %v13345
    %13494 = vmatprep.subr.bf16.mxu0 0
    %13495 = vmatpush2.bf16.msra.mxu0 %v13344
    %13496 = vmatprep.mubr.bf16.mxu0 %v12938
    %13497 = vmatmul.mubr.bf16.gmra.mxu0 %v12937
    %v13498 = vpop.f32.mrf.mxu0
    %v13499 = vadd.f32 %v13078, %v13498
    %v13500 = vpop.f32.mrf.mxu0
    %v13501 = vpop.f32.mrf.mxu0
    %v13502 = vpop.f32.mrf.mxu0
    %13503 = vdwg.mxu0
    %13504 = vmatprep.subr.bf16.mxu0 0
    %13505 = vmatpush1.bf16.msra.mxu0 %v13359
    %13506 = vmatprep.subr.bf16.mxu0 0
    %13507 = vmatpush1.bf16.msra.mxu0 %v13358
    %13508 = vmatprep.subr.bf16.mxu0 0
    %13509 = vmatpush1.bf16.msra.mxu0 %v13357
    %13510 = vmatprep.subr.bf16.mxu0 0
    %13511 = vmatpush1.bf16.msra.mxu0 %v13356
    %13512 = vmatprep.subr.bf16.mxu0 0
    %13513 = vmatpush1.bf16.msra.mxu0 %v13355
    %13514 = vmatprep.subr.bf16.mxu0 0
    %13515 = vmatpush1.bf16.msra.mxu0 %v13354
    %13516 = vmatprep.subr.bf16.mxu0 0
    %13517 = vmatpush1.bf16.msra.mxu0 %v13353
    %13518 = vmatprep.subr.bf16.mxu0 0
    %13519 = vmatpush1.bf16.msra.mxu0 %v13352
    %13520 = vmatprep.subr.bf16.mxu0 0
    %13521 = vmatpush2.bf16.msra.mxu0 %v13367
    %13522 = vmatprep.subr.bf16.mxu0 0
    %13523 = vmatpush2.bf16.msra.mxu0 %v13366
    %13524 = vmatprep.subr.bf16.mxu0 0
    %13525 = vmatpush2.bf16.msra.mxu0 %v13365
    %13526 = vmatprep.subr.bf16.mxu0 0
    %13527 = vmatpush2.bf16.msra.mxu0 %v13364
    %13528 = vmatprep.subr.bf16.mxu0 0
    %13529 = vmatpush2.bf16.msra.mxu0 %v13363
    %13530 = vmatprep.subr.bf16.mxu0 0
    %13531 = vmatpush2.bf16.msra.mxu0 %v13362
    %13532 = vmatprep.subr.bf16.mxu0 0
    %13533 = vmatpush2.bf16.msra.mxu0 %v13361
    %13534 = vmatprep.subr.bf16.mxu0 0
    %13535 = vmatpush2.bf16.msra.mxu0 %v13360
    %13536 = vmatprep.mubr.bf16.mxu0 %v12940
    %13537 = vmatmul.mubr.bf16.gmra.mxu0 %v12939
    %v13538 = vpop.f32.mrf.mxu0
    %v13539 = vadd.f32 %v13499, %v13538
    %v13540 = vpop.f32.mrf.mxu0
    %v13541 = vpop.f32.mrf.mxu0
    %v13542 = vpop.f32.mrf.mxu0
    %13543 = vdwg.mxu0
    %13544 = vmatprep.subr.bf16.mxu0 0
    %13545 = vmatpush1.bf16.msra.mxu0 %v13375
    %13546 = vmatprep.subr.bf16.mxu0 0
    %13547 = vmatpush1.bf16.msra.mxu0 %v13374
    %13548 = vmatprep.subr.bf16.mxu0 0
    %13549 = vmatpush1.bf16.msra.mxu0 %v13373
    %13550 = vmatprep.subr.bf16.mxu0 0
    %13551 = vmatpush1.bf16.msra.mxu0 %v13372
    %13552 = vmatprep.subr.bf16.mxu0 0
    %13553 = vmatpush1.bf16.msra.mxu0 %v13371
    %13554 = vmatprep.subr.bf16.mxu0 0
    %13555 = vmatpush1.bf16.msra.mxu0 %v13370
    %13556 = vmatprep.subr.bf16.mxu0 0
    %13557 = vmatpush1.bf16.msra.mxu0 %v13369
    %13558 = vmatprep.subr.bf16.mxu0 0
    %13559 = vmatpush1.bf16.msra.mxu0 %v13368
    %13560 = vmatprep.subr.bf16.mxu0 0
    %13561 = vmatpush2.bf16.msra.mxu0 %v13383
    %13562 = vmatprep.subr.bf16.mxu0 0
    %13563 = vmatpush2.bf16.msra.mxu0 %v13382
    %13564 = vmatprep.subr.bf16.mxu0 0
    %13565 = vmatpush2.bf16.msra.mxu0 %v13381
    %13566 = vmatprep.subr.bf16.mxu0 0
    %13567 = vmatpush2.bf16.msra.mxu0 %v13380
    %13568 = vmatprep.subr.bf16.mxu0 0
    %13569 = vmatpush2.bf16.msra.mxu0 %v13379
    %13570 = vmatprep.subr.bf16.mxu0 0
    %13571 = vmatpush2.bf16.msra.mxu0 %v13378
    %13572 = vmatprep.subr.bf16.mxu0 0
    %13573 = vmatpush2.bf16.msra.mxu0 %v13377
    %13574 = vmatprep.subr.bf16.mxu0 0
    %13575 = vmatpush2.bf16.msra.mxu0 %v13376
    %13576 = vmatprep.mubr.bf16.mxu0 %v12942
    %13577 = vmatmul.mubr.bf16.gmra.mxu0 %v12941
    %v13578 = vpop.f32.mrf.mxu0
    %v13579 = vadd.f32 %v13539, %v13578
    %v13580 = vpop.f32.mrf.mxu0
    %v13581 = vpop.f32.mrf.mxu0
    %v13582 = vpop.f32.mrf.mxu0
    %13583 = vdwg.mxu0
    %13584 = vmatprep.subr.bf16.mxu0 0
    %13585 = vmatpush1.bf16.msra.mxu0 %v13391
    %13586 = vmatprep.subr.bf16.mxu0 0
    %13587 = vmatpush1.bf16.msra.mxu0 %v13390
    %13588 = vmatprep.subr.bf16.mxu0 0
    %13589 = vmatpush1.bf16.msra.mxu0 %v13389
    %13590 = vmatprep.subr.bf16.mxu0 0
    %13591 = vmatpush1.bf16.msra.mxu0 %v13388
    %13592 = vmatprep.subr.bf16.mxu0 0
    %13593 = vmatpush1.bf16.msra.mxu0 %v13387
    %13594 = vmatprep.subr.bf16.mxu0 0
    %13595 = vmatpush1.bf16.msra.mxu0 %v13386
    %13596 = vmatprep.subr.bf16.mxu0 0
    %13597 = vmatpush1.bf16.msra.mxu0 %v13385
    %13598 = vmatprep.subr.bf16.mxu0 0
    %13599 = vmatpush1.bf16.msra.mxu0 %v13384
    %13600 = vmatprep.subr.bf16.mxu0 0
    %13601 = vmatpush2.bf16.msra.mxu0 %v13399
    %13602 = vmatprep.subr.bf16.mxu0 0
    %13603 = vmatpush2.bf16.msra.mxu0 %v13398
    %13604 = vmatprep.subr.bf16.mxu0 0
    %13605 = vmatpush2.bf16.msra.mxu0 %v13397
    %13606 = vmatprep.subr.bf16.mxu0 0
    %13607 = vmatpush2.bf16.msra.mxu0 %v13396
    %13608 = vmatprep.subr.bf16.mxu0 0
    %13609 = vmatpush2.bf16.msra.mxu0 %v13395
    %13610 = vmatprep.subr.bf16.mxu0 0
    %13611 = vmatpush2.bf16.msra.mxu0 %v13394
    %13612 = vmatprep.subr.bf16.mxu0 0
    %13613 = vmatpush2.bf16.msra.mxu0 %v13393
    %13614 = vmatprep.subr.bf16.mxu0 0
    %13615 = vmatpush2.bf16.msra.mxu0 %v13392
    %13616 = vmatprep.mubr.bf16.mxu0 %v12944
    %13617 = vmatmul.mubr.bf16.gmra.mxu0 %v12943
    %v13618 = vpop.f32.mrf.mxu0
    %v13619 = vadd.f32 %v13579, %v13618
    %v13620 = vpop.f32.mrf.mxu0
    %v13621 = vpop.f32.mrf.mxu0
    %v13622 = vpop.f32.mrf.mxu0
    %13623 = vdwg.mxu0
    %vm13624 = vcmask 15360
    %13625 = vst.msk [vmem:[%s19] sm:$0xff] %vm13624, %v13619
    // Predicated region
    $region146: #{generator_forward.1} parent=1 // pred_check
      _
    $region147: #{generator_forward.1} parent=1 // pred_check_branch
      %13627 = sbr.rel (0) target = $region149
    $region148: #{generator_forward.1} parent=1 // pred_region
      _
    $region149: #{generator_forward.1} parent=1 // pred_fallthru
      _
    // Predicated region
    $region150: #{generator_forward.1} parent=1 // pred_check
      _
    $region151: #{generator_forward.1} parent=1 // pred_check_branch
      %13629 = sbr.rel (0) target = $region153
    $region152: #{generator_forward.1} parent=1 // pred_region
      _
    $region153: #{generator_forward.1} parent=1 // pred_fallthru
      _
    %13630 = vsyncpa [#allocation3], 1
    %13631 = vsyncpa [#allocation5], 1
    %13632 = vsyncpa [#allocation8], 1
    %13633 = vsyncpa [#allocation11], 1
    %13634 = vsyncpa [#allocation14], 1
    %13635 = vsyncpa [#allocation17], 1
    %13636 = vsyncpa [#allocation20], 1
    %13637 = vsyncpa [#allocation23], 1
    %13638 = vsyncpa [#allocation26], 1

</llo_original>
